<compile_context>
chip_gen: v7x
topology: tpu7x:2x2x1
jax: 0.10.0
libtpu: 0.0.40
codegen_flags: <defaults>
</compile_context>

<pallas_src>
import jax
import jax.numpy as jnp
from jax import lax
from jax.experimental import pallas as pl
from jax.experimental.pallas import tpu as pltpu


# ----------------------- LeNet geometry (static ints) ----------------------- #
_K = 5                        # conv kernel size
_W1 = 32                      # conv1 input width (32x32 image)
_L1 = 27 * _W1 + 27 + 1       # 892: full-width flattened conv1 output length
_W2 = 14                      # pooled map width
_L2 = 9 * _W2 + 9 + 1         # 136: full-width flattened conv2 output length


# ------------------------------ fused kernel -------------------------------- #
def _lenet_kernel(x_ref, w1_ref, b1_ref, sc1_ref, w2_ref, b2_ref, sc2_ref,
                  fw1_ref, fb1_ref, fw2_ref, fb2_ref, fw3_ref, fb3_ref,
                  o_ref,
                  stk1_ref, h1_ref, p1_ref, stk2_ref, h2_ref, p2_ref, row_ref):
    f32 = jnp.float32

    # conv1: stack the 25 shifted input slices along K, one (6,75)@(75,892) dot.
    for idx in range(_K * _K):
        ky, kx = divmod(idx, _K)
        off = ky * _W1 + kx
        stk1_ref[idx * 3:(idx + 1) * 3, :] = x_ref[:, off:off + _L1]
    h1 = jnp.dot(w1_ref[...], stk1_ref[...], preferred_element_type=f32)
    h1_ref[...] = jnp.maximum(h1 + b1_ref[...], 0.0)            # (6, 892)

    # pool1: per pooled row, max of 4 shifted slices, then a tiny even-column
    # selection matmul (6,27)@(27,14) written at its flattened (width-14) slot.
    sc1 = sc1_ref[...]                                           # (27, 14)
    for r in range(14):
        m = None
        for dy in (0, 1):
            for dx in (0, 1):
                base = (2 * r + dy) * _W1 + dx
                v = h1_ref[:, base:base + 27]
                m = v if m is None else jnp.maximum(m, v)
        p1_ref[:, r * 14:(r + 1) * 14] = jnp.dot(m, sc1, preferred_element_type=f32)

    # conv2: same stacking trick on the flattened 14x14 pooled map.
    for idx in range(_K * _K):
        ky, kx = divmod(idx, _K)
        off = ky * _W2 + kx
        stk2_ref[idx * 6:(idx + 1) * 6, :] = p1_ref[:, off:off + _L2]
    h2 = jnp.dot(w2_ref[...], stk2_ref[...], preferred_element_type=f32)
    h2_ref[...] = jnp.maximum(h2 + b2_ref[...], 0.0)             # (16, 136)

    # pool2: same per-row pooling -> p2 (16, 25).
    sc2 = sc2_ref[...]                                           # (9, 5)
    for r in range(5):
        m = None
        for dy in (0, 1):
            for dx in (0, 1):
                base = (2 * r + dy) * _W2 + dx
                v = h2_ref[:, base:base + 9]
                m = v if m is None else jnp.maximum(m, v)
        p2_ref[:, r * 5:(r + 1) * 5] = jnp.dot(m, sc2, preferred_element_type=f32)

    # flatten to a lane-dense (1, 400) row, channel-major (== torch .view order).
    for c in range(16):
        row_ref[0:1, c * 25:(c + 1) * 25] = p2_ref[c:c + 1, :]

    # fc1 -> fc2 -> fc3 as lane-dense row-vector matmuls.
    y = jnp.maximum(jnp.dot(row_ref[...], fw1_ref[...],
                            preferred_element_type=f32) + fb1_ref[...], 0.0)
    y = jnp.maximum(jnp.dot(y, fw2_ref[...],
                            preferred_element_type=f32) + fb2_ref[...], 0.0)
    y = jnp.dot(y, fw3_ref[...], preferred_element_type=f32) + fb3_ref[...]
    o_ref[...] = y.astype(o_ref.dtype)                           # (1, 10)


# ------------------------------- JAX wrapper -------------------------------- #
def lenet_forward(params, x):
    # x: (B, 3, 32, 32) float32, NCHW (spatial must be 32 so fc1 sees 16*5*5).
    B = x.shape[0]
    assert x.shape[1:] == (3, 32, 32)
    xf = x.reshape(B, 3, 32 * 32).astype(jnp.float32)

    # One-time weight repacking in the wrapper (tiny).
    w1m = params["conv1_w"].transpose(0, 2, 3, 1).reshape(6, 75)     # col = (ky,kx,cin)
    b1 = params["conv1_b"].reshape(6, 1)
    w2m = params["conv2_w"].transpose(0, 2, 3, 1).reshape(16, 150)
    b2 = params["conv2_b"].reshape(16, 1)
    sc1 = (jnp.arange(27)[:, None] == 2 * jnp.arange(14)[None, :]).astype(jnp.float32)
    sc2 = (jnp.arange(9)[:, None] == 2 * jnp.arange(5)[None, :]).astype(jnp.float32)
    fw1 = params["fc1_w"].T                                          # (400, 120)
    fb1 = params["fc1_b"].reshape(1, 120)
    fw2 = params["fc2_w"].T                                          # (120, 84)
    fb2 = params["fc2_b"].reshape(1, 84)
    fw3 = params["fc3_w"].T                                          # (84, 10)
    fb3 = params["fc3_b"].reshape(1, 10)

    def const(arr):   # whole-array VMEM block, resident across the batch grid
        nd = arr.ndim
        return pl.BlockSpec(arr.shape, lambda b, _nd=nd: (0,) * _nd)

    flops = int(2 * B * (6 * 75 * _L1 + 16 * 150 * _L2 +
                         14 * 6 * 27 * 14 + 5 * 16 * 9 * 5 +
                         400 * 120 + 120 * 84 + 84 * 10))
    bytes_accessed = int(4 * (B * (3 * 1024 + 10) + 6 * 75 + 6 + 27 * 14 +
                              16 * 150 + 16 + 9 * 5 + 400 * 120 + 120 +
                              120 * 84 + 84 + 84 * 10 + 10))

    out = pl.pallas_call(
        _lenet_kernel,
        out_shape=jax.ShapeDtypeStruct((B, 1, 10), jnp.float32),
        grid=(B,),
        in_specs=[
            pl.BlockSpec((None, 3, 32 * 32), lambda b: (b, 0, 0)),
            const(w1m), const(b1), const(sc1),
            const(w2m), const(b2), const(sc2),
            const(fw1), const(fb1), const(fw2), const(fb2),
            const(fw3), const(fb3),
        ],
        out_specs=pl.BlockSpec((None, 1, 10), lambda b: (b, 0, 0)),
        scratch_shapes=[
            pltpu.VMEM((75, _L1), jnp.float32),    # stacked conv1 input
            pltpu.VMEM((6, _L1), jnp.float32),     # relu(conv1), full-width
            pltpu.VMEM((6, 196), jnp.float32),     # pooled 14x14 map
            pltpu.VMEM((150, _L2), jnp.float32),   # stacked conv2 input
            pltpu.VMEM((16, _L2), jnp.float32),    # relu(conv2), full-width
            pltpu.VMEM((16, 25), jnp.float32),     # pooled 5x5 map
            pltpu.VMEM((1, 400), jnp.float32),     # flattened fc1 input row
        ],
        compiler_params=pltpu.CompilerParams(
            dimension_semantics=("parallel",)),
        cost_estimate=pl.CostEstimate(
            flops=flops, transcendentals=0, bytes_accessed=bytes_accessed),
    )(xf, w1m, b1, sc1, w2m, b2, sc2, fw1, fb1, fw2, fb2, fw3, fb3)
    return out.reshape(B, 10)


# ------------------------- init + pure-JAX reference ------------------------ #
def init_params(key):
    ks = jax.random.split(key, 10)

    def u(k, shape, fan_in):
        bound = 1.0 / float(fan_in) ** 0.5
        return jax.random.uniform(k, shape, jnp.float32, -bound, bound)

    return {
        "conv1_w": u(ks[0], (6, 3, 5, 5), 3 * 25),
        "conv1_b": u(ks[1], (6,), 3 * 25),
        "conv2_w": u(ks[2], (16, 6, 5, 5), 6 * 25),
        "conv2_b": u(ks[3], (16,), 6 * 25),
        "fc1_w": u(ks[4], (120, 400), 400),
        "fc1_b": u(ks[5], (120,), 400),
        "fc2_w": u(ks[6], (84, 120), 120),
        "fc2_b": u(ks[7], (84,), 120),
        "fc3_w": u(ks[8], (10, 84), 84),
        "fc3_b": u(ks[9], (10,), 84),
    }


def lenet_reference(params, x):
    dn = ("NCHW", "OIHW", "NCHW")
    y = lax.conv_general_dilated(x, params["conv1_w"], (1, 1), "VALID",
                                 dimension_numbers=dn)
    y = jax.nn.relu(y + params["conv1_b"].reshape(1, 6, 1, 1))
    y = lax.reduce_window(y, -jnp.inf, lax.max, (1, 1, 2, 2), (1, 1, 2, 2), "VALID")
    y = lax.conv_general_dilated(y, params["conv2_w"], (1, 1), "VALID",
                                 dimension_numbers=dn)
    y = jax.nn.relu(y + params["conv2_b"].reshape(1, 16, 1, 1))
    y = lax.reduce_window(y, -jnp.inf, lax.max, (1, 1, 2, 2), (1, 1, 2, 2), "VALID")
    y = y.reshape(y.shape[0], 16 * 5 * 5)
    y = jax.nn.relu(y @ params["fc1_w"].T + params["fc1_b"])
    y = jax.nn.relu(y @ params["fc2_w"].T + params["fc2_b"])
    return y @ params["fc3_w"].T + params["fc3_b"]


if __name__ == "__main__":
    key = jax.random.PRNGKey(0)
    pkey, xkey = jax.random.split(key)
    params = init_params(pkey)
    x = jax.random.normal(xkey, (2, 3, 32, 32), jnp.float32)   # small batch

    out = jax.jit(lenet_forward)(params, x)
    out = jax.block_until_ready(out)
    assert out.shape == (2, 10) and out.dtype == jnp.float32

    ref = jax.block_until_ready(jax.jit(lenet_reference)(params, x))
    assert bool(jnp.allclose(out, ref, atol=1e-3, rtol=1e-3)), (
        "max abs err = %e" % float(jnp.max(jnp.abs(out - ref))))
    print("KERNEL_OK")
</pallas_src>

<mosaic_0001>
module attributes {stable_mosaic.version = 11 : i64} {
  func.func @_lenet_kernel(%arg0: i32, %arg1: memref<1x3x1024xf32, #tpu.memory_space<vmem>>, %arg2: memref<6x75xf32, #tpu.memory_space<vmem>>, %arg3: memref<6x1xf32, #tpu.memory_space<vmem>>, %arg4: memref<27x14xf32, #tpu.memory_space<vmem>>, %arg5: memref<16x150xf32, #tpu.memory_space<vmem>>, %arg6: memref<16x1xf32, #tpu.memory_space<vmem>>, %arg7: memref<9x5xf32, #tpu.memory_space<vmem>>, %arg8: memref<400x120xf32, #tpu.memory_space<vmem>>, %arg9: memref<1x120xf32, #tpu.memory_space<vmem>>, %arg10: memref<120x84xf32, #tpu.memory_space<vmem>>, %arg11: memref<1x84xf32, #tpu.memory_space<vmem>>, %arg12: memref<84x10xf32, #tpu.memory_space<vmem>>, %arg13: memref<1x10xf32, #tpu.memory_space<vmem>>, %arg14: memref<1x1x10xf32, #tpu.memory_space<vmem>>, %arg15: memref<75x892xf32, #tpu.memory_space<vmem>>, %arg16: memref<6x892xf32, #tpu.memory_space<vmem>>, %arg17: memref<6x196xf32, #tpu.memory_space<vmem>>, %arg18: memref<150x136xf32, #tpu.memory_space<vmem>>, %arg19: memref<16x136xf32, #tpu.memory_space<vmem>>, %arg20: memref<16x25xf32, #tpu.memory_space<vmem>>, %arg21: memref<1x400xf32, #tpu.memory_space<vmem>>) attributes {dimension_semantics = [#tpu.dimension_semantics<parallel>], iteration_bounds = array<i64: 2>, scalar_prefetch = 0 : i64, scratch_operands = 7 : i64, tpu.core_type = #tpu.core_type<tc>, window_params = [{transform_indices = @transform_0, window_bounds = array<i64: 1, 3, 1024>}, {pipeline_mode = #tpu.pipeline_mode<synchronous>, transform_indices = @transform_1, window_bounds = array<i64: 6, 75>}, {pipeline_mode = #tpu.pipeline_mode<synchronous>, transform_indices = @transform_2, window_bounds = array<i64: 6, 1>}, {pipeline_mode = #tpu.pipeline_mode<synchronous>, transform_indices = @transform_3, window_bounds = array<i64: 27, 14>}, {pipeline_mode = #tpu.pipeline_mode<synchronous>, transform_indices = @transform_4, window_bounds = array<i64: 16, 150>}, {pipeline_mode = #tpu.pipeline_mode<synchronous>, transform_indices = @transform_5, window_bounds = array<i64: 16, 1>}, {pipeline_mode = #tpu.pipeline_mode<synchronous>, transform_indices = @transform_6, window_bounds = array<i64: 9, 5>}, {pipeline_mode = #tpu.pipeline_mode<synchronous>, transform_indices = @transform_7, window_bounds = array<i64: 400, 120>}, {pipeline_mode = #tpu.pipeline_mode<synchronous>, transform_indices = @transform_8, window_bounds = array<i64: 1, 120>}, {pipeline_mode = #tpu.pipeline_mode<synchronous>, transform_indices = @transform_9, window_bounds = array<i64: 120, 84>}, {pipeline_mode = #tpu.pipeline_mode<synchronous>, transform_indices = @transform_10, window_bounds = array<i64: 1, 84>}, {pipeline_mode = #tpu.pipeline_mode<synchronous>, transform_indices = @transform_11, window_bounds = array<i64: 84, 10>}, {pipeline_mode = #tpu.pipeline_mode<synchronous>, transform_indices = @transform_12, window_bounds = array<i64: 1, 10>}, {transform_indices = @transform_13, window_bounds = array<i64: 1, 1, 10>}]} {
    %c0 = arith.constant 0 : index
    %c0_0 = arith.constant 0 : index
    %c0_1 = arith.constant 0 : index
    %0 = vector.load %arg1[%c0, %c0_0, %c0_1] : memref<1x3x1024xf32, #tpu.memory_space<vmem>>, vector<1x3x892xf32>
    %1 = vector.shape_cast %0 : vector<1x3x892xf32> to vector<3x892xf32>
    %c0_2 = arith.constant 0 : index
    %c0_3 = arith.constant 0 : index
    %2 = vector.load %arg15[%c0_2, %c0_3] : memref<75x892xf32, #tpu.memory_space<vmem>>, vector<3x892xf32>
    tpu.vector_store %arg15[%c0_2, %c0_3], %1 {strides = array<i32>} : memref<75x892xf32, #tpu.memory_space<vmem>>, vector<3x892xf32>,
    %c0_4 = arith.constant 0 : index
    %c0_5 = arith.constant 0 : index
    %c1 = arith.constant 1 : index
    %3 = vector.load %arg1[%c0_4, %c0_5, %c1] : memref<1x3x1024xf32, #tpu.memory_space<vmem>>, vector<1x3x892xf32>
    %4 = vector.shape_cast %3 : vector<1x3x892xf32> to vector<3x892xf32>
    %c3 = arith.constant 3 : index
    %c0_6 = arith.constant 0 : index
    %5 = vector.load %arg15[%c3, %c0_6] : memref<75x892xf32, #tpu.memory_space<vmem>>, vector<3x892xf32>
    tpu.vector_store %arg15[%c3, %c0_6], %4 {strides = array<i32>} : memref<75x892xf32, #tpu.memory_space<vmem>>, vector<3x892xf32>,
    %c0_7 = arith.constant 0 : index
    %c0_8 = arith.constant 0 : index
    %c2 = arith.constant 2 : index
    %6 = vector.load %arg1[%c0_7, %c0_8, %c2] : memref<1x3x1024xf32, #tpu.memory_space<vmem>>, vector<1x3x892xf32>
    %7 = vector.shape_cast %6 : vector<1x3x892xf32> to vector<3x892xf32>
    %c6 = arith.constant 6 : index
    %c0_9 = arith.constant 0 : index
    %8 = vector.load %arg15[%c6, %c0_9] : memref<75x892xf32, #tpu.memory_space<vmem>>, vector<3x892xf32>
    tpu.vector_store %arg15[%c6, %c0_9], %7 {strides = array<i32>} : memref<75x892xf32, #tpu.memory_space<vmem>>, vector<3x892xf32>,
    %c0_10 = arith.constant 0 : index
    %c0_11 = arith.constant 0 : index
    %c3_12 = arith.constant 3 : index
    %9 = vector.load %arg1[%c0_10, %c0_11, %c3_12] : memref<1x3x1024xf32, #tpu.memory_space<vmem>>, vector<1x3x892xf32>
    %10 = vector.shape_cast %9 : vector<1x3x892xf32> to vector<3x892xf32>
    %c9 = arith.constant 9 : index
    %c0_13 = arith.constant 0 : index
    %11 = vector.load %arg15[%c9, %c0_13] : memref<75x892xf32, #tpu.memory_space<vmem>>, vector<3x892xf32>
    tpu.vector_store %arg15[%c9, %c0_13], %10 {strides = array<i32>} : memref<75x892xf32, #tpu.memory_space<vmem>>, vector<3x892xf32>,
    %c0_14 = arith.constant 0 : index
    %c0_15 = arith.constant 0 : index
    %c4 = arith.constant 4 : index
    %12 = vector.load %arg1[%c0_14, %c0_15, %c4] : memref<1x3x1024xf32, #tpu.memory_space<vmem>>, vector<1x3x892xf32>
    %13 = vector.shape_cast %12 : vector<1x3x892xf32> to vector<3x892xf32>
    %c12 = arith.constant 12 : index
    %c0_16 = arith.constant 0 : index
    %14 = vector.load %arg15[%c12, %c0_16] : memref<75x892xf32, #tpu.memory_space<vmem>>, vector<3x892xf32>
    tpu.vector_store %arg15[%c12, %c0_16], %13 {strides = array<i32>} : memref<75x892xf32, #tpu.memory_space<vmem>>, vector<3x892xf32>,
    %c0_17 = arith.constant 0 : index
    %c0_18 = arith.constant 0 : index
    %c32 = arith.constant 32 : index
    %15 = vector.load %arg1[%c0_17, %c0_18, %c32] : memref<1x3x1024xf32, #tpu.memory_space<vmem>>, vector<1x3x892xf32>
    %16 = vector.shape_cast %15 : vector<1x3x892xf32> to vector<3x892xf32>
    %c15 = arith.constant 15 : index
    %c0_19 = arith.constant 0 : index
    %17 = vector.load %arg15[%c15, %c0_19] : memref<75x892xf32, #tpu.memory_space<vmem>>, vector<3x892xf32>
    tpu.vector_store %arg15[%c15, %c0_19], %16 {strides = array<i32>} : memref<75x892xf32, #tpu.memory_space<vmem>>, vector<3x892xf32>,
    %c0_20 = arith.constant 0 : index
    %c0_21 = arith.constant 0 : index
    %c33 = arith.constant 33 : index
    %18 = vector.load %arg1[%c0_20, %c0_21, %c33] : memref<1x3x1024xf32, #tpu.memory_space<vmem>>, vector<1x3x892xf32>
    %19 = vector.shape_cast %18 : vector<1x3x892xf32> to vector<3x892xf32>
    %c18 = arith.constant 18 : index
    %c0_22 = arith.constant 0 : index
    %20 = vector.load %arg15[%c18, %c0_22] : memref<75x892xf32, #tpu.memory_space<vmem>>, vector<3x892xf32>
    tpu.vector_store %arg15[%c18, %c0_22], %19 {strides = array<i32>} : memref<75x892xf32, #tpu.memory_space<vmem>>, vector<3x892xf32>,
    %c0_23 = arith.constant 0 : index
    %c0_24 = arith.constant 0 : index
    %c34 = arith.constant 34 : index
    %21 = vector.load %arg1[%c0_23, %c0_24, %c34] : memref<1x3x1024xf32, #tpu.memory_space<vmem>>, vector<1x3x892xf32>
    %22 = vector.shape_cast %21 : vector<1x3x892xf32> to vector<3x892xf32>
    %c21 = arith.constant 21 : index
    %c0_25 = arith.constant 0 : index
    %23 = vector.load %arg15[%c21, %c0_25] : memref<75x892xf32, #tpu.memory_space<vmem>>, vector<3x892xf32>
    tpu.vector_store %arg15[%c21, %c0_25], %22 {strides = array<i32>} : memref<75x892xf32, #tpu.memory_space<vmem>>, vector<3x892xf32>,
    %c0_26 = arith.constant 0 : index
    %c0_27 = arith.constant 0 : index
    %c35 = arith.constant 35 : index
    %24 = vector.load %arg1[%c0_26, %c0_27, %c35] : memref<1x3x1024xf32, #tpu.memory_space<vmem>>, vector<1x3x892xf32>
    %25 = vector.shape_cast %24 : vector<1x3x892xf32> to vector<3x892xf32>
    %c24 = arith.constant 24 : index
    %c0_28 = arith.constant 0 : index
    %26 = vector.load %arg15[%c24, %c0_28] : memref<75x892xf32, #tpu.memory_space<vmem>>, vector<3x892xf32>
    tpu.vector_store %arg15[%c24, %c0_28], %25 {strides = array<i32>} : memref<75x892xf32, #tpu.memory_space<vmem>>, vector<3x892xf32>,
    %c0_29 = arith.constant 0 : index
    %c0_30 = arith.constant 0 : index
    %c36 = arith.constant 36 : index
    %27 = vector.load %arg1[%c0_29, %c0_30, %c36] : memref<1x3x1024xf32, #tpu.memory_space<vmem>>, vector<1x3x892xf32>
    %28 = vector.shape_cast %27 : vector<1x3x892xf32> to vector<3x892xf32>
    %c27 = arith.constant 27 : index
    %c0_31 = arith.constant 0 : index
    %29 = vector.load %arg15[%c27, %c0_31] : memref<75x892xf32, #tpu.memory_space<vmem>>, vector<3x892xf32>
    tpu.vector_store %arg15[%c27, %c0_31], %28 {strides = array<i32>} : memref<75x892xf32, #tpu.memory_space<vmem>>, vector<3x892xf32>,
    %c0_32 = arith.constant 0 : index
    %c0_33 = arith.constant 0 : index
    %c64 = arith.constant 64 : index
    %30 = vector.load %arg1[%c0_32, %c0_33, %c64] : memref<1x3x1024xf32, #tpu.memory_space<vmem>>, vector<1x3x892xf32>
    %31 = vector.shape_cast %30 : vector<1x3x892xf32> to vector<3x892xf32>
    %c30 = arith.constant 30 : index
    %c0_34 = arith.constant 0 : index
    %32 = vector.load %arg15[%c30, %c0_34] : memref<75x892xf32, #tpu.memory_space<vmem>>, vector<3x892xf32>
    tpu.vector_store %arg15[%c30, %c0_34], %31 {strides = array<i32>} : memref<75x892xf32, #tpu.memory_space<vmem>>, vector<3x892xf32>,
    %c0_35 = arith.constant 0 : index
    %c0_36 = arith.constant 0 : index
    %c65 = arith.constant 65 : index
    %33 = vector.load %arg1[%c0_35, %c0_36, %c65] : memref<1x3x1024xf32, #tpu.memory_space<vmem>>, vector<1x3x892xf32>
    %34 = vector.shape_cast %33 : vector<1x3x892xf32> to vector<3x892xf32>
    %c33_37 = arith.constant 33 : index
    %c0_38 = arith.constant 0 : index
    %35 = vector.load %arg15[%c33_37, %c0_38] : memref<75x892xf32, #tpu.memory_space<vmem>>, vector<3x892xf32>
    tpu.vector_store %arg15[%c33_37, %c0_38], %34 {strides = array<i32>} : memref<75x892xf32, #tpu.memory_space<vmem>>, vector<3x892xf32>,
    %c0_39 = arith.constant 0 : index
    %c0_40 = arith.constant 0 : index
    %c66 = arith.constant 66 : index
    %36 = vector.load %arg1[%c0_39, %c0_40, %c66] : memref<1x3x1024xf32, #tpu.memory_space<vmem>>, vector<1x3x892xf32>
    %37 = vector.shape_cast %36 : vector<1x3x892xf32> to vector<3x892xf32>
    %c36_41 = arith.constant 36 : index
    %c0_42 = arith.constant 0 : index
    %38 = vector.load %arg15[%c36_41, %c0_42] : memref<75x892xf32, #tpu.memory_space<vmem>>, vector<3x892xf32>
    tpu.vector_store %arg15[%c36_41, %c0_42], %37 {strides = array<i32>} : memref<75x892xf32, #tpu.memory_space<vmem>>, vector<3x892xf32>,
    %c0_43 = arith.constant 0 : index
    %c0_44 = arith.constant 0 : index
    %c67 = arith.constant 67 : index
    %39 = vector.load %arg1[%c0_43, %c0_44, %c67] : memref<1x3x1024xf32, #tpu.memory_space<vmem>>, vector<1x3x892xf32>
    %40 = vector.shape_cast %39 : vector<1x3x892xf32> to vector<3x892xf32>
    %c39 = arith.constant 39 : index
    %c0_45 = arith.constant 0 : index
    %41 = vector.load %arg15[%c39, %c0_45] : memref<75x892xf32, #tpu.memory_space<vmem>>, vector<3x892xf32>
    tpu.vector_store %arg15[%c39, %c0_45], %40 {strides = array<i32>} : memref<75x892xf32, #tpu.memory_space<vmem>>, vector<3x892xf32>,
    %c0_46 = arith.constant 0 : index
    %c0_47 = arith.constant 0 : index
    %c68 = arith.constant 68 : index
    %42 = vector.load %arg1[%c0_46, %c0_47, %c68] : memref<1x3x1024xf32, #tpu.memory_space<vmem>>, vector<1x3x892xf32>
    %43 = vector.shape_cast %42 : vector<1x3x892xf32> to vector<3x892xf32>
    %c42 = arith.constant 42 : index
    %c0_48 = arith.constant 0 : index
    %44 = vector.load %arg15[%c42, %c0_48] : memref<75x892xf32, #tpu.memory_space<vmem>>, vector<3x892xf32>
    tpu.vector_store %arg15[%c42, %c0_48], %43 {strides = array<i32>} : memref<75x892xf32, #tpu.memory_space<vmem>>, vector<3x892xf32>,
    %c0_49 = arith.constant 0 : index
    %c0_50 = arith.constant 0 : index
    %c96 = arith.constant 96 : index
    %45 = vector.load %arg1[%c0_49, %c0_50, %c96] : memref<1x3x1024xf32, #tpu.memory_space<vmem>>, vector<1x3x892xf32>
    %46 = vector.shape_cast %45 : vector<1x3x892xf32> to vector<3x892xf32>
    %c45 = arith.constant 45 : index
    %c0_51 = arith.constant 0 : index
    %47 = vector.load %arg15[%c45, %c0_51] : memref<75x892xf32, #tpu.memory_space<vmem>>, vector<3x892xf32>
    tpu.vector_store %arg15[%c45, %c0_51], %46 {strides = array<i32>} : memref<75x892xf32, #tpu.memory_space<vmem>>, vector<3x892xf32>,
    %c0_52 = arith.constant 0 : index
    %c0_53 = arith.constant 0 : index
    %c97 = arith.constant 97 : index
    %48 = vector.load %arg1[%c0_52, %c0_53, %c97] : memref<1x3x1024xf32, #tpu.memory_space<vmem>>, vector<1x3x892xf32>
    %49 = vector.shape_cast %48 : vector<1x3x892xf32> to vector<3x892xf32>
    %c48 = arith.constant 48 : index
    %c0_54 = arith.constant 0 : index
    %50 = vector.load %arg15[%c48, %c0_54] : memref<75x892xf32, #tpu.memory_space<vmem>>, vector<3x892xf32>
    tpu.vector_store %arg15[%c48, %c0_54], %49 {strides = array<i32>} : memref<75x892xf32, #tpu.memory_space<vmem>>, vector<3x892xf32>,
    %c0_55 = arith.constant 0 : index
    %c0_56 = arith.constant 0 : index
    %c98 = arith.constant 98 : index
    %51 = vector.load %arg1[%c0_55, %c0_56, %c98] : memref<1x3x1024xf32, #tpu.memory_space<vmem>>, vector<1x3x892xf32>
    %52 = vector.shape_cast %51 : vector<1x3x892xf32> to vector<3x892xf32>
    %c51 = arith.constant 51 : index
    %c0_57 = arith.constant 0 : index
    %53 = vector.load %arg15[%c51, %c0_57] : memref<75x892xf32, #tpu.memory_space<vmem>>, vector<3x892xf32>
    tpu.vector_store %arg15[%c51, %c0_57], %52 {strides = array<i32>} : memref<75x892xf32, #tpu.memory_space<vmem>>, vector<3x892xf32>,
    %c0_58 = arith.constant 0 : index
    %c0_59 = arith.constant 0 : index
    %c99 = arith.constant 99 : index
    %54 = vector.load %arg1[%c0_58, %c0_59, %c99] : memref<1x3x1024xf32, #tpu.memory_space<vmem>>, vector<1x3x892xf32>
    %55 = vector.shape_cast %54 : vector<1x3x892xf32> to vector<3x892xf32>
    %c54 = arith.constant 54 : index
    %c0_60 = arith.constant 0 : index
    %56 = vector.load %arg15[%c54, %c0_60] : memref<75x892xf32, #tpu.memory_space<vmem>>, vector<3x892xf32>
    tpu.vector_store %arg15[%c54, %c0_60], %55 {strides = array<i32>} : memref<75x892xf32, #tpu.memory_space<vmem>>, vector<3x892xf32>,
    %c0_61 = arith.constant 0 : index
    %c0_62 = arith.constant 0 : index
    %c100 = arith.constant 100 : index
    %57 = vector.load %arg1[%c0_61, %c0_62, %c100] : memref<1x3x1024xf32, #tpu.memory_space<vmem>>, vector<1x3x892xf32>
    %58 = vector.shape_cast %57 : vector<1x3x892xf32> to vector<3x892xf32>
    %c57 = arith.constant 57 : index
    %c0_63 = arith.constant 0 : index
    %59 = vector.load %arg15[%c57, %c0_63] : memref<75x892xf32, #tpu.memory_space<vmem>>, vector<3x892xf32>
    tpu.vector_store %arg15[%c57, %c0_63], %58 {strides = array<i32>} : memref<75x892xf32, #tpu.memory_space<vmem>>, vector<3x892xf32>,
    %c0_64 = arith.constant 0 : index
    %c0_65 = arith.constant 0 : index
    %c128 = arith.constant 128 : index
    %60 = vector.load %arg1[%c0_64, %c0_65, %c128] : memref<1x3x1024xf32, #tpu.memory_space<vmem>>, vector<1x3x892xf32>
    %61 = vector.shape_cast %60 : vector<1x3x892xf32> to vector<3x892xf32>
    %c60 = arith.constant 60 : index
    %c0_66 = arith.constant 0 : index
    %62 = vector.load %arg15[%c60, %c0_66] : memref<75x892xf32, #tpu.memory_space<vmem>>, vector<3x892xf32>
    tpu.vector_store %arg15[%c60, %c0_66], %61 {strides = array<i32>} : memref<75x892xf32, #tpu.memory_space<vmem>>, vector<3x892xf32>,
    %c0_67 = arith.constant 0 : index
    %c0_68 = arith.constant 0 : index
    %c129 = arith.constant 129 : index
    %63 = vector.load %arg1[%c0_67, %c0_68, %c129] : memref<1x3x1024xf32, #tpu.memory_space<vmem>>, vector<1x3x892xf32>
    %64 = vector.shape_cast %63 : vector<1x3x892xf32> to vector<3x892xf32>
    %c63 = arith.constant 63 : index
    %c0_69 = arith.constant 0 : index
    %65 = vector.load %arg15[%c63, %c0_69] : memref<75x892xf32, #tpu.memory_space<vmem>>, vector<3x892xf32>
    tpu.vector_store %arg15[%c63, %c0_69], %64 {strides = array<i32>} : memref<75x892xf32, #tpu.memory_space<vmem>>, vector<3x892xf32>,
    %c0_70 = arith.constant 0 : index
    %c0_71 = arith.constant 0 : index
    %c130 = arith.constant 130 : index
    %66 = vector.load %arg1[%c0_70, %c0_71, %c130] : memref<1x3x1024xf32, #tpu.memory_space<vmem>>, vector<1x3x892xf32>
    %67 = vector.shape_cast %66 : vector<1x3x892xf32> to vector<3x892xf32>
    %c66_72 = arith.constant 66 : index
    %c0_73 = arith.constant 0 : index
    %68 = vector.load %arg15[%c66_72, %c0_73] : memref<75x892xf32, #tpu.memory_space<vmem>>, vector<3x892xf32>
    tpu.vector_store %arg15[%c66_72, %c0_73], %67 {strides = array<i32>} : memref<75x892xf32, #tpu.memory_space<vmem>>, vector<3x892xf32>,
    %c0_74 = arith.constant 0 : index
    %c0_75 = arith.constant 0 : index
    %c131 = arith.constant 131 : index
    %69 = vector.load %arg1[%c0_74, %c0_75, %c131] : memref<1x3x1024xf32, #tpu.memory_space<vmem>>, vector<1x3x892xf32>
    %70 = vector.shape_cast %69 : vector<1x3x892xf32> to vector<3x892xf32>
    %c69 = arith.constant 69 : index
    %c0_76 = arith.constant 0 : index
    %71 = vector.load %arg15[%c69, %c0_76] : memref<75x892xf32, #tpu.memory_space<vmem>>, vector<3x892xf32>
    tpu.vector_store %arg15[%c69, %c0_76], %70 {strides = array<i32>} : memref<75x892xf32, #tpu.memory_space<vmem>>, vector<3x892xf32>,
    %c0_77 = arith.constant 0 : index
    %c0_78 = arith.constant 0 : index
    %c132 = arith.constant 132 : index
    %72 = vector.load %arg1[%c0_77, %c0_78, %c132] : memref<1x3x1024xf32, #tpu.memory_space<vmem>>, vector<1x3x892xf32>
    %73 = vector.shape_cast %72 : vector<1x3x892xf32> to vector<3x892xf32>
    %c72 = arith.constant 72 : index
    %c0_79 = arith.constant 0 : index
    %74 = vector.load %arg15[%c72, %c0_79] : memref<75x892xf32, #tpu.memory_space<vmem>>, vector<3x892xf32>
    tpu.vector_store %arg15[%c72, %c0_79], %73 {strides = array<i32>} : memref<75x892xf32, #tpu.memory_space<vmem>>, vector<3x892xf32>,
    %c0_80 = arith.constant 0 : index
    %c0_81 = arith.constant 0 : index
    %75 = vector.load %arg2[%c0_80, %c0_81] : memref<6x75xf32, #tpu.memory_space<vmem>>, vector<6x75xf32>
    %c0_82 = arith.constant 0 : index
    %c0_83 = arith.constant 0 : index
    %76 = vector.load %arg15[%c0_82, %c0_83] : memref<75x892xf32, #tpu.memory_space<vmem>>, vector<75x892xf32>
    %cst = arith.constant dense<0.000000e+00> : vector<6x892xf32>
    %77 = tpu.matmul %75, %76, %cst {dimension_numbers = #tpu.dot_dimension_numbers<[1], [0], [0], [1], [0, 0, 1, 1], [], []>} : vector<6x75xf32>, vector<75x892xf32>, vector<6x892xf32> -> vector<6x892xf32>
    %c0_84 = arith.constant 0 : index
    %c0_85 = arith.constant 0 : index
    %78 = vector.load %arg3[%c0_84, %c0_85] : memref<6x1xf32, #tpu.memory_space<vmem>>, vector<6x1xf32>
    %79 = vector.broadcast %78 : vector<6x1xf32> to vector<6x892xf32>
    %80 = arith.addf %77, %79 : vector<6x892xf32>
    %cst_86 = arith.constant 0.000000e+00 : f32
    %81 = vector.broadcast %cst_86 : f32 to vector<6x892xf32>
    %82 = arith.maximumf %80, %81 : vector<6x892xf32>
    %c0_87 = arith.constant 0 : index
    %c0_88 = arith.constant 0 : index
    %83 = vector.load %arg16[%c0_87, %c0_88] : memref<6x892xf32, #tpu.memory_space<vmem>>, vector<6x892xf32>
    tpu.vector_store %arg16[%c0_87, %c0_88], %82 {strides = array<i32>} : memref<6x892xf32, #tpu.memory_space<vmem>>, vector<6x892xf32>,
    %c0_89 = arith.constant 0 : index
    %c0_90 = arith.constant 0 : index
    %84 = vector.load %arg4[%c0_89, %c0_90] : memref<27x14xf32, #tpu.memory_space<vmem>>, vector<27x14xf32>
    %c0_91 = arith.constant 0 : index
    %c0_92 = arith.constant 0 : index
    %85 = vector.load %arg16[%c0_91, %c0_92] : memref<6x892xf32, #tpu.memory_space<vmem>>, vector<6x27xf32>
    %c0_93 = arith.constant 0 : index
    %c1_94 = arith.constant 1 : index
    %86 = vector.load %arg16[%c0_93, %c1_94] : memref<6x892xf32, #tpu.memory_space<vmem>>, vector<6x27xf32>
    %87 = arith.maximumf %85, %86 : vector<6x27xf32>
    %c0_95 = arith.constant 0 : index
    %c32_96 = arith.constant 32 : index
    %88 = vector.load %arg16[%c0_95, %c32_96] : memref<6x892xf32, #tpu.memory_space<vmem>>, vector<6x27xf32>
    %89 = arith.maximumf %87, %88 : vector<6x27xf32>
    %c0_97 = arith.constant 0 : index
    %c33_98 = arith.constant 33 : index
    %90 = vector.load %arg16[%c0_97, %c33_98] : memref<6x892xf32, #tpu.memory_space<vmem>>, vector<6x27xf32>
    %91 = arith.maximumf %89, %90 : vector<6x27xf32>
    %cst_99 = arith.constant dense<0.000000e+00> : vector<6x14xf32>
    %92 = tpu.matmul %91, %84, %cst_99 {dimension_numbers = #tpu.dot_dimension_numbers<[1], [0], [0], [1], [0, 0, 1, 1], [], []>} : vector<6x27xf32>, vector<27x14xf32>, vector<6x14xf32> -> vector<6x14xf32>
    %c0_100 = arith.constant 0 : index
    %c0_101 = arith.constant 0 : index
    %93 = vector.load %arg17[%c0_100, %c0_101] : memref<6x196xf32, #tpu.memory_space<vmem>>, vector<6x14xf32>
    tpu.vector_store %arg17[%c0_100, %c0_101], %92 {strides = array<i32>} : memref<6x196xf32, #tpu.memory_space<vmem>>, vector<6x14xf32>,
    %c0_102 = arith.constant 0 : index
    %c64_103 = arith.constant 64 : index
    %94 = vector.load %arg16[%c0_102, %c64_103] : memref<6x892xf32, #tpu.memory_space<vmem>>, vector<6x27xf32>
    %c0_104 = arith.constant 0 : index
    %c65_105 = arith.constant 65 : index
    %95 = vector.load %arg16[%c0_104, %c65_105] : memref<6x892xf32, #tpu.memory_space<vmem>>, vector<6x27xf32>
    %96 = arith.maximumf %94, %95 : vector<6x27xf32>
    %c0_106 = arith.constant 0 : index
    %c96_107 = arith.constant 96 : index
    %97 = vector.load %arg16[%c0_106, %c96_107] : memref<6x892xf32, #tpu.memory_space<vmem>>, vector<6x27xf32>
    %98 = arith.maximumf %96, %97 : vector<6x27xf32>
    %c0_108 = arith.constant 0 : index
    %c97_109 = arith.constant 97 : index
    %99 = vector.load %arg16[%c0_108, %c97_109] : memref<6x892xf32, #tpu.memory_space<vmem>>, vector<6x27xf32>
    %100 = arith.maximumf %98, %99 : vector<6x27xf32>
    %cst_110 = arith.constant dense<0.000000e+00> : vector<6x14xf32>
    %101 = tpu.matmul %100, %84, %cst_110 {dimension_numbers = #tpu.dot_dimension_numbers<[1], [0], [0], [1], [0, 0, 1, 1], [], []>} : vector<6x27xf32>, vector<27x14xf32>, vector<6x14xf32> -> vector<6x14xf32>
    %c0_111 = arith.constant 0 : index
    %c14 = arith.constant 14 : index
    %102 = vector.load %arg17[%c0_111, %c14] : memref<6x196xf32, #tpu.memory_space<vmem>>, vector<6x14xf32>
    tpu.vector_store %arg17[%c0_111, %c14], %101 {strides = array<i32>} : memref<6x196xf32, #tpu.memory_space<vmem>>, vector<6x14xf32>,
    %c0_112 = arith.constant 0 : index
    %c128_113 = arith.constant 128 : index
    %103 = vector.load %arg16[%c0_112, %c128_113] : memref<6x892xf32, #tpu.memory_space<vmem>>, vector<6x27xf32>
    %c0_114 = arith.constant 0 : index
    %c129_115 = arith.constant 129 : index
    %104 = vector.load %arg16[%c0_114, %c129_115] : memref<6x892xf32, #tpu.memory_space<vmem>>, vector<6x27xf32>
    %105 = arith.maximumf %103, %104 : vector<6x27xf32>
    %c0_116 = arith.constant 0 : index
    %c160 = arith.constant 160 : index
    %106 = vector.load %arg16[%c0_116, %c160] : memref<6x892xf32, #tpu.memory_space<vmem>>, vector<6x27xf32>
    %107 = arith.maximumf %105, %106 : vector<6x27xf32>
    %c0_117 = arith.constant 0 : index
    %c161 = arith.constant 161 : index
    %108 = vector.load %arg16[%c0_117, %c161] : memref<6x892xf32, #tpu.memory_space<vmem>>, vector<6x27xf32>
    %109 = arith.maximumf %107, %108 : vector<6x27xf32>
    %cst_118 = arith.constant dense<0.000000e+00> : vector<6x14xf32>
    %110 = tpu.matmul %109, %84, %cst_118 {dimension_numbers = #tpu.dot_dimension_numbers<[1], [0], [0], [1], [0, 0, 1, 1], [], []>} : vector<6x27xf32>, vector<27x14xf32>, vector<6x14xf32> -> vector<6x14xf32>
    %c0_119 = arith.constant 0 : index
    %c28 = arith.constant 28 : index
    %111 = vector.load %arg17[%c0_119, %c28] : memref<6x196xf32, #tpu.memory_space<vmem>>, vector<6x14xf32>
    tpu.vector_store %arg17[%c0_119, %c28], %110 {strides = array<i32>} : memref<6x196xf32, #tpu.memory_space<vmem>>, vector<6x14xf32>,
    %c0_120 = arith.constant 0 : index
    %c192 = arith.constant 192 : index
    %112 = vector.load %arg16[%c0_120, %c192] : memref<6x892xf32, #tpu.memory_space<vmem>>, vector<6x27xf32>
    %c0_121 = arith.constant 0 : index
    %c193 = arith.constant 193 : index
    %113 = vector.load %arg16[%c0_121, %c193] : memref<6x892xf32, #tpu.memory_space<vmem>>, vector<6x27xf32>
    %114 = arith.maximumf %112, %113 : vector<6x27xf32>
    %c0_122 = arith.constant 0 : index
    %c224 = arith.constant 224 : index
    %115 = vector.load %arg16[%c0_122, %c224] : memref<6x892xf32, #tpu.memory_space<vmem>>, vector<6x27xf32>
    %116 = arith.maximumf %114, %115 : vector<6x27xf32>
    %c0_123 = arith.constant 0 : index
    %c225 = arith.constant 225 : index
    %117 = vector.load %arg16[%c0_123, %c225] : memref<6x892xf32, #tpu.memory_space<vmem>>, vector<6x27xf32>
    %118 = arith.maximumf %116, %117 : vector<6x27xf32>
    %cst_124 = arith.constant dense<0.000000e+00> : vector<6x14xf32>
    %119 = tpu.matmul %118, %84, %cst_124 {dimension_numbers = #tpu.dot_dimension_numbers<[1], [0], [0], [1], [0, 0, 1, 1], [], []>} : vector<6x27xf32>, vector<27x14xf32>, vector<6x14xf32> -> vector<6x14xf32>
    %c0_125 = arith.constant 0 : index
    %c42_126 = arith.constant 42 : index
    %120 = vector.load %arg17[%c0_125, %c42_126] : memref<6x196xf32, #tpu.memory_space<vmem>>, vector<6x14xf32>
    tpu.vector_store %arg17[%c0_125, %c42_126], %119 {strides = array<i32>} : memref<6x196xf32, #tpu.memory_space<vmem>>, vector<6x14xf32>,
    %c0_127 = arith.constant 0 : index
    %c256 = arith.constant 256 : index
    %121 = vector.load %arg16[%c0_127, %c256] : memref<6x892xf32, #tpu.memory_space<vmem>>, vector<6x27xf32>
    %c0_128 = arith.constant 0 : index
    %c257 = arith.constant 257 : index
    %122 = vector.load %arg16[%c0_128, %c257] : memref<6x892xf32, #tpu.memory_space<vmem>>, vector<6x27xf32>
    %123 = arith.maximumf %121, %122 : vector<6x27xf32>
    %c0_129 = arith.constant 0 : index
    %c288 = arith.constant 288 : index
    %124 = vector.load %arg16[%c0_129, %c288] : memref<6x892xf32, #tpu.memory_space<vmem>>, vector<6x27xf32>
    %125 = arith.maximumf %123, %124 : vector<6x27xf32>
    %c0_130 = arith.constant 0 : index
    %c289 = arith.constant 289 : index
    %126 = vector.load %arg16[%c0_130, %c289] : memref<6x892xf32, #tpu.memory_space<vmem>>, vector<6x27xf32>
    %127 = arith.maximumf %125, %126 : vector<6x27xf32>
    %cst_131 = arith.constant dense<0.000000e+00> : vector<6x14xf32>
    %128 = tpu.matmul %127, %84, %cst_131 {dimension_numbers = #tpu.dot_dimension_numbers<[1], [0], [0], [1], [0, 0, 1, 1], [], []>} : vector<6x27xf32>, vector<27x14xf32>, vector<6x14xf32> -> vector<6x14xf32>
    %c0_132 = arith.constant 0 : index
    %c56 = arith.constant 56 : index
    %129 = vector.load %arg17[%c0_132, %c56] : memref<6x196xf32, #tpu.memory_space<vmem>>, vector<6x14xf32>
    tpu.vector_store %arg17[%c0_132, %c56], %128 {strides = array<i32>} : memref<6x196xf32, #tpu.memory_space<vmem>>, vector<6x14xf32>,
    %c0_133 = arith.constant 0 : index
    %c320 = arith.constant 320 : index
    %130 = vector.load %arg16[%c0_133, %c320] : memref<6x892xf32, #tpu.memory_space<vmem>>, vector<6x27xf32>
    %c0_134 = arith.constant 0 : index
    %c321 = arith.constant 321 : index
    %131 = vector.load %arg16[%c0_134, %c321] : memref<6x892xf32, #tpu.memory_space<vmem>>, vector<6x27xf32>
    %132 = arith.maximumf %130, %131 : vector<6x27xf32>
    %c0_135 = arith.constant 0 : index
    %c352 = arith.constant 352 : index
    %133 = vector.load %arg16[%c0_135, %c352] : memref<6x892xf32, #tpu.memory_space<vmem>>, vector<6x27xf32>
    %134 = arith.maximumf %132, %133 : vector<6x27xf32>
    %c0_136 = arith.constant 0 : index
    %c353 = arith.constant 353 : index
    %135 = vector.load %arg16[%c0_136, %c353] : memref<6x892xf32, #tpu.memory_space<vmem>>, vector<6x27xf32>
    %136 = arith.maximumf %134, %135 : vector<6x27xf32>
    %cst_137 = arith.constant dense<0.000000e+00> : vector<6x14xf32>
    %137 = tpu.matmul %136, %84, %cst_137 {dimension_numbers = #tpu.dot_dimension_numbers<[1], [0], [0], [1], [0, 0, 1, 1], [], []>} : vector<6x27xf32>, vector<27x14xf32>, vector<6x14xf32> -> vector<6x14xf32>
    %c0_138 = arith.constant 0 : index
    %c70 = arith.constant 70 : index
    %138 = vector.load %arg17[%c0_138, %c70] : memref<6x196xf32, #tpu.memory_space<vmem>>, vector<6x14xf32>
    tpu.vector_store %arg17[%c0_138, %c70], %137 {strides = array<i32>} : memref<6x196xf32, #tpu.memory_space<vmem>>, vector<6x14xf32>,
    %c0_139 = arith.constant 0 : index
    %c384 = arith.constant 384 : index
    %139 = vector.load %arg16[%c0_139, %c384] : memref<6x892xf32, #tpu.memory_space<vmem>>, vector<6x27xf32>
    %c0_140 = arith.constant 0 : index
    %c385 = arith.constant 385 : index
    %140 = vector.load %arg16[%c0_140, %c385] : memref<6x892xf32, #tpu.memory_space<vmem>>, vector<6x27xf32>
    %141 = arith.maximumf %139, %140 : vector<6x27xf32>
    %c0_141 = arith.constant 0 : index
    %c416 = arith.constant 416 : index
    %142 = vector.load %arg16[%c0_141, %c416] : memref<6x892xf32, #tpu.memory_space<vmem>>, vector<6x27xf32>
    %143 = arith.maximumf %141, %142 : vector<6x27xf32>
    %c0_142 = arith.constant 0 : index
    %c417 = arith.constant 417 : index
    %144 = vector.load %arg16[%c0_142, %c417] : memref<6x892xf32, #tpu.memory_space<vmem>>, vector<6x27xf32>
    %145 = arith.maximumf %143, %144 : vector<6x27xf32>
    %cst_143 = arith.constant dense<0.000000e+00> : vector<6x14xf32>
    %146 = tpu.matmul %145, %84, %cst_143 {dimension_numbers = #tpu.dot_dimension_numbers<[1], [0], [0], [1], [0, 0, 1, 1], [], []>} : vector<6x27xf32>, vector<27x14xf32>, vector<6x14xf32> -> vector<6x14xf32>
    %c0_144 = arith.constant 0 : index
    %c84 = arith.constant 84 : index
    %147 = vector.load %arg17[%c0_144, %c84] : memref<6x196xf32, #tpu.memory_space<vmem>>, vector<6x14xf32>
    tpu.vector_store %arg17[%c0_144, %c84], %146 {strides = array<i32>} : memref<6x196xf32, #tpu.memory_space<vmem>>, vector<6x14xf32>,
    %c0_145 = arith.constant 0 : index
    %c448 = arith.constant 448 : index
    %148 = vector.load %arg16[%c0_145, %c448] : memref<6x892xf32, #tpu.memory_space<vmem>>, vector<6x27xf32>
    %c0_146 = arith.constant 0 : index
    %c449 = arith.constant 449 : index
    %149 = vector.load %arg16[%c0_146, %c449] : memref<6x892xf32, #tpu.memory_space<vmem>>, vector<6x27xf32>
    %150 = arith.maximumf %148, %149 : vector<6x27xf32>
    %c0_147 = arith.constant 0 : index
    %c480 = arith.constant 480 : index
    %151 = vector.load %arg16[%c0_147, %c480] : memref<6x892xf32, #tpu.memory_space<vmem>>, vector<6x27xf32>
    %152 = arith.maximumf %150, %151 : vector<6x27xf32>
    %c0_148 = arith.constant 0 : index
    %c481 = arith.constant 481 : index
    %153 = vector.load %arg16[%c0_148, %c481] : memref<6x892xf32, #tpu.memory_space<vmem>>, vector<6x27xf32>
    %154 = arith.maximumf %152, %153 : vector<6x27xf32>
    %cst_149 = arith.constant dense<0.000000e+00> : vector<6x14xf32>
    %155 = tpu.matmul %154, %84, %cst_149 {dimension_numbers = #tpu.dot_dimension_numbers<[1], [0], [0], [1], [0, 0, 1, 1], [], []>} : vector<6x27xf32>, vector<27x14xf32>, vector<6x14xf32> -> vector<6x14xf32>
    %c0_150 = arith.constant 0 : index
    %c98_151 = arith.constant 98 : index
    %156 = vector.load %arg17[%c0_150, %c98_151] : memref<6x196xf32, #tpu.memory_space<vmem>>, vector<6x14xf32>
    tpu.vector_store %arg17[%c0_150, %c98_151], %155 {strides = array<i32>} : memref<6x196xf32, #tpu.memory_space<vmem>>, vector<6x14xf32>,
    %c0_152 = arith.constant 0 : index
    %c512 = arith.constant 512 : index
    %157 = vector.load %arg16[%c0_152, %c512] : memref<6x892xf32, #tpu.memory_space<vmem>>, vector<6x27xf32>
    %c0_153 = arith.constant 0 : index
    %c513 = arith.constant 513 : index
    %158 = vector.load %arg16[%c0_153, %c513] : memref<6x892xf32, #tpu.memory_space<vmem>>, vector<6x27xf32>
    %159 = arith.maximumf %157, %158 : vector<6x27xf32>
    %c0_154 = arith.constant 0 : index
    %c544 = arith.constant 544 : index
    %160 = vector.load %arg16[%c0_154, %c544] : memref<6x892xf32, #tpu.memory_space<vmem>>, vector<6x27xf32>
    %161 = arith.maximumf %159, %160 : vector<6x27xf32>
    %c0_155 = arith.constant 0 : index
    %c545 = arith.constant 545 : index
    %162 = vector.load %arg16[%c0_155, %c545] : memref<6x892xf32, #tpu.memory_space<vmem>>, vector<6x27xf32>
    %163 = arith.maximumf %161, %162 : vector<6x27xf32>
    %cst_156 = arith.constant dense<0.000000e+00> : vector<6x14xf32>
    %164 = tpu.matmul %163, %84, %cst_156 {dimension_numbers = #tpu.dot_dimension_numbers<[1], [0], [0], [1], [0, 0, 1, 1], [], []>} : vector<6x27xf32>, vector<27x14xf32>, vector<6x14xf32> -> vector<6x14xf32>
    %c0_157 = arith.constant 0 : index
    %c112 = arith.constant 112 : index
    %165 = vector.load %arg17[%c0_157, %c112] : memref<6x196xf32, #tpu.memory_space<vmem>>, vector<6x14xf32>
    tpu.vector_store %arg17[%c0_157, %c112], %164 {strides = array<i32>} : memref<6x196xf32, #tpu.memory_space<vmem>>, vector<6x14xf32>,
    %c0_158 = arith.constant 0 : index
    %c576 = arith.constant 576 : index
    %166 = vector.load %arg16[%c0_158, %c576] : memref<6x892xf32, #tpu.memory_space<vmem>>, vector<6x27xf32>
    %c0_159 = arith.constant 0 : index
    %c577 = arith.constant 577 : index
    %167 = vector.load %arg16[%c0_159, %c577] : memref<6x892xf32, #tpu.memory_space<vmem>>, vector<6x27xf32>
    %168 = arith.maximumf %166, %167 : vector<6x27xf32>
    %c0_160 = arith.constant 0 : index
    %c608 = arith.constant 608 : index
    %169 = vector.load %arg16[%c0_160, %c608] : memref<6x892xf32, #tpu.memory_space<vmem>>, vector<6x27xf32>
    %170 = arith.maximumf %168, %169 : vector<6x27xf32>
    %c0_161 = arith.constant 0 : index
    %c609 = arith.constant 609 : index
    %171 = vector.load %arg16[%c0_161, %c609] : memref<6x892xf32, #tpu.memory_space<vmem>>, vector<6x27xf32>
    %172 = arith.maximumf %170, %171 : vector<6x27xf32>
    %cst_162 = arith.constant dense<0.000000e+00> : vector<6x14xf32>
    %173 = tpu.matmul %172, %84, %cst_162 {dimension_numbers = #tpu.dot_dimension_numbers<[1], [0], [0], [1], [0, 0, 1, 1], [], []>} : vector<6x27xf32>, vector<27x14xf32>, vector<6x14xf32> -> vector<6x14xf32>
    %c0_163 = arith.constant 0 : index
    %c126 = arith.constant 126 : index
    %174 = vector.load %arg17[%c0_163, %c126] : memref<6x196xf32, #tpu.memory_space<vmem>>, vector<6x14xf32>
    tpu.vector_store %arg17[%c0_163, %c126], %173 {strides = array<i32>} : memref<6x196xf32, #tpu.memory_space<vmem>>, vector<6x14xf32>,
    %c0_164 = arith.constant 0 : index
    %c640 = arith.constant 640 : index
    %175 = vector.load %arg16[%c0_164, %c640] : memref<6x892xf32, #tpu.memory_space<vmem>>, vector<6x27xf32>
    %c0_165 = arith.constant 0 : index
    %c641 = arith.constant 641 : index
    %176 = vector.load %arg16[%c0_165, %c641] : memref<6x892xf32, #tpu.memory_space<vmem>>, vector<6x27xf32>
    %177 = arith.maximumf %175, %176 : vector<6x27xf32>
    %c0_166 = arith.constant 0 : index
    %c672 = arith.constant 672 : index
    %178 = vector.load %arg16[%c0_166, %c672] : memref<6x892xf32, #tpu.memory_space<vmem>>, vector<6x27xf32>
    %179 = arith.maximumf %177, %178 : vector<6x27xf32>
    %c0_167 = arith.constant 0 : index
    %c673 = arith.constant 673 : index
    %180 = vector.load %arg16[%c0_167, %c673] : memref<6x892xf32, #tpu.memory_space<vmem>>, vector<6x27xf32>
    %181 = arith.maximumf %179, %180 : vector<6x27xf32>
    %cst_168 = arith.constant dense<0.000000e+00> : vector<6x14xf32>
    %182 = tpu.matmul %181, %84, %cst_168 {dimension_numbers = #tpu.dot_dimension_numbers<[1], [0], [0], [1], [0, 0, 1, 1], [], []>} : vector<6x27xf32>, vector<27x14xf32>, vector<6x14xf32> -> vector<6x14xf32>
    %c0_169 = arith.constant 0 : index
    %c140 = arith.constant 140 : index
    %183 = vector.load %arg17[%c0_169, %c140] : memref<6x196xf32, #tpu.memory_space<vmem>>, vector<6x14xf32>
    tpu.vector_store %arg17[%c0_169, %c140], %182 {strides = array<i32>} : memref<6x196xf32, #tpu.memory_space<vmem>>, vector<6x14xf32>,
    %c0_170 = arith.constant 0 : index
    %c704 = arith.constant 704 : index
    %184 = vector.load %arg16[%c0_170, %c704] : memref<6x892xf32, #tpu.memory_space<vmem>>, vector<6x27xf32>
    %c0_171 = arith.constant 0 : index
    %c705 = arith.constant 705 : index
    %185 = vector.load %arg16[%c0_171, %c705] : memref<6x892xf32, #tpu.memory_space<vmem>>, vector<6x27xf32>
    %186 = arith.maximumf %184, %185 : vector<6x27xf32>
    %c0_172 = arith.constant 0 : index
    %c736 = arith.constant 736 : index
    %187 = vector.load %arg16[%c0_172, %c736] : memref<6x892xf32, #tpu.memory_space<vmem>>, vector<6x27xf32>
    %188 = arith.maximumf %186, %187 : vector<6x27xf32>
    %c0_173 = arith.constant 0 : index
    %c737 = arith.constant 737 : index
    %189 = vector.load %arg16[%c0_173, %c737] : memref<6x892xf32, #tpu.memory_space<vmem>>, vector<6x27xf32>
    %190 = arith.maximumf %188, %189 : vector<6x27xf32>
    %cst_174 = arith.constant dense<0.000000e+00> : vector<6x14xf32>
    %191 = tpu.matmul %190, %84, %cst_174 {dimension_numbers = #tpu.dot_dimension_numbers<[1], [0], [0], [1], [0, 0, 1, 1], [], []>} : vector<6x27xf32>, vector<27x14xf32>, vector<6x14xf32> -> vector<6x14xf32>
    %c0_175 = arith.constant 0 : index
    %c154 = arith.constant 154 : index
    %192 = vector.load %arg17[%c0_175, %c154] : memref<6x196xf32, #tpu.memory_space<vmem>>, vector<6x14xf32>
    tpu.vector_store %arg17[%c0_175, %c154], %191 {strides = array<i32>} : memref<6x196xf32, #tpu.memory_space<vmem>>, vector<6x14xf32>,
    %c0_176 = arith.constant 0 : index
    %c768 = arith.constant 768 : index
    %193 = vector.load %arg16[%c0_176, %c768] : memref<6x892xf32, #tpu.memory_space<vmem>>, vector<6x27xf32>
    %c0_177 = arith.constant 0 : index
    %c769 = arith.constant 769 : index
    %194 = vector.load %arg16[%c0_177, %c769] : memref<6x892xf32, #tpu.memory_space<vmem>>, vector<6x27xf32>
    %195 = arith.maximumf %193, %194 : vector<6x27xf32>
    %c0_178 = arith.constant 0 : index
    %c800 = arith.constant 800 : index
    %196 = vector.load %arg16[%c0_178, %c800] : memref<6x892xf32, #tpu.memory_space<vmem>>, vector<6x27xf32>
    %197 = arith.maximumf %195, %196 : vector<6x27xf32>
    %c0_179 = arith.constant 0 : index
    %c801 = arith.constant 801 : index
    %198 = vector.load %arg16[%c0_179, %c801] : memref<6x892xf32, #tpu.memory_space<vmem>>, vector<6x27xf32>
    %199 = arith.maximumf %197, %198 : vector<6x27xf32>
    %cst_180 = arith.constant dense<0.000000e+00> : vector<6x14xf32>
    %200 = tpu.matmul %199, %84, %cst_180 {dimension_numbers = #tpu.dot_dimension_numbers<[1], [0], [0], [1], [0, 0, 1, 1], [], []>} : vector<6x27xf32>, vector<27x14xf32>, vector<6x14xf32> -> vector<6x14xf32>
    %c0_181 = arith.constant 0 : index
    %c168 = arith.constant 168 : index
    %201 = vector.load %arg17[%c0_181, %c168] : memref<6x196xf32, #tpu.memory_space<vmem>>, vector<6x14xf32>
    tpu.vector_store %arg17[%c0_181, %c168], %200 {strides = array<i32>} : memref<6x196xf32, #tpu.memory_space<vmem>>, vector<6x14xf32>,
    %c0_182 = arith.constant 0 : index
    %c832 = arith.constant 832 : index
    %202 = vector.load %arg16[%c0_182, %c832] : memref<6x892xf32, #tpu.memory_space<vmem>>, vector<6x27xf32>
    %c0_183 = arith.constant 0 : index
    %c833 = arith.constant 833 : index
    %203 = vector.load %arg16[%c0_183, %c833] : memref<6x892xf32, #tpu.memory_space<vmem>>, vector<6x27xf32>
    %204 = arith.maximumf %202, %203 : vector<6x27xf32>
    %c0_184 = arith.constant 0 : index
    %c864 = arith.constant 864 : index
    %205 = vector.load %arg16[%c0_184, %c864] : memref<6x892xf32, #tpu.memory_space<vmem>>, vector<6x27xf32>
    %206 = arith.maximumf %204, %205 : vector<6x27xf32>
    %c0_185 = arith.constant 0 : index
    %c865 = arith.constant 865 : index
    %207 = vector.load %arg16[%c0_185, %c865] : memref<6x892xf32, #tpu.memory_space<vmem>>, vector<6x27xf32>
    %208 = arith.maximumf %206, %207 : vector<6x27xf32>
    %cst_186 = arith.constant dense<0.000000e+00> : vector<6x14xf32>
    %209 = tpu.matmul %208, %84, %cst_186 {dimension_numbers = #tpu.dot_dimension_numbers<[1], [0], [0], [1], [0, 0, 1, 1], [], []>} : vector<6x27xf32>, vector<27x14xf32>, vector<6x14xf32> -> vector<6x14xf32>
    %c0_187 = arith.constant 0 : index
    %c182 = arith.constant 182 : index
    %210 = vector.load %arg17[%c0_187, %c182] : memref<6x196xf32, #tpu.memory_space<vmem>>, vector<6x14xf32>
    tpu.vector_store %arg17[%c0_187, %c182], %209 {strides = array<i32>} : memref<6x196xf32, #tpu.memory_space<vmem>>, vector<6x14xf32>,
    %c0_188 = arith.constant 0 : index
    %c0_189 = arith.constant 0 : index
    %211 = vector.load %arg17[%c0_188, %c0_189] : memref<6x196xf32, #tpu.memory_space<vmem>>, vector<6x136xf32>
    %c0_190 = arith.constant 0 : index
    %c0_191 = arith.constant 0 : index
    %212 = vector.load %arg18[%c0_190, %c0_191] : memref<150x136xf32, #tpu.memory_space<vmem>>, vector<6x136xf32>
    tpu.vector_store %arg18[%c0_190, %c0_191], %211 {strides = array<i32>} : memref<150x136xf32, #tpu.memory_space<vmem>>, vector<6x136xf32>,
    %c0_192 = arith.constant 0 : index
    %c1_193 = arith.constant 1 : index
    %213 = vector.load %arg17[%c0_192, %c1_193] : memref<6x196xf32, #tpu.memory_space<vmem>>, vector<6x136xf32>
    %c6_194 = arith.constant 6 : index
    %c0_195 = arith.constant 0 : index
    %214 = vector.load %arg18[%c6_194, %c0_195] : memref<150x136xf32, #tpu.memory_space<vmem>>, vector<6x136xf32>
    tpu.vector_store %arg18[%c6_194, %c0_195], %213 {strides = array<i32>} : memref<150x136xf32, #tpu.memory_space<vmem>>, vector<6x136xf32>,
    %c0_196 = arith.constant 0 : index
    %c2_197 = arith.constant 2 : index
    %215 = vector.load %arg17[%c0_196, %c2_197] : memref<6x196xf32, #tpu.memory_space<vmem>>, vector<6x136xf32>
    %c12_198 = arith.constant 12 : index
    %c0_199 = arith.constant 0 : index
    %216 = vector.load %arg18[%c12_198, %c0_199] : memref<150x136xf32, #tpu.memory_space<vmem>>, vector<6x136xf32>
    tpu.vector_store %arg18[%c12_198, %c0_199], %215 {strides = array<i32>} : memref<150x136xf32, #tpu.memory_space<vmem>>, vector<6x136xf32>,
    %c0_200 = arith.constant 0 : index
    %c3_201 = arith.constant 3 : index
    %217 = vector.load %arg17[%c0_200, %c3_201] : memref<6x196xf32, #tpu.memory_space<vmem>>, vector<6x136xf32>
    %c18_202 = arith.constant 18 : index
    %c0_203 = arith.constant 0 : index
    %218 = vector.load %arg18[%c18_202, %c0_203] : memref<150x136xf32, #tpu.memory_space<vmem>>, vector<6x136xf32>
    tpu.vector_store %arg18[%c18_202, %c0_203], %217 {strides = array<i32>} : memref<150x136xf32, #tpu.memory_space<vmem>>, vector<6x136xf32>,
    %c0_204 = arith.constant 0 : index
    %c4_205 = arith.constant 4 : index
    %219 = vector.load %arg17[%c0_204, %c4_205] : memref<6x196xf32, #tpu.memory_space<vmem>>, vector<6x136xf32>
    %c24_206 = arith.constant 24 : index
    %c0_207 = arith.constant 0 : index
    %220 = vector.load %arg18[%c24_206, %c0_207] : memref<150x136xf32, #tpu.memory_space<vmem>>, vector<6x136xf32>
    tpu.vector_store %arg18[%c24_206, %c0_207], %219 {strides = array<i32>} : memref<150x136xf32, #tpu.memory_space<vmem>>, vector<6x136xf32>,
    %c0_208 = arith.constant 0 : index
    %c14_209 = arith.constant 14 : index
    %221 = vector.load %arg17[%c0_208, %c14_209] : memref<6x196xf32, #tpu.memory_space<vmem>>, vector<6x136xf32>
    %c30_210 = arith.constant 30 : index
    %c0_211 = arith.constant 0 : index
    %222 = vector.load %arg18[%c30_210, %c0_211] : memref<150x136xf32, #tpu.memory_space<vmem>>, vector<6x136xf32>
    tpu.vector_store %arg18[%c30_210, %c0_211], %221 {strides = array<i32>} : memref<150x136xf32, #tpu.memory_space<vmem>>, vector<6x136xf32>,
    %c0_212 = arith.constant 0 : index
    %c15_213 = arith.constant 15 : index
    %223 = vector.load %arg17[%c0_212, %c15_213] : memref<6x196xf32, #tpu.memory_space<vmem>>, vector<6x136xf32>
    %c36_214 = arith.constant 36 : index
    %c0_215 = arith.constant 0 : index
    %224 = vector.load %arg18[%c36_214, %c0_215] : memref<150x136xf32, #tpu.memory_space<vmem>>, vector<6x136xf32>
    tpu.vector_store %arg18[%c36_214, %c0_215], %223 {strides = array<i32>} : memref<150x136xf32, #tpu.memory_space<vmem>>, vector<6x136xf32>,
    %c0_216 = arith.constant 0 : index
    %c16 = arith.constant 16 : index
    %225 = vector.load %arg17[%c0_216, %c16] : memref<6x196xf32, #tpu.memory_space<vmem>>, vector<6x136xf32>
    %c42_217 = arith.constant 42 : index
    %c0_218 = arith.constant 0 : index
    %226 = vector.load %arg18[%c42_217, %c0_218] : memref<150x136xf32, #tpu.memory_space<vmem>>, vector<6x136xf32>
    tpu.vector_store %arg18[%c42_217, %c0_218], %225 {strides = array<i32>} : memref<150x136xf32, #tpu.memory_space<vmem>>, vector<6x136xf32>,
    %c0_219 = arith.constant 0 : index
    %c17 = arith.constant 17 : index
    %227 = vector.load %arg17[%c0_219, %c17] : memref<6x196xf32, #tpu.memory_space<vmem>>, vector<6x136xf32>
    %c48_220 = arith.constant 48 : index
    %c0_221 = arith.constant 0 : index
    %228 = vector.load %arg18[%c48_220, %c0_221] : memref<150x136xf32, #tpu.memory_space<vmem>>, vector<6x136xf32>
    tpu.vector_store %arg18[%c48_220, %c0_221], %227 {strides = array<i32>} : memref<150x136xf32, #tpu.memory_space<vmem>>, vector<6x136xf32>,
    %c0_222 = arith.constant 0 : index
    %c18_223 = arith.constant 18 : index
    %229 = vector.load %arg17[%c0_222, %c18_223] : memref<6x196xf32, #tpu.memory_space<vmem>>, vector<6x136xf32>
    %c54_224 = arith.constant 54 : index
    %c0_225 = arith.constant 0 : index
    %230 = vector.load %arg18[%c54_224, %c0_225] : memref<150x136xf32, #tpu.memory_space<vmem>>, vector<6x136xf32>
    tpu.vector_store %arg18[%c54_224, %c0_225], %229 {strides = array<i32>} : memref<150x136xf32, #tpu.memory_space<vmem>>, vector<6x136xf32>,
    %c0_226 = arith.constant 0 : index
    %c28_227 = arith.constant 28 : index
    %231 = vector.load %arg17[%c0_226, %c28_227] : memref<6x196xf32, #tpu.memory_space<vmem>>, vector<6x136xf32>
    %c60_228 = arith.constant 60 : index
    %c0_229 = arith.constant 0 : index
    %232 = vector.load %arg18[%c60_228, %c0_229] : memref<150x136xf32, #tpu.memory_space<vmem>>, vector<6x136xf32>
    tpu.vector_store %arg18[%c60_228, %c0_229], %231 {strides = array<i32>} : memref<150x136xf32, #tpu.memory_space<vmem>>, vector<6x136xf32>,
    %c0_230 = arith.constant 0 : index
    %c29 = arith.constant 29 : index
    %233 = vector.load %arg17[%c0_230, %c29] : memref<6x196xf32, #tpu.memory_space<vmem>>, vector<6x136xf32>
    %c66_231 = arith.constant 66 : index
    %c0_232 = arith.constant 0 : index
    %234 = vector.load %arg18[%c66_231, %c0_232] : memref<150x136xf32, #tpu.memory_space<vmem>>, vector<6x136xf32>
    tpu.vector_store %arg18[%c66_231, %c0_232], %233 {strides = array<i32>} : memref<150x136xf32, #tpu.memory_space<vmem>>, vector<6x136xf32>,
    %c0_233 = arith.constant 0 : index
    %c30_234 = arith.constant 30 : index
    %235 = vector.load %arg17[%c0_233, %c30_234] : memref<6x196xf32, #tpu.memory_space<vmem>>, vector<6x136xf32>
    %c72_235 = arith.constant 72 : index
    %c0_236 = arith.constant 0 : index
    %236 = vector.load %arg18[%c72_235, %c0_236] : memref<150x136xf32, #tpu.memory_space<vmem>>, vector<6x136xf32>
    tpu.vector_store %arg18[%c72_235, %c0_236], %235 {strides = array<i32>} : memref<150x136xf32, #tpu.memory_space<vmem>>, vector<6x136xf32>,
    %c0_237 = arith.constant 0 : index
    %c31 = arith.constant 31 : index
    %237 = vector.load %arg17[%c0_237, %c31] : memref<6x196xf32, #tpu.memory_space<vmem>>, vector<6x136xf32>
    %c78 = arith.constant 78 : index
    %c0_238 = arith.constant 0 : index
    %238 = vector.load %arg18[%c78, %c0_238] : memref<150x136xf32, #tpu.memory_space<vmem>>, vector<6x136xf32>
    tpu.vector_store %arg18[%c78, %c0_238], %237 {strides = array<i32>} : memref<150x136xf32, #tpu.memory_space<vmem>>, vector<6x136xf32>,
    %c0_239 = arith.constant 0 : index
    %c32_240 = arith.constant 32 : index
    %239 = vector.load %arg17[%c0_239, %c32_240] : memref<6x196xf32, #tpu.memory_space<vmem>>, vector<6x136xf32>
    %c84_241 = arith.constant 84 : index
    %c0_242 = arith.constant 0 : index
    %240 = vector.load %arg18[%c84_241, %c0_242] : memref<150x136xf32, #tpu.memory_space<vmem>>, vector<6x136xf32>
    tpu.vector_store %arg18[%c84_241, %c0_242], %239 {strides = array<i32>} : memref<150x136xf32, #tpu.memory_space<vmem>>, vector<6x136xf32>,
    %c0_243 = arith.constant 0 : index
    %c42_244 = arith.constant 42 : index
    %241 = vector.load %arg17[%c0_243, %c42_244] : memref<6x196xf32, #tpu.memory_space<vmem>>, vector<6x136xf32>
    %c90 = arith.constant 90 : index
    %c0_245 = arith.constant 0 : index
    %242 = vector.load %arg18[%c90, %c0_245] : memref<150x136xf32, #tpu.memory_space<vmem>>, vector<6x136xf32>
    tpu.vector_store %arg18[%c90, %c0_245], %241 {strides = array<i32>} : memref<150x136xf32, #tpu.memory_space<vmem>>, vector<6x136xf32>,
    %c0_246 = arith.constant 0 : index
    %c43 = arith.constant 43 : index
    %243 = vector.load %arg17[%c0_246, %c43] : memref<6x196xf32, #tpu.memory_space<vmem>>, vector<6x136xf32>
    %c96_247 = arith.constant 96 : index
    %c0_248 = arith.constant 0 : index
    %244 = vector.load %arg18[%c96_247, %c0_248] : memref<150x136xf32, #tpu.memory_space<vmem>>, vector<6x136xf32>
    tpu.vector_store %arg18[%c96_247, %c0_248], %243 {strides = array<i32>} : memref<150x136xf32, #tpu.memory_space<vmem>>, vector<6x136xf32>,
    %c0_249 = arith.constant 0 : index
    %c44 = arith.constant 44 : index
    %245 = vector.load %arg17[%c0_249, %c44] : memref<6x196xf32, #tpu.memory_space<vmem>>, vector<6x136xf32>
    %c102 = arith.constant 102 : index
    %c0_250 = arith.constant 0 : index
    %246 = vector.load %arg18[%c102, %c0_250] : memref<150x136xf32, #tpu.memory_space<vmem>>, vector<6x136xf32>
    tpu.vector_store %arg18[%c102, %c0_250], %245 {strides = array<i32>} : memref<150x136xf32, #tpu.memory_space<vmem>>, vector<6x136xf32>,
    %c0_251 = arith.constant 0 : index
    %c45_252 = arith.constant 45 : index
    %247 = vector.load %arg17[%c0_251, %c45_252] : memref<6x196xf32, #tpu.memory_space<vmem>>, vector<6x136xf32>
    %c108 = arith.constant 108 : index
    %c0_253 = arith.constant 0 : index
    %248 = vector.load %arg18[%c108, %c0_253] : memref<150x136xf32, #tpu.memory_space<vmem>>, vector<6x136xf32>
    tpu.vector_store %arg18[%c108, %c0_253], %247 {strides = array<i32>} : memref<150x136xf32, #tpu.memory_space<vmem>>, vector<6x136xf32>,
    %c0_254 = arith.constant 0 : index
    %c46 = arith.constant 46 : index
    %249 = vector.load %arg17[%c0_254, %c46] : memref<6x196xf32, #tpu.memory_space<vmem>>, vector<6x136xf32>
    %c114 = arith.constant 114 : index
    %c0_255 = arith.constant 0 : index
    %250 = vector.load %arg18[%c114, %c0_255] : memref<150x136xf32, #tpu.memory_space<vmem>>, vector<6x136xf32>
    tpu.vector_store %arg18[%c114, %c0_255], %249 {strides = array<i32>} : memref<150x136xf32, #tpu.memory_space<vmem>>, vector<6x136xf32>,
    %c0_256 = arith.constant 0 : index
    %c56_257 = arith.constant 56 : index
    %251 = vector.load %arg17[%c0_256, %c56_257] : memref<6x196xf32, #tpu.memory_space<vmem>>, vector<6x136xf32>
    %c120 = arith.constant 120 : index
    %c0_258 = arith.constant 0 : index
    %252 = vector.load %arg18[%c120, %c0_258] : memref<150x136xf32, #tpu.memory_space<vmem>>, vector<6x136xf32>
    tpu.vector_store %arg18[%c120, %c0_258], %251 {strides = array<i32>} : memref<150x136xf32, #tpu.memory_space<vmem>>, vector<6x136xf32>,
    %c0_259 = arith.constant 0 : index
    %c57_260 = arith.constant 57 : index
    %253 = vector.load %arg17[%c0_259, %c57_260] : memref<6x196xf32, #tpu.memory_space<vmem>>, vector<6x136xf32>
    %c126_261 = arith.constant 126 : index
    %c0_262 = arith.constant 0 : index
    %254 = vector.load %arg18[%c126_261, %c0_262] : memref<150x136xf32, #tpu.memory_space<vmem>>, vector<6x136xf32>
    tpu.vector_store %arg18[%c126_261, %c0_262], %253 {strides = array<i32>} : memref<150x136xf32, #tpu.memory_space<vmem>>, vector<6x136xf32>,
    %c0_263 = arith.constant 0 : index
    %c58 = arith.constant 58 : index
    %255 = vector.load %arg17[%c0_263, %c58] : memref<6x196xf32, #tpu.memory_space<vmem>>, vector<6x136xf32>
    %c132_264 = arith.constant 132 : index
    %c0_265 = arith.constant 0 : index
    %256 = vector.load %arg18[%c132_264, %c0_265] : memref<150x136xf32, #tpu.memory_space<vmem>>, vector<6x136xf32>
    tpu.vector_store %arg18[%c132_264, %c0_265], %255 {strides = array<i32>} : memref<150x136xf32, #tpu.memory_space<vmem>>, vector<6x136xf32>,
    %c0_266 = arith.constant 0 : index
    %c59 = arith.constant 59 : index
    %257 = vector.load %arg17[%c0_266, %c59] : memref<6x196xf32, #tpu.memory_space<vmem>>, vector<6x136xf32>
    %c138 = arith.constant 138 : index
    %c0_267 = arith.constant 0 : index
    %258 = vector.load %arg18[%c138, %c0_267] : memref<150x136xf32, #tpu.memory_space<vmem>>, vector<6x136xf32>
    tpu.vector_store %arg18[%c138, %c0_267], %257 {strides = array<i32>} : memref<150x136xf32, #tpu.memory_space<vmem>>, vector<6x136xf32>,
    %c0_268 = arith.constant 0 : index
    %c60_269 = arith.constant 60 : index
    %259 = vector.load %arg17[%c0_268, %c60_269] : memref<6x196xf32, #tpu.memory_space<vmem>>, vector<6x136xf32>
    %c144 = arith.constant 144 : index
    %c0_270 = arith.constant 0 : index
    %260 = vector.load %arg18[%c144, %c0_270] : memref<150x136xf32, #tpu.memory_space<vmem>>, vector<6x136xf32>
    tpu.vector_store %arg18[%c144, %c0_270], %259 {strides = array<i32>} : memref<150x136xf32, #tpu.memory_space<vmem>>, vector<6x136xf32>,
    %c0_271 = arith.constant 0 : index
    %c0_272 = arith.constant 0 : index
    %261 = vector.load %arg5[%c0_271, %c0_272] : memref<16x150xf32, #tpu.memory_space<vmem>>, vector<16x150xf32>
    %c0_273 = arith.constant 0 : index
    %c0_274 = arith.constant 0 : index
    %262 = vector.load %arg18[%c0_273, %c0_274] : memref<150x136xf32, #tpu.memory_space<vmem>>, vector<150x136xf32>
    %cst_275 = arith.constant dense<0.000000e+00> : vector<16x136xf32>
    %263 = tpu.matmul %261, %262, %cst_275 {dimension_numbers = #tpu.dot_dimension_numbers<[1], [0], [0], [1], [0, 0, 1, 1], [], []>} : vector<16x150xf32>, vector<150x136xf32>, vector<16x136xf32> -> vector<16x136xf32>
    %c0_276 = arith.constant 0 : index
    %c0_277 = arith.constant 0 : index
    %264 = vector.load %arg6[%c0_276, %c0_277] : memref<16x1xf32, #tpu.memory_space<vmem>>, vector<16x1xf32>
    %265 = vector.broadcast %264 : vector<16x1xf32> to vector<16x136xf32>
    %266 = arith.addf %263, %265 : vector<16x136xf32>
    %cst_278 = arith.constant 0.000000e+00 : f32
    %267 = vector.broadcast %cst_278 : f32 to vector<16x136xf32>
    %268 = arith.maximumf %266, %267 : vector<16x136xf32>
    %c0_279 = arith.constant 0 : index
    %c0_280 = arith.constant 0 : index
    %269 = vector.load %arg19[%c0_279, %c0_280] : memref<16x136xf32, #tpu.memory_space<vmem>>, vector<16x136xf32>
    tpu.vector_store %arg19[%c0_279, %c0_280], %268 {strides = array<i32>} : memref<16x136xf32, #tpu.memory_space<vmem>>, vector<16x136xf32>,
    %c0_281 = arith.constant 0 : index
    %c0_282 = arith.constant 0 : index
    %270 = vector.load %arg7[%c0_281, %c0_282] : memref<9x5xf32, #tpu.memory_space<vmem>>, vector<9x5xf32>
    %c0_283 = arith.constant 0 : index
    %c0_284 = arith.constant 0 : index
    %271 = vector.load %arg19[%c0_283, %c0_284] : memref<16x136xf32, #tpu.memory_space<vmem>>, vector<16x9xf32>
    %c0_285 = arith.constant 0 : index
    %c1_286 = arith.constant 1 : index
    %272 = vector.load %arg19[%c0_285, %c1_286] : memref<16x136xf32, #tpu.memory_space<vmem>>, vector<16x9xf32>
    %273 = arith.maximumf %271, %272 : vector<16x9xf32>
    %c0_287 = arith.constant 0 : index
    %c14_288 = arith.constant 14 : index
    %274 = vector.load %arg19[%c0_287, %c14_288] : memref<16x136xf32, #tpu.memory_space<vmem>>, vector<16x9xf32>
    %275 = arith.maximumf %273, %274 : vector<16x9xf32>
    %c0_289 = arith.constant 0 : index
    %c15_290 = arith.constant 15 : index
    %276 = vector.load %arg19[%c0_289, %c15_290] : memref<16x136xf32, #tpu.memory_space<vmem>>, vector<16x9xf32>
    %277 = arith.maximumf %275, %276 : vector<16x9xf32>
    %cst_291 = arith.constant dense<0.000000e+00> : vector<16x5xf32>
    %278 = tpu.matmul %277, %270, %cst_291 {dimension_numbers = #tpu.dot_dimension_numbers<[1], [0], [0], [1], [0, 0, 1, 1], [], []>} : vector<16x9xf32>, vector<9x5xf32>, vector<16x5xf32> -> vector<16x5xf32>
    %c0_292 = arith.constant 0 : index
    %c0_293 = arith.constant 0 : index
    %279 = vector.load %arg20[%c0_292, %c0_293] : memref<16x25xf32, #tpu.memory_space<vmem>>, vector<16x5xf32>
    tpu.vector_store %arg20[%c0_292, %c0_293], %278 {strides = array<i32>} : memref<16x25xf32, #tpu.memory_space<vmem>>, vector<16x5xf32>,
    %c0_294 = arith.constant 0 : index
    %c28_295 = arith.constant 28 : index
    %280 = vector.load %arg19[%c0_294, %c28_295] : memref<16x136xf32, #tpu.memory_space<vmem>>, vector<16x9xf32>
    %c0_296 = arith.constant 0 : index
    %c29_297 = arith.constant 29 : index
    %281 = vector.load %arg19[%c0_296, %c29_297] : memref<16x136xf32, #tpu.memory_space<vmem>>, vector<16x9xf32>
    %282 = arith.maximumf %280, %281 : vector<16x9xf32>
    %c0_298 = arith.constant 0 : index
    %c42_299 = arith.constant 42 : index
    %283 = vector.load %arg19[%c0_298, %c42_299] : memref<16x136xf32, #tpu.memory_space<vmem>>, vector<16x9xf32>
    %284 = arith.maximumf %282, %283 : vector<16x9xf32>
    %c0_300 = arith.constant 0 : index
    %c43_301 = arith.constant 43 : index
    %285 = vector.load %arg19[%c0_300, %c43_301] : memref<16x136xf32, #tpu.memory_space<vmem>>, vector<16x9xf32>
    %286 = arith.maximumf %284, %285 : vector<16x9xf32>
    %cst_302 = arith.constant dense<0.000000e+00> : vector<16x5xf32>
    %287 = tpu.matmul %286, %270, %cst_302 {dimension_numbers = #tpu.dot_dimension_numbers<[1], [0], [0], [1], [0, 0, 1, 1], [], []>} : vector<16x9xf32>, vector<9x5xf32>, vector<16x5xf32> -> vector<16x5xf32>
    %c0_303 = arith.constant 0 : index
    %c5 = arith.constant 5 : index
    %288 = vector.load %arg20[%c0_303, %c5] : memref<16x25xf32, #tpu.memory_space<vmem>>, vector<16x5xf32>
    tpu.vector_store %arg20[%c0_303, %c5], %287 {strides = array<i32>} : memref<16x25xf32, #tpu.memory_space<vmem>>, vector<16x5xf32>,
    %c0_304 = arith.constant 0 : index
    %c56_305 = arith.constant 56 : index
    %289 = vector.load %arg19[%c0_304, %c56_305] : memref<16x136xf32, #tpu.memory_space<vmem>>, vector<16x9xf32>
    %c0_306 = arith.constant 0 : index
    %c57_307 = arith.constant 57 : index
    %290 = vector.load %arg19[%c0_306, %c57_307] : memref<16x136xf32, #tpu.memory_space<vmem>>, vector<16x9xf32>
    %291 = arith.maximumf %289, %290 : vector<16x9xf32>
    %c0_308 = arith.constant 0 : index
    %c70_309 = arith.constant 70 : index
    %292 = vector.load %arg19[%c0_308, %c70_309] : memref<16x136xf32, #tpu.memory_space<vmem>>, vector<16x9xf32>
    %293 = arith.maximumf %291, %292 : vector<16x9xf32>
    %c0_310 = arith.constant 0 : index
    %c71 = arith.constant 71 : index
    %294 = vector.load %arg19[%c0_310, %c71] : memref<16x136xf32, #tpu.memory_space<vmem>>, vector<16x9xf32>
    %295 = arith.maximumf %293, %294 : vector<16x9xf32>
    %cst_311 = arith.constant dense<0.000000e+00> : vector<16x5xf32>
    %296 = tpu.matmul %295, %270, %cst_311 {dimension_numbers = #tpu.dot_dimension_numbers<[1], [0], [0], [1], [0, 0, 1, 1], [], []>} : vector<16x9xf32>, vector<9x5xf32>, vector<16x5xf32> -> vector<16x5xf32>
    %c0_312 = arith.constant 0 : index
    %c10 = arith.constant 10 : index
    %297 = vector.load %arg20[%c0_312, %c10] : memref<16x25xf32, #tpu.memory_space<vmem>>, vector<16x5xf32>
    tpu.vector_store %arg20[%c0_312, %c10], %296 {strides = array<i32>} : memref<16x25xf32, #tpu.memory_space<vmem>>, vector<16x5xf32>,
    %c0_313 = arith.constant 0 : index
    %c84_314 = arith.constant 84 : index
    %298 = vector.load %arg19[%c0_313, %c84_314] : memref<16x136xf32, #tpu.memory_space<vmem>>, vector<16x9xf32>
    %c0_315 = arith.constant 0 : index
    %c85 = arith.constant 85 : index
    %299 = vector.load %arg19[%c0_315, %c85] : memref<16x136xf32, #tpu.memory_space<vmem>>, vector<16x9xf32>
    %300 = arith.maximumf %298, %299 : vector<16x9xf32>
    %c0_316 = arith.constant 0 : index
    %c98_317 = arith.constant 98 : index
    %301 = vector.load %arg19[%c0_316, %c98_317] : memref<16x136xf32, #tpu.memory_space<vmem>>, vector<16x9xf32>
    %302 = arith.maximumf %300, %301 : vector<16x9xf32>
    %c0_318 = arith.constant 0 : index
    %c99_319 = arith.constant 99 : index
    %303 = vector.load %arg19[%c0_318, %c99_319] : memref<16x136xf32, #tpu.memory_space<vmem>>, vector<16x9xf32>
    %304 = arith.maximumf %302, %303 : vector<16x9xf32>
    %cst_320 = arith.constant dense<0.000000e+00> : vector<16x5xf32>
    %305 = tpu.matmul %304, %270, %cst_320 {dimension_numbers = #tpu.dot_dimension_numbers<[1], [0], [0], [1], [0, 0, 1, 1], [], []>} : vector<16x9xf32>, vector<9x5xf32>, vector<16x5xf32> -> vector<16x5xf32>
    %c0_321 = arith.constant 0 : index
    %c15_322 = arith.constant 15 : index
    %306 = vector.load %arg20[%c0_321, %c15_322] : memref<16x25xf32, #tpu.memory_space<vmem>>, vector<16x5xf32>
    tpu.vector_store %arg20[%c0_321, %c15_322], %305 {strides = array<i32>} : memref<16x25xf32, #tpu.memory_space<vmem>>, vector<16x5xf32>,
    %c0_323 = arith.constant 0 : index
    %c112_324 = arith.constant 112 : index
    %307 = vector.load %arg19[%c0_323, %c112_324] : memref<16x136xf32, #tpu.memory_space<vmem>>, vector<16x9xf32>
    %c0_325 = arith.constant 0 : index
    %c113 = arith.constant 113 : index
    %308 = vector.load %arg19[%c0_325, %c113] : memref<16x136xf32, #tpu.memory_space<vmem>>, vector<16x9xf32>
    %309 = arith.maximumf %307, %308 : vector<16x9xf32>
    %c0_326 = arith.constant 0 : index
    %c126_327 = arith.constant 126 : index
    %310 = vector.load %arg19[%c0_326, %c126_327] : memref<16x136xf32, #tpu.memory_space<vmem>>, vector<16x9xf32>
    %311 = arith.maximumf %309, %310 : vector<16x9xf32>
    %c0_328 = arith.constant 0 : index
    %c127 = arith.constant 127 : index
    %312 = vector.load %arg19[%c0_328, %c127] : memref<16x136xf32, #tpu.memory_space<vmem>>, vector<16x9xf32>
    %313 = arith.maximumf %311, %312 : vector<16x9xf32>
    %cst_329 = arith.constant dense<0.000000e+00> : vector<16x5xf32>
    %314 = tpu.matmul %313, %270, %cst_329 {dimension_numbers = #tpu.dot_dimension_numbers<[1], [0], [0], [1], [0, 0, 1, 1], [], []>} : vector<16x9xf32>, vector<9x5xf32>, vector<16x5xf32> -> vector<16x5xf32>
    %c0_330 = arith.constant 0 : index
    %c20 = arith.constant 20 : index
    %315 = vector.load %arg20[%c0_330, %c20] : memref<16x25xf32, #tpu.memory_space<vmem>>, vector<16x5xf32>
    tpu.vector_store %arg20[%c0_330, %c20], %314 {strides = array<i32>} : memref<16x25xf32, #tpu.memory_space<vmem>>, vector<16x5xf32>,
    %c0_331 = arith.constant 0 : index
    %c0_332 = arith.constant 0 : index
    %316 = vector.load %arg20[%c0_331, %c0_332] : memref<16x25xf32, #tpu.memory_space<vmem>>, vector<1x25xf32>
    %c0_333 = arith.constant 0 : index
    %c0_334 = arith.constant 0 : index
    %317 = vector.load %arg21[%c0_333, %c0_334] : memref<1x400xf32, #tpu.memory_space<vmem>>, vector<1x25xf32>
    tpu.vector_store %arg21[%c0_333, %c0_334], %316 {strides = array<i32>} : memref<1x400xf32, #tpu.memory_space<vmem>>, vector<1x25xf32>,
    %c1_335 = arith.constant 1 : index
    %c0_336 = arith.constant 0 : index
    %318 = vector.load %arg20[%c1_335, %c0_336] : memref<16x25xf32, #tpu.memory_space<vmem>>, vector<1x25xf32>
    %c0_337 = arith.constant 0 : index
    %c25 = arith.constant 25 : index
    %319 = vector.load %arg21[%c0_337, %c25] : memref<1x400xf32, #tpu.memory_space<vmem>>, vector<1x25xf32>
    tpu.vector_store %arg21[%c0_337, %c25], %318 {strides = array<i32>} : memref<1x400xf32, #tpu.memory_space<vmem>>, vector<1x25xf32>,
    %c2_338 = arith.constant 2 : index
    %c0_339 = arith.constant 0 : index
    %320 = vector.load %arg20[%c2_338, %c0_339] : memref<16x25xf32, #tpu.memory_space<vmem>>, vector<1x25xf32>
    %c0_340 = arith.constant 0 : index
    %c50 = arith.constant 50 : index
    %321 = vector.load %arg21[%c0_340, %c50] : memref<1x400xf32, #tpu.memory_space<vmem>>, vector<1x25xf32>
    tpu.vector_store %arg21[%c0_340, %c50], %320 {strides = array<i32>} : memref<1x400xf32, #tpu.memory_space<vmem>>, vector<1x25xf32>,
    %c3_341 = arith.constant 3 : index
    %c0_342 = arith.constant 0 : index
    %322 = vector.load %arg20[%c3_341, %c0_342] : memref<16x25xf32, #tpu.memory_space<vmem>>, vector<1x25xf32>
    %c0_343 = arith.constant 0 : index
    %c75 = arith.constant 75 : index
    %323 = vector.load %arg21[%c0_343, %c75] : memref<1x400xf32, #tpu.memory_space<vmem>>, vector<1x25xf32>
    tpu.vector_store %arg21[%c0_343, %c75], %322 {strides = array<i32>} : memref<1x400xf32, #tpu.memory_space<vmem>>, vector<1x25xf32>,
    %c4_344 = arith.constant 4 : index
    %c0_345 = arith.constant 0 : index
    %324 = vector.load %arg20[%c4_344, %c0_345] : memref<16x25xf32, #tpu.memory_space<vmem>>, vector<1x25xf32>
    %c0_346 = arith.constant 0 : index
    %c100_347 = arith.constant 100 : index
    %325 = vector.load %arg21[%c0_346, %c100_347] : memref<1x400xf32, #tpu.memory_space<vmem>>, vector<1x25xf32>
    tpu.vector_store %arg21[%c0_346, %c100_347], %324 {strides = array<i32>} : memref<1x400xf32, #tpu.memory_space<vmem>>, vector<1x25xf32>,
    %c5_348 = arith.constant 5 : index
    %c0_349 = arith.constant 0 : index
    %326 = vector.load %arg20[%c5_348, %c0_349] : memref<16x25xf32, #tpu.memory_space<vmem>>, vector<1x25xf32>
    %c0_350 = arith.constant 0 : index
    %c125 = arith.constant 125 : index
    %327 = vector.load %arg21[%c0_350, %c125] : memref<1x400xf32, #tpu.memory_space<vmem>>, vector<1x25xf32>
    tpu.vector_store %arg21[%c0_350, %c125], %326 {strides = array<i32>} : memref<1x400xf32, #tpu.memory_space<vmem>>, vector<1x25xf32>,
    %c6_351 = arith.constant 6 : index
    %c0_352 = arith.constant 0 : index
    %328 = vector.load %arg20[%c6_351, %c0_352] : memref<16x25xf32, #tpu.memory_space<vmem>>, vector<1x25xf32>
    %c0_353 = arith.constant 0 : index
    %c150 = arith.constant 150 : index
    %329 = vector.load %arg21[%c0_353, %c150] : memref<1x400xf32, #tpu.memory_space<vmem>>, vector<1x25xf32>
    tpu.vector_store %arg21[%c0_353, %c150], %328 {strides = array<i32>} : memref<1x400xf32, #tpu.memory_space<vmem>>, vector<1x25xf32>,
    %c7 = arith.constant 7 : index
    %c0_354 = arith.constant 0 : index
    %330 = vector.load %arg20[%c7, %c0_354] : memref<16x25xf32, #tpu.memory_space<vmem>>, vector<1x25xf32>
    %c0_355 = arith.constant 0 : index
    %c175 = arith.constant 175 : index
    %331 = vector.load %arg21[%c0_355, %c175] : memref<1x400xf32, #tpu.memory_space<vmem>>, vector<1x25xf32>
    tpu.vector_store %arg21[%c0_355, %c175], %330 {strides = array<i32>} : memref<1x400xf32, #tpu.memory_space<vmem>>, vector<1x25xf32>,
    %c8 = arith.constant 8 : index
    %c0_356 = arith.constant 0 : index
    %332 = vector.load %arg20[%c8, %c0_356] : memref<16x25xf32, #tpu.memory_space<vmem>>, vector<1x25xf32>
    %c0_357 = arith.constant 0 : index
    %c200 = arith.constant 200 : index
    %333 = vector.load %arg21[%c0_357, %c200] : memref<1x400xf32, #tpu.memory_space<vmem>>, vector<1x25xf32>
    tpu.vector_store %arg21[%c0_357, %c200], %332 {strides = array<i32>} : memref<1x400xf32, #tpu.memory_space<vmem>>, vector<1x25xf32>,
    %c9_358 = arith.constant 9 : index
    %c0_359 = arith.constant 0 : index
    %334 = vector.load %arg20[%c9_358, %c0_359] : memref<16x25xf32, #tpu.memory_space<vmem>>, vector<1x25xf32>
    %c0_360 = arith.constant 0 : index
    %c225_361 = arith.constant 225 : index
    %335 = vector.load %arg21[%c0_360, %c225_361] : memref<1x400xf32, #tpu.memory_space<vmem>>, vector<1x25xf32>
    tpu.vector_store %arg21[%c0_360, %c225_361], %334 {strides = array<i32>} : memref<1x400xf32, #tpu.memory_space<vmem>>, vector<1x25xf32>,
    %c10_362 = arith.constant 10 : index
    %c0_363 = arith.constant 0 : index
    %336 = vector.load %arg20[%c10_362, %c0_363] : memref<16x25xf32, #tpu.memory_space<vmem>>, vector<1x25xf32>
    %c0_364 = arith.constant 0 : index
    %c250 = arith.constant 250 : index
    %337 = vector.load %arg21[%c0_364, %c250] : memref<1x400xf32, #tpu.memory_space<vmem>>, vector<1x25xf32>
    tpu.vector_store %arg21[%c0_364, %c250], %336 {strides = array<i32>} : memref<1x400xf32, #tpu.memory_space<vmem>>, vector<1x25xf32>,
    %c11 = arith.constant 11 : index
    %c0_365 = arith.constant 0 : index
    %338 = vector.load %arg20[%c11, %c0_365] : memref<16x25xf32, #tpu.memory_space<vmem>>, vector<1x25xf32>
    %c0_366 = arith.constant 0 : index
    %c275 = arith.constant 275 : index
    %339 = vector.load %arg21[%c0_366, %c275] : memref<1x400xf32, #tpu.memory_space<vmem>>, vector<1x25xf32>
    tpu.vector_store %arg21[%c0_366, %c275], %338 {strides = array<i32>} : memref<1x400xf32, #tpu.memory_space<vmem>>, vector<1x25xf32>,
    %c12_367 = arith.constant 12 : index
    %c0_368 = arith.constant 0 : index
    %340 = vector.load %arg20[%c12_367, %c0_368] : memref<16x25xf32, #tpu.memory_space<vmem>>, vector<1x25xf32>
    %c0_369 = arith.constant 0 : index
    %c300 = arith.constant 300 : index
    %341 = vector.load %arg21[%c0_369, %c300] : memref<1x400xf32, #tpu.memory_space<vmem>>, vector<1x25xf32>
    tpu.vector_store %arg21[%c0_369, %c300], %340 {strides = array<i32>} : memref<1x400xf32, #tpu.memory_space<vmem>>, vector<1x25xf32>,
    %c13 = arith.constant 13 : index
    %c0_370 = arith.constant 0 : index
    %342 = vector.load %arg20[%c13, %c0_370] : memref<16x25xf32, #tpu.memory_space<vmem>>, vector<1x25xf32>
    %c0_371 = arith.constant 0 : index
    %c325 = arith.constant 325 : index
    %343 = vector.load %arg21[%c0_371, %c325] : memref<1x400xf32, #tpu.memory_space<vmem>>, vector<1x25xf32>
    tpu.vector_store %arg21[%c0_371, %c325], %342 {strides = array<i32>} : memref<1x400xf32, #tpu.memory_space<vmem>>, vector<1x25xf32>,
    %c14_372 = arith.constant 14 : index
    %c0_373 = arith.constant 0 : index
    %344 = vector.load %arg20[%c14_372, %c0_373] : memref<16x25xf32, #tpu.memory_space<vmem>>, vector<1x25xf32>
    %c0_374 = arith.constant 0 : index
    %c350 = arith.constant 350 : index
    %345 = vector.load %arg21[%c0_374, %c350] : memref<1x400xf32, #tpu.memory_space<vmem>>, vector<1x25xf32>
    tpu.vector_store %arg21[%c0_374, %c350], %344 {strides = array<i32>} : memref<1x400xf32, #tpu.memory_space<vmem>>, vector<1x25xf32>,
    %c15_375 = arith.constant 15 : index
    %c0_376 = arith.constant 0 : index
    %346 = vector.load %arg20[%c15_375, %c0_376] : memref<16x25xf32, #tpu.memory_space<vmem>>, vector<1x25xf32>
    %c0_377 = arith.constant 0 : index
    %c375 = arith.constant 375 : index
    %347 = vector.load %arg21[%c0_377, %c375] : memref<1x400xf32, #tpu.memory_space<vmem>>, vector<1x25xf32>
    tpu.vector_store %arg21[%c0_377, %c375], %346 {strides = array<i32>} : memref<1x400xf32, #tpu.memory_space<vmem>>, vector<1x25xf32>,
    %c0_378 = arith.constant 0 : index
    %c0_379 = arith.constant 0 : index
    %348 = vector.load %arg21[%c0_378, %c0_379] : memref<1x400xf32, #tpu.memory_space<vmem>>, vector<1x400xf32>
    %c0_380 = arith.constant 0 : index
    %c0_381 = arith.constant 0 : index
    %349 = vector.load %arg8[%c0_380, %c0_381] : memref<400x120xf32, #tpu.memory_space<vmem>>, vector<400x120xf32>
    %cst_382 = arith.constant dense<0.000000e+00> : vector<1x120xf32>
    %350 = tpu.matmul %348, %349, %cst_382 {dimension_numbers = #tpu.dot_dimension_numbers<[1], [0], [0], [1], [0, 0, 1, 1], [], []>} : vector<1x400xf32>, vector<400x120xf32>, vector<1x120xf32> -> vector<1x120xf32>
    %c0_383 = arith.constant 0 : index
    %c0_384 = arith.constant 0 : index
    %351 = vector.load %arg9[%c0_383, %c0_384] : memref<1x120xf32, #tpu.memory_space<vmem>>, vector<1x120xf32>
    %352 = arith.addf %350, %351 : vector<1x120xf32>
    %cst_385 = arith.constant 0.000000e+00 : f32
    %353 = vector.broadcast %cst_385 : f32 to vector<1x120xf32>
    %354 = arith.maximumf %352, %353 : vector<1x120xf32>
    %c0_386 = arith.constant 0 : index
    %c0_387 = arith.constant 0 : index
    %355 = vector.load %arg10[%c0_386, %c0_387] : memref<120x84xf32, #tpu.memory_space<vmem>>, vector<120x84xf32>
    %cst_388 = arith.constant dense<0.000000e+00> : vector<1x84xf32>
    %356 = tpu.matmul %354, %355, %cst_388 {dimension_numbers = #tpu.dot_dimension_numbers<[1], [0], [0], [1], [0, 0, 1, 1], [], []>} : vector<1x120xf32>, vector<120x84xf32>, vector<1x84xf32> -> vector<1x84xf32>
    %c0_389 = arith.constant 0 : index
    %c0_390 = arith.constant 0 : index
    %357 = vector.load %arg11[%c0_389, %c0_390] : memref<1x84xf32, #tpu.memory_space<vmem>>, vector<1x84xf32>
    %358 = arith.addf %356, %357 : vector<1x84xf32>
    %cst_391 = arith.constant 0.000000e+00 : f32
    %359 = vector.broadcast %cst_391 : f32 to vector<1x84xf32>
    %360 = arith.maximumf %358, %359 : vector<1x84xf32>
    %c0_392 = arith.constant 0 : index
    %c0_393 = arith.constant 0 : index
    %361 = vector.load %arg12[%c0_392, %c0_393] : memref<84x10xf32, #tpu.memory_space<vmem>>, vector<84x10xf32>
    %cst_394 = arith.constant dense<0.000000e+00> : vector<1x10xf32>
    %362 = tpu.matmul %360, %361, %cst_394 {dimension_numbers = #tpu.dot_dimension_numbers<[1], [0], [0], [1], [0, 0, 1, 1], [], []>} : vector<1x84xf32>, vector<84x10xf32>, vector<1x10xf32> -> vector<1x10xf32>
    %c0_395 = arith.constant 0 : index
    %c0_396 = arith.constant 0 : index
    %363 = vector.load %arg13[%c0_395, %c0_396] : memref<1x10xf32, #tpu.memory_space<vmem>>, vector<1x10xf32>
    %364 = arith.addf %362, %363 : vector<1x10xf32>
    %c0_397 = arith.constant 0 : index
    %c0_398 = arith.constant 0 : index
    %c0_399 = arith.constant 0 : index
    %365 = vector.load %arg14[%c0_397, %c0_398, %c0_399] : memref<1x1x10xf32, #tpu.memory_space<vmem>>, vector<1x1x10xf32>
    %366 = vector.shape_cast %365 : vector<1x1x10xf32> to vector<1x10xf32>
    %367 = vector.shape_cast %364 : vector<1x10xf32> to vector<1x1x10xf32>
    tpu.vector_store %arg14[%c0_397, %c0_398, %c0_399], %367 {strides = array<i32>} : memref<1x1x10xf32, #tpu.memory_space<vmem>>, vector<1x1x10xf32>,
    return
  }
  func.func @transform_0(%arg0: i32) -> (i32, i32, i32) {
    %c0_i32 = arith.constant 0 : i32
    %c0_i32_0 = arith.constant 0 : i32
    %c0_i32_1 = arith.constant 0 : i32
    return %arg0, %c0_i32, %c0_i32_0 : i32, i32, i32
  }
  func.func @transform_1(%arg0: i32) -> (i32, i32) {
    %c0_i32 = arith.constant 0 : i32
    %c0_i32_0 = arith.constant 0 : i32
    %c0_i32_1 = arith.constant 0 : i32
    return %c0_i32, %c0_i32_0 : i32, i32
  }
  func.func @transform_2(%arg0: i32) -> (i32, i32) {
    %c0_i32 = arith.constant 0 : i32
    %c0_i32_0 = arith.constant 0 : i32
    %c0_i32_1 = arith.constant 0 : i32
    return %c0_i32, %c0_i32_0 : i32, i32
  }
  func.func @transform_3(%arg0: i32) -> (i32, i32) {
    %c0_i32 = arith.constant 0 : i32
    %c0_i32_0 = arith.constant 0 : i32
    %c0_i32_1 = arith.constant 0 : i32
    return %c0_i32, %c0_i32_0 : i32, i32
  }
  func.func @transform_4(%arg0: i32) -> (i32, i32) {
    %c0_i32 = arith.constant 0 : i32
    %c0_i32_0 = arith.constant 0 : i32
    %c0_i32_1 = arith.constant 0 : i32
    return %c0_i32, %c0_i32_0 : i32, i32
  }
  func.func @transform_5(%arg0: i32) -> (i32, i32) {
    %c0_i32 = arith.constant 0 : i32
    %c0_i32_0 = arith.constant 0 : i32
    %c0_i32_1 = arith.constant 0 : i32
    return %c0_i32, %c0_i32_0 : i32, i32
  }
  func.func @transform_6(%arg0: i32) -> (i32, i32) {
    %c0_i32 = arith.constant 0 : i32
    %c0_i32_0 = arith.constant 0 : i32
    %c0_i32_1 = arith.constant 0 : i32
    return %c0_i32, %c0_i32_0 : i32, i32
  }
  func.func @transform_7(%arg0: i32) -> (i32, i32) {
    %c0_i32 = arith.constant 0 : i32
    %c0_i32_0 = arith.constant 0 : i32
    %c0_i32_1 = arith.constant 0 : i32
    return %c0_i32, %c0_i32_0 : i32, i32
  }
  func.func @transform_8(%arg0: i32) -> (i32, i32) {
    %c0_i32 = arith.constant 0 : i32
    %c0_i32_0 = arith.constant 0 : i32
    %c0_i32_1 = arith.constant 0 : i32
    return %c0_i32, %c0_i32_0 : i32, i32
  }
  func.func @transform_9(%arg0: i32) -> (i32, i32) {
    %c0_i32 = arith.constant 0 : i32
    %c0_i32_0 = arith.constant 0 : i32
    %c0_i32_1 = arith.constant 0 : i32
    return %c0_i32, %c0_i32_0 : i32, i32
  }
  func.func @transform_10(%arg0: i32) -> (i32, i32) {
    %c0_i32 = arith.constant 0 : i32
    %c0_i32_0 = arith.constant 0 : i32
    %c0_i32_1 = arith.constant 0 : i32
    return %c0_i32, %c0_i32_0 : i32, i32
  }
  func.func @transform_11(%arg0: i32) -> (i32, i32) {
    %c0_i32 = arith.constant 0 : i32
    %c0_i32_0 = arith.constant 0 : i32
    %c0_i32_1 = arith.constant 0 : i32
    return %c0_i32, %c0_i32_0 : i32, i32
  }
  func.func @transform_12(%arg0: i32) -> (i32, i32) {
    %c0_i32 = arith.constant 0 : i32
    %c0_i32_0 = arith.constant 0 : i32
    %c0_i32_1 = arith.constant 0 : i32
    return %c0_i32, %c0_i32_0 : i32, i32
  }
  func.func @transform_13(%arg0: i32) -> (i32, i32, i32) {
    %c0_i32 = arith.constant 0 : i32
    %c0_i32_0 = arith.constant 0 : i32
    %c0_i32_1 = arith.constant 0 : i32
    return %arg0, %c0_i32, %c0_i32_0 : i32, i32, i32
  }
}

</mosaic_0001>

<llo_original>
// kernel: lenet_forward.1
$region0: #{lenet_forward.1}
  #allocation0 [shape = 'u32[]', space=smem, size = 0x4, offset = 0x4, fixed_abs, tag = 'smem constant byte address 0x4 - core index']
  #allocation1 [shape = 'u32[144,128]{1,0:T(1,128)}', space=vmem, size = 0x12000, scoped, tag = 'internal scratch']
  #allocation2 [shape = 'f32[75,892]{1,0:T(8,128)}', space=vmem, size = 0x46000, scoped, tag = 'scratch operand']
  #allocation3 [shape = 'f32[6,892]{1,0:T(8,128)}', space=vmem, size = 0x7000, scoped, tag = 'scratch operand']
  #allocation4 [shape = 'f32[6,196]{1,0:T(8,128)}', space=vmem, size = 0x2000, scoped, tag = 'scratch operand']
  #allocation5 [shape = 'f32[150,136]{1,0:T(8,128)}', space=vmem, size = 0x26000, scoped, tag = 'scratch operand']
  #allocation6 [shape = 'f32[16,136]{1,0:T(8,128)}', space=vmem, size = 0x4000, scoped, tag = 'scratch operand']
  #allocation7 [shape = 'f32[16,25]{1,0:T(8,128)}', space=vmem, size = 0x2000, scoped, tag = 'scratch operand']
  #allocation8 [shape = 'f32[1,400]{1,0:T(1,128)}', space=vmem, size = 0x800, scoped, tag = 'scratch operand']
  %s0 = inlined_call_operand.vmem [shape: f32[2,3,1024], index: 0, kind: input, shape index: {}]
  %s1 = inlined_call_operand.vmem [shape: f32[6,75], index: 1, kind: input, shape index: {}]
  %s2 = inlined_call_operand.vmem [shape: f32[6,1], index: 2, kind: input, shape index: {}]
  %s3 = inlined_call_operand.vmem [shape: f32[27,14], index: 3, kind: input, shape index: {}]
  %s4 = inlined_call_operand.vmem [shape: f32[16,150], index: 4, kind: input, shape index: {}]
  %s5 = inlined_call_operand.vmem [shape: f32[16,1], index: 5, kind: input, shape index: {}]
  %s6 = inlined_call_operand.vmem [shape: f32[9,5], index: 6, kind: input, shape index: {}]
  %s7 = inlined_call_operand.vmem [shape: f32[400,120], index: 7, kind: input, shape index: {}]
  %s8 = inlined_call_operand.vmem [shape: f32[1,120], index: 8, kind: input, shape index: {}]
  %s9 = inlined_call_operand.vmem [shape: f32[120,84], index: 9, kind: input, shape index: {}]
  %s10 = inlined_call_operand.vmem [shape: f32[1,84], index: 10, kind: input, shape index: {}]
  %s11 = inlined_call_operand.vmem [shape: f32[84,10], index: 11, kind: input, shape index: {}]
  %s12 = inlined_call_operand.vmem [shape: f32[1,10], index: 12, kind: input, shape index: {}]
  %s13 = inlined_call_operand.hbm [shape: f32[2,1,10], index: 13, kind: output, shape index: {}]
  %s14 = sld [smem:[#allocation0]]
  $region85: #{lenet_forward.1} parent=0
    _
  %s16 = ssub.s32 1, %s14
  %s17 = scalar_select 0, %s16, %s14
  $region1: #{lenet_forward.1} parent=0
    #allocation9 [shape = 'u8[1024]{0}', space=vmem, size = 0x400, scoped, tag = 'output window, operand 0']
    #allocation10 [shape = 's32[2]{0}', space=sflag, size = 0x8, scoped, tag = 'scoped memory for lenet_forward.1']
    %18 = vsyncpa [#allocation10], 0
    %s19 = scalar_lea.sflag [#allocation10], 1
    %20 = vsyncpa %s19, 0
    loop: start=0, step=1, limit=4
    $region2: #{lenet_forward.1} parent=1 // loop_pre_header
      _
    $region3: #{lenet_forward.1} parent=1 // loop_header
      %s22 = sphi 0, %s26
      %p23 = scmp.ge.s32.totalorder %s22, 4
      %s32 = sphi 0, %s34
      %s35 = sphi 0, %s32
      %s36 = sphi 0, %s35
      %s52 = sphi 0, %s36
      %s56 = sphi 0, %s56
      %s58 = sphi 0, %s56
      %s59 = sphi 0, %s58
      %s73 = sphi 0, %s59
      %s77 = sphi 0, %s77
      %s79 = sphi 0, %s77
      %s80 = sphi 0, %s79
      %s94 = sphi 0, %s80
      %s98 = sphi 0, %s98
      %s100 = sphi 0, %s98
      %s101 = sphi 0, %s100
      %s115 = sphi 0, %s101
      %s119 = sphi 0, %s119
      %s121 = sphi 0, %s119
      %s122 = sphi 0, %s121
      %s136 = sphi 0, %s122
      %s140 = sphi 0, %s140
      %s142 = sphi 0, %s140
      %s143 = sphi 0, %s142
      %s157 = sphi 0, %s143
      %s161 = sphi 0, %s161
      %s163 = sphi 0, %s161
      %s164 = sphi 0, %s163
      %s178 = sphi 0, %s164
      %s182 = sphi 0, %s182
      %s184 = sphi 0, %s182
      %s185 = sphi 0, %s184
      %s199 = sphi 0, %s185
      %s203 = sphi 0, %s203
      %s205 = sphi 0, %s203
      %s206 = sphi 0, %s205
      %s220 = sphi 0, %s206
      %s224 = sphi 0, %s224
      %s226 = sphi 0, %s224
      %s227 = sphi 0, %s226
      %s241 = sphi 0, %s227
      %s245 = sphi 0, %s245
      %s247 = sphi 0, %s245
      %s248 = sphi 0, %s247
      %s262 = sphi 0, %s248
      %s266 = sphi 0, %s266
      %s268 = sphi 0, %s266
      %s269 = sphi 0, %s268
      %s283 = sphi 0, %s269
      %s287 = sphi 0, %s287
      %s289 = sphi 0, %s287
      %s290 = sphi 0, %s289
      %s304 = sphi 0, %s290
      %s310 = sphi 0, %s312
      %s313 = sphi 0, %s310
      %s314 = sphi 0, %s313
      %s330 = sphi 0, %s314
    $region4: #{lenet_forward.1} parent=1 // loop_header_branch
      %25 = sbr.rel (%p23) target = $region8
    $region5: #{lenet_forward.1} parent=1 // loop_body
      %s27 = ssub.s32 %s22, 1
      %s28 = ssub.s32 %s22, 2
      %s29 = sadd.s32 %s22, 1
      %s30 = ssub.s32 %s22, %s29
      %p31 = scmp.eq.s32.totalorder %s30, 0
      %s33 = sadd.s32 %s32, 1
      %s34 = scalar_select %p31, %s32, %s33
      %p37 = pneg %p31
      %p38 = scmp.eq.s32.totalorder %s22, 1
      %p39 = por %p37, %p38
      %p40 = scmp.ne.s32.totalorder %s32, %s35
      %p41 = scmp.eq.s32.totalorder %s22, 0
      %p42 = por %p40, %p41
      %p43 = scmp.ne.s32.totalorder %s32, %s35
      %p44 = scmp.eq.s32.totalorder %s27, 1
      %p45 = por %p43, %p44
      %p46 = scmp.ne.s32.totalorder %s35, %s36
      %p47 = scmp.eq.s32.totalorder %s27, 0
      %p48 = por %p46, %p47
      %p49 = scmp.ne.s32.totalorder %s35, %s36
      %p50 = scmp.eq.s32.totalorder %s28, 1
      %p51 = por %p49, %p50
      %p53 = scmp.ne.s32.totalorder %s36, %s52
      %p54 = scmp.eq.s32.totalorder %s28, 0
      %p55 = por %p53, %p54
      %s57 = sadd.s32 %s56, 1
      %p60 = scmp.eq.s32.totalorder %s22, 1
      %p61 = scmp.ne.s32.totalorder %s56, %s58
      %p62 = scmp.eq.s32.totalorder %s22, 0
      %p63 = por %p61, %p62
      %p64 = scmp.ne.s32.totalorder %s56, %s58
      %p65 = scmp.eq.s32.totalorder %s27, 1
      %p66 = por %p64, %p65
      %p67 = scmp.ne.s32.totalorder %s58, %s59
      %p68 = scmp.eq.s32.totalorder %s27, 0
      %p69 = por %p67, %p68
      %p70 = scmp.ne.s32.totalorder %s58, %s59
      %p71 = scmp.eq.s32.totalorder %s28, 1
      %p72 = por %p70, %p71
      %p74 = scmp.ne.s32.totalorder %s59, %s73
      %p75 = scmp.eq.s32.totalorder %s28, 0
      %p76 = por %p74, %p75
      %s78 = sadd.s32 %s77, 1
      %p81 = scmp.eq.s32.totalorder %s22, 1
      %p82 = scmp.ne.s32.totalorder %s77, %s79
      %p83 = scmp.eq.s32.totalorder %s22, 0
      %p84 = por %p82, %p83
      %p85 = scmp.ne.s32.totalorder %s77, %s79
      %p86 = scmp.eq.s32.totalorder %s27, 1
      %p87 = por %p85, %p86
      %p88 = scmp.ne.s32.totalorder %s79, %s80
      %p89 = scmp.eq.s32.totalorder %s27, 0
      %p90 = por %p88, %p89
      %p91 = scmp.ne.s32.totalorder %s79, %s80
      %p92 = scmp.eq.s32.totalorder %s28, 1
      %p93 = por %p91, %p92
      %p95 = scmp.ne.s32.totalorder %s80, %s94
      %p96 = scmp.eq.s32.totalorder %s28, 0
      %p97 = por %p95, %p96
      %s99 = sadd.s32 %s98, 1
      %p102 = scmp.eq.s32.totalorder %s22, 1
      %p103 = scmp.ne.s32.totalorder %s98, %s100
      %p104 = scmp.eq.s32.totalorder %s22, 0
      %p105 = por %p103, %p104
      %p106 = scmp.ne.s32.totalorder %s98, %s100
      %p107 = scmp.eq.s32.totalorder %s27, 1
      %p108 = por %p106, %p107
      %p109 = scmp.ne.s32.totalorder %s100, %s101
      %p110 = scmp.eq.s32.totalorder %s27, 0
      %p111 = por %p109, %p110
      %p112 = scmp.ne.s32.totalorder %s100, %s101
      %p113 = scmp.eq.s32.totalorder %s28, 1
      %p114 = por %p112, %p113
      %p116 = scmp.ne.s32.totalorder %s101, %s115
      %p117 = scmp.eq.s32.totalorder %s28, 0
      %p118 = por %p116, %p117
      %s120 = sadd.s32 %s119, 1
      %p123 = scmp.eq.s32.totalorder %s22, 1
      %p124 = scmp.ne.s32.totalorder %s119, %s121
      %p125 = scmp.eq.s32.totalorder %s22, 0
      %p126 = por %p124, %p125
      %p127 = scmp.ne.s32.totalorder %s119, %s121
      %p128 = scmp.eq.s32.totalorder %s27, 1
      %p129 = por %p127, %p128
      %p130 = scmp.ne.s32.totalorder %s121, %s122
      %p131 = scmp.eq.s32.totalorder %s27, 0
      %p132 = por %p130, %p131
      %p133 = scmp.ne.s32.totalorder %s121, %s122
      %p134 = scmp.eq.s32.totalorder %s28, 1
      %p135 = por %p133, %p134
      %p137 = scmp.ne.s32.totalorder %s122, %s136
      %p138 = scmp.eq.s32.totalorder %s28, 0
      %p139 = por %p137, %p138
      %s141 = sadd.s32 %s140, 1
      %p144 = scmp.eq.s32.totalorder %s22, 1
      %p145 = scmp.ne.s32.totalorder %s140, %s142
      %p146 = scmp.eq.s32.totalorder %s22, 0
      %p147 = por %p145, %p146
      %p148 = scmp.ne.s32.totalorder %s140, %s142
      %p149 = scmp.eq.s32.totalorder %s27, 1
      %p150 = por %p148, %p149
      %p151 = scmp.ne.s32.totalorder %s142, %s143
      %p152 = scmp.eq.s32.totalorder %s27, 0
      %p153 = por %p151, %p152
      %p154 = scmp.ne.s32.totalorder %s142, %s143
      %p155 = scmp.eq.s32.totalorder %s28, 1
      %p156 = por %p154, %p155
      %p158 = scmp.ne.s32.totalorder %s143, %s157
      %p159 = scmp.eq.s32.totalorder %s28, 0
      %p160 = por %p158, %p159
      %s162 = sadd.s32 %s161, 1
      %p165 = scmp.eq.s32.totalorder %s22, 1
      %p166 = scmp.ne.s32.totalorder %s161, %s163
      %p167 = scmp.eq.s32.totalorder %s22, 0
      %p168 = por %p166, %p167
      %p169 = scmp.ne.s32.totalorder %s161, %s163
      %p170 = scmp.eq.s32.totalorder %s27, 1
      %p171 = por %p169, %p170
      %p172 = scmp.ne.s32.totalorder %s163, %s164
      %p173 = scmp.eq.s32.totalorder %s27, 0
      %p174 = por %p172, %p173
      %p175 = scmp.ne.s32.totalorder %s163, %s164
      %p176 = scmp.eq.s32.totalorder %s28, 1
      %p177 = por %p175, %p176
      %p179 = scmp.ne.s32.totalorder %s164, %s178
      %p180 = scmp.eq.s32.totalorder %s28, 0
      %p181 = por %p179, %p180
      %s183 = sadd.s32 %s182, 1
      %p186 = scmp.eq.s32.totalorder %s22, 1
      %p187 = scmp.ne.s32.totalorder %s182, %s184
      %p188 = scmp.eq.s32.totalorder %s22, 0
      %p189 = por %p187, %p188
      %p190 = scmp.ne.s32.totalorder %s182, %s184
      %p191 = scmp.eq.s32.totalorder %s27, 1
      %p192 = por %p190, %p191
      %p193 = scmp.ne.s32.totalorder %s184, %s185
      %p194 = scmp.eq.s32.totalorder %s27, 0
      %p195 = por %p193, %p194
      %p196 = scmp.ne.s32.totalorder %s184, %s185
      %p197 = scmp.eq.s32.totalorder %s28, 1
      %p198 = por %p196, %p197
      %p200 = scmp.ne.s32.totalorder %s185, %s199
      %p201 = scmp.eq.s32.totalorder %s28, 0
      %p202 = por %p200, %p201
      %s204 = sadd.s32 %s203, 1
      %p207 = scmp.eq.s32.totalorder %s22, 1
      %p208 = scmp.ne.s32.totalorder %s203, %s205
      %p209 = scmp.eq.s32.totalorder %s22, 0
      %p210 = por %p208, %p209
      %p211 = scmp.ne.s32.totalorder %s203, %s205
      %p212 = scmp.eq.s32.totalorder %s27, 1
      %p213 = por %p211, %p212
      %p214 = scmp.ne.s32.totalorder %s205, %s206
      %p215 = scmp.eq.s32.totalorder %s27, 0
      %p216 = por %p214, %p215
      %p217 = scmp.ne.s32.totalorder %s205, %s206
      %p218 = scmp.eq.s32.totalorder %s28, 1
      %p219 = por %p217, %p218
      %p221 = scmp.ne.s32.totalorder %s206, %s220
      %p222 = scmp.eq.s32.totalorder %s28, 0
      %p223 = por %p221, %p222
      %s225 = sadd.s32 %s224, 1
      %p228 = scmp.eq.s32.totalorder %s22, 1
      %p229 = scmp.ne.s32.totalorder %s224, %s226
      %p230 = scmp.eq.s32.totalorder %s22, 0
      %p231 = por %p229, %p230
      %p232 = scmp.ne.s32.totalorder %s224, %s226
      %p233 = scmp.eq.s32.totalorder %s27, 1
      %p234 = por %p232, %p233
      %p235 = scmp.ne.s32.totalorder %s226, %s227
      %p236 = scmp.eq.s32.totalorder %s27, 0
      %p237 = por %p235, %p236
      %p238 = scmp.ne.s32.totalorder %s226, %s227
      %p239 = scmp.eq.s32.totalorder %s28, 1
      %p240 = por %p238, %p239
      %p242 = scmp.ne.s32.totalorder %s227, %s241
      %p243 = scmp.eq.s32.totalorder %s28, 0
      %p244 = por %p242, %p243
      %s246 = sadd.s32 %s245, 1
      %p249 = scmp.eq.s32.totalorder %s22, 1
      %p250 = scmp.ne.s32.totalorder %s245, %s247
      %p251 = scmp.eq.s32.totalorder %s22, 0
      %p252 = por %p250, %p251
      %p253 = scmp.ne.s32.totalorder %s245, %s247
      %p254 = scmp.eq.s32.totalorder %s27, 1
      %p255 = por %p253, %p254
      %p256 = scmp.ne.s32.totalorder %s247, %s248
      %p257 = scmp.eq.s32.totalorder %s27, 0
      %p258 = por %p256, %p257
      %p259 = scmp.ne.s32.totalorder %s247, %s248
      %p260 = scmp.eq.s32.totalorder %s28, 1
      %p261 = por %p259, %p260
      %p263 = scmp.ne.s32.totalorder %s248, %s262
      %p264 = scmp.eq.s32.totalorder %s28, 0
      %p265 = por %p263, %p264
      %s267 = sadd.s32 %s266, 1
      %p270 = scmp.eq.s32.totalorder %s22, 1
      %p271 = scmp.ne.s32.totalorder %s266, %s268
      %p272 = scmp.eq.s32.totalorder %s22, 0
      %p273 = por %p271, %p272
      %p274 = scmp.ne.s32.totalorder %s266, %s268
      %p275 = scmp.eq.s32.totalorder %s27, 1
      %p276 = por %p274, %p275
      %p277 = scmp.ne.s32.totalorder %s268, %s269
      %p278 = scmp.eq.s32.totalorder %s27, 0
      %p279 = por %p277, %p278
      %p280 = scmp.ne.s32.totalorder %s268, %s269
      %p281 = scmp.eq.s32.totalorder %s28, 1
      %p282 = por %p280, %p281
      %p284 = scmp.ne.s32.totalorder %s269, %s283
      %p285 = scmp.eq.s32.totalorder %s28, 0
      %p286 = por %p284, %p285
      %s288 = sadd.s32 %s287, 1
      %p291 = scmp.eq.s32.totalorder %s22, 1
      %p292 = scmp.ne.s32.totalorder %s287, %s289
      %p293 = scmp.eq.s32.totalorder %s22, 0
      %p294 = por %p292, %p293
      %p295 = scmp.ne.s32.totalorder %s287, %s289
      %p296 = scmp.eq.s32.totalorder %s27, 1
      %p297 = por %p295, %p296
      %p298 = scmp.ne.s32.totalorder %s289, %s290
      %p299 = scmp.eq.s32.totalorder %s27, 0
      %p300 = por %p298, %p299
      %p301 = scmp.ne.s32.totalorder %s289, %s290
      %p302 = scmp.eq.s32.totalorder %s28, 1
      %p303 = por %p301, %p302
      %p305 = scmp.ne.s32.totalorder %s290, %s304
      %p306 = scmp.eq.s32.totalorder %s28, 0
      %p307 = por %p305, %p306
      %s308 = ssub.s32 %s22, %s29
      %p309 = scmp.eq.s32.totalorder %s308, 0
      %s311 = sadd.s32 %s310, 1
      %s312 = scalar_select %p309, %s310, %s311
      %p315 = pneg %p309
      %p316 = scmp.eq.s32.totalorder %s22, 1
      %p317 = por %p315, %p316
      %p318 = scmp.ne.s32.totalorder %s310, %s313
      %p319 = scmp.eq.s32.totalorder %s22, 0
      %p320 = por %p318, %p319
      %p321 = scmp.ne.s32.totalorder %s310, %s313
      %p322 = scmp.eq.s32.totalorder %s27, 1
      %p323 = por %p321, %p322
      %p324 = scmp.ne.s32.totalorder %s313, %s314
      %p325 = scmp.eq.s32.totalorder %s27, 0
      %p326 = por %p324, %p325
      %p327 = scmp.ne.s32.totalorder %s313, %s314
      %p328 = scmp.eq.s32.totalorder %s28, 1
      %p329 = por %p327, %p328
      %p331 = scmp.ne.s32.totalorder %s314, %s330
      %p332 = scmp.eq.s32.totalorder %s28, 0
      %p333 = por %p331, %p332
      %p334 = scmp.le.s32.totalorder 1, %s22
      %p335 = scmp.lt.s32.totalorder %s22, 3
      %p336 = pnand %p334, %p335
      %p337 = pneg %p336
      // Predicated region
      $region9: #{lenet_forward.1} parent=5 // pred_check
        _
      $region10: #{lenet_forward.1} parent=5 // pred_check_branch
        %339 = sbr.rel (%p336) target = $region12
      $region11: #{lenet_forward.1} parent=5 // pred_region
        %s340 = ssub.s32 %s22, 1
        // Predicated region
        $region13: #{lenet_forward.1} parent=11 // pred_check
          %p341 = pneg %p69
        $region14: #{lenet_forward.1} parent=11 // pred_check_branch
          %343 = sbr.rel (%p341) target = $region16
        $region15: #{lenet_forward.1} parent=11 // pred_region
          _
        $region16: #{lenet_forward.1} parent=11 // pred_fallthru
          _
        // Predicated region
        $region17: #{lenet_forward.1} parent=11 // pred_check
          %p344 = pneg %p90
        $region18: #{lenet_forward.1} parent=11 // pred_check_branch
          %346 = sbr.rel (%p344) target = $region20
        $region19: #{lenet_forward.1} parent=11 // pred_region
          _
        $region20: #{lenet_forward.1} parent=11 // pred_fallthru
          _
        // Predicated region
        $region21: #{lenet_forward.1} parent=11 // pred_check
          %p347 = pneg %p111
        $region22: #{lenet_forward.1} parent=11 // pred_check_branch
          %349 = sbr.rel (%p347) target = $region24
        $region23: #{lenet_forward.1} parent=11 // pred_region
          _
        $region24: #{lenet_forward.1} parent=11 // pred_fallthru
          _
        // Predicated region
        $region25: #{lenet_forward.1} parent=11 // pred_check
          %p350 = pneg %p132
        $region26: #{lenet_forward.1} parent=11 // pred_check_branch
          %352 = sbr.rel (%p350) target = $region28
        $region27: #{lenet_forward.1} parent=11 // pred_region
          _
        $region28: #{lenet_forward.1} parent=11 // pred_fallthru
          _
        // Predicated region
        $region29: #{lenet_forward.1} parent=11 // pred_check
          %p353 = pneg %p153
        $region30: #{lenet_forward.1} parent=11 // pred_check_branch
          %355 = sbr.rel (%p353) target = $region32
        $region31: #{lenet_forward.1} parent=11 // pred_region
          _
        $region32: #{lenet_forward.1} parent=11 // pred_fallthru
          _
        // Predicated region
        $region33: #{lenet_forward.1} parent=11 // pred_check
          %p356 = pneg %p174
        $region34: #{lenet_forward.1} parent=11 // pred_check_branch
          %358 = sbr.rel (%p356) target = $region36
        $region35: #{lenet_forward.1} parent=11 // pred_region
          _
        $region36: #{lenet_forward.1} parent=11 // pred_fallthru
          _
        // Predicated region
        $region37: #{lenet_forward.1} parent=11 // pred_check
          %p359 = pneg %p195
        $region38: #{lenet_forward.1} parent=11 // pred_check_branch
          %361 = sbr.rel (%p359) target = $region40
        $region39: #{lenet_forward.1} parent=11 // pred_region
          _
        $region40: #{lenet_forward.1} parent=11 // pred_fallthru
          _
        // Predicated region
        $region41: #{lenet_forward.1} parent=11 // pred_check
          %p362 = pneg %p216
        $region42: #{lenet_forward.1} parent=11 // pred_check_branch
          %364 = sbr.rel (%p362) target = $region44
        $region43: #{lenet_forward.1} parent=11 // pred_region
          _
        $region44: #{lenet_forward.1} parent=11 // pred_fallthru
          _
        // Predicated region
        $region45: #{lenet_forward.1} parent=11 // pred_check
          %p365 = pneg %p237
        $region46: #{lenet_forward.1} parent=11 // pred_check_branch
          %367 = sbr.rel (%p365) target = $region48
        $region47: #{lenet_forward.1} parent=11 // pred_region
          _
        $region48: #{lenet_forward.1} parent=11 // pred_fallthru
          _
        // Predicated region
        $region49: #{lenet_forward.1} parent=11 // pred_check
          %p368 = pneg %p258
        $region50: #{lenet_forward.1} parent=11 // pred_check_branch
          %370 = sbr.rel (%p368) target = $region52
        $region51: #{lenet_forward.1} parent=11 // pred_region
          _
        $region52: #{lenet_forward.1} parent=11 // pred_fallthru
          _
        // Predicated region
        $region53: #{lenet_forward.1} parent=11 // pred_check
          %p371 = pneg %p279
        $region54: #{lenet_forward.1} parent=11 // pred_check_branch
          %373 = sbr.rel (%p371) target = $region56
        $region55: #{lenet_forward.1} parent=11 // pred_region
          _
        $region56: #{lenet_forward.1} parent=11 // pred_fallthru
          _
        // Predicated region
        $region57: #{lenet_forward.1} parent=11 // pred_check
          %p374 = pneg %p300
        $region58: #{lenet_forward.1} parent=11 // pred_check_branch
          %376 = sbr.rel (%p374) target = $region60
        $region59: #{lenet_forward.1} parent=11 // pred_region
          _
        $region60: #{lenet_forward.1} parent=11 // pred_fallthru
          _
      $region12: #{lenet_forward.1} parent=5 // pred_fallthru
        _
      %p377 = scmp.lt.s32.totalorder %s22, 2
      // Predicated region
      $region61: #{lenet_forward.1} parent=5 // pred_check
        %p378 = pneg %p377
      $region62: #{lenet_forward.1} parent=5 // pred_check_branch
        %380 = sbr.rel (%p378) target = $region64
      $region63: #{lenet_forward.1} parent=5 // pred_region
        // Predicated region
        $region65: #{lenet_forward.1} parent=63 // pred_check
          %p381 = pneg %p42
        $region66: #{lenet_forward.1} parent=63 // pred_check_branch
          %383 = sbr.rel (%p381) target = $region68
        $region67: #{lenet_forward.1} parent=63 // pred_region
          %p384 = scmp.lt.s32.totalorder %s22, 1
          %s385 = scalar_select %p384, %s22, 1
          %s386 = smul.addr %s385, 8
          %s387 = smul.addr %s386, 4
          %s388 = scalar_lea.vmem %s0, %s387
        $region68: #{lenet_forward.1} parent=63 // pred_fallthru
          _
      $region64: #{lenet_forward.1} parent=5 // pred_fallthru
        _
      %p389 = scmp.le.s32.totalorder 1, %s22
      %p390 = scmp.lt.s32.totalorder %s22, 3
      %p391 = pnand %p389, %p390
      %p392 = pneg %p391
      // Predicated region
      $region69: #{lenet_forward.1} parent=5 // pred_check
        _
      $region70: #{lenet_forward.1} parent=5 // pred_check_branch
        %394 = sbr.rel (%p391) target = $region72
      $region71: #{lenet_forward.1} parent=5 // pred_region
        %s395 = ssub.s32 %s22, 1
        %p396 = scmp.lt.s32.totalorder %s27, 1
        %s397 = scalar_select %p396, %s27, 1
        %s398 = smul.addr %s397, 8
        %s399 = smul.addr %s398, 4
        %s400 = scalar_lea.vmem %s0, %s399
        %p401 = pneg %p48
        %p402 = pneg %p45
        %p403 = pneg %p69
        %p404 = pneg %p66
        %p405 = pneg %p90
        %p406 = pneg %p87
        %p407 = pneg %p111
        %p408 = pneg %p108
        %p409 = pneg %p132
        %p410 = pneg %p129
        %p411 = pneg %p153
        %p412 = pneg %p150
        %p413 = pneg %p174
        %p414 = pneg %p171
        %p415 = pneg %p195
        %p416 = pneg %p192
        %p417 = pneg %p216
        %p418 = pneg %p213
        %p419 = pneg %p237
        %p420 = pneg %p234
        %p421 = pneg %p258
        %p422 = pneg %p255
        %p423 = pneg %p279
        %p424 = pneg %p276
        %p425 = pneg %p300
        %p426 = pneg %p297
        %p427 = pneg %p326
        %p428 = pneg %p323
        %s429 = sand.u32 %s313, 1
        %s430 = scalar_lea.sflag [#allocation10], %s429
        %s431 = sand.u32 %s313, 1
        %s432 = scalar_lea.vmem [#allocation9], %s431
        %p433 = scmp.lt.s32.totalorder %s27, 1
        %s434 = scalar_select %p433, %s27, 1
        %s435 = smul.addr %s434, 8
        %s436 = smul.addr %s435, 4
        %s437 = scalar_lea.vmem %s0, %s436
        %v438 = vld [vmem:[%s437] sm:$0x77]
        %v439 = vld [vmem:[%s437 + $0x8] sm:$0x77]
        %v440 = vld [vmem:[%s437 + $0x10] sm:$0x77]
        %v441 = vld [vmem:[%s437 + $0x18] sm:$0x7]
        %v445 = vcombine.high %v438, %v438
        %v446 = vcombine.high %v439, %v439
        %v447 = vcombine.high %v440, %v440
        %451 = vst [vmem:[#allocation2] sm:$0x7] %v438
        %452 = vst [vmem:[#allocation2 + $0x8] sm:$0x7] %v445
        %453 = vst [vmem:[#allocation2 + $0x10] sm:$0x7] %v439
        %454 = vst [vmem:[#allocation2 + $0x18] sm:$0x7] %v446
        %455 = vst [vmem:[#allocation2 + $0x20] sm:$0x7] %v440
        %456 = vst [vmem:[#allocation2 + $0x28] sm:$0x7] %v447
        %vm457 = vcmask 1009664
        %458 = vst.msk [vmem:[#allocation2 + $0x30] sm:$0x7] %vm457, %v441
        %v459 = vld [vmem:[%s437] sm:$0x77]
        %v460 = vld [vmem:[%s437 + $0x8] sm:$0x77]
        %v461 = vld [vmem:[%s437 + $0x10] sm:$0x77]
        %v462 = vld [vmem:[%s437 + $0x18] sm:$0x7]
        %v467 = vcombine.high %v459, %v459
        %v468 = vcombine.high %v460, %v460
        %v469 = vcombine.high %v461, %v461
        %v470 = vrot.slane %v459, 5
        %v471 = vrot.slane %v467, 5
        %v472 = vrot.slane %v460, 5
        %v473 = vrot.slane %v468, 5
        %v474 = vrot.slane %v461, 5
        %v475 = vrot.slane %v469, 5
        %v476 = vrot.slane %v462, 5
        %477 = vrot.lane.b32.xlu0 %v470, 127
        %v478 = vpop.permute.xlu0 %477
        %479 = vrot.lane.b32.xlu0 %v471, 127
        %v480 = vpop.permute.xlu0 %479
        %481 = vrot.lane.b32.xlu0 %v472, 127
        %v482 = vpop.permute.xlu0 %481
        %483 = vrot.lane.b32.xlu0 %v473, 127
        %v484 = vpop.permute.xlu0 %483
        %485 = vrot.lane.b32.xlu0 %v474, 127
        %v486 = vpop.permute.xlu0 %485
        %487 = vrot.lane.b32.xlu0 %v475, 127
        %v488 = vpop.permute.xlu0 %487
        %489 = vrot.lane.b32.xlu0 %v476, 127
        %v490 = vpop.permute.xlu0 %489
        %vm491 = vcmask 1039360
        %v492 = vsel %vm491, %v478, %v480
        %v493 = vsel %vm491, %v480, %v482
        %v494 = vsel %vm491, %v482, %v484
        %v495 = vsel %vm491, %v484, %v486
        %v496 = vsel %vm491, %v486, %v488
        %v497 = vsel %vm491, %v488, %v490
        %505 = vst [vmem:[#allocation2] sm:$0x38] %v492
        %506 = vst [vmem:[#allocation2 + $0x8] sm:$0x38] %v493
        %507 = vst [vmem:[#allocation2 + $0x10] sm:$0x38] %v494
        %508 = vst [vmem:[#allocation2 + $0x18] sm:$0x38] %v495
        %509 = vst [vmem:[#allocation2 + $0x20] sm:$0x38] %v496
        %510 = vst [vmem:[#allocation2 + $0x28] sm:$0x38] %v497
        %vm511 = vcmask 1012739
        %512 = vst.msk [vmem:[#allocation2 + $0x30] sm:$0x38] %vm511, %v490
        %v513 = vld [vmem:[%s437] sm:$0x77]
        %v514 = vld [vmem:[%s437 + $0x8] sm:$0x77]
        %v515 = vld [vmem:[%s437 + $0x10] sm:$0x77]
        %v516 = vld [vmem:[%s437 + $0x18] sm:$0x7]
        %v521 = vcombine.high %v513, %v513
        %v522 = vcombine.high %v514, %v514
        %v523 = vcombine.high %v515, %v515
        %v524 = vrot.slane %v513, 2
        %v525 = vrot.slane %v521, 2
        %v526 = vrot.slane %v514, 2
        %v527 = vrot.slane %v522, 2
        %v528 = vrot.slane %v515, 2
        %v529 = vrot.slane %v523, 2
        %v530 = vrot.slane %v516, 2
        %531 = vrot.lane.b32.xlu0 %v524, 126
        %v532 = vpop.permute.xlu0 %531
        %533 = vrot.lane.b32.xlu0 %v525, 126
        %v534 = vpop.permute.xlu0 %533
        %535 = vrot.lane.b32.xlu0 %v526, 126
        %v536 = vpop.permute.xlu0 %535
        %537 = vrot.lane.b32.xlu0 %v527, 126
        %v538 = vpop.permute.xlu0 %537
        %539 = vrot.lane.b32.xlu0 %v528, 126
        %v540 = vpop.permute.xlu0 %539
        %541 = vrot.lane.b32.xlu0 %v529, 126
        %v542 = vpop.permute.xlu0 %541
        %543 = vrot.lane.b32.xlu0 %v530, 126
        %v544 = vpop.permute.xlu0 %543
        %vm545 = vcmask 1031168
        %v546 = vsel %vm545, %v532, %v534
        %v547 = vsel %vm545, %v534, %v536
        %v548 = vsel %vm545, %v536, %v538
        %v549 = vsel %vm545, %v538, %v540
        %v550 = vsel %vm545, %v540, %v542
        %v551 = vsel %vm545, %v542, %v544
        %559 = vst [vmem:[#allocation2] sm:$0xc0] %v546
        %560 = vst [vmem:[#allocation2 + $0x8] sm:$0xc0] %v547
        %561 = vst [vmem:[#allocation2 + $0x10] sm:$0xc0] %v548
        %562 = vst [vmem:[#allocation2 + $0x18] sm:$0xc0] %v549
        %563 = vst [vmem:[#allocation2 + $0x20] sm:$0xc0] %v550
        %564 = vst [vmem:[#allocation2 + $0x28] sm:$0xc0] %v551
        %vm565 = vcmask 1014790
        %566 = vst.msk [vmem:[#allocation2 + $0x30] sm:$0xc0] %vm565, %v544
        %567 = vst [vmem:[#allocation2 + $0x38] sm:$0x1] %v546
        %568 = vst [vmem:[#allocation2 + $0x40] sm:$0x1] %v547
        %569 = vst [vmem:[#allocation2 + $0x48] sm:$0x1] %v548
        %570 = vst [vmem:[#allocation2 + $0x50] sm:$0x1] %v549
        %571 = vst [vmem:[#allocation2 + $0x58] sm:$0x1] %v550
        %572 = vst [vmem:[#allocation2 + $0x60] sm:$0x1] %v551
        %vm573 = vcmask 1007616
        %574 = vst.msk [vmem:[#allocation2 + $0x68] sm:$0x1] %vm573, %v544
        %v575 = vld [vmem:[%s437] sm:$0x77]
        %v576 = vld [vmem:[%s437 + $0x8] sm:$0x77]
        %v577 = vld [vmem:[%s437 + $0x10] sm:$0x77]
        %v578 = vld [vmem:[%s437 + $0x18] sm:$0x7]
        %v583 = vcombine.high %v575, %v575
        %v584 = vcombine.high %v576, %v576
        %v585 = vcombine.high %v577, %v577
        %v586 = vrot.slane %v575, 7
        %v587 = vrot.slane %v583, 7
        %v588 = vrot.slane %v576, 7
        %v589 = vrot.slane %v584, 7
        %v590 = vrot.slane %v577, 7
        %v591 = vrot.slane %v585, 7
        %v592 = vrot.slane %v578, 7
        %593 = vrot.lane.b32.xlu0 %v586, 125
        %v594 = vpop.permute.xlu0 %593
        %595 = vrot.lane.b32.xlu0 %v587, 125
        %v596 = vpop.permute.xlu0 %595
        %597 = vrot.lane.b32.xlu0 %v588, 125
        %v598 = vpop.permute.xlu0 %597
        %599 = vrot.lane.b32.xlu0 %v589, 125
        %v600 = vpop.permute.xlu0 %599
        %601 = vrot.lane.b32.xlu0 %v590, 125
        %v602 = vpop.permute.xlu0 %601
        %603 = vrot.lane.b32.xlu0 %v591, 125
        %v604 = vpop.permute.xlu0 %603
        %605 = vrot.lane.b32.xlu0 %v592, 125
        %v606 = vpop.permute.xlu0 %605
        %vm607 = vcmask 1022976
        %v608 = vsel %vm607, %v594, %v596
        %v609 = vsel %vm607, %v596, %v598
        %v610 = vsel %vm607, %v598, %v600
        %v611 = vsel %vm607, %v600, %v602
        %v612 = vsel %vm607, %v602, %v604
        %v613 = vsel %vm607, %v604, %v606
        %621 = vst [vmem:[#allocation2 + $0x38] sm:$0xe] %v608
        %622 = vst [vmem:[#allocation2 + $0x40] sm:$0xe] %v609
        %623 = vst [vmem:[#allocation2 + $0x48] sm:$0xe] %v610
        %624 = vst [vmem:[#allocation2 + $0x50] sm:$0xe] %v611
        %625 = vst [vmem:[#allocation2 + $0x58] sm:$0xe] %v612
        %626 = vst [vmem:[#allocation2 + $0x60] sm:$0xe] %v613
        %vm627 = vcmask 1010689
        %628 = vst.msk [vmem:[#allocation2 + $0x68] sm:$0xe] %vm627, %v606
        %v629 = vld [vmem:[%s437] sm:$0x77]
        %v630 = vld [vmem:[%s437 + $0x8] sm:$0x77]
        %v631 = vld [vmem:[%s437 + $0x10] sm:$0x77]
        %v632 = vld [vmem:[%s437 + $0x18] sm:$0x7]
        %v637 = vcombine.low %v629, %v629
        %v638 = vcombine.low %v630, %v630
        %v639 = vcombine.low %v631, %v631
        %v640 = vcombine.low %v632, %v632
        %641 = vrot.lane.b32.xlu0 %v637, 124
        %v642 = vpop.permute.xlu0 %641
        %643 = vrot.lane.b32.xlu0 %v629, 124
        %v644 = vpop.permute.xlu0 %643
        %645 = vrot.lane.b32.xlu0 %v638, 124
        %v646 = vpop.permute.xlu0 %645
        %647 = vrot.lane.b32.xlu0 %v630, 124
        %v648 = vpop.permute.xlu0 %647
        %649 = vrot.lane.b32.xlu0 %v639, 124
        %v650 = vpop.permute.xlu0 %649
        %651 = vrot.lane.b32.xlu0 %v631, 124
        %v652 = vpop.permute.xlu0 %651
        %653 = vrot.lane.b32.xlu0 %v640, 124
        %v654 = vpop.permute.xlu0 %653
        %vm655 = vcmask 1014784
        %v656 = vsel %vm655, %v642, %v644
        %v657 = vsel %vm655, %v644, %v646
        %v658 = vsel %vm655, %v646, %v648
        %v659 = vsel %vm655, %v648, %v650
        %v660 = vsel %vm655, %v650, %v652
        %v661 = vsel %vm655, %v652, %v654
        %669 = vst [vmem:[#allocation2 + $0x38] sm:$0x70] %v656
        %670 = vst [vmem:[#allocation2 + $0x40] sm:$0x70] %v657
        %671 = vst [vmem:[#allocation2 + $0x48] sm:$0x70] %v658
        %672 = vst [vmem:[#allocation2 + $0x50] sm:$0x70] %v659
        %673 = vst [vmem:[#allocation2 + $0x58] sm:$0x70] %v660
        %674 = vst [vmem:[#allocation2 + $0x60] sm:$0x70] %v661
        %vm675 = vcmask 1013764
        %676 = vst.msk [vmem:[#allocation2 + $0x68] sm:$0x70] %vm675, %v654
        %v677 = vld [vmem:[%s437] sm:$0x77]
        %v678 = vld [vmem:[%s437 + $0x8] sm:$0x77]
        %v679 = vld [vmem:[%s437 + $0x10] sm:$0x77]
        %v680 = vld [vmem:[%s437 + $0x18] sm:$0x77]
        %v685 = vcombine.high %v677, %v677
        %v686 = vcombine.high %v678, %v678
        %v687 = vcombine.high %v679, %v679
        %v688 = vcombine.high %v680, %v680
        %v689 = vrot.slane %v677, 1
        %v690 = vrot.slane %v685, 1
        %v691 = vrot.slane %v678, 1
        %v692 = vrot.slane %v686, 1
        %v693 = vrot.slane %v679, 1
        %v694 = vrot.slane %v687, 1
        %v695 = vrot.slane %v680, 1
        %v696 = vrot.slane %v688, 1
        %697 = vrot.lane.b32.xlu0 %v689, 96
        %v698 = vpop.permute.xlu0 %697
        %699 = vrot.lane.b32.xlu0 %v690, 96
        %v700 = vpop.permute.xlu0 %699
        %701 = vrot.lane.b32.xlu0 %v691, 96
        %v702 = vpop.permute.xlu0 %701
        %703 = vrot.lane.b32.xlu0 %v692, 96
        %v704 = vpop.permute.xlu0 %703
        %705 = vrot.lane.b32.xlu0 %v693, 96
        %v706 = vpop.permute.xlu0 %705
        %707 = vrot.lane.b32.xlu0 %v694, 96
        %v708 = vpop.permute.xlu0 %707
        %709 = vrot.lane.b32.xlu0 %v695, 96
        %v710 = vpop.permute.xlu0 %709
        %711 = vrot.lane.b32.xlu0 %v696, 96
        %v712 = vpop.permute.xlu0 %711
        %vm713 = vcmask 785408
        %v714 = vsel %vm713, %v698, %v700
        %v715 = vsel %vm713, %v700, %v702
        %v716 = vsel %vm713, %v702, %v704
        %v717 = vsel %vm713, %v704, %v706
        %v718 = vsel %vm713, %v706, %v708
        %v719 = vsel %vm713, %v708, %v710
        %v720 = vsel %vm713, %v710, %v712
        %728 = vst [vmem:[#allocation2 + $0x38] sm:$0x80] %v714
        %729 = vst [vmem:[#allocation2 + $0x40] sm:$0x80] %v715
        %730 = vst [vmem:[#allocation2 + $0x48] sm:$0x80] %v716
        %731 = vst [vmem:[#allocation2 + $0x50] sm:$0x80] %v717
        %732 = vst [vmem:[#allocation2 + $0x58] sm:$0x80] %v718
        %733 = vst [vmem:[#allocation2 + $0x60] sm:$0x80] %v719
        %vm734 = vcmask 1014791
        %735 = vst.msk [vmem:[#allocation2 + $0x68] sm:$0x80] %vm734, %v720
        %736 = vst [vmem:[#allocation2 + $0x70] sm:$0x3] %v714
        %737 = vst [vmem:[#allocation2 + $0x78] sm:$0x3] %v715
        %738 = vst [vmem:[#allocation2 + $0x80] sm:$0x3] %v716
        %739 = vst [vmem:[#allocation2 + $0x88] sm:$0x3] %v717
        %740 = vst [vmem:[#allocation2 + $0x90] sm:$0x3] %v718
        %741 = vst [vmem:[#allocation2 + $0x98] sm:$0x3] %v719
        %vm742 = vcmask 1008640
        %743 = vst.msk [vmem:[#allocation2 + $0xa0] sm:$0x3] %vm742, %v720
        %v744 = vld [vmem:[%s437] sm:$0x77]
        %v745 = vld [vmem:[%s437 + $0x8] sm:$0x77]
        %v746 = vld [vmem:[%s437 + $0x10] sm:$0x77]
        %v747 = vld [vmem:[%s437 + $0x18] sm:$0x77]
        %v752 = vcombine.high %v744, %v744
        %v753 = vcombine.high %v745, %v745
        %v754 = vcombine.high %v746, %v746
        %v755 = vcombine.high %v747, %v747
        %v756 = vrot.slane %v744, 6
        %v757 = vrot.slane %v752, 6
        %v758 = vrot.slane %v745, 6
        %v759 = vrot.slane %v753, 6
        %v760 = vrot.slane %v746, 6
        %v761 = vrot.slane %v754, 6
        %v762 = vrot.slane %v747, 6
        %v763 = vrot.slane %v755, 6
        %764 = vrot.lane.b32.xlu0 %v756, 95
        %v765 = vpop.permute.xlu0 %764
        %766 = vrot.lane.b32.xlu0 %v757, 95
        %v767 = vpop.permute.xlu0 %766
        %768 = vrot.lane.b32.xlu0 %v758, 95
        %v769 = vpop.permute.xlu0 %768
        %770 = vrot.lane.b32.xlu0 %v759, 95
        %v771 = vpop.permute.xlu0 %770
        %772 = vrot.lane.b32.xlu0 %v760, 95
        %v773 = vpop.permute.xlu0 %772
        %774 = vrot.lane.b32.xlu0 %v761, 95
        %v775 = vpop.permute.xlu0 %774
        %776 = vrot.lane.b32.xlu0 %v762, 95
        %v777 = vpop.permute.xlu0 %776
        %778 = vrot.lane.b32.xlu0 %v763, 95
        %v779 = vpop.permute.xlu0 %778
        %vm780 = vcmask 777216
        %v781 = vsel %vm780, %v765, %v767
        %v782 = vsel %vm780, %v767, %v769
        %v783 = vsel %vm780, %v769, %v771
        %v784 = vsel %vm780, %v771, %v773
        %v785 = vsel %vm780, %v773, %v775
        %v786 = vsel %vm780, %v775, %v777
        %v787 = vsel %vm780, %v777, %v779
        %795 = vst [vmem:[#allocation2 + $0x70] sm:$0x1c] %v781
        %796 = vst [vmem:[#allocation2 + $0x78] sm:$0x1c] %v782
        %797 = vst [vmem:[#allocation2 + $0x80] sm:$0x1c] %v783
        %798 = vst [vmem:[#allocation2 + $0x88] sm:$0x1c] %v784
        %799 = vst [vmem:[#allocation2 + $0x90] sm:$0x1c] %v785
        %800 = vst [vmem:[#allocation2 + $0x98] sm:$0x1c] %v786
        %vm801 = vcmask 1011714
        %802 = vst.msk [vmem:[#allocation2 + $0xa0] sm:$0x1c] %vm801, %v787
        %v803 = vld [vmem:[%s437] sm:$0x77]
        %v804 = vld [vmem:[%s437 + $0x8] sm:$0x77]
        %v805 = vld [vmem:[%s437 + $0x10] sm:$0x77]
        %v806 = vld [vmem:[%s437 + $0x18] sm:$0x77]
        %v811 = vcombine.high %v803, %v803
        %v812 = vcombine.high %v804, %v804
        %v813 = vcombine.high %v805, %v805
        %v814 = vcombine.high %v806, %v806
        %v815 = vrot.slane %v803, 3
        %v816 = vrot.slane %v811, 3
        %v817 = vrot.slane %v804, 3
        %v818 = vrot.slane %v812, 3
        %v819 = vrot.slane %v805, 3
        %v820 = vrot.slane %v813, 3
        %v821 = vrot.slane %v806, 3
        %v822 = vrot.slane %v814, 3
        %823 = vrot.lane.b32.xlu0 %v815, 94
        %v824 = vpop.permute.xlu0 %823
        %825 = vrot.lane.b32.xlu0 %v816, 94
        %v826 = vpop.permute.xlu0 %825
        %827 = vrot.lane.b32.xlu0 %v817, 94
        %v828 = vpop.permute.xlu0 %827
        %829 = vrot.lane.b32.xlu0 %v818, 94
        %v830 = vpop.permute.xlu0 %829
        %831 = vrot.lane.b32.xlu0 %v819, 94
        %v832 = vpop.permute.xlu0 %831
        %833 = vrot.lane.b32.xlu0 %v820, 94
        %v834 = vpop.permute.xlu0 %833
        %835 = vrot.lane.b32.xlu0 %v821, 94
        %v836 = vpop.permute.xlu0 %835
        %837 = vrot.lane.b32.xlu0 %v822, 94
        %v838 = vpop.permute.xlu0 %837
        %vm839 = vcmask 769024
        %v840 = vsel %vm839, %v824, %v826
        %v841 = vsel %vm839, %v826, %v828
        %v842 = vsel %vm839, %v828, %v830
        %v843 = vsel %vm839, %v830, %v832
        %v844 = vsel %vm839, %v832, %v834
        %v845 = vsel %vm839, %v834, %v836
        %v846 = vsel %vm839, %v836, %v838
        %854 = vst [vmem:[#allocation2 + $0x70] sm:$0xe0] %v840
        %855 = vst [vmem:[#allocation2 + $0x78] sm:$0xe0] %v841
        %856 = vst [vmem:[#allocation2 + $0x80] sm:$0xe0] %v842
        %857 = vst [vmem:[#allocation2 + $0x88] sm:$0xe0] %v843
        %858 = vst [vmem:[#allocation2 + $0x90] sm:$0xe0] %v844
        %859 = vst [vmem:[#allocation2 + $0x98] sm:$0xe0] %v845
        %vm860 = vcmask 1014789
        %861 = vst.msk [vmem:[#allocation2 + $0xa0] sm:$0xe0] %vm860, %v846
        %v862 = vld [vmem:[%s437] sm:$0x77]
        %v863 = vld [vmem:[%s437 + $0x8] sm:$0x77]
        %v864 = vld [vmem:[%s437 + $0x10] sm:$0x77]
        %v865 = vld [vmem:[%s437 + $0x18] sm:$0x77]
        %v870 = vcombine.high %v862, %v862
        %v871 = vcombine.high %v863, %v863
        %v872 = vcombine.high %v864, %v864
        %v873 = vcombine.high %v865, %v865
        %874 = vrot.lane.b32.xlu0 %v862, 93
        %v875 = vpop.permute.xlu0 %874
        %876 = vrot.lane.b32.xlu0 %v870, 93
        %v877 = vpop.permute.xlu0 %876
        %878 = vrot.lane.b32.xlu0 %v863, 93
        %v879 = vpop.permute.xlu0 %878
        %880 = vrot.lane.b32.xlu0 %v871, 93
        %v881 = vpop.permute.xlu0 %880
        %882 = vrot.lane.b32.xlu0 %v864, 93
        %v883 = vpop.permute.xlu0 %882
        %884 = vrot.lane.b32.xlu0 %v872, 93
        %v885 = vpop.permute.xlu0 %884
        %886 = vrot.lane.b32.xlu0 %v865, 93
        %v887 = vpop.permute.xlu0 %886
        %888 = vrot.lane.b32.xlu0 %v873, 93
        %v889 = vpop.permute.xlu0 %888
        %vm890 = vcmask 760832
        %v891 = vsel %vm890, %v875, %v877
        %v892 = vsel %vm890, %v877, %v879
        %v893 = vsel %vm890, %v879, %v881
        %v894 = vsel %vm890, %v881, %v883
        %v895 = vsel %vm890, %v883, %v885
        %v896 = vsel %vm890, %v885, %v887
        %v897 = vsel %vm890, %v887, %v889
        %905 = vst [vmem:[#allocation2 + $0xa8] sm:$0x7] %v891
        %906 = vst [vmem:[#allocation2 + $0xb0] sm:$0x7] %v892
        %907 = vst [vmem:[#allocation2 + $0xb8] sm:$0x7] %v893
        %908 = vst [vmem:[#allocation2 + $0xc0] sm:$0x7] %v894
        %909 = vst [vmem:[#allocation2 + $0xc8] sm:$0x7] %v895
        %910 = vst [vmem:[#allocation2 + $0xd0] sm:$0x7] %v896
        %911 = vst.msk [vmem:[#allocation2 + $0xd8] sm:$0x7] %vm457, %v897
        %v912 = vld [vmem:[%s437] sm:$0x77]
        %v913 = vld [vmem:[%s437 + $0x8] sm:$0x77]
        %v914 = vld [vmem:[%s437 + $0x10] sm:$0x77]
        %v915 = vld [vmem:[%s437 + $0x18] sm:$0x77]
        %v920 = vcombine.high %v912, %v912
        %v921 = vcombine.high %v913, %v913
        %v922 = vcombine.high %v914, %v914
        %v923 = vcombine.high %v915, %v915
        %v924 = vrot.slane %v912, 5
        %v925 = vrot.slane %v920, 5
        %v926 = vrot.slane %v913, 5
        %v927 = vrot.slane %v921, 5
        %v928 = vrot.slane %v914, 5
        %v929 = vrot.slane %v922, 5
        %v930 = vrot.slane %v915, 5
        %v931 = vrot.slane %v923, 5
        %932 = vrot.lane.b32.xlu0 %v924, 92
        %v933 = vpop.permute.xlu0 %932
        %934 = vrot.lane.b32.xlu0 %v925, 92
        %v935 = vpop.permute.xlu0 %934
        %936 = vrot.lane.b32.xlu0 %v926, 92
        %v937 = vpop.permute.xlu0 %936
        %938 = vrot.lane.b32.xlu0 %v927, 92
        %v939 = vpop.permute.xlu0 %938
        %940 = vrot.lane.b32.xlu0 %v928, 92
        %v941 = vpop.permute.xlu0 %940
        %942 = vrot.lane.b32.xlu0 %v929, 92
        %v943 = vpop.permute.xlu0 %942
        %944 = vrot.lane.b32.xlu0 %v930, 92
        %v945 = vpop.permute.xlu0 %944
        %946 = vrot.lane.b32.xlu0 %v931, 92
        %v947 = vpop.permute.xlu0 %946
        %vm948 = vcmask 752640
        %v949 = vsel %vm948, %v933, %v935
        %v950 = vsel %vm948, %v935, %v937
        %v951 = vsel %vm948, %v937, %v939
        %v952 = vsel %vm948, %v939, %v941
        %v953 = vsel %vm948, %v941, %v943
        %v954 = vsel %vm948, %v943, %v945
        %v955 = vsel %vm948, %v945, %v947
        %963 = vst [vmem:[#allocation2 + $0xa8] sm:$0x38] %v949
        %964 = vst [vmem:[#allocation2 + $0xb0] sm:$0x38] %v950
        %965 = vst [vmem:[#allocation2 + $0xb8] sm:$0x38] %v951
        %966 = vst [vmem:[#allocation2 + $0xc0] sm:$0x38] %v952
        %967 = vst [vmem:[#allocation2 + $0xc8] sm:$0x38] %v953
        %968 = vst [vmem:[#allocation2 + $0xd0] sm:$0x38] %v954
        %969 = vst.msk [vmem:[#allocation2 + $0xd8] sm:$0x38] %vm511, %v955
        %v970 = vld [vmem:[%s437] sm:$0x77]
        %v971 = vld [vmem:[%s437 + $0x8] sm:$0x77]
        %v972 = vld [vmem:[%s437 + $0x10] sm:$0x77]
        %v973 = vld [vmem:[%s437 + $0x18] sm:$0x77]
        %v978 = vcombine.high %v970, %v970
        %v979 = vcombine.high %v971, %v971
        %v980 = vcombine.high %v972, %v972
        %v981 = vcombine.high %v973, %v973
        %v982 = vrot.slane %v970, 2
        %v983 = vrot.slane %v978, 2
        %v984 = vrot.slane %v971, 2
        %v985 = vrot.slane %v979, 2
        %v986 = vrot.slane %v972, 2
        %v987 = vrot.slane %v980, 2
        %v988 = vrot.slane %v973, 2
        %v989 = vrot.slane %v981, 2
        %990 = vrot.lane.b32.xlu0 %v982, 64
        %v991 = vpop.permute.xlu0 %990
        %992 = vrot.lane.b32.xlu0 %v983, 64
        %v993 = vpop.permute.xlu0 %992
        %994 = vrot.lane.b32.xlu0 %v984, 64
        %v995 = vpop.permute.xlu0 %994
        %996 = vrot.lane.b32.xlu0 %v985, 64
        %v997 = vpop.permute.xlu0 %996
        %998 = vrot.lane.b32.xlu0 %v986, 64
        %v999 = vpop.permute.xlu0 %998
        %1000 = vrot.lane.b32.xlu0 %v987, 64
        %v1001 = vpop.permute.xlu0 %1000
        %1002 = vrot.lane.b32.xlu0 %v988, 64
        %v1003 = vpop.permute.xlu0 %1002
        %1004 = vrot.lane.b32.xlu0 %v989, 64
        %v1005 = vpop.permute.xlu0 %1004
        %vm1006 = vcmask 523264
        %v1007 = vsel %vm1006, %v991, %v993
        %v1008 = vsel %vm1006, %v993, %v995
        %v1009 = vsel %vm1006, %v995, %v997
        %v1010 = vsel %vm1006, %v997, %v999
        %v1011 = vsel %vm1006, %v999, %v1001
        %v1012 = vsel %vm1006, %v1001, %v1003
        %v1013 = vsel %vm1006, %v1003, %v1005
        %1021 = vst [vmem:[#allocation2 + $0xa8] sm:$0xc0] %v1007
        %1022 = vst [vmem:[#allocation2 + $0xb0] sm:$0xc0] %v1008
        %1023 = vst [vmem:[#allocation2 + $0xb8] sm:$0xc0] %v1009
        %1024 = vst [vmem:[#allocation2 + $0xc0] sm:$0xc0] %v1010
        %1025 = vst [vmem:[#allocation2 + $0xc8] sm:$0xc0] %v1011
        %1026 = vst [vmem:[#allocation2 + $0xd0] sm:$0xc0] %v1012
        %1027 = vst.msk [vmem:[#allocation2 + $0xd8] sm:$0xc0] %vm565, %v1013
        %1028 = vst [vmem:[#allocation2 + $0xe0] sm:$0x1] %v1007
        %1029 = vst [vmem:[#allocation2 + $0xe8] sm:$0x1] %v1008
        %1030 = vst [vmem:[#allocation2 + $0xf0] sm:$0x1] %v1009
        %1031 = vst [vmem:[#allocation2 + $0xf8] sm:$0x1] %v1010
        %1032 = vst [vmem:[#allocation2 + $0x100] sm:$0x1] %v1011
        %1033 = vst [vmem:[#allocation2 + $0x108] sm:$0x1] %v1012
        %1034 = vst.msk [vmem:[#allocation2 + $0x110] sm:$0x1] %vm573, %v1013
        %v1035 = vld [vmem:[%s437] sm:$0x77]
        %v1036 = vld [vmem:[%s437 + $0x8] sm:$0x77]
        %v1037 = vld [vmem:[%s437 + $0x10] sm:$0x77]
        %v1038 = vld [vmem:[%s437 + $0x18] sm:$0x77]
        %v1043 = vcombine.high %v1035, %v1035
        %v1044 = vcombine.high %v1036, %v1036
        %v1045 = vcombine.high %v1037, %v1037
        %v1046 = vcombine.high %v1038, %v1038
        %v1047 = vrot.slane %v1035, 7
        %v1048 = vrot.slane %v1043, 7
        %v1049 = vrot.slane %v1036, 7
        %v1050 = vrot.slane %v1044, 7
        %v1051 = vrot.slane %v1037, 7
        %v1052 = vrot.slane %v1045, 7
        %v1053 = vrot.slane %v1038, 7
        %v1054 = vrot.slane %v1046, 7
        %1055 = vrot.lane.b32.xlu0 %v1047, 63
        %v1056 = vpop.permute.xlu0 %1055
        %1057 = vrot.lane.b32.xlu0 %v1048, 63
        %v1058 = vpop.permute.xlu0 %1057
        %1059 = vrot.lane.b32.xlu0 %v1049, 63
        %v1060 = vpop.permute.xlu0 %1059
        %1061 = vrot.lane.b32.xlu0 %v1050, 63
        %v1062 = vpop.permute.xlu0 %1061
        %1063 = vrot.lane.b32.xlu0 %v1051, 63
        %v1064 = vpop.permute.xlu0 %1063
        %1065 = vrot.lane.b32.xlu0 %v1052, 63
        %v1066 = vpop.permute.xlu0 %1065
        %1067 = vrot.lane.b32.xlu0 %v1053, 63
        %v1068 = vpop.permute.xlu0 %1067
        %1069 = vrot.lane.b32.xlu0 %v1054, 63
        %v1070 = vpop.permute.xlu0 %1069
        %vm1071 = vcmask 515072
        %v1072 = vsel %vm1071, %v1056, %v1058
        %v1073 = vsel %vm1071, %v1058, %v1060
        %v1074 = vsel %vm1071, %v1060, %v1062
        %v1075 = vsel %vm1071, %v1062, %v1064
        %v1076 = vsel %vm1071, %v1064, %v1066
        %v1077 = vsel %vm1071, %v1066, %v1068
        %v1078 = vsel %vm1071, %v1068, %v1070
        %1086 = vst [vmem:[#allocation2 + $0xe0] sm:$0xe] %v1072
        %1087 = vst [vmem:[#allocation2 + $0xe8] sm:$0xe] %v1073
        %1088 = vst [vmem:[#allocation2 + $0xf0] sm:$0xe] %v1074
        %1089 = vst [vmem:[#allocation2 + $0xf8] sm:$0xe] %v1075
        %1090 = vst [vmem:[#allocation2 + $0x100] sm:$0xe] %v1076
        %1091 = vst [vmem:[#allocation2 + $0x108] sm:$0xe] %v1077
        %1092 = vst.msk [vmem:[#allocation2 + $0x110] sm:$0xe] %vm627, %v1078
        %v1093 = vld [vmem:[%s437] sm:$0x77]
        %v1094 = vld [vmem:[%s437 + $0x8] sm:$0x77]
        %v1095 = vld [vmem:[%s437 + $0x10] sm:$0x77]
        %v1096 = vld [vmem:[%s437 + $0x18] sm:$0x77]
        %v1101 = vcombine.low %v1093, %v1093
        %v1102 = vcombine.low %v1094, %v1094
        %v1103 = vcombine.low %v1095, %v1095
        %v1104 = vcombine.low %v1096, %v1096
        %1105 = vrot.lane.b32.xlu0 %v1101, 62
        %v1106 = vpop.permute.xlu0 %1105
        %1107 = vrot.lane.b32.xlu0 %v1093, 62
        %v1108 = vpop.permute.xlu0 %1107
        %1109 = vrot.lane.b32.xlu0 %v1102, 62
        %v1110 = vpop.permute.xlu0 %1109
        %1111 = vrot.lane.b32.xlu0 %v1094, 62
        %v1112 = vpop.permute.xlu0 %1111
        %1113 = vrot.lane.b32.xlu0 %v1103, 62
        %v1114 = vpop.permute.xlu0 %1113
        %1115 = vrot.lane.b32.xlu0 %v1095, 62
        %v1116 = vpop.permute.xlu0 %1115
        %1117 = vrot.lane.b32.xlu0 %v1104, 62
        %v1118 = vpop.permute.xlu0 %1117
        %1119 = vrot.lane.b32.xlu0 %v1096, 62
        %v1120 = vpop.permute.xlu0 %1119
        %vm1121 = vcmask 506880
        %v1122 = vsel %vm1121, %v1106, %v1108
        %v1123 = vsel %vm1121, %v1108, %v1110
        %v1124 = vsel %vm1121, %v1110, %v1112
        %v1125 = vsel %vm1121, %v1112, %v1114
        %v1126 = vsel %vm1121, %v1114, %v1116
        %v1127 = vsel %vm1121, %v1116, %v1118
        %v1128 = vsel %vm1121, %v1118, %v1120
        %1136 = vst [vmem:[#allocation2 + $0xe0] sm:$0x70] %v1122
        %1137 = vst [vmem:[#allocation2 + $0xe8] sm:$0x70] %v1123
        %1138 = vst [vmem:[#allocation2 + $0xf0] sm:$0x70] %v1124
        %1139 = vst [vmem:[#allocation2 + $0xf8] sm:$0x70] %v1125
        %1140 = vst [vmem:[#allocation2 + $0x100] sm:$0x70] %v1126
        %1141 = vst [vmem:[#allocation2 + $0x108] sm:$0x70] %v1127
        %1142 = vst.msk [vmem:[#allocation2 + $0x110] sm:$0x70] %vm675, %v1128
        %v1143 = vld [vmem:[%s437] sm:$0x77]
        %v1144 = vld [vmem:[%s437 + $0x8] sm:$0x77]
        %v1145 = vld [vmem:[%s437 + $0x10] sm:$0x77]
        %v1146 = vld [vmem:[%s437 + $0x18] sm:$0x77]
        %v1151 = vcombine.high %v1143, %v1143
        %v1152 = vcombine.high %v1144, %v1144
        %v1153 = vcombine.high %v1145, %v1145
        %v1154 = vcombine.high %v1146, %v1146
        %v1155 = vrot.slane %v1143, 1
        %v1156 = vrot.slane %v1151, 1
        %v1157 = vrot.slane %v1144, 1
        %v1158 = vrot.slane %v1152, 1
        %v1159 = vrot.slane %v1145, 1
        %v1160 = vrot.slane %v1153, 1
        %v1161 = vrot.slane %v1146, 1
        %v1162 = vrot.slane %v1154, 1
        %1163 = vrot.lane.b32.xlu0 %v1155, 61
        %v1164 = vpop.permute.xlu0 %1163
        %1165 = vrot.lane.b32.xlu0 %v1156, 61
        %v1166 = vpop.permute.xlu0 %1165
        %1167 = vrot.lane.b32.xlu0 %v1157, 61
        %v1168 = vpop.permute.xlu0 %1167
        %1169 = vrot.lane.b32.xlu0 %v1158, 61
        %v1170 = vpop.permute.xlu0 %1169
        %1171 = vrot.lane.b32.xlu0 %v1159, 61
        %v1172 = vpop.permute.xlu0 %1171
        %1173 = vrot.lane.b32.xlu0 %v1160, 61
        %v1174 = vpop.permute.xlu0 %1173
        %1175 = vrot.lane.b32.xlu0 %v1161, 61
        %v1176 = vpop.permute.xlu0 %1175
        %1177 = vrot.lane.b32.xlu0 %v1162, 61
        %v1178 = vpop.permute.xlu0 %1177
        %vm1179 = vcmask 498688
        %v1180 = vsel %vm1179, %v1164, %v1166
        %v1181 = vsel %vm1179, %v1166, %v1168
        %v1182 = vsel %vm1179, %v1168, %v1170
        %v1183 = vsel %vm1179, %v1170, %v1172
        %v1184 = vsel %vm1179, %v1172, %v1174
        %v1185 = vsel %vm1179, %v1174, %v1176
        %v1186 = vsel %vm1179, %v1176, %v1178
        %1194 = vst [vmem:[#allocation2 + $0xe0] sm:$0x80] %v1180
        %1195 = vst [vmem:[#allocation2 + $0xe8] sm:$0x80] %v1181
        %1196 = vst [vmem:[#allocation2 + $0xf0] sm:$0x80] %v1182
        %1197 = vst [vmem:[#allocation2 + $0xf8] sm:$0x80] %v1183
        %1198 = vst [vmem:[#allocation2 + $0x100] sm:$0x80] %v1184
        %1199 = vst [vmem:[#allocation2 + $0x108] sm:$0x80] %v1185
        %1200 = vst.msk [vmem:[#allocation2 + $0x110] sm:$0x80] %vm734, %v1186
        %1201 = vst [vmem:[#allocation2 + $0x118] sm:$0x3] %v1180
        %1202 = vst [vmem:[#allocation2 + $0x120] sm:$0x3] %v1181
        %1203 = vst [vmem:[#allocation2 + $0x128] sm:$0x3] %v1182
        %1204 = vst [vmem:[#allocation2 + $0x130] sm:$0x3] %v1183
        %1205 = vst [vmem:[#allocation2 + $0x138] sm:$0x3] %v1184
        %1206 = vst [vmem:[#allocation2 + $0x140] sm:$0x3] %v1185
        %1207 = vst.msk [vmem:[#allocation2 + $0x148] sm:$0x3] %vm742, %v1186
        %v1208 = vld [vmem:[%s437] sm:$0x77]
        %v1209 = vld [vmem:[%s437 + $0x8] sm:$0x77]
        %v1210 = vld [vmem:[%s437 + $0x10] sm:$0x77]
        %v1211 = vld [vmem:[%s437 + $0x18] sm:$0x77]
        %v1216 = vcombine.high %v1208, %v1208
        %v1217 = vcombine.high %v1209, %v1209
        %v1218 = vcombine.high %v1210, %v1210
        %v1219 = vcombine.high %v1211, %v1211
        %v1220 = vrot.slane %v1208, 6
        %v1221 = vrot.slane %v1216, 6
        %v1222 = vrot.slane %v1209, 6
        %v1223 = vrot.slane %v1217, 6
        %v1224 = vrot.slane %v1210, 6
        %v1225 = vrot.slane %v1218, 6
        %v1226 = vrot.slane %v1211, 6
        %v1227 = vrot.slane %v1219, 6
        %1228 = vrot.lane.b32.xlu0 %v1220, 60
        %v1229 = vpop.permute.xlu0 %1228
        %1230 = vrot.lane.b32.xlu0 %v1221, 60
        %v1231 = vpop.permute.xlu0 %1230
        %1232 = vrot.lane.b32.xlu0 %v1222, 60
        %v1233 = vpop.permute.xlu0 %1232
        %1234 = vrot.lane.b32.xlu0 %v1223, 60
        %v1235 = vpop.permute.xlu0 %1234
        %1236 = vrot.lane.b32.xlu0 %v1224, 60
        %v1237 = vpop.permute.xlu0 %1236
        %1238 = vrot.lane.b32.xlu0 %v1225, 60
        %v1239 = vpop.permute.xlu0 %1238
        %1240 = vrot.lane.b32.xlu0 %v1226, 60
        %v1241 = vpop.permute.xlu0 %1240
        %1242 = vrot.lane.b32.xlu0 %v1227, 60
        %v1243 = vpop.permute.xlu0 %1242
        %vm1244 = vcmask 490496
        %v1245 = vsel %vm1244, %v1229, %v1231
        %v1246 = vsel %vm1244, %v1231, %v1233
        %v1247 = vsel %vm1244, %v1233, %v1235
        %v1248 = vsel %vm1244, %v1235, %v1237
        %v1249 = vsel %vm1244, %v1237, %v1239
        %v1250 = vsel %vm1244, %v1239, %v1241
        %v1251 = vsel %vm1244, %v1241, %v1243
        %1259 = vst [vmem:[#allocation2 + $0x118] sm:$0x1c] %v1245
        %1260 = vst [vmem:[#allocation2 + $0x120] sm:$0x1c] %v1246
        %1261 = vst [vmem:[#allocation2 + $0x128] sm:$0x1c] %v1247
        %1262 = vst [vmem:[#allocation2 + $0x130] sm:$0x1c] %v1248
        %1263 = vst [vmem:[#allocation2 + $0x138] sm:$0x1c] %v1249
        %1264 = vst [vmem:[#allocation2 + $0x140] sm:$0x1c] %v1250
        %1265 = vst.msk [vmem:[#allocation2 + $0x148] sm:$0x1c] %vm801, %v1251
        %v1266 = vld [vmem:[%s437] sm:$0x77]
        %v1267 = vld [vmem:[%s437 + $0x8] sm:$0x77]
        %v1268 = vld [vmem:[%s437 + $0x10] sm:$0x77]
        %v1269 = vld [vmem:[%s437 + $0x18] sm:$0x77]
        %v1274 = vcombine.high %v1266, %v1266
        %v1275 = vcombine.high %v1267, %v1267
        %v1276 = vcombine.high %v1268, %v1268
        %v1277 = vcombine.high %v1269, %v1269
        %v1278 = vrot.slane %v1266, 3
        %v1279 = vrot.slane %v1274, 3
        %v1280 = vrot.slane %v1267, 3
        %v1281 = vrot.slane %v1275, 3
        %v1282 = vrot.slane %v1268, 3
        %v1283 = vrot.slane %v1276, 3
        %v1284 = vrot.slane %v1269, 3
        %v1285 = vrot.slane %v1277, 3
        %1286 = vrot.lane.b32.xlu0 %v1278, 32
        %v1287 = vpop.permute.xlu0 %1286
        %1288 = vrot.lane.b32.xlu0 %v1279, 32
        %v1289 = vpop.permute.xlu0 %1288
        %1290 = vrot.lane.b32.xlu0 %v1280, 32
        %v1291 = vpop.permute.xlu0 %1290
        %1292 = vrot.lane.b32.xlu0 %v1281, 32
        %v1293 = vpop.permute.xlu0 %1292
        %1294 = vrot.lane.b32.xlu0 %v1282, 32
        %v1295 = vpop.permute.xlu0 %1294
        %1296 = vrot.lane.b32.xlu0 %v1283, 32
        %v1297 = vpop.permute.xlu0 %1296
        %1298 = vrot.lane.b32.xlu0 %v1284, 32
        %v1299 = vpop.permute.xlu0 %1298
        %1300 = vrot.lane.b32.xlu0 %v1285, 32
        %v1301 = vpop.permute.xlu0 %1300
        %vm1302 = vcmask 261120
        %v1303 = vsel %vm1302, %v1287, %v1289
        %v1304 = vsel %vm1302, %v1289, %v1291
        %v1305 = vsel %vm1302, %v1291, %v1293
        %v1306 = vsel %vm1302, %v1293, %v1295
        %v1307 = vsel %vm1302, %v1295, %v1297
        %v1308 = vsel %vm1302, %v1297, %v1299
        %v1309 = vsel %vm1302, %v1299, %v1301
        %1317 = vst [vmem:[#allocation2 + $0x118] sm:$0xe0] %v1303
        %1318 = vst [vmem:[#allocation2 + $0x120] sm:$0xe0] %v1304
        %1319 = vst [vmem:[#allocation2 + $0x128] sm:$0xe0] %v1305
        %1320 = vst [vmem:[#allocation2 + $0x130] sm:$0xe0] %v1306
        %1321 = vst [vmem:[#allocation2 + $0x138] sm:$0xe0] %v1307
        %1322 = vst [vmem:[#allocation2 + $0x140] sm:$0xe0] %v1308
        %1323 = vst.msk [vmem:[#allocation2 + $0x148] sm:$0xe0] %vm860, %v1309
        %v1324 = vld [vmem:[%s437] sm:$0x77]
        %v1325 = vld [vmem:[%s437 + $0x8] sm:$0x77]
        %v1326 = vld [vmem:[%s437 + $0x10] sm:$0x77]
        %v1327 = vld [vmem:[%s437 + $0x18] sm:$0x77]
        %v1332 = vcombine.high %v1324, %v1324
        %v1333 = vcombine.high %v1325, %v1325
        %v1334 = vcombine.high %v1326, %v1326
        %v1335 = vcombine.high %v1327, %v1327
        %1336 = vrot.lane.b32.xlu0 %v1324, 31
        %v1337 = vpop.permute.xlu0 %1336
        %1338 = vrot.lane.b32.xlu0 %v1332, 31
        %v1339 = vpop.permute.xlu0 %1338
        %1340 = vrot.lane.b32.xlu0 %v1325, 31
        %v1341 = vpop.permute.xlu0 %1340
        %1342 = vrot.lane.b32.xlu0 %v1333, 31
        %v1343 = vpop.permute.xlu0 %1342
        %1344 = vrot.lane.b32.xlu0 %v1326, 31
        %v1345 = vpop.permute.xlu0 %1344
        %1346 = vrot.lane.b32.xlu0 %v1334, 31
        %v1347 = vpop.permute.xlu0 %1346
        %1348 = vrot.lane.b32.xlu0 %v1327, 31
        %v1349 = vpop.permute.xlu0 %1348
        %1350 = vrot.lane.b32.xlu0 %v1335, 31
        %v1351 = vpop.permute.xlu0 %1350
        %vm1352 = vcmask 252928
        %v1353 = vsel %vm1352, %v1337, %v1339
        %v1354 = vsel %vm1352, %v1339, %v1341
        %v1355 = vsel %vm1352, %v1341, %v1343
        %v1356 = vsel %vm1352, %v1343, %v1345
        %v1357 = vsel %vm1352, %v1345, %v1347
        %v1358 = vsel %vm1352, %v1347, %v1349
        %v1359 = vsel %vm1352, %v1349, %v1351
        %1367 = vst [vmem:[#allocation2 + $0x150] sm:$0x7] %v1353
        %1368 = vst [vmem:[#allocation2 + $0x158] sm:$0x7] %v1354
        %1369 = vst [vmem:[#allocation2 + $0x160] sm:$0x7] %v1355
        %1370 = vst [vmem:[#allocation2 + $0x168] sm:$0x7] %v1356
        %1371 = vst [vmem:[#allocation2 + $0x170] sm:$0x7] %v1357
        %1372 = vst [vmem:[#allocation2 + $0x178] sm:$0x7] %v1358
        %1373 = vst.msk [vmem:[#allocation2 + $0x180] sm:$0x7] %vm457, %v1359
        %v1374 = vld [vmem:[%s437] sm:$0x77]
        %v1375 = vld [vmem:[%s437 + $0x8] sm:$0x77]
        %v1376 = vld [vmem:[%s437 + $0x10] sm:$0x77]
        %v1377 = vld [vmem:[%s437 + $0x18] sm:$0x77]
        %v1382 = vcombine.high %v1374, %v1374
        %v1383 = vcombine.high %v1375, %v1375
        %v1384 = vcombine.high %v1376, %v1376
        %v1385 = vcombine.high %v1377, %v1377
        %v1386 = vrot.slane %v1374, 5
        %v1387 = vrot.slane %v1382, 5
        %v1388 = vrot.slane %v1375, 5
        %v1389 = vrot.slane %v1383, 5
        %v1390 = vrot.slane %v1376, 5
        %v1391 = vrot.slane %v1384, 5
        %v1392 = vrot.slane %v1377, 5
        %v1393 = vrot.slane %v1385, 5
        %1394 = vrot.lane.b32.xlu0 %v1386, 30
        %v1395 = vpop.permute.xlu0 %1394
        %1396 = vrot.lane.b32.xlu0 %v1387, 30
        %v1397 = vpop.permute.xlu0 %1396
        %1398 = vrot.lane.b32.xlu0 %v1388, 30
        %v1399 = vpop.permute.xlu0 %1398
        %1400 = vrot.lane.b32.xlu0 %v1389, 30
        %v1401 = vpop.permute.xlu0 %1400
        %1402 = vrot.lane.b32.xlu0 %v1390, 30
        %v1403 = vpop.permute.xlu0 %1402
        %1404 = vrot.lane.b32.xlu0 %v1391, 30
        %v1405 = vpop.permute.xlu0 %1404
        %1406 = vrot.lane.b32.xlu0 %v1392, 30
        %v1407 = vpop.permute.xlu0 %1406
        %1408 = vrot.lane.b32.xlu0 %v1393, 30
        %v1409 = vpop.permute.xlu0 %1408
        %vm1410 = vcmask 244736
        %v1411 = vsel %vm1410, %v1395, %v1397
        %v1412 = vsel %vm1410, %v1397, %v1399
        %v1413 = vsel %vm1410, %v1399, %v1401
        %v1414 = vsel %vm1410, %v1401, %v1403
        %v1415 = vsel %vm1410, %v1403, %v1405
        %v1416 = vsel %vm1410, %v1405, %v1407
        %v1417 = vsel %vm1410, %v1407, %v1409
        %1425 = vst [vmem:[#allocation2 + $0x150] sm:$0x38] %v1411
        %1426 = vst [vmem:[#allocation2 + $0x158] sm:$0x38] %v1412
        %1427 = vst [vmem:[#allocation2 + $0x160] sm:$0x38] %v1413
        %1428 = vst [vmem:[#allocation2 + $0x168] sm:$0x38] %v1414
        %1429 = vst [vmem:[#allocation2 + $0x170] sm:$0x38] %v1415
        %1430 = vst [vmem:[#allocation2 + $0x178] sm:$0x38] %v1416
        %1431 = vst.msk [vmem:[#allocation2 + $0x180] sm:$0x38] %vm511, %v1417
        %v1432 = vld [vmem:[%s437] sm:$0x77]
        %v1433 = vld [vmem:[%s437 + $0x8] sm:$0x77]
        %v1434 = vld [vmem:[%s437 + $0x10] sm:$0x77]
        %v1435 = vld [vmem:[%s437 + $0x18] sm:$0x77]
        %v1440 = vcombine.high %v1432, %v1432
        %v1441 = vcombine.high %v1433, %v1433
        %v1442 = vcombine.high %v1434, %v1434
        %v1443 = vcombine.high %v1435, %v1435
        %v1444 = vrot.slane %v1432, 2
        %v1445 = vrot.slane %v1440, 2
        %v1446 = vrot.slane %v1433, 2
        %v1447 = vrot.slane %v1441, 2
        %v1448 = vrot.slane %v1434, 2
        %v1449 = vrot.slane %v1442, 2
        %v1450 = vrot.slane %v1435, 2
        %v1451 = vrot.slane %v1443, 2
        %1452 = vrot.lane.b32.xlu0 %v1444, 29
        %v1453 = vpop.permute.xlu0 %1452
        %1454 = vrot.lane.b32.xlu0 %v1445, 29
        %v1455 = vpop.permute.xlu0 %1454
        %1456 = vrot.lane.b32.xlu0 %v1446, 29
        %v1457 = vpop.permute.xlu0 %1456
        %1458 = vrot.lane.b32.xlu0 %v1447, 29
        %v1459 = vpop.permute.xlu0 %1458
        %1460 = vrot.lane.b32.xlu0 %v1448, 29
        %v1461 = vpop.permute.xlu0 %1460
        %1462 = vrot.lane.b32.xlu0 %v1449, 29
        %v1463 = vpop.permute.xlu0 %1462
        %1464 = vrot.lane.b32.xlu0 %v1450, 29
        %v1465 = vpop.permute.xlu0 %1464
        %1466 = vrot.lane.b32.xlu0 %v1451, 29
        %v1467 = vpop.permute.xlu0 %1466
        %vm1468 = vcmask 236544
        %v1469 = vsel %vm1468, %v1453, %v1455
        %v1470 = vsel %vm1468, %v1455, %v1457
        %v1471 = vsel %vm1468, %v1457, %v1459
        %v1472 = vsel %vm1468, %v1459, %v1461
        %v1473 = vsel %vm1468, %v1461, %v1463
        %v1474 = vsel %vm1468, %v1463, %v1465
        %v1475 = vsel %vm1468, %v1465, %v1467
        %1483 = vst [vmem:[#allocation2 + $0x150] sm:$0xc0] %v1469
        %1484 = vst [vmem:[#allocation2 + $0x158] sm:$0xc0] %v1470
        %1485 = vst [vmem:[#allocation2 + $0x160] sm:$0xc0] %v1471
        %1486 = vst [vmem:[#allocation2 + $0x168] sm:$0xc0] %v1472
        %1487 = vst [vmem:[#allocation2 + $0x170] sm:$0xc0] %v1473
        %1488 = vst [vmem:[#allocation2 + $0x178] sm:$0xc0] %v1474
        %1489 = vst.msk [vmem:[#allocation2 + $0x180] sm:$0xc0] %vm565, %v1475
        %1490 = vst [vmem:[#allocation2 + $0x188] sm:$0x1] %v1469
        %1491 = vst [vmem:[#allocation2 + $0x190] sm:$0x1] %v1470
        %1492 = vst [vmem:[#allocation2 + $0x198] sm:$0x1] %v1471
        %1493 = vst [vmem:[#allocation2 + $0x1a0] sm:$0x1] %v1472
        %1494 = vst [vmem:[#allocation2 + $0x1a8] sm:$0x1] %v1473
        %1495 = vst [vmem:[#allocation2 + $0x1b0] sm:$0x1] %v1474
        %1496 = vst.msk [vmem:[#allocation2 + $0x1b8] sm:$0x1] %vm573, %v1475
        %v1497 = vld [vmem:[%s437] sm:$0x77]
        %v1498 = vld [vmem:[%s437 + $0x8] sm:$0x77]
        %v1499 = vld [vmem:[%s437 + $0x10] sm:$0x77]
        %v1500 = vld [vmem:[%s437 + $0x18] sm:$0x77]
        %v1505 = vcombine.high %v1497, %v1497
        %v1506 = vcombine.high %v1498, %v1498
        %v1507 = vcombine.high %v1499, %v1499
        %v1508 = vcombine.high %v1500, %v1500
        %v1509 = vrot.slane %v1497, 7
        %v1510 = vrot.slane %v1505, 7
        %v1511 = vrot.slane %v1498, 7
        %v1512 = vrot.slane %v1506, 7
        %v1513 = vrot.slane %v1499, 7
        %v1514 = vrot.slane %v1507, 7
        %v1515 = vrot.slane %v1500, 7
        %v1516 = vrot.slane %v1508, 7
        %1517 = vrot.lane.b32.xlu0 %v1509, 28
        %v1518 = vpop.permute.xlu0 %1517
        %1519 = vrot.lane.b32.xlu0 %v1510, 28
        %v1520 = vpop.permute.xlu0 %1519
        %1521 = vrot.lane.b32.xlu0 %v1511, 28
        %v1522 = vpop.permute.xlu0 %1521
        %1523 = vrot.lane.b32.xlu0 %v1512, 28
        %v1524 = vpop.permute.xlu0 %1523
        %1525 = vrot.lane.b32.xlu0 %v1513, 28
        %v1526 = vpop.permute.xlu0 %1525
        %1527 = vrot.lane.b32.xlu0 %v1514, 28
        %v1528 = vpop.permute.xlu0 %1527
        %1529 = vrot.lane.b32.xlu0 %v1515, 28
        %v1530 = vpop.permute.xlu0 %1529
        %1531 = vrot.lane.b32.xlu0 %v1516, 28
        %v1532 = vpop.permute.xlu0 %1531
        %vm1533 = vcmask 228352
        %v1534 = vsel %vm1533, %v1518, %v1520
        %v1535 = vsel %vm1533, %v1520, %v1522
        %v1536 = vsel %vm1533, %v1522, %v1524
        %v1537 = vsel %vm1533, %v1524, %v1526
        %v1538 = vsel %vm1533, %v1526, %v1528
        %v1539 = vsel %vm1533, %v1528, %v1530
        %v1540 = vsel %vm1533, %v1530, %v1532
        %1548 = vst [vmem:[#allocation2 + $0x188] sm:$0xe] %v1534
        %1549 = vst [vmem:[#allocation2 + $0x190] sm:$0xe] %v1535
        %1550 = vst [vmem:[#allocation2 + $0x198] sm:$0xe] %v1536
        %1551 = vst [vmem:[#allocation2 + $0x1a0] sm:$0xe] %v1537
        %1552 = vst [vmem:[#allocation2 + $0x1a8] sm:$0xe] %v1538
        %1553 = vst [vmem:[#allocation2 + $0x1b0] sm:$0xe] %v1539
        %1554 = vst.msk [vmem:[#allocation2 + $0x1b8] sm:$0xe] %vm627, %v1540
        %v1555 = vld [vmem:[%s437 + $0x4] sm:$0x77]
        %v1556 = vld [vmem:[%s437 + $0xc] sm:$0x77]
        %v1557 = vld [vmem:[%s437 + $0x14] sm:$0x77]
        %v1558 = vld [vmem:[%s437 + $0x1c] sm:$0x7]
        %v1563 = vcombine.low %v1555, %v1555
        %v1564 = vcombine.low %v1556, %v1556
        %v1565 = vcombine.low %v1557, %v1557
        %v1566 = vcombine.low %v1558, %v1558
        %1571 = vst [vmem:[#allocation2 + $0x188] sm:$0x70] %v1563
        %1572 = vst [vmem:[#allocation2 + $0x190] sm:$0x70] %v1555
        %1573 = vst [vmem:[#allocation2 + $0x198] sm:$0x70] %v1564
        %1574 = vst [vmem:[#allocation2 + $0x1a0] sm:$0x70] %v1556
        %1575 = vst [vmem:[#allocation2 + $0x1a8] sm:$0x70] %v1565
        %1576 = vst [vmem:[#allocation2 + $0x1b0] sm:$0x70] %v1557
        %1577 = vst.msk [vmem:[#allocation2 + $0x1b8] sm:$0x70] %vm675, %v1566
        %v1578 = vld [vmem:[%s437 + $0x4] sm:$0x77]
        %v1579 = vld [vmem:[%s437 + $0xc] sm:$0x77]
        %v1580 = vld [vmem:[%s437 + $0x14] sm:$0x77]
        %v1581 = vld [vmem:[%s437 + $0x1c] sm:$0x7]
        %v1586 = vcombine.high %v1578, %v1578
        %v1587 = vcombine.high %v1579, %v1579
        %v1588 = vcombine.high %v1580, %v1580
        %v1589 = vrot.slane %v1578, 1
        %v1590 = vrot.slane %v1586, 1
        %v1591 = vrot.slane %v1579, 1
        %v1592 = vrot.slane %v1587, 1
        %v1593 = vrot.slane %v1580, 1
        %v1594 = vrot.slane %v1588, 1
        %v1595 = vrot.slane %v1581, 1
        %1596 = vrot.lane.b32.xlu0 %v1589, 127
        %v1597 = vpop.permute.xlu0 %1596
        %1598 = vrot.lane.b32.xlu0 %v1590, 127
        %v1599 = vpop.permute.xlu0 %1598
        %1600 = vrot.lane.b32.xlu0 %v1591, 127
        %v1601 = vpop.permute.xlu0 %1600
        %1602 = vrot.lane.b32.xlu0 %v1592, 127
        %v1603 = vpop.permute.xlu0 %1602
        %1604 = vrot.lane.b32.xlu0 %v1593, 127
        %v1605 = vpop.permute.xlu0 %1604
        %1606 = vrot.lane.b32.xlu0 %v1594, 127
        %v1607 = vpop.permute.xlu0 %1606
        %1608 = vrot.lane.b32.xlu0 %v1595, 127
        %v1609 = vpop.permute.xlu0 %1608
        %v1610 = vsel %vm491, %v1597, %v1599
        %v1611 = vsel %vm491, %v1599, %v1601
        %v1612 = vsel %vm491, %v1601, %v1603
        %v1613 = vsel %vm491, %v1603, %v1605
        %v1614 = vsel %vm491, %v1605, %v1607
        %v1615 = vsel %vm491, %v1607, %v1609
        %1623 = vst [vmem:[#allocation2 + $0x188] sm:$0x80] %v1610
        %1624 = vst [vmem:[#allocation2 + $0x190] sm:$0x80] %v1611
        %1625 = vst [vmem:[#allocation2 + $0x198] sm:$0x80] %v1612
        %1626 = vst [vmem:[#allocation2 + $0x1a0] sm:$0x80] %v1613
        %1627 = vst [vmem:[#allocation2 + $0x1a8] sm:$0x80] %v1614
        %1628 = vst [vmem:[#allocation2 + $0x1b0] sm:$0x80] %v1615
        %1629 = vst.msk [vmem:[#allocation2 + $0x1b8] sm:$0x80] %vm734, %v1609
        %1630 = vst [vmem:[#allocation2 + $0x1c0] sm:$0x3] %v1610
        %1631 = vst [vmem:[#allocation2 + $0x1c8] sm:$0x3] %v1611
        %1632 = vst [vmem:[#allocation2 + $0x1d0] sm:$0x3] %v1612
        %1633 = vst [vmem:[#allocation2 + $0x1d8] sm:$0x3] %v1613
        %1634 = vst [vmem:[#allocation2 + $0x1e0] sm:$0x3] %v1614
        %1635 = vst [vmem:[#allocation2 + $0x1e8] sm:$0x3] %v1615
        %1636 = vst.msk [vmem:[#allocation2 + $0x1f0] sm:$0x3] %vm742, %v1609
        %v1637 = vld [vmem:[%s437 + $0x4] sm:$0x77]
        %v1638 = vld [vmem:[%s437 + $0xc] sm:$0x77]
        %v1639 = vld [vmem:[%s437 + $0x14] sm:$0x77]
        %v1640 = vld [vmem:[%s437 + $0x1c] sm:$0x7]
        %v1645 = vcombine.high %v1637, %v1637
        %v1646 = vcombine.high %v1638, %v1638
        %v1647 = vcombine.high %v1639, %v1639
        %v1648 = vrot.slane %v1637, 6
        %v1649 = vrot.slane %v1645, 6
        %v1650 = vrot.slane %v1638, 6
        %v1651 = vrot.slane %v1646, 6
        %v1652 = vrot.slane %v1639, 6
        %v1653 = vrot.slane %v1647, 6
        %v1654 = vrot.slane %v1640, 6
        %1655 = vrot.lane.b32.xlu0 %v1648, 126
        %v1656 = vpop.permute.xlu0 %1655
        %1657 = vrot.lane.b32.xlu0 %v1649, 126
        %v1658 = vpop.permute.xlu0 %1657
        %1659 = vrot.lane.b32.xlu0 %v1650, 126
        %v1660 = vpop.permute.xlu0 %1659
        %1661 = vrot.lane.b32.xlu0 %v1651, 126
        %v1662 = vpop.permute.xlu0 %1661
        %1663 = vrot.lane.b32.xlu0 %v1652, 126
        %v1664 = vpop.permute.xlu0 %1663
        %1665 = vrot.lane.b32.xlu0 %v1653, 126
        %v1666 = vpop.permute.xlu0 %1665
        %1667 = vrot.lane.b32.xlu0 %v1654, 126
        %v1668 = vpop.permute.xlu0 %1667
        %v1669 = vsel %vm545, %v1656, %v1658
        %v1670 = vsel %vm545, %v1658, %v1660
        %v1671 = vsel %vm545, %v1660, %v1662
        %v1672 = vsel %vm545, %v1662, %v1664
        %v1673 = vsel %vm545, %v1664, %v1666
        %v1674 = vsel %vm545, %v1666, %v1668
        %1682 = vst [vmem:[#allocation2 + $0x1c0] sm:$0x1c] %v1669
        %1683 = vst [vmem:[#allocation2 + $0x1c8] sm:$0x1c] %v1670
        %1684 = vst [vmem:[#allocation2 + $0x1d0] sm:$0x1c] %v1671
        %1685 = vst [vmem:[#allocation2 + $0x1d8] sm:$0x1c] %v1672
        %1686 = vst [vmem:[#allocation2 + $0x1e0] sm:$0x1c] %v1673
        %1687 = vst [vmem:[#allocation2 + $0x1e8] sm:$0x1c] %v1674
        %1688 = vst.msk [vmem:[#allocation2 + $0x1f0] sm:$0x1c] %vm801, %v1668
        %v1689 = vld [vmem:[%s437 + $0x4] sm:$0x77]
        %v1690 = vld [vmem:[%s437 + $0xc] sm:$0x77]
        %v1691 = vld [vmem:[%s437 + $0x14] sm:$0x77]
        %v1692 = vld [vmem:[%s437 + $0x1c] sm:$0x7]
        %v1697 = vcombine.high %v1689, %v1689
        %v1698 = vcombine.high %v1690, %v1690
        %v1699 = vcombine.high %v1691, %v1691
        %v1700 = vrot.slane %v1689, 3
        %v1701 = vrot.slane %v1697, 3
        %v1702 = vrot.slane %v1690, 3
        %v1703 = vrot.slane %v1698, 3
        %v1704 = vrot.slane %v1691, 3
        %v1705 = vrot.slane %v1699, 3
        %v1706 = vrot.slane %v1692, 3
        %1707 = vrot.lane.b32.xlu0 %v1700, 125
        %v1708 = vpop.permute.xlu0 %1707
        %1709 = vrot.lane.b32.xlu0 %v1701, 125
        %v1710 = vpop.permute.xlu0 %1709
        %1711 = vrot.lane.b32.xlu0 %v1702, 125
        %v1712 = vpop.permute.xlu0 %1711
        %1713 = vrot.lane.b32.xlu0 %v1703, 125
        %v1714 = vpop.permute.xlu0 %1713
        %1715 = vrot.lane.b32.xlu0 %v1704, 125
        %v1716 = vpop.permute.xlu0 %1715
        %1717 = vrot.lane.b32.xlu0 %v1705, 125
        %v1718 = vpop.permute.xlu0 %1717
        %1719 = vrot.lane.b32.xlu0 %v1706, 125
        %v1720 = vpop.permute.xlu0 %1719
        %v1721 = vsel %vm607, %v1708, %v1710
        %v1722 = vsel %vm607, %v1710, %v1712
        %v1723 = vsel %vm607, %v1712, %v1714
        %v1724 = vsel %vm607, %v1714, %v1716
        %v1725 = vsel %vm607, %v1716, %v1718
        %v1726 = vsel %vm607, %v1718, %v1720
        %1734 = vst [vmem:[#allocation2 + $0x1c0] sm:$0xe0] %v1721
        %1735 = vst [vmem:[#allocation2 + $0x1c8] sm:$0xe0] %v1722
        %1736 = vst [vmem:[#allocation2 + $0x1d0] sm:$0xe0] %v1723
        %1737 = vst [vmem:[#allocation2 + $0x1d8] sm:$0xe0] %v1724
        %1738 = vst [vmem:[#allocation2 + $0x1e0] sm:$0xe0] %v1725
        %1739 = vst [vmem:[#allocation2 + $0x1e8] sm:$0xe0] %v1726
        %1740 = vst.msk [vmem:[#allocation2 + $0x1f0] sm:$0xe0] %vm860, %v1720
        %v1741 = vld [vmem:[%s437 + $0x4] sm:$0x77]
        %v1742 = vld [vmem:[%s437 + $0xc] sm:$0x77]
        %v1743 = vld [vmem:[%s437 + $0x14] sm:$0x77]
        %v1744 = vld [vmem:[%s437 + $0x1c] sm:$0x7]
        %v1749 = vcombine.high %v1741, %v1741
        %v1750 = vcombine.high %v1742, %v1742
        %v1751 = vcombine.high %v1743, %v1743
        %1752 = vrot.lane.b32.xlu0 %v1741, 124
        %v1753 = vpop.permute.xlu0 %1752
        %1754 = vrot.lane.b32.xlu0 %v1749, 124
        %v1755 = vpop.permute.xlu0 %1754
        %1756 = vrot.lane.b32.xlu0 %v1742, 124
        %v1757 = vpop.permute.xlu0 %1756
        %1758 = vrot.lane.b32.xlu0 %v1750, 124
        %v1759 = vpop.permute.xlu0 %1758
        %1760 = vrot.lane.b32.xlu0 %v1743, 124
        %v1761 = vpop.permute.xlu0 %1760
        %1762 = vrot.lane.b32.xlu0 %v1751, 124
        %v1763 = vpop.permute.xlu0 %1762
        %1764 = vrot.lane.b32.xlu0 %v1744, 124
        %v1765 = vpop.permute.xlu0 %1764
        %v1766 = vsel %vm655, %v1753, %v1755
        %v1767 = vsel %vm655, %v1755, %v1757
        %v1768 = vsel %vm655, %v1757, %v1759
        %v1769 = vsel %vm655, %v1759, %v1761
        %v1770 = vsel %vm655, %v1761, %v1763
        %v1771 = vsel %vm655, %v1763, %v1765
        %1779 = vst [vmem:[#allocation2 + $0x1f8] sm:$0x7] %v1766
        %1780 = vst [vmem:[#allocation2 + $0x200] sm:$0x7] %v1767
        %1781 = vst [vmem:[#allocation2 + $0x208] sm:$0x7] %v1768
        %1782 = vst [vmem:[#allocation2 + $0x210] sm:$0x7] %v1769
        %1783 = vst [vmem:[#allocation2 + $0x218] sm:$0x7] %v1770
        %1784 = vst [vmem:[#allocation2 + $0x220] sm:$0x7] %v1771
        %1785 = vst.msk [vmem:[#allocation2 + $0x228] sm:$0x7] %vm457, %v1765
        %v1786 = vld [vmem:[%s1] sm:$0x3f]
        %v1787 = vld [vmem:[#allocation2] sm:$0xff]
        %v1788 = vld [vmem:[#allocation2 + $0x8] sm:$0xff]
        %v1789 = vld [vmem:[#allocation2 + $0x10] sm:$0xff]
        %v1790 = vld [vmem:[#allocation2 + $0x18] sm:$0xff]
        %v1791 = vld [vmem:[#allocation2 + $0x20] sm:$0xff]
        %v1792 = vld [vmem:[#allocation2 + $0x28] sm:$0xff]
        %v1793 = vld [vmem:[#allocation2 + $0x30] sm:$0xff]
        %v1794 = vld [vmem:[#allocation2 + $0x38] sm:$0xff]
        %v1795 = vld [vmem:[#allocation2 + $0x40] sm:$0xff]
        %v1796 = vld [vmem:[#allocation2 + $0x48] sm:$0xff]
        %v1797 = vld [vmem:[#allocation2 + $0x50] sm:$0xff]
        %v1798 = vld [vmem:[#allocation2 + $0x58] sm:$0xff]
        %v1799 = vld [vmem:[#allocation2 + $0x60] sm:$0xff]
        %v1800 = vld [vmem:[#allocation2 + $0x68] sm:$0xff]
        %v1801 = vld [vmem:[#allocation2 + $0x70] sm:$0xff]
        %v1802 = vld [vmem:[#allocation2 + $0x78] sm:$0xff]
        %v1803 = vld [vmem:[#allocation2 + $0x80] sm:$0xff]
        %v1804 = vld [vmem:[#allocation2 + $0x88] sm:$0xff]
        %v1805 = vld [vmem:[#allocation2 + $0x90] sm:$0xff]
        %v1806 = vld [vmem:[#allocation2 + $0x98] sm:$0xff]
        %v1807 = vld [vmem:[#allocation2 + $0xa0] sm:$0xff]
        %v1808 = vld [vmem:[#allocation2 + $0xa8] sm:$0xff]
        %v1809 = vld [vmem:[#allocation2 + $0xb0] sm:$0xff]
        %v1810 = vld [vmem:[#allocation2 + $0xb8] sm:$0xff]
        %v1811 = vld [vmem:[#allocation2 + $0xc0] sm:$0xff]
        %v1812 = vld [vmem:[#allocation2 + $0xc8] sm:$0xff]
        %v1813 = vld [vmem:[#allocation2 + $0xd0] sm:$0xff]
        %v1814 = vld [vmem:[#allocation2 + $0xd8] sm:$0xff]
        %v1815 = vld [vmem:[#allocation2 + $0xe0] sm:$0xff]
        %v1816 = vld [vmem:[#allocation2 + $0xe8] sm:$0xff]
        %v1817 = vld [vmem:[#allocation2 + $0xf0] sm:$0xff]
        %v1818 = vld [vmem:[#allocation2 + $0xf8] sm:$0xff]
        %v1819 = vld [vmem:[#allocation2 + $0x100] sm:$0xff]
        %v1820 = vld [vmem:[#allocation2 + $0x108] sm:$0xff]
        %v1821 = vld [vmem:[#allocation2 + $0x110] sm:$0xff]
        %v1822 = vld [vmem:[#allocation2 + $0x118] sm:$0xff]
        %v1823 = vld [vmem:[#allocation2 + $0x120] sm:$0xff]
        %v1824 = vld [vmem:[#allocation2 + $0x128] sm:$0xff]
        %v1825 = vld [vmem:[#allocation2 + $0x130] sm:$0xff]
        %v1826 = vld [vmem:[#allocation2 + $0x138] sm:$0xff]
        %v1827 = vld [vmem:[#allocation2 + $0x140] sm:$0xff]
        %v1828 = vld [vmem:[#allocation2 + $0x148] sm:$0xff]
        %v1829 = vld [vmem:[#allocation2 + $0x150] sm:$0xff]
        %v1830 = vld [vmem:[#allocation2 + $0x158] sm:$0xff]
        %v1831 = vld [vmem:[#allocation2 + $0x160] sm:$0xff]
        %v1832 = vld [vmem:[#allocation2 + $0x168] sm:$0xff]
        %v1833 = vld [vmem:[#allocation2 + $0x170] sm:$0xff]
        %v1834 = vld [vmem:[#allocation2 + $0x178] sm:$0xff]
        %v1835 = vld [vmem:[#allocation2 + $0x180] sm:$0xff]
        %v1836 = vld [vmem:[#allocation2 + $0x188] sm:$0xff]
        %v1837 = vld [vmem:[#allocation2 + $0x190] sm:$0xff]
        %v1838 = vld [vmem:[#allocation2 + $0x198] sm:$0xff]
        %v1839 = vld [vmem:[#allocation2 + $0x1a0] sm:$0xff]
        %v1840 = vld [vmem:[#allocation2 + $0x1a8] sm:$0xff]
        %v1841 = vld [vmem:[#allocation2 + $0x1b0] sm:$0xff]
        %v1842 = vld [vmem:[#allocation2 + $0x1b8] sm:$0xff]
        %v1843 = vld [vmem:[#allocation2 + $0x1c0] sm:$0xff]
        %v1844 = vld [vmem:[#allocation2 + $0x1c8] sm:$0xff]
        %v1845 = vld [vmem:[#allocation2 + $0x1d0] sm:$0xff]
        %v1846 = vld [vmem:[#allocation2 + $0x1d8] sm:$0xff]
        %v1847 = vld [vmem:[#allocation2 + $0x1e0] sm:$0xff]
        %v1848 = vld [vmem:[#allocation2 + $0x1e8] sm:$0xff]
        %v1849 = vld [vmem:[#allocation2 + $0x1f0] sm:$0xff]
        %v1850 = vld [vmem:[#allocation2 + $0x1f8] sm:$0x7]
        %v1851 = vld [vmem:[#allocation2 + $0x200] sm:$0x7]
        %v1852 = vld [vmem:[#allocation2 + $0x208] sm:$0x7]
        %v1853 = vld [vmem:[#allocation2 + $0x210] sm:$0x7]
        %v1854 = vld [vmem:[#allocation2 + $0x218] sm:$0x7]
        %v1855 = vld [vmem:[#allocation2 + $0x220] sm:$0x7]
        %v1856 = vld [vmem:[#allocation2 + $0x228] sm:$0x7]
        %v1857 = vld [vmem:[%s2] sm:$0x3f]
        %1859 = vset.pattern.permute.xlu0 0
        %1860 = vperm.xlu0 %1859, %v1857
        %v1861 = vpop.permute.xlu0 %1860
        %vm1863 = vcmask 613376
        %v1865 = vsel %vm1863, %v1786, 0
        %vm1867 = vcmask 1042432
        %v1869 = vsel %vm1867, %v1850, 0
        %v1872 = vsel %vm1867, %v1851, 0
        %v1875 = vsel %vm1867, %v1852, 0
        %v1878 = vsel %vm1867, %v1853, 0
        %v1881 = vsel %vm1867, %v1854, 0
        %v1884 = vsel %vm1867, %v1855, 0
        %v1887 = vsel %vm1867, %v1856, 0
        %1889 = vmatprep.subr.mxu0 %v1788
        %1890 = vmatpush1.msra.mxu0 %v1787
        %1891 = vmatprep.subr.mxu0 %v1795
        %1892 = vmatpush1.msra.mxu0 %v1794
        %1893 = vmatprep.subr.mxu0 %v1802
        %1894 = vmatpush1.msra.mxu0 %v1801
        %1895 = vmatprep.subr.mxu0 %v1809
        %1896 = vmatpush1.msra.mxu0 %v1808
        %1897 = vmatprep.subr.mxu0 %v1816
        %1898 = vmatpush1.msra.mxu0 %v1815
        %1899 = vmatprep.subr.mxu0 %v1823
        %1900 = vmatpush1.msra.mxu0 %v1822
        %1901 = vmatprep.subr.mxu0 %v1830
        %1902 = vmatpush1.msra.mxu0 %v1829
        %1903 = vmatprep.subr.mxu0 %v1837
        %1904 = vmatpush1.msra.mxu0 %v1836
        %1905 = vmatprep.subr.mxu0 %v1844
        %1906 = vmatpush1.msra.mxu0 %v1843
        %1907 = vmatprep.subr.mxu0 %v1872
        %1908 = vmatpush1.msra.mxu0 %v1869
        %1909 = vmatprep.subr.mxu0 0.0
        %1910 = vmatpush1.msra.mxu0 0.0
        %1911 = vmatprep.subr.mxu0 0.0
        %1912 = vmatpush1.msra.mxu0 0.0
        %1913 = vmatprep.subr.mxu0 0.0
        %1914 = vmatpush1.msra.mxu0 0.0
        %1915 = vmatprep.subr.mxu0 0.0
        %1916 = vmatpush1.msra.mxu0 0.0
        %1917 = vmatprep.subr.mxu0 0.0
        %1918 = vmatpush1.msra.mxu0 0.0
        %1919 = vmatprep.subr.mxu0 0.0
        %1920 = vmatpush1.msra.mxu0 0.0
        %1921 = vmatprep.subr.mxu0 0.0
        %1922 = vmatpush1.msra.mxu0 0.0
        %1923 = vmatprep.subr.mxu0 0.0
        %1924 = vmatpush1.msra.mxu0 0.0
        %1925 = vmatprep.subr.mxu0 0.0
        %1926 = vmatpush1.msra.mxu0 0.0
        %1927 = vmatprep.subr.mxu0 0.0
        %1928 = vmatpush1.msra.mxu0 0.0
        %1929 = vmatprep.subr.mxu0 0.0
        %1930 = vmatpush1.msra.mxu0 0.0
        %1931 = vmatprep.subr.mxu0 0.0
        %1932 = vmatpush1.msra.mxu0 0.0
        %1933 = vmatprep.subr.mxu0 0.0
        %1934 = vmatpush1.msra.mxu0 0.0
        %1935 = vmatprep.subr.mxu0 0.0
        %1936 = vmatpush1.msra.mxu0 0.0
        %1937 = vmatprep.subr.mxu0 0.0
        %1938 = vmatpush1.msra.mxu0 0.0
        %1939 = vmatprep.subr.mxu0 0.0
        %1940 = vmatpush1.msra.mxu0 0.0
        %1941 = vmatprep.subr.mxu0 0.0
        %1942 = vmatpush1.msra.mxu0 0.0
        %1943 = vmatprep.subr.mxu0 0.0
        %1944 = vmatpush1.msra.mxu0 0.0
        %1945 = vmatprep.subr.mxu0 0.0
        %1946 = vmatpush1.msra.mxu0 0.0
        %1947 = vmatprep.subr.mxu0 0.0
        %1948 = vmatpush1.msra.mxu0 0.0
        %1949 = vmatprep.subr.mxu0 0.0
        %1950 = vmatpush1.msra.mxu0 0.0
        %1951 = vmatprep.subr.mxu0 0.0
        %1952 = vmatpush1.msra.mxu0 0.0
        %1953 = vmatprep.mubr.f32.mxu0 0.0
        %1954 = vmatmul.mubr.f32.gmra.mrb[0].mxu0 %v1865
        %v1955 = vpop.f32.mrb[0].mxu0
        %v1956 = vadd.f32 %v1861, %v1955
        %v1957 = vpop.f32.mrb[0].mxu0
        %v1958 = vadd.f32 %v1861, %v1957
        %1959 = vdwg.mxu0
        %1960 = vmatprep.subr.mxu0 %v1790
        %1961 = vmatpush1.msra.mxu0 %v1789
        %1962 = vmatprep.subr.mxu0 %v1797
        %1963 = vmatpush1.msra.mxu0 %v1796
        %1964 = vmatprep.subr.mxu0 %v1804
        %1965 = vmatpush1.msra.mxu0 %v1803
        %1966 = vmatprep.subr.mxu0 %v1811
        %1967 = vmatpush1.msra.mxu0 %v1810
        %1968 = vmatprep.subr.mxu0 %v1818
        %1969 = vmatpush1.msra.mxu0 %v1817
        %1970 = vmatprep.subr.mxu0 %v1825
        %1971 = vmatpush1.msra.mxu0 %v1824
        %1972 = vmatprep.subr.mxu0 %v1832
        %1973 = vmatpush1.msra.mxu0 %v1831
        %1974 = vmatprep.subr.mxu0 %v1839
        %1975 = vmatpush1.msra.mxu0 %v1838
        %1976 = vmatprep.subr.mxu0 %v1846
        %1977 = vmatpush1.msra.mxu0 %v1845
        %1978 = vmatprep.subr.mxu0 %v1878
        %1979 = vmatpush1.msra.mxu0 %v1875
        %1980 = vmatprep.subr.mxu0 0.0
        %1981 = vmatpush1.msra.mxu0 0.0
        %1982 = vmatprep.subr.mxu0 0.0
        %1983 = vmatpush1.msra.mxu0 0.0
        %1984 = vmatprep.subr.mxu0 0.0
        %1985 = vmatpush1.msra.mxu0 0.0
        %1986 = vmatprep.subr.mxu0 0.0
        %1987 = vmatpush1.msra.mxu0 0.0
        %1988 = vmatprep.subr.mxu0 0.0
        %1989 = vmatpush1.msra.mxu0 0.0
        %1990 = vmatprep.subr.mxu0 0.0
        %1991 = vmatpush1.msra.mxu0 0.0
        %1992 = vmatprep.subr.mxu0 0.0
        %1993 = vmatpush1.msra.mxu0 0.0
        %1994 = vmatprep.subr.mxu0 0.0
        %1995 = vmatpush1.msra.mxu0 0.0
        %1996 = vmatprep.subr.mxu0 0.0
        %1997 = vmatpush1.msra.mxu0 0.0
        %1998 = vmatprep.subr.mxu0 0.0
        %1999 = vmatpush1.msra.mxu0 0.0
        %2000 = vmatprep.subr.mxu0 0.0
        %2001 = vmatpush1.msra.mxu0 0.0
        %2002 = vmatprep.subr.mxu0 0.0
        %2003 = vmatpush1.msra.mxu0 0.0
        %2004 = vmatprep.subr.mxu0 0.0
        %2005 = vmatpush1.msra.mxu0 0.0
        %2006 = vmatprep.subr.mxu0 0.0
        %2007 = vmatpush1.msra.mxu0 0.0
        %2008 = vmatprep.subr.mxu0 0.0
        %2009 = vmatpush1.msra.mxu0 0.0
        %2010 = vmatprep.subr.mxu0 0.0
        %2011 = vmatpush1.msra.mxu0 0.0
        %2012 = vmatprep.subr.mxu0 0.0
        %2013 = vmatpush1.msra.mxu0 0.0
        %2014 = vmatprep.subr.mxu0 0.0
        %2015 = vmatpush1.msra.mxu0 0.0
        %2016 = vmatprep.subr.mxu0 0.0
        %2017 = vmatpush1.msra.mxu0 0.0
        %2018 = vmatprep.subr.mxu0 0.0
        %2019 = vmatpush1.msra.mxu0 0.0
        %2020 = vmatprep.subr.mxu0 0.0
        %2021 = vmatpush1.msra.mxu0 0.0
        %2022 = vmatprep.subr.mxu0 0.0
        %2023 = vmatpush1.msra.mxu0 0.0
        %2024 = vmatprep.mubr.f32.mxu0 0.0
        %2025 = vmatmul.mubr.f32.gmra.mrb[0].mxu0 %v1865
        %v2026 = vpop.f32.mrb[0].mxu0
        %v2027 = vadd.f32 %v1861, %v2026
        %v2028 = vpop.f32.mrb[0].mxu0
        %v2029 = vadd.f32 %v1861, %v2028
        %2030 = vdwg.mxu0
        %2031 = vmatprep.subr.mxu0 %v1792
        %2032 = vmatpush1.msra.mxu0 %v1791
        %2033 = vmatprep.subr.mxu0 %v1799
        %2034 = vmatpush1.msra.mxu0 %v1798
        %2035 = vmatprep.subr.mxu0 %v1806
        %2036 = vmatpush1.msra.mxu0 %v1805
        %2037 = vmatprep.subr.mxu0 %v1813
        %2038 = vmatpush1.msra.mxu0 %v1812
        %2039 = vmatprep.subr.mxu0 %v1820
        %2040 = vmatpush1.msra.mxu0 %v1819
        %2041 = vmatprep.subr.mxu0 %v1827
        %2042 = vmatpush1.msra.mxu0 %v1826
        %2043 = vmatprep.subr.mxu0 %v1834
        %2044 = vmatpush1.msra.mxu0 %v1833
        %2045 = vmatprep.subr.mxu0 %v1841
        %2046 = vmatpush1.msra.mxu0 %v1840
        %2047 = vmatprep.subr.mxu0 %v1848
        %2048 = vmatpush1.msra.mxu0 %v1847
        %2049 = vmatprep.subr.mxu0 %v1884
        %2050 = vmatpush1.msra.mxu0 %v1881
        %2051 = vmatprep.subr.mxu0 0.0
        %2052 = vmatpush1.msra.mxu0 0.0
        %2053 = vmatprep.subr.mxu0 0.0
        %2054 = vmatpush1.msra.mxu0 0.0
        %2055 = vmatprep.subr.mxu0 0.0
        %2056 = vmatpush1.msra.mxu0 0.0
        %2057 = vmatprep.subr.mxu0 0.0
        %2058 = vmatpush1.msra.mxu0 0.0
        %2059 = vmatprep.subr.mxu0 0.0
        %2060 = vmatpush1.msra.mxu0 0.0
        %2061 = vmatprep.subr.mxu0 0.0
        %2062 = vmatpush1.msra.mxu0 0.0
        %2063 = vmatprep.subr.mxu0 0.0
        %2064 = vmatpush1.msra.mxu0 0.0
        %2065 = vmatprep.subr.mxu0 0.0
        %2066 = vmatpush1.msra.mxu0 0.0
        %2067 = vmatprep.subr.mxu0 0.0
        %2068 = vmatpush1.msra.mxu0 0.0
        %2069 = vmatprep.subr.mxu0 0.0
        %2070 = vmatpush1.msra.mxu0 0.0
        %2071 = vmatprep.subr.mxu0 0.0
        %2072 = vmatpush1.msra.mxu0 0.0
        %2073 = vmatprep.subr.mxu0 0.0
        %2074 = vmatpush1.msra.mxu0 0.0
        %2075 = vmatprep.subr.mxu0 0.0
        %2076 = vmatpush1.msra.mxu0 0.0
        %2077 = vmatprep.subr.mxu0 0.0
        %2078 = vmatpush1.msra.mxu0 0.0
        %2079 = vmatprep.subr.mxu0 0.0
        %2080 = vmatpush1.msra.mxu0 0.0
        %2081 = vmatprep.subr.mxu0 0.0
        %2082 = vmatpush1.msra.mxu0 0.0
        %2083 = vmatprep.subr.mxu0 0.0
        %2084 = vmatpush1.msra.mxu0 0.0
        %2085 = vmatprep.subr.mxu0 0.0
        %2086 = vmatpush1.msra.mxu0 0.0
        %2087 = vmatprep.subr.mxu0 0.0
        %2088 = vmatpush1.msra.mxu0 0.0
        %2089 = vmatprep.subr.mxu0 0.0
        %2090 = vmatpush1.msra.mxu0 0.0
        %2091 = vmatprep.subr.mxu0 0.0
        %2092 = vmatpush1.msra.mxu0 0.0
        %2093 = vmatprep.subr.mxu0 0.0
        %2094 = vmatpush1.msra.mxu0 0.0
        %2095 = vmatprep.mubr.f32.mxu0 0.0
        %2096 = vmatmul.mubr.f32.gmra.mrb[0].mxu0 %v1865
        %v2097 = vpop.f32.mrb[0].mxu0
        %v2098 = vadd.f32 %v1861, %v2097
        %v2099 = vpop.f32.mrb[0].mxu0
        %v2100 = vadd.f32 %v1861, %v2099
        %2101 = vdwg.mxu0
        %2102 = vmatprep.subr.mxu0 0.0
        %2103 = vmatpush1.msra.mxu0 %v1793
        %2104 = vmatprep.subr.mxu0 0.0
        %2105 = vmatpush1.msra.mxu0 %v1800
        %2106 = vmatprep.subr.mxu0 0.0
        %2107 = vmatpush1.msra.mxu0 %v1807
        %2108 = vmatprep.subr.mxu0 0.0
        %2109 = vmatpush1.msra.mxu0 %v1814
        %2110 = vmatprep.subr.mxu0 0.0
        %2111 = vmatpush1.msra.mxu0 %v1821
        %2112 = vmatprep.subr.mxu0 0.0
        %2113 = vmatpush1.msra.mxu0 %v1828
        %2114 = vmatprep.subr.mxu0 0.0
        %2115 = vmatpush1.msra.mxu0 %v1835
        %2116 = vmatprep.subr.mxu0 0.0
        %2117 = vmatpush1.msra.mxu0 %v1842
        %2118 = vmatprep.subr.mxu0 0.0
        %2119 = vmatpush1.msra.mxu0 %v1849
        %2120 = vmatprep.subr.mxu0 0.0
        %2121 = vmatpush1.msra.mxu0 %v1887
        %2122 = vmatprep.subr.mxu0 0.0
        %2123 = vmatpush1.msra.mxu0 0.0
        %2124 = vmatprep.subr.mxu0 0.0
        %2125 = vmatpush1.msra.mxu0 0.0
        %2126 = vmatprep.subr.mxu0 0.0
        %2127 = vmatpush1.msra.mxu0 0.0
        %2128 = vmatprep.subr.mxu0 0.0
        %2129 = vmatpush1.msra.mxu0 0.0
        %2130 = vmatprep.subr.mxu0 0.0
        %2131 = vmatpush1.msra.mxu0 0.0
        %2132 = vmatprep.subr.mxu0 0.0
        %2133 = vmatpush1.msra.mxu0 0.0
        %2134 = vmatprep.subr.mxu0 0.0
        %2135 = vmatpush1.msra.mxu0 0.0
        %2136 = vmatprep.subr.mxu0 0.0
        %2137 = vmatpush1.msra.mxu0 0.0
        %2138 = vmatprep.subr.mxu0 0.0
        %2139 = vmatpush1.msra.mxu0 0.0
        %2140 = vmatprep.subr.mxu0 0.0
        %2141 = vmatpush1.msra.mxu0 0.0
        %2142 = vmatprep.subr.mxu0 0.0
        %2143 = vmatpush1.msra.mxu0 0.0
        %2144 = vmatprep.subr.mxu0 0.0
        %2145 = vmatpush1.msra.mxu0 0.0
        %2146 = vmatprep.subr.mxu0 0.0
        %2147 = vmatpush1.msra.mxu0 0.0
        %2148 = vmatprep.subr.mxu0 0.0
        %2149 = vmatpush1.msra.mxu0 0.0
        %2150 = vmatprep.subr.mxu0 0.0
        %2151 = vmatpush1.msra.mxu0 0.0
        %2152 = vmatprep.subr.mxu0 0.0
        %2153 = vmatpush1.msra.mxu0 0.0
        %2154 = vmatprep.subr.mxu0 0.0
        %2155 = vmatpush1.msra.mxu0 0.0
        %2156 = vmatprep.subr.mxu0 0.0
        %2157 = vmatpush1.msra.mxu0 0.0
        %2158 = vmatprep.subr.mxu0 0.0
        %2159 = vmatpush1.msra.mxu0 0.0
        %2160 = vmatprep.subr.mxu0 0.0
        %2161 = vmatpush1.msra.mxu0 0.0
        %2162 = vmatprep.subr.mxu0 0.0
        %2163 = vmatpush1.msra.mxu0 0.0
        %2164 = vmatprep.subr.mxu0 0.0
        %2165 = vmatpush1.msra.mxu0 0.0
        %2166 = vmatprep.mubr.f32.mxu0 0.0
        %2167 = vmatmul.mubr.f32.gmra.mrb[0].mxu0 %v1865
        %v2168 = vpop.f32.mrb[0].mxu0
        %v2169 = vadd.f32 %v1861, %v2168
        %v2170 = vpop.f32.mrb[0].mxu0
        %2171 = vdwg.mxu0
        %v2172 = vmax.f32 %v1956, 0.0
        %v2173 = vmax.f32 %v1958, 0.0
        %v2174 = vmax.f32 %v2027, 0.0
        %v2175 = vmax.f32 %v2029, 0.0
        %v2176 = vmax.f32 %v2098, 0.0
        %v2177 = vmax.f32 %v2100, 0.0
        %v2178 = vmax.f32 %v2169, 0.0
        %2179 = vst [vmem:[#allocation3] sm:$0x3f] %v2172
        %2180 = vst [vmem:[#allocation3 + $0x8] sm:$0x3f] %v2173
        %2181 = vst [vmem:[#allocation3 + $0x10] sm:$0x3f] %v2174
        %2182 = vst [vmem:[#allocation3 + $0x18] sm:$0x3f] %v2175
        %2183 = vst [vmem:[#allocation3 + $0x20] sm:$0x3f] %v2176
        %2184 = vst [vmem:[#allocation3 + $0x28] sm:$0x3f] %v2177
        %vm2185 = vcmask 1012736
        %2186 = vst.msk [vmem:[#allocation3 + $0x30] sm:$0x3f] %vm2185, %v2178
        %v2187 = vld [vmem:[%s3] sm:$0xff]
        %v2188 = vld [vmem:[%s3 + $0x8] sm:$0xff]
        %v2189 = vld [vmem:[%s3 + $0x10] sm:$0xff]
        %v2190 = vld [vmem:[%s3 + $0x18] sm:$0x7]
        %v2191 = vld [vmem:[#allocation3] sm:$0x3f]
        %2193 = vrot.lane.b32.xlu0 %v2191, 127
        %v2194 = vpop.permute.xlu0 %2193
        %v2196 = vmax.f32 %v2191, %v2194
        %2197 = vrot.lane.b32.xlu0 %v2191, 96
        %v2198 = vpop.permute.xlu0 %2197
        %v2200 = vmax.f32 %v2196, %v2198
        %2201 = vrot.lane.b32.xlu0 %v2191, 95
        %v2202 = vpop.permute.xlu0 %2201
        %v2204 = vmax.f32 %v2200, %v2202
        %vm2205 = vcmask 220160
        %v2207 = vsel %vm2205, %v2204, 0
        %v2210 = vsel %vm1867, %v2190, 0
        %2212 = vmatprep.subr.mxu0 0.0
        %2213 = vmatpush1.msra.mxu0 %v2187
        %2214 = vmatprep.subr.mxu0 0.0
        %2215 = vmatpush1.msra.mxu0 %v2188
        %2216 = vmatprep.subr.mxu0 0.0
        %2217 = vmatpush1.msra.mxu0 %v2189
        %2218 = vmatprep.subr.mxu0 0.0
        %2219 = vmatpush1.msra.mxu0 %v2210
        %2220 = vmatprep.subr.mxu0 0.0
        %2221 = vmatpush1.msra.mxu0 0.0
        %2222 = vmatprep.subr.mxu0 0.0
        %2223 = vmatpush1.msra.mxu0 0.0
        %2224 = vmatprep.subr.mxu0 0.0
        %2225 = vmatpush1.msra.mxu0 0.0
        %2226 = vmatprep.subr.mxu0 0.0
        %2227 = vmatpush1.msra.mxu0 0.0
        %2228 = vmatprep.subr.mxu0 0.0
        %2229 = vmatpush1.msra.mxu0 0.0
        %2230 = vmatprep.subr.mxu0 0.0
        %2231 = vmatpush1.msra.mxu0 0.0
        %2232 = vmatprep.subr.mxu0 0.0
        %2233 = vmatpush1.msra.mxu0 0.0
        %2234 = vmatprep.subr.mxu0 0.0
        %2235 = vmatpush1.msra.mxu0 0.0
        %2236 = vmatprep.subr.mxu0 0.0
        %2237 = vmatpush1.msra.mxu0 0.0
        %2238 = vmatprep.subr.mxu0 0.0
        %2239 = vmatpush1.msra.mxu0 0.0
        %2240 = vmatprep.subr.mxu0 0.0
        %2241 = vmatpush1.msra.mxu0 0.0
        %2242 = vmatprep.subr.mxu0 0.0
        %2243 = vmatpush1.msra.mxu0 0.0
        %2244 = vmatprep.subr.mxu0 0.0
        %2245 = vmatpush1.msra.mxu0 0.0
        %2246 = vmatprep.subr.mxu0 0.0
        %2247 = vmatpush1.msra.mxu0 0.0
        %2248 = vmatprep.subr.mxu0 0.0
        %2249 = vmatpush1.msra.mxu0 0.0
        %2250 = vmatprep.subr.mxu0 0.0
        %2251 = vmatpush1.msra.mxu0 0.0
        %2252 = vmatprep.subr.mxu0 0.0
        %2253 = vmatpush1.msra.mxu0 0.0
        %2254 = vmatprep.subr.mxu0 0.0
        %2255 = vmatpush1.msra.mxu0 0.0
        %2256 = vmatprep.subr.mxu0 0.0
        %2257 = vmatpush1.msra.mxu0 0.0
        %2258 = vmatprep.subr.mxu0 0.0
        %2259 = vmatpush1.msra.mxu0 0.0
        %2260 = vmatprep.subr.mxu0 0.0
        %2261 = vmatpush1.msra.mxu0 0.0
        %2262 = vmatprep.subr.mxu0 0.0
        %2263 = vmatpush1.msra.mxu0 0.0
        %2264 = vmatprep.subr.mxu0 0.0
        %2265 = vmatpush1.msra.mxu0 0.0
        %2266 = vmatprep.subr.mxu0 0.0
        %2267 = vmatpush1.msra.mxu0 0.0
        %2268 = vmatprep.subr.mxu0 0.0
        %2269 = vmatpush1.msra.mxu0 0.0
        %2270 = vmatprep.subr.mxu0 0.0
        %2271 = vmatpush1.msra.mxu0 0.0
        %2272 = vmatprep.subr.mxu0 0.0
        %2273 = vmatpush1.msra.mxu0 0.0
        %2274 = vmatprep.subr.mxu0 0.0
        %2275 = vmatpush1.msra.mxu0 0.0
        %2276 = vmatprep.mubr.f32.mxu0 0.0
        %2277 = vmatmul.mubr.f32.gmra.mrb[0].mxu0 %v2207
        %v2278 = vpop.f32.mrb[0].mxu0
        %v2279 = vadd.f32 0.0, %v2278
        %v2280 = vpop.f32.mrb[0].mxu0
        %2281 = vdwg.mxu0
        %vm2282 = vcmask 111616
        %2283 = vst.msk [vmem:[#allocation4] sm:$0x3f] %vm2282, %v2279
        %v2284 = vld [vmem:[#allocation3] sm:$0x3f]
        %2286 = vrot.lane.b32.xlu0 %v2284, 127
        %v2287 = vpop.permute.xlu0 %2286
        %v2289 = vmax.f32 %v2284, %v2287
        %2290 = vrot.lane.b32.xlu0 %v2284, 96
        %v2291 = vpop.permute.xlu0 %2290
        %v2293 = vmax.f32 %v2289, %v2291
        %2294 = vrot.lane.b32.xlu0 %v2284, 95
        %v2295 = vpop.permute.xlu0 %2294
        %v2297 = vmax.f32 %v2293, %v2295
        %2299 = vrot.lane.b32.xlu0 %v2297, 64
        %v2300 = vpop.permute.xlu0 %2299
        %v2301 = vsel %vm2205, %v2300, 0
        %2303 = vmatprep.subr.mxu0 0.0
        %2304 = vmatpush1.msra.mxu0 %v2187
        %2305 = vmatprep.subr.mxu0 0.0
        %2306 = vmatpush1.msra.mxu0 %v2188
        %2307 = vmatprep.subr.mxu0 0.0
        %2308 = vmatpush1.msra.mxu0 %v2189
        %2309 = vmatprep.subr.mxu0 0.0
        %2310 = vmatpush1.msra.mxu0 %v2210
        %2311 = vmatprep.subr.mxu0 0.0
        %2312 = vmatpush1.msra.mxu0 0.0
        %2313 = vmatprep.subr.mxu0 0.0
        %2314 = vmatpush1.msra.mxu0 0.0
        %2315 = vmatprep.subr.mxu0 0.0
        %2316 = vmatpush1.msra.mxu0 0.0
        %2317 = vmatprep.subr.mxu0 0.0
        %2318 = vmatpush1.msra.mxu0 0.0
        %2319 = vmatprep.subr.mxu0 0.0
        %2320 = vmatpush1.msra.mxu0 0.0
        %2321 = vmatprep.subr.mxu0 0.0
        %2322 = vmatpush1.msra.mxu0 0.0
        %2323 = vmatprep.subr.mxu0 0.0
        %2324 = vmatpush1.msra.mxu0 0.0
        %2325 = vmatprep.subr.mxu0 0.0
        %2326 = vmatpush1.msra.mxu0 0.0
        %2327 = vmatprep.subr.mxu0 0.0
        %2328 = vmatpush1.msra.mxu0 0.0
        %2329 = vmatprep.subr.mxu0 0.0
        %2330 = vmatpush1.msra.mxu0 0.0
        %2331 = vmatprep.subr.mxu0 0.0
        %2332 = vmatpush1.msra.mxu0 0.0
        %2333 = vmatprep.subr.mxu0 0.0
        %2334 = vmatpush1.msra.mxu0 0.0
        %2335 = vmatprep.subr.mxu0 0.0
        %2336 = vmatpush1.msra.mxu0 0.0
        %2337 = vmatprep.subr.mxu0 0.0
        %2338 = vmatpush1.msra.mxu0 0.0
        %2339 = vmatprep.subr.mxu0 0.0
        %2340 = vmatpush1.msra.mxu0 0.0
        %2341 = vmatprep.subr.mxu0 0.0
        %2342 = vmatpush1.msra.mxu0 0.0
        %2343 = vmatprep.subr.mxu0 0.0
        %2344 = vmatpush1.msra.mxu0 0.0
        %2345 = vmatprep.subr.mxu0 0.0
        %2346 = vmatpush1.msra.mxu0 0.0
        %2347 = vmatprep.subr.mxu0 0.0
        %2348 = vmatpush1.msra.mxu0 0.0
        %2349 = vmatprep.subr.mxu0 0.0
        %2350 = vmatpush1.msra.mxu0 0.0
        %2351 = vmatprep.subr.mxu0 0.0
        %2352 = vmatpush1.msra.mxu0 0.0
        %2353 = vmatprep.subr.mxu0 0.0
        %2354 = vmatpush1.msra.mxu0 0.0
        %2355 = vmatprep.subr.mxu0 0.0
        %2356 = vmatpush1.msra.mxu0 0.0
        %2357 = vmatprep.subr.mxu0 0.0
        %2358 = vmatpush1.msra.mxu0 0.0
        %2359 = vmatprep.subr.mxu0 0.0
        %2360 = vmatpush1.msra.mxu0 0.0
        %2361 = vmatprep.subr.mxu0 0.0
        %2362 = vmatpush1.msra.mxu0 0.0
        %2363 = vmatprep.subr.mxu0 0.0
        %2364 = vmatpush1.msra.mxu0 0.0
        %2365 = vmatprep.subr.mxu0 0.0
        %2366 = vmatpush1.msra.mxu0 0.0
        %2367 = vmatprep.mubr.f32.mxu0 0.0
        %2368 = vmatmul.mubr.f32.gmra.mrb[0].mxu0 %v2301
        %v2369 = vpop.f32.mrb[0].mxu0
        %v2370 = vadd.f32 0.0, %v2369
        %v2371 = vpop.f32.mrb[0].mxu0
        %2372 = vdwg.mxu0
        %2374 = vrot.lane.b32.xlu0 %v2370, 14
        %v2375 = vpop.permute.xlu0 %2374
        %vm2377 = vcmask 226416
        %2378 = vst.msk [vmem:[#allocation4] sm:$0x3f] %vm2377, %v2375
        %v2379 = vld [vmem:[#allocation3 + $0x8] sm:$0x3f]
        %2381 = vrot.lane.b32.xlu0 %v2379, 127
        %v2382 = vpop.permute.xlu0 %2381
        %v2384 = vmax.f32 %v2379, %v2382
        %2385 = vrot.lane.b32.xlu0 %v2379, 96
        %v2386 = vpop.permute.xlu0 %2385
        %v2388 = vmax.f32 %v2384, %v2386
        %2389 = vrot.lane.b32.xlu0 %v2379, 95
        %v2390 = vpop.permute.xlu0 %2389
        %v2392 = vmax.f32 %v2388, %v2390
        %v2394 = vsel %vm2205, %v2392, 0
        %2396 = vmatprep.subr.mxu0 0.0
        %2397 = vmatpush1.msra.mxu0 %v2187
        %2398 = vmatprep.subr.mxu0 0.0
        %2399 = vmatpush1.msra.mxu0 %v2188
        %2400 = vmatprep.subr.mxu0 0.0
        %2401 = vmatpush1.msra.mxu0 %v2189
        %2402 = vmatprep.subr.mxu0 0.0
        %2403 = vmatpush1.msra.mxu0 %v2210
        %2404 = vmatprep.subr.mxu0 0.0
        %2405 = vmatpush1.msra.mxu0 0.0
        %2406 = vmatprep.subr.mxu0 0.0
        %2407 = vmatpush1.msra.mxu0 0.0
        %2408 = vmatprep.subr.mxu0 0.0
        %2409 = vmatpush1.msra.mxu0 0.0
        %2410 = vmatprep.subr.mxu0 0.0
        %2411 = vmatpush1.msra.mxu0 0.0
        %2412 = vmatprep.subr.mxu0 0.0
        %2413 = vmatpush1.msra.mxu0 0.0
        %2414 = vmatprep.subr.mxu0 0.0
        %2415 = vmatpush1.msra.mxu0 0.0
        %2416 = vmatprep.subr.mxu0 0.0
        %2417 = vmatpush1.msra.mxu0 0.0
        %2418 = vmatprep.subr.mxu0 0.0
        %2419 = vmatpush1.msra.mxu0 0.0
        %2420 = vmatprep.subr.mxu0 0.0
        %2421 = vmatpush1.msra.mxu0 0.0
        %2422 = vmatprep.subr.mxu0 0.0
        %2423 = vmatpush1.msra.mxu0 0.0
        %2424 = vmatprep.subr.mxu0 0.0
        %2425 = vmatpush1.msra.mxu0 0.0
        %2426 = vmatprep.subr.mxu0 0.0
        %2427 = vmatpush1.msra.mxu0 0.0
        %2428 = vmatprep.subr.mxu0 0.0
        %2429 = vmatpush1.msra.mxu0 0.0
        %2430 = vmatprep.subr.mxu0 0.0
        %2431 = vmatpush1.msra.mxu0 0.0
        %2432 = vmatprep.subr.mxu0 0.0
        %2433 = vmatpush1.msra.mxu0 0.0
        %2434 = vmatprep.subr.mxu0 0.0
        %2435 = vmatpush1.msra.mxu0 0.0
        %2436 = vmatprep.subr.mxu0 0.0
        %2437 = vmatpush1.msra.mxu0 0.0
        %2438 = vmatprep.subr.mxu0 0.0
        %2439 = vmatpush1.msra.mxu0 0.0
        %2440 = vmatprep.subr.mxu0 0.0
        %2441 = vmatpush1.msra.mxu0 0.0
        %2442 = vmatprep.subr.mxu0 0.0
        %2443 = vmatpush1.msra.mxu0 0.0
        %2444 = vmatprep.subr.mxu0 0.0
        %2445 = vmatpush1.msra.mxu0 0.0
        %2446 = vmatprep.subr.mxu0 0.0
        %2447 = vmatpush1.msra.mxu0 0.0
        %2448 = vmatprep.subr.mxu0 0.0
        %2449 = vmatpush1.msra.mxu0 0.0
        %2450 = vmatprep.subr.mxu0 0.0
        %2451 = vmatpush1.msra.mxu0 0.0
        %2452 = vmatprep.subr.mxu0 0.0
        %2453 = vmatpush1.msra.mxu0 0.0
        %2454 = vmatprep.subr.mxu0 0.0
        %2455 = vmatpush1.msra.mxu0 0.0
        %2456 = vmatprep.subr.mxu0 0.0
        %2457 = vmatpush1.msra.mxu0 0.0
        %2458 = vmatprep.subr.mxu0 0.0
        %2459 = vmatpush1.msra.mxu0 0.0
        %2460 = vmatprep.mubr.f32.mxu0 0.0
        %2461 = vmatmul.mubr.f32.gmra.mrb[0].mxu0 %v2394
        %v2462 = vpop.f32.mrb[0].mxu0
        %v2463 = vadd.f32 0.0, %v2462
        %v2464 = vpop.f32.mrb[0].mxu0
        %2465 = vdwg.mxu0
        %2467 = vrot.lane.b32.xlu0 %v2463, 28
        %v2468 = vpop.permute.xlu0 %2467
        %vm2470 = vcmask 341216
        %2471 = vst.msk [vmem:[#allocation4] sm:$0x3f] %vm2470, %v2468
        %v2472 = vld [vmem:[#allocation3 + $0x8] sm:$0x3f]
        %2474 = vrot.lane.b32.xlu0 %v2472, 127
        %v2475 = vpop.permute.xlu0 %2474
        %v2477 = vmax.f32 %v2472, %v2475
        %2478 = vrot.lane.b32.xlu0 %v2472, 96
        %v2479 = vpop.permute.xlu0 %2478
        %v2481 = vmax.f32 %v2477, %v2479
        %2482 = vrot.lane.b32.xlu0 %v2472, 95
        %v2483 = vpop.permute.xlu0 %2482
        %v2485 = vmax.f32 %v2481, %v2483
        %2487 = vrot.lane.b32.xlu0 %v2485, 64
        %v2488 = vpop.permute.xlu0 %2487
        %v2489 = vsel %vm2205, %v2488, 0
        %2491 = vmatprep.subr.mxu0 0.0
        %2492 = vmatpush1.msra.mxu0 %v2187
        %2493 = vmatprep.subr.mxu0 0.0
        %2494 = vmatpush1.msra.mxu0 %v2188
        %2495 = vmatprep.subr.mxu0 0.0
        %2496 = vmatpush1.msra.mxu0 %v2189
        %2497 = vmatprep.subr.mxu0 0.0
        %2498 = vmatpush1.msra.mxu0 %v2210
        %2499 = vmatprep.subr.mxu0 0.0
        %2500 = vmatpush1.msra.mxu0 0.0
        %2501 = vmatprep.subr.mxu0 0.0
        %2502 = vmatpush1.msra.mxu0 0.0
        %2503 = vmatprep.subr.mxu0 0.0
        %2504 = vmatpush1.msra.mxu0 0.0
        %2505 = vmatprep.subr.mxu0 0.0
        %2506 = vmatpush1.msra.mxu0 0.0
        %2507 = vmatprep.subr.mxu0 0.0
        %2508 = vmatpush1.msra.mxu0 0.0
        %2509 = vmatprep.subr.mxu0 0.0
        %2510 = vmatpush1.msra.mxu0 0.0
        %2511 = vmatprep.subr.mxu0 0.0
        %2512 = vmatpush1.msra.mxu0 0.0
        %2513 = vmatprep.subr.mxu0 0.0
        %2514 = vmatpush1.msra.mxu0 0.0
        %2515 = vmatprep.subr.mxu0 0.0
        %2516 = vmatpush1.msra.mxu0 0.0
        %2517 = vmatprep.subr.mxu0 0.0
        %2518 = vmatpush1.msra.mxu0 0.0
        %2519 = vmatprep.subr.mxu0 0.0
        %2520 = vmatpush1.msra.mxu0 0.0
        %2521 = vmatprep.subr.mxu0 0.0
        %2522 = vmatpush1.msra.mxu0 0.0
        %2523 = vmatprep.subr.mxu0 0.0
        %2524 = vmatpush1.msra.mxu0 0.0
        %2525 = vmatprep.subr.mxu0 0.0
        %2526 = vmatpush1.msra.mxu0 0.0
        %2527 = vmatprep.subr.mxu0 0.0
        %2528 = vmatpush1.msra.mxu0 0.0
        %2529 = vmatprep.subr.mxu0 0.0
        %2530 = vmatpush1.msra.mxu0 0.0
        %2531 = vmatprep.subr.mxu0 0.0
        %2532 = vmatpush1.msra.mxu0 0.0
        %2533 = vmatprep.subr.mxu0 0.0
        %2534 = vmatpush1.msra.mxu0 0.0
        %2535 = vmatprep.subr.mxu0 0.0
        %2536 = vmatpush1.msra.mxu0 0.0
        %2537 = vmatprep.subr.mxu0 0.0
        %2538 = vmatpush1.msra.mxu0 0.0
        %2539 = vmatprep.subr.mxu0 0.0
        %2540 = vmatpush1.msra.mxu0 0.0
        %2541 = vmatprep.subr.mxu0 0.0
        %2542 = vmatpush1.msra.mxu0 0.0
        %2543 = vmatprep.subr.mxu0 0.0
        %2544 = vmatpush1.msra.mxu0 0.0
        %2545 = vmatprep.subr.mxu0 0.0
        %2546 = vmatpush1.msra.mxu0 0.0
        %2547 = vmatprep.subr.mxu0 0.0
        %2548 = vmatpush1.msra.mxu0 0.0
        %2549 = vmatprep.subr.mxu0 0.0
        %2550 = vmatpush1.msra.mxu0 0.0
        %2551 = vmatprep.subr.mxu0 0.0
        %2552 = vmatpush1.msra.mxu0 0.0
        %2553 = vmatprep.subr.mxu0 0.0
        %2554 = vmatpush1.msra.mxu0 0.0
        %2555 = vmatprep.mubr.f32.mxu0 0.0
        %2556 = vmatmul.mubr.f32.gmra.mrb[0].mxu0 %v2489
        %v2557 = vpop.f32.mrb[0].mxu0
        %v2558 = vadd.f32 0.0, %v2557
        %v2559 = vpop.f32.mrb[0].mxu0
        %2560 = vdwg.mxu0
        %2562 = vrot.lane.b32.xlu0 %v2558, 42
        %v2563 = vpop.permute.xlu0 %2562
        %vm2565 = vcmask 456016
        %2566 = vst.msk [vmem:[#allocation4] sm:$0x3f] %vm2565, %v2563
        %v2567 = vld [vmem:[#allocation3 + $0x10] sm:$0x3f]
        %2569 = vrot.lane.b32.xlu0 %v2567, 127
        %v2570 = vpop.permute.xlu0 %2569
        %v2572 = vmax.f32 %v2567, %v2570
        %2573 = vrot.lane.b32.xlu0 %v2567, 96
        %v2574 = vpop.permute.xlu0 %2573
        %v2576 = vmax.f32 %v2572, %v2574
        %2577 = vrot.lane.b32.xlu0 %v2567, 95
        %v2578 = vpop.permute.xlu0 %2577
        %v2580 = vmax.f32 %v2576, %v2578
        %v2582 = vsel %vm2205, %v2580, 0
        %2584 = vmatprep.subr.mxu0 0.0
        %2585 = vmatpush1.msra.mxu0 %v2187
        %2586 = vmatprep.subr.mxu0 0.0
        %2587 = vmatpush1.msra.mxu0 %v2188
        %2588 = vmatprep.subr.mxu0 0.0
        %2589 = vmatpush1.msra.mxu0 %v2189
        %2590 = vmatprep.subr.mxu0 0.0
        %2591 = vmatpush1.msra.mxu0 %v2210
        %2592 = vmatprep.subr.mxu0 0.0
        %2593 = vmatpush1.msra.mxu0 0.0
        %2594 = vmatprep.subr.mxu0 0.0
        %2595 = vmatpush1.msra.mxu0 0.0
        %2596 = vmatprep.subr.mxu0 0.0
        %2597 = vmatpush1.msra.mxu0 0.0
        %2598 = vmatprep.subr.mxu0 0.0
        %2599 = vmatpush1.msra.mxu0 0.0
        %2600 = vmatprep.subr.mxu0 0.0
        %2601 = vmatpush1.msra.mxu0 0.0
        %2602 = vmatprep.subr.mxu0 0.0
        %2603 = vmatpush1.msra.mxu0 0.0
        %2604 = vmatprep.subr.mxu0 0.0
        %2605 = vmatpush1.msra.mxu0 0.0
        %2606 = vmatprep.subr.mxu0 0.0
        %2607 = vmatpush1.msra.mxu0 0.0
        %2608 = vmatprep.subr.mxu0 0.0
        %2609 = vmatpush1.msra.mxu0 0.0
        %2610 = vmatprep.subr.mxu0 0.0
        %2611 = vmatpush1.msra.mxu0 0.0
        %2612 = vmatprep.subr.mxu0 0.0
        %2613 = vmatpush1.msra.mxu0 0.0
        %2614 = vmatprep.subr.mxu0 0.0
        %2615 = vmatpush1.msra.mxu0 0.0
        %2616 = vmatprep.subr.mxu0 0.0
        %2617 = vmatpush1.msra.mxu0 0.0
        %2618 = vmatprep.subr.mxu0 0.0
        %2619 = vmatpush1.msra.mxu0 0.0
        %2620 = vmatprep.subr.mxu0 0.0
        %2621 = vmatpush1.msra.mxu0 0.0
        %2622 = vmatprep.subr.mxu0 0.0
        %2623 = vmatpush1.msra.mxu0 0.0
        %2624 = vmatprep.subr.mxu0 0.0
        %2625 = vmatpush1.msra.mxu0 0.0
        %2626 = vmatprep.subr.mxu0 0.0
        %2627 = vmatpush1.msra.mxu0 0.0
        %2628 = vmatprep.subr.mxu0 0.0
        %2629 = vmatpush1.msra.mxu0 0.0
        %2630 = vmatprep.subr.mxu0 0.0
        %2631 = vmatpush1.msra.mxu0 0.0
        %2632 = vmatprep.subr.mxu0 0.0
        %2633 = vmatpush1.msra.mxu0 0.0
        %2634 = vmatprep.subr.mxu0 0.0
        %2635 = vmatpush1.msra.mxu0 0.0
        %2636 = vmatprep.subr.mxu0 0.0
        %2637 = vmatpush1.msra.mxu0 0.0
        %2638 = vmatprep.subr.mxu0 0.0
        %2639 = vmatpush1.msra.mxu0 0.0
        %2640 = vmatprep.subr.mxu0 0.0
        %2641 = vmatpush1.msra.mxu0 0.0
        %2642 = vmatprep.subr.mxu0 0.0
        %2643 = vmatpush1.msra.mxu0 0.0
        %2644 = vmatprep.subr.mxu0 0.0
        %2645 = vmatpush1.msra.mxu0 0.0
        %2646 = vmatprep.subr.mxu0 0.0
        %2647 = vmatpush1.msra.mxu0 0.0
        %2648 = vmatprep.mubr.f32.mxu0 0.0
        %2649 = vmatmul.mubr.f32.gmra.mrb[0].mxu0 %v2582
        %v2650 = vpop.f32.mrb[0].mxu0
        %v2651 = vadd.f32 0.0, %v2650
        %v2652 = vpop.f32.mrb[0].mxu0
        %2653 = vdwg.mxu0
        %2655 = vrot.lane.b32.xlu0 %v2651, 56
        %v2656 = vpop.permute.xlu0 %2655
        %vm2658 = vcmask 570816
        %2659 = vst.msk [vmem:[#allocation4] sm:$0x3f] %vm2658, %v2656
        %v2660 = vld [vmem:[#allocation3 + $0x10] sm:$0x3f]
        %2662 = vrot.lane.b32.xlu0 %v2660, 127
        %v2663 = vpop.permute.xlu0 %2662
        %v2665 = vmax.f32 %v2660, %v2663
        %2666 = vrot.lane.b32.xlu0 %v2660, 96
        %v2667 = vpop.permute.xlu0 %2666
        %v2669 = vmax.f32 %v2665, %v2667
        %2670 = vrot.lane.b32.xlu0 %v2660, 95
        %v2671 = vpop.permute.xlu0 %2670
        %v2673 = vmax.f32 %v2669, %v2671
        %2675 = vrot.lane.b32.xlu0 %v2673, 64
        %v2676 = vpop.permute.xlu0 %2675
        %v2677 = vsel %vm2205, %v2676, 0
        %2679 = vmatprep.subr.mxu0 0.0
        %2680 = vmatpush1.msra.mxu0 %v2187
        %2681 = vmatprep.subr.mxu0 0.0
        %2682 = vmatpush1.msra.mxu0 %v2188
        %2683 = vmatprep.subr.mxu0 0.0
        %2684 = vmatpush1.msra.mxu0 %v2189
        %2685 = vmatprep.subr.mxu0 0.0
        %2686 = vmatpush1.msra.mxu0 %v2210
        %2687 = vmatprep.subr.mxu0 0.0
        %2688 = vmatpush1.msra.mxu0 0.0
        %2689 = vmatprep.subr.mxu0 0.0
        %2690 = vmatpush1.msra.mxu0 0.0
        %2691 = vmatprep.subr.mxu0 0.0
        %2692 = vmatpush1.msra.mxu0 0.0
        %2693 = vmatprep.subr.mxu0 0.0
        %2694 = vmatpush1.msra.mxu0 0.0
        %2695 = vmatprep.subr.mxu0 0.0
        %2696 = vmatpush1.msra.mxu0 0.0
        %2697 = vmatprep.subr.mxu0 0.0
        %2698 = vmatpush1.msra.mxu0 0.0
        %2699 = vmatprep.subr.mxu0 0.0
        %2700 = vmatpush1.msra.mxu0 0.0
        %2701 = vmatprep.subr.mxu0 0.0
        %2702 = vmatpush1.msra.mxu0 0.0
        %2703 = vmatprep.subr.mxu0 0.0
        %2704 = vmatpush1.msra.mxu0 0.0
        %2705 = vmatprep.subr.mxu0 0.0
        %2706 = vmatpush1.msra.mxu0 0.0
        %2707 = vmatprep.subr.mxu0 0.0
        %2708 = vmatpush1.msra.mxu0 0.0
        %2709 = vmatprep.subr.mxu0 0.0
        %2710 = vmatpush1.msra.mxu0 0.0
        %2711 = vmatprep.subr.mxu0 0.0
        %2712 = vmatpush1.msra.mxu0 0.0
        %2713 = vmatprep.subr.mxu0 0.0
        %2714 = vmatpush1.msra.mxu0 0.0
        %2715 = vmatprep.subr.mxu0 0.0
        %2716 = vmatpush1.msra.mxu0 0.0
        %2717 = vmatprep.subr.mxu0 0.0
        %2718 = vmatpush1.msra.mxu0 0.0
        %2719 = vmatprep.subr.mxu0 0.0
        %2720 = vmatpush1.msra.mxu0 0.0
        %2721 = vmatprep.subr.mxu0 0.0
        %2722 = vmatpush1.msra.mxu0 0.0
        %2723 = vmatprep.subr.mxu0 0.0
        %2724 = vmatpush1.msra.mxu0 0.0
        %2725 = vmatprep.subr.mxu0 0.0
        %2726 = vmatpush1.msra.mxu0 0.0
        %2727 = vmatprep.subr.mxu0 0.0
        %2728 = vmatpush1.msra.mxu0 0.0
        %2729 = vmatprep.subr.mxu0 0.0
        %2730 = vmatpush1.msra.mxu0 0.0
        %2731 = vmatprep.subr.mxu0 0.0
        %2732 = vmatpush1.msra.mxu0 0.0
        %2733 = vmatprep.subr.mxu0 0.0
        %2734 = vmatpush1.msra.mxu0 0.0
        %2735 = vmatprep.subr.mxu0 0.0
        %2736 = vmatpush1.msra.mxu0 0.0
        %2737 = vmatprep.subr.mxu0 0.0
        %2738 = vmatpush1.msra.mxu0 0.0
        %2739 = vmatprep.subr.mxu0 0.0
        %2740 = vmatpush1.msra.mxu0 0.0
        %2741 = vmatprep.subr.mxu0 0.0
        %2742 = vmatpush1.msra.mxu0 0.0
        %2743 = vmatprep.mubr.f32.mxu0 0.0
        %2744 = vmatmul.mubr.f32.gmra.mrb[0].mxu0 %v2677
        %v2745 = vpop.f32.mrb[0].mxu0
        %v2746 = vadd.f32 0.0, %v2745
        %v2747 = vpop.f32.mrb[0].mxu0
        %2748 = vdwg.mxu0
        %2750 = vrot.lane.b32.xlu0 %v2746, 70
        %v2751 = vpop.permute.xlu0 %2750
        %vm2753 = vcmask 685616
        %2754 = vst.msk [vmem:[#allocation4] sm:$0x3f] %vm2753, %v2751
        %v2755 = vld [vmem:[#allocation3 + $0x18] sm:$0x3f]
        %2757 = vrot.lane.b32.xlu0 %v2755, 127
        %v2758 = vpop.permute.xlu0 %2757
        %v2760 = vmax.f32 %v2755, %v2758
        %2761 = vrot.lane.b32.xlu0 %v2755, 96
        %v2762 = vpop.permute.xlu0 %2761
        %v2764 = vmax.f32 %v2760, %v2762
        %2765 = vrot.lane.b32.xlu0 %v2755, 95
        %v2766 = vpop.permute.xlu0 %2765
        %v2768 = vmax.f32 %v2764, %v2766
        %v2770 = vsel %vm2205, %v2768, 0
        %2772 = vmatprep.subr.mxu0 0.0
        %2773 = vmatpush1.msra.mxu0 %v2187
        %2774 = vmatprep.subr.mxu0 0.0
        %2775 = vmatpush1.msra.mxu0 %v2188
        %2776 = vmatprep.subr.mxu0 0.0
        %2777 = vmatpush1.msra.mxu0 %v2189
        %2778 = vmatprep.subr.mxu0 0.0
        %2779 = vmatpush1.msra.mxu0 %v2210
        %2780 = vmatprep.subr.mxu0 0.0
        %2781 = vmatpush1.msra.mxu0 0.0
        %2782 = vmatprep.subr.mxu0 0.0
        %2783 = vmatpush1.msra.mxu0 0.0
        %2784 = vmatprep.subr.mxu0 0.0
        %2785 = vmatpush1.msra.mxu0 0.0
        %2786 = vmatprep.subr.mxu0 0.0
        %2787 = vmatpush1.msra.mxu0 0.0
        %2788 = vmatprep.subr.mxu0 0.0
        %2789 = vmatpush1.msra.mxu0 0.0
        %2790 = vmatprep.subr.mxu0 0.0
        %2791 = vmatpush1.msra.mxu0 0.0
        %2792 = vmatprep.subr.mxu0 0.0
        %2793 = vmatpush1.msra.mxu0 0.0
        %2794 = vmatprep.subr.mxu0 0.0
        %2795 = vmatpush1.msra.mxu0 0.0
        %2796 = vmatprep.subr.mxu0 0.0
        %2797 = vmatpush1.msra.mxu0 0.0
        %2798 = vmatprep.subr.mxu0 0.0
        %2799 = vmatpush1.msra.mxu0 0.0
        %2800 = vmatprep.subr.mxu0 0.0
        %2801 = vmatpush1.msra.mxu0 0.0
        %2802 = vmatprep.subr.mxu0 0.0
        %2803 = vmatpush1.msra.mxu0 0.0
        %2804 = vmatprep.subr.mxu0 0.0
        %2805 = vmatpush1.msra.mxu0 0.0
        %2806 = vmatprep.subr.mxu0 0.0
        %2807 = vmatpush1.msra.mxu0 0.0
        %2808 = vmatprep.subr.mxu0 0.0
        %2809 = vmatpush1.msra.mxu0 0.0
        %2810 = vmatprep.subr.mxu0 0.0
        %2811 = vmatpush1.msra.mxu0 0.0
        %2812 = vmatprep.subr.mxu0 0.0
        %2813 = vmatpush1.msra.mxu0 0.0
        %2814 = vmatprep.subr.mxu0 0.0
        %2815 = vmatpush1.msra.mxu0 0.0
        %2816 = vmatprep.subr.mxu0 0.0
        %2817 = vmatpush1.msra.mxu0 0.0
        %2818 = vmatprep.subr.mxu0 0.0
        %2819 = vmatpush1.msra.mxu0 0.0
        %2820 = vmatprep.subr.mxu0 0.0
        %2821 = vmatpush1.msra.mxu0 0.0
        %2822 = vmatprep.subr.mxu0 0.0
        %2823 = vmatpush1.msra.mxu0 0.0
        %2824 = vmatprep.subr.mxu0 0.0
        %2825 = vmatpush1.msra.mxu0 0.0
        %2826 = vmatprep.subr.mxu0 0.0
        %2827 = vmatpush1.msra.mxu0 0.0
        %2828 = vmatprep.subr.mxu0 0.0
        %2829 = vmatpush1.msra.mxu0 0.0
        %2830 = vmatprep.subr.mxu0 0.0
        %2831 = vmatpush1.msra.mxu0 0.0
        %2832 = vmatprep.subr.mxu0 0.0
        %2833 = vmatpush1.msra.mxu0 0.0
        %2834 = vmatprep.subr.mxu0 0.0
        %2835 = vmatpush1.msra.mxu0 0.0
        %2836 = vmatprep.mubr.f32.mxu0 0.0
        %2837 = vmatmul.mubr.f32.gmra.mrb[0].mxu0 %v2770
        %v2838 = vpop.f32.mrb[0].mxu0
        %v2839 = vadd.f32 0.0, %v2838
        %v2840 = vpop.f32.mrb[0].mxu0
        %2841 = vdwg.mxu0
        %2843 = vrot.lane.b32.xlu0 %v2839, 84
        %v2844 = vpop.permute.xlu0 %2843
        %vm2846 = vcmask 800416
        %2847 = vst.msk [vmem:[#allocation4] sm:$0x3f] %vm2846, %v2844
        %v2848 = vld [vmem:[#allocation3 + $0x18] sm:$0x3f]
        %2850 = vrot.lane.b32.xlu0 %v2848, 127
        %v2851 = vpop.permute.xlu0 %2850
        %v2853 = vmax.f32 %v2848, %v2851
        %2854 = vrot.lane.b32.xlu0 %v2848, 96
        %v2855 = vpop.permute.xlu0 %2854
        %v2857 = vmax.f32 %v2853, %v2855
        %2858 = vrot.lane.b32.xlu0 %v2848, 95
        %v2859 = vpop.permute.xlu0 %2858
        %v2861 = vmax.f32 %v2857, %v2859
        %2863 = vrot.lane.b32.xlu0 %v2861, 64
        %v2864 = vpop.permute.xlu0 %2863
        %v2865 = vsel %vm2205, %v2864, 0
        %2867 = vmatprep.subr.mxu0 0.0
        %2868 = vmatpush1.msra.mxu0 %v2187
        %2869 = vmatprep.subr.mxu0 0.0
        %2870 = vmatpush1.msra.mxu0 %v2188
        %2871 = vmatprep.subr.mxu0 0.0
        %2872 = vmatpush1.msra.mxu0 %v2189
        %2873 = vmatprep.subr.mxu0 0.0
        %2874 = vmatpush1.msra.mxu0 %v2210
        %2875 = vmatprep.subr.mxu0 0.0
        %2876 = vmatpush1.msra.mxu0 0.0
        %2877 = vmatprep.subr.mxu0 0.0
        %2878 = vmatpush1.msra.mxu0 0.0
        %2879 = vmatprep.subr.mxu0 0.0
        %2880 = vmatpush1.msra.mxu0 0.0
        %2881 = vmatprep.subr.mxu0 0.0
        %2882 = vmatpush1.msra.mxu0 0.0
        %2883 = vmatprep.subr.mxu0 0.0
        %2884 = vmatpush1.msra.mxu0 0.0
        %2885 = vmatprep.subr.mxu0 0.0
        %2886 = vmatpush1.msra.mxu0 0.0
        %2887 = vmatprep.subr.mxu0 0.0
        %2888 = vmatpush1.msra.mxu0 0.0
        %2889 = vmatprep.subr.mxu0 0.0
        %2890 = vmatpush1.msra.mxu0 0.0
        %2891 = vmatprep.subr.mxu0 0.0
        %2892 = vmatpush1.msra.mxu0 0.0
        %2893 = vmatprep.subr.mxu0 0.0
        %2894 = vmatpush1.msra.mxu0 0.0
        %2895 = vmatprep.subr.mxu0 0.0
        %2896 = vmatpush1.msra.mxu0 0.0
        %2897 = vmatprep.subr.mxu0 0.0
        %2898 = vmatpush1.msra.mxu0 0.0
        %2899 = vmatprep.subr.mxu0 0.0
        %2900 = vmatpush1.msra.mxu0 0.0
        %2901 = vmatprep.subr.mxu0 0.0
        %2902 = vmatpush1.msra.mxu0 0.0
        %2903 = vmatprep.subr.mxu0 0.0
        %2904 = vmatpush1.msra.mxu0 0.0
        %2905 = vmatprep.subr.mxu0 0.0
        %2906 = vmatpush1.msra.mxu0 0.0
        %2907 = vmatprep.subr.mxu0 0.0
        %2908 = vmatpush1.msra.mxu0 0.0
        %2909 = vmatprep.subr.mxu0 0.0
        %2910 = vmatpush1.msra.mxu0 0.0
        %2911 = vmatprep.subr.mxu0 0.0
        %2912 = vmatpush1.msra.mxu0 0.0
        %2913 = vmatprep.subr.mxu0 0.0
        %2914 = vmatpush1.msra.mxu0 0.0
        %2915 = vmatprep.subr.mxu0 0.0
        %2916 = vmatpush1.msra.mxu0 0.0
        %2917 = vmatprep.subr.mxu0 0.0
        %2918 = vmatpush1.msra.mxu0 0.0
        %2919 = vmatprep.subr.mxu0 0.0
        %2920 = vmatpush1.msra.mxu0 0.0
        %2921 = vmatprep.subr.mxu0 0.0
        %2922 = vmatpush1.msra.mxu0 0.0
        %2923 = vmatprep.subr.mxu0 0.0
        %2924 = vmatpush1.msra.mxu0 0.0
        %2925 = vmatprep.subr.mxu0 0.0
        %2926 = vmatpush1.msra.mxu0 0.0
        %2927 = vmatprep.subr.mxu0 0.0
        %2928 = vmatpush1.msra.mxu0 0.0
        %2929 = vmatprep.subr.mxu0 0.0
        %2930 = vmatpush1.msra.mxu0 0.0
        %2931 = vmatprep.mubr.f32.mxu0 0.0
        %2932 = vmatmul.mubr.f32.gmra.mrb[0].mxu0 %v2865
        %v2933 = vpop.f32.mrb[0].mxu0
        %v2934 = vadd.f32 0.0, %v2933
        %v2935 = vpop.f32.mrb[0].mxu0
        %2936 = vdwg.mxu0
        %2938 = vrot.lane.b32.xlu0 %v2934, 98
        %v2939 = vpop.permute.xlu0 %2938
        %vm2941 = vcmask 915216
        %2942 = vst.msk [vmem:[#allocation4] sm:$0x3f] %vm2941, %v2939
        %v2943 = vld [vmem:[#allocation3 + $0x20] sm:$0x3f]
        %2945 = vrot.lane.b32.xlu0 %v2943, 127
        %v2946 = vpop.permute.xlu0 %2945
        %v2948 = vmax.f32 %v2943, %v2946
        %2949 = vrot.lane.b32.xlu0 %v2943, 96
        %v2950 = vpop.permute.xlu0 %2949
        %v2952 = vmax.f32 %v2948, %v2950
        %2953 = vrot.lane.b32.xlu0 %v2943, 95
        %v2954 = vpop.permute.xlu0 %2953
        %v2956 = vmax.f32 %v2952, %v2954
        %v2958 = vsel %vm2205, %v2956, 0
        %2960 = vmatprep.subr.mxu0 0.0
        %2961 = vmatpush1.msra.mxu0 %v2187
        %2962 = vmatprep.subr.mxu0 0.0
        %2963 = vmatpush1.msra.mxu0 %v2188
        %2964 = vmatprep.subr.mxu0 0.0
        %2965 = vmatpush1.msra.mxu0 %v2189
        %2966 = vmatprep.subr.mxu0 0.0
        %2967 = vmatpush1.msra.mxu0 %v2210
        %2968 = vmatprep.subr.mxu0 0.0
        %2969 = vmatpush1.msra.mxu0 0.0
        %2970 = vmatprep.subr.mxu0 0.0
        %2971 = vmatpush1.msra.mxu0 0.0
        %2972 = vmatprep.subr.mxu0 0.0
        %2973 = vmatpush1.msra.mxu0 0.0
        %2974 = vmatprep.subr.mxu0 0.0
        %2975 = vmatpush1.msra.mxu0 0.0
        %2976 = vmatprep.subr.mxu0 0.0
        %2977 = vmatpush1.msra.mxu0 0.0
        %2978 = vmatprep.subr.mxu0 0.0
        %2979 = vmatpush1.msra.mxu0 0.0
        %2980 = vmatprep.subr.mxu0 0.0
        %2981 = vmatpush1.msra.mxu0 0.0
        %2982 = vmatprep.subr.mxu0 0.0
        %2983 = vmatpush1.msra.mxu0 0.0
        %2984 = vmatprep.subr.mxu0 0.0
        %2985 = vmatpush1.msra.mxu0 0.0
        %2986 = vmatprep.subr.mxu0 0.0
        %2987 = vmatpush1.msra.mxu0 0.0
        %2988 = vmatprep.subr.mxu0 0.0
        %2989 = vmatpush1.msra.mxu0 0.0
        %2990 = vmatprep.subr.mxu0 0.0
        %2991 = vmatpush1.msra.mxu0 0.0
        %2992 = vmatprep.subr.mxu0 0.0
        %2993 = vmatpush1.msra.mxu0 0.0
        %2994 = vmatprep.subr.mxu0 0.0
        %2995 = vmatpush1.msra.mxu0 0.0
        %2996 = vmatprep.subr.mxu0 0.0
        %2997 = vmatpush1.msra.mxu0 0.0
        %2998 = vmatprep.subr.mxu0 0.0
        %2999 = vmatpush1.msra.mxu0 0.0
        %3000 = vmatprep.subr.mxu0 0.0
        %3001 = vmatpush1.msra.mxu0 0.0
        %3002 = vmatprep.subr.mxu0 0.0
        %3003 = vmatpush1.msra.mxu0 0.0
        %3004 = vmatprep.subr.mxu0 0.0
        %3005 = vmatpush1.msra.mxu0 0.0
        %3006 = vmatprep.subr.mxu0 0.0
        %3007 = vmatpush1.msra.mxu0 0.0
        %3008 = vmatprep.subr.mxu0 0.0
        %3009 = vmatpush1.msra.mxu0 0.0
        %3010 = vmatprep.subr.mxu0 0.0
        %3011 = vmatpush1.msra.mxu0 0.0
        %3012 = vmatprep.subr.mxu0 0.0
        %3013 = vmatpush1.msra.mxu0 0.0
        %3014 = vmatprep.subr.mxu0 0.0
        %3015 = vmatpush1.msra.mxu0 0.0
        %3016 = vmatprep.subr.mxu0 0.0
        %3017 = vmatpush1.msra.mxu0 0.0
        %3018 = vmatprep.subr.mxu0 0.0
        %3019 = vmatpush1.msra.mxu0 0.0
        %3020 = vmatprep.subr.mxu0 0.0
        %3021 = vmatpush1.msra.mxu0 0.0
        %3022 = vmatprep.subr.mxu0 0.0
        %3023 = vmatpush1.msra.mxu0 0.0
        %3024 = vmatprep.mubr.f32.mxu0 0.0
        %3025 = vmatmul.mubr.f32.gmra.mrb[0].mxu0 %v2958
        %v3026 = vpop.f32.mrb[0].mxu0
        %v3027 = vadd.f32 0.0, %v3026
        %v3028 = vpop.f32.mrb[0].mxu0
        %3029 = vdwg.mxu0
        %3031 = vrot.lane.b32.xlu0 %v3027, 112
        %v3032 = vpop.permute.xlu0 %3031
        %vm3034 = vcmask 1030016
        %3035 = vst.msk [vmem:[#allocation4] sm:$0x3f] %vm3034, %v3032
        %v3036 = vld [vmem:[#allocation3 + $0x20] sm:$0x3f]
        %3038 = vrot.lane.b32.xlu0 %v3036, 127
        %v3039 = vpop.permute.xlu0 %3038
        %v3041 = vmax.f32 %v3036, %v3039
        %3042 = vrot.lane.b32.xlu0 %v3036, 96
        %v3043 = vpop.permute.xlu0 %3042
        %v3045 = vmax.f32 %v3041, %v3043
        %3046 = vrot.lane.b32.xlu0 %v3036, 95
        %v3047 = vpop.permute.xlu0 %3046
        %v3049 = vmax.f32 %v3045, %v3047
        %3051 = vrot.lane.b32.xlu0 %v3049, 64
        %v3052 = vpop.permute.xlu0 %3051
        %v3053 = vsel %vm2205, %v3052, 0
        %3055 = vmatprep.subr.mxu0 0.0
        %3056 = vmatpush1.msra.mxu0 %v2187
        %3057 = vmatprep.subr.mxu0 0.0
        %3058 = vmatpush1.msra.mxu0 %v2188
        %3059 = vmatprep.subr.mxu0 0.0
        %3060 = vmatpush1.msra.mxu0 %v2189
        %3061 = vmatprep.subr.mxu0 0.0
        %3062 = vmatpush1.msra.mxu0 %v2210
        %3063 = vmatprep.subr.mxu0 0.0
        %3064 = vmatpush1.msra.mxu0 0.0
        %3065 = vmatprep.subr.mxu0 0.0
        %3066 = vmatpush1.msra.mxu0 0.0
        %3067 = vmatprep.subr.mxu0 0.0
        %3068 = vmatpush1.msra.mxu0 0.0
        %3069 = vmatprep.subr.mxu0 0.0
        %3070 = vmatpush1.msra.mxu0 0.0
        %3071 = vmatprep.subr.mxu0 0.0
        %3072 = vmatpush1.msra.mxu0 0.0
        %3073 = vmatprep.subr.mxu0 0.0
        %3074 = vmatpush1.msra.mxu0 0.0
        %3075 = vmatprep.subr.mxu0 0.0
        %3076 = vmatpush1.msra.mxu0 0.0
        %3077 = vmatprep.subr.mxu0 0.0
        %3078 = vmatpush1.msra.mxu0 0.0
        %3079 = vmatprep.subr.mxu0 0.0
        %3080 = vmatpush1.msra.mxu0 0.0
        %3081 = vmatprep.subr.mxu0 0.0
        %3082 = vmatpush1.msra.mxu0 0.0
        %3083 = vmatprep.subr.mxu0 0.0
        %3084 = vmatpush1.msra.mxu0 0.0
        %3085 = vmatprep.subr.mxu0 0.0
        %3086 = vmatpush1.msra.mxu0 0.0
        %3087 = vmatprep.subr.mxu0 0.0
        %3088 = vmatpush1.msra.mxu0 0.0
        %3089 = vmatprep.subr.mxu0 0.0
        %3090 = vmatpush1.msra.mxu0 0.0
        %3091 = vmatprep.subr.mxu0 0.0
        %3092 = vmatpush1.msra.mxu0 0.0
        %3093 = vmatprep.subr.mxu0 0.0
        %3094 = vmatpush1.msra.mxu0 0.0
        %3095 = vmatprep.subr.mxu0 0.0
        %3096 = vmatpush1.msra.mxu0 0.0
        %3097 = vmatprep.subr.mxu0 0.0
        %3098 = vmatpush1.msra.mxu0 0.0
        %3099 = vmatprep.subr.mxu0 0.0
        %3100 = vmatpush1.msra.mxu0 0.0
        %3101 = vmatprep.subr.mxu0 0.0
        %3102 = vmatpush1.msra.mxu0 0.0
        %3103 = vmatprep.subr.mxu0 0.0
        %3104 = vmatpush1.msra.mxu0 0.0
        %3105 = vmatprep.subr.mxu0 0.0
        %3106 = vmatpush1.msra.mxu0 0.0
        %3107 = vmatprep.subr.mxu0 0.0
        %3108 = vmatpush1.msra.mxu0 0.0
        %3109 = vmatprep.subr.mxu0 0.0
        %3110 = vmatpush1.msra.mxu0 0.0
        %3111 = vmatprep.subr.mxu0 0.0
        %3112 = vmatpush1.msra.mxu0 0.0
        %3113 = vmatprep.subr.mxu0 0.0
        %3114 = vmatpush1.msra.mxu0 0.0
        %3115 = vmatprep.subr.mxu0 0.0
        %3116 = vmatpush1.msra.mxu0 0.0
        %3117 = vmatprep.subr.mxu0 0.0
        %3118 = vmatpush1.msra.mxu0 0.0
        %3119 = vmatprep.mubr.f32.mxu0 0.0
        %3120 = vmatmul.mubr.f32.gmra.mrb[0].mxu0 %v3053
        %v3121 = vpop.f32.mrb[0].mxu0
        %v3122 = vadd.f32 0.0, %v3121
        %v3123 = vpop.f32.mrb[0].mxu0
        %3124 = vdwg.mxu0
        %3126 = vrot.lane.b32.xlu0 %v3122, 126
        %v3127 = vpop.permute.xlu0 %3126
        %vm3129 = vcmask 1046512
        %3130 = vst.msk [vmem:[#allocation4] sm:$0x3f] %vm3129, %v3127
        %vm3131 = vcmask 95232
        %3132 = vst.msk [vmem:[#allocation4 + $0x8] sm:$0x3f] %vm3131, %v3127
        %v3133 = vld [vmem:[#allocation3 + $0x28] sm:$0x3f]
        %3135 = vrot.lane.b32.xlu0 %v3133, 127
        %v3136 = vpop.permute.xlu0 %3135
        %v3138 = vmax.f32 %v3133, %v3136
        %3139 = vrot.lane.b32.xlu0 %v3133, 96
        %v3140 = vpop.permute.xlu0 %3139
        %v3142 = vmax.f32 %v3138, %v3140
        %3143 = vrot.lane.b32.xlu0 %v3133, 95
        %v3144 = vpop.permute.xlu0 %3143
        %v3146 = vmax.f32 %v3142, %v3144
        %v3148 = vsel %vm2205, %v3146, 0
        %3150 = vmatprep.subr.mxu0 0.0
        %3151 = vmatpush1.msra.mxu0 %v2187
        %3152 = vmatprep.subr.mxu0 0.0
        %3153 = vmatpush1.msra.mxu0 %v2188
        %3154 = vmatprep.subr.mxu0 0.0
        %3155 = vmatpush1.msra.mxu0 %v2189
        %3156 = vmatprep.subr.mxu0 0.0
        %3157 = vmatpush1.msra.mxu0 %v2210
        %3158 = vmatprep.subr.mxu0 0.0
        %3159 = vmatpush1.msra.mxu0 0.0
        %3160 = vmatprep.subr.mxu0 0.0
        %3161 = vmatpush1.msra.mxu0 0.0
        %3162 = vmatprep.subr.mxu0 0.0
        %3163 = vmatpush1.msra.mxu0 0.0
        %3164 = vmatprep.subr.mxu0 0.0
        %3165 = vmatpush1.msra.mxu0 0.0
        %3166 = vmatprep.subr.mxu0 0.0
        %3167 = vmatpush1.msra.mxu0 0.0
        %3168 = vmatprep.subr.mxu0 0.0
        %3169 = vmatpush1.msra.mxu0 0.0
        %3170 = vmatprep.subr.mxu0 0.0
        %3171 = vmatpush1.msra.mxu0 0.0
        %3172 = vmatprep.subr.mxu0 0.0
        %3173 = vmatpush1.msra.mxu0 0.0
        %3174 = vmatprep.subr.mxu0 0.0
        %3175 = vmatpush1.msra.mxu0 0.0
        %3176 = vmatprep.subr.mxu0 0.0
        %3177 = vmatpush1.msra.mxu0 0.0
        %3178 = vmatprep.subr.mxu0 0.0
        %3179 = vmatpush1.msra.mxu0 0.0
        %3180 = vmatprep.subr.mxu0 0.0
        %3181 = vmatpush1.msra.mxu0 0.0
        %3182 = vmatprep.subr.mxu0 0.0
        %3183 = vmatpush1.msra.mxu0 0.0
        %3184 = vmatprep.subr.mxu0 0.0
        %3185 = vmatpush1.msra.mxu0 0.0
        %3186 = vmatprep.subr.mxu0 0.0
        %3187 = vmatpush1.msra.mxu0 0.0
        %3188 = vmatprep.subr.mxu0 0.0
        %3189 = vmatpush1.msra.mxu0 0.0
        %3190 = vmatprep.subr.mxu0 0.0
        %3191 = vmatpush1.msra.mxu0 0.0
        %3192 = vmatprep.subr.mxu0 0.0
        %3193 = vmatpush1.msra.mxu0 0.0
        %3194 = vmatprep.subr.mxu0 0.0
        %3195 = vmatpush1.msra.mxu0 0.0
        %3196 = vmatprep.subr.mxu0 0.0
        %3197 = vmatpush1.msra.mxu0 0.0
        %3198 = vmatprep.subr.mxu0 0.0
        %3199 = vmatpush1.msra.mxu0 0.0
        %3200 = vmatprep.subr.mxu0 0.0
        %3201 = vmatpush1.msra.mxu0 0.0
        %3202 = vmatprep.subr.mxu0 0.0
        %3203 = vmatpush1.msra.mxu0 0.0
        %3204 = vmatprep.subr.mxu0 0.0
        %3205 = vmatpush1.msra.mxu0 0.0
        %3206 = vmatprep.subr.mxu0 0.0
        %3207 = vmatpush1.msra.mxu0 0.0
        %3208 = vmatprep.subr.mxu0 0.0
        %3209 = vmatpush1.msra.mxu0 0.0
        %3210 = vmatprep.subr.mxu0 0.0
        %3211 = vmatpush1.msra.mxu0 0.0
        %3212 = vmatprep.subr.mxu0 0.0
        %3213 = vmatpush1.msra.mxu0 0.0
        %3214 = vmatprep.mubr.f32.mxu0 0.0
        %3215 = vmatmul.mubr.f32.gmra.mrb[0].mxu0 %v3148
        %v3216 = vpop.f32.mrb[0].mxu0
        %v3217 = vadd.f32 0.0, %v3216
        %v3218 = vpop.f32.mrb[0].mxu0
        %3219 = vdwg.mxu0
        %3221 = vrot.lane.b32.xlu0 %v3217, 12
        %v3222 = vpop.permute.xlu0 %3221
        %vm3224 = vcmask 210016
        %3225 = vst.msk [vmem:[#allocation4 + $0x8] sm:$0x3f] %vm3224, %v3222
        %v3226 = vld [vmem:[#allocation3 + $0x28] sm:$0x3f]
        %3228 = vrot.lane.b32.xlu0 %v3226, 127
        %v3229 = vpop.permute.xlu0 %3228
        %v3231 = vmax.f32 %v3226, %v3229
        %3232 = vrot.lane.b32.xlu0 %v3226, 96
        %v3233 = vpop.permute.xlu0 %3232
        %v3235 = vmax.f32 %v3231, %v3233
        %3236 = vrot.lane.b32.xlu0 %v3226, 95
        %v3237 = vpop.permute.xlu0 %3236
        %v3239 = vmax.f32 %v3235, %v3237
        %3241 = vrot.lane.b32.xlu0 %v3239, 64
        %v3242 = vpop.permute.xlu0 %3241
        %v3243 = vsel %vm2205, %v3242, 0
        %3245 = vmatprep.subr.mxu0 0.0
        %3246 = vmatpush1.msra.mxu0 %v2187
        %3247 = vmatprep.subr.mxu0 0.0
        %3248 = vmatpush1.msra.mxu0 %v2188
        %3249 = vmatprep.subr.mxu0 0.0
        %3250 = vmatpush1.msra.mxu0 %v2189
        %3251 = vmatprep.subr.mxu0 0.0
        %3252 = vmatpush1.msra.mxu0 %v2210
        %3253 = vmatprep.subr.mxu0 0.0
        %3254 = vmatpush1.msra.mxu0 0.0
        %3255 = vmatprep.subr.mxu0 0.0
        %3256 = vmatpush1.msra.mxu0 0.0
        %3257 = vmatprep.subr.mxu0 0.0
        %3258 = vmatpush1.msra.mxu0 0.0
        %3259 = vmatprep.subr.mxu0 0.0
        %3260 = vmatpush1.msra.mxu0 0.0
        %3261 = vmatprep.subr.mxu0 0.0
        %3262 = vmatpush1.msra.mxu0 0.0
        %3263 = vmatprep.subr.mxu0 0.0
        %3264 = vmatpush1.msra.mxu0 0.0
        %3265 = vmatprep.subr.mxu0 0.0
        %3266 = vmatpush1.msra.mxu0 0.0
        %3267 = vmatprep.subr.mxu0 0.0
        %3268 = vmatpush1.msra.mxu0 0.0
        %3269 = vmatprep.subr.mxu0 0.0
        %3270 = vmatpush1.msra.mxu0 0.0
        %3271 = vmatprep.subr.mxu0 0.0
        %3272 = vmatpush1.msra.mxu0 0.0
        %3273 = vmatprep.subr.mxu0 0.0
        %3274 = vmatpush1.msra.mxu0 0.0
        %3275 = vmatprep.subr.mxu0 0.0
        %3276 = vmatpush1.msra.mxu0 0.0
        %3277 = vmatprep.subr.mxu0 0.0
        %3278 = vmatpush1.msra.mxu0 0.0
        %3279 = vmatprep.subr.mxu0 0.0
        %3280 = vmatpush1.msra.mxu0 0.0
        %3281 = vmatprep.subr.mxu0 0.0
        %3282 = vmatpush1.msra.mxu0 0.0
        %3283 = vmatprep.subr.mxu0 0.0
        %3284 = vmatpush1.msra.mxu0 0.0
        %3285 = vmatprep.subr.mxu0 0.0
        %3286 = vmatpush1.msra.mxu0 0.0
        %3287 = vmatprep.subr.mxu0 0.0
        %3288 = vmatpush1.msra.mxu0 0.0
        %3289 = vmatprep.subr.mxu0 0.0
        %3290 = vmatpush1.msra.mxu0 0.0
        %3291 = vmatprep.subr.mxu0 0.0
        %3292 = vmatpush1.msra.mxu0 0.0
        %3293 = vmatprep.subr.mxu0 0.0
        %3294 = vmatpush1.msra.mxu0 0.0
        %3295 = vmatprep.subr.mxu0 0.0
        %3296 = vmatpush1.msra.mxu0 0.0
        %3297 = vmatprep.subr.mxu0 0.0
        %3298 = vmatpush1.msra.mxu0 0.0
        %3299 = vmatprep.subr.mxu0 0.0
        %3300 = vmatpush1.msra.mxu0 0.0
        %3301 = vmatprep.subr.mxu0 0.0
        %3302 = vmatpush1.msra.mxu0 0.0
        %3303 = vmatprep.subr.mxu0 0.0
        %3304 = vmatpush1.msra.mxu0 0.0
        %3305 = vmatprep.subr.mxu0 0.0
        %3306 = vmatpush1.msra.mxu0 0.0
        %3307 = vmatprep.subr.mxu0 0.0
        %3308 = vmatpush1.msra.mxu0 0.0
        %3309 = vmatprep.mubr.f32.mxu0 0.0
        %3310 = vmatmul.mubr.f32.gmra.mrb[0].mxu0 %v3243
        %v3311 = vpop.f32.mrb[0].mxu0
        %v3312 = vadd.f32 0.0, %v3311
        %v3313 = vpop.f32.mrb[0].mxu0
        %3314 = vdwg.mxu0
        %3316 = vrot.lane.b32.xlu0 %v3312, 26
        %v3317 = vpop.permute.xlu0 %3316
        %vm3319 = vcmask 324816
        %3320 = vst.msk [vmem:[#allocation4 + $0x8] sm:$0x3f] %vm3319, %v3317
        %v3321 = vld [vmem:[#allocation3 + $0x30] sm:$0x3f]
        %3323 = vrot.lane.b32.xlu0 %v3321, 127
        %v3324 = vpop.permute.xlu0 %3323
        %v3326 = vmax.f32 %v3321, %v3324
        %3327 = vrot.lane.b32.xlu0 %v3321, 96
        %v3328 = vpop.permute.xlu0 %3327
        %v3330 = vmax.f32 %v3326, %v3328
        %3331 = vrot.lane.b32.xlu0 %v3321, 95
        %v3332 = vpop.permute.xlu0 %3331
        %v3334 = vmax.f32 %v3330, %v3332
        %v3336 = vsel %vm2205, %v3334, 0
        %3338 = vmatprep.subr.mxu0 0.0
        %3339 = vmatpush1.msra.mxu0 %v2187
        %3340 = vmatprep.subr.mxu0 0.0
        %3341 = vmatpush1.msra.mxu0 %v2188
        %3342 = vmatprep.subr.mxu0 0.0
        %3343 = vmatpush1.msra.mxu0 %v2189
        %3344 = vmatprep.subr.mxu0 0.0
        %3345 = vmatpush1.msra.mxu0 %v2210
        %3346 = vmatprep.subr.mxu0 0.0
        %3347 = vmatpush1.msra.mxu0 0.0
        %3348 = vmatprep.subr.mxu0 0.0
        %3349 = vmatpush1.msra.mxu0 0.0
        %3350 = vmatprep.subr.mxu0 0.0
        %3351 = vmatpush1.msra.mxu0 0.0
        %3352 = vmatprep.subr.mxu0 0.0
        %3353 = vmatpush1.msra.mxu0 0.0
        %3354 = vmatprep.subr.mxu0 0.0
        %3355 = vmatpush1.msra.mxu0 0.0
        %3356 = vmatprep.subr.mxu0 0.0
        %3357 = vmatpush1.msra.mxu0 0.0
        %3358 = vmatprep.subr.mxu0 0.0
        %3359 = vmatpush1.msra.mxu0 0.0
        %3360 = vmatprep.subr.mxu0 0.0
        %3361 = vmatpush1.msra.mxu0 0.0
        %3362 = vmatprep.subr.mxu0 0.0
        %3363 = vmatpush1.msra.mxu0 0.0
        %3364 = vmatprep.subr.mxu0 0.0
        %3365 = vmatpush1.msra.mxu0 0.0
        %3366 = vmatprep.subr.mxu0 0.0
        %3367 = vmatpush1.msra.mxu0 0.0
        %3368 = vmatprep.subr.mxu0 0.0
        %3369 = vmatpush1.msra.mxu0 0.0
        %3370 = vmatprep.subr.mxu0 0.0
        %3371 = vmatpush1.msra.mxu0 0.0
        %3372 = vmatprep.subr.mxu0 0.0
        %3373 = vmatpush1.msra.mxu0 0.0
        %3374 = vmatprep.subr.mxu0 0.0
        %3375 = vmatpush1.msra.mxu0 0.0
        %3376 = vmatprep.subr.mxu0 0.0
        %3377 = vmatpush1.msra.mxu0 0.0
        %3378 = vmatprep.subr.mxu0 0.0
        %3379 = vmatpush1.msra.mxu0 0.0
        %3380 = vmatprep.subr.mxu0 0.0
        %3381 = vmatpush1.msra.mxu0 0.0
        %3382 = vmatprep.subr.mxu0 0.0
        %3383 = vmatpush1.msra.mxu0 0.0
        %3384 = vmatprep.subr.mxu0 0.0
        %3385 = vmatpush1.msra.mxu0 0.0
        %3386 = vmatprep.subr.mxu0 0.0
        %3387 = vmatpush1.msra.mxu0 0.0
        %3388 = vmatprep.subr.mxu0 0.0
        %3389 = vmatpush1.msra.mxu0 0.0
        %3390 = vmatprep.subr.mxu0 0.0
        %3391 = vmatpush1.msra.mxu0 0.0
        %3392 = vmatprep.subr.mxu0 0.0
        %3393 = vmatpush1.msra.mxu0 0.0
        %3394 = vmatprep.subr.mxu0 0.0
        %3395 = vmatpush1.msra.mxu0 0.0
        %3396 = vmatprep.subr.mxu0 0.0
        %3397 = vmatpush1.msra.mxu0 0.0
        %3398 = vmatprep.subr.mxu0 0.0
        %3399 = vmatpush1.msra.mxu0 0.0
        %3400 = vmatprep.subr.mxu0 0.0
        %3401 = vmatpush1.msra.mxu0 0.0
        %3402 = vmatprep.mubr.f32.mxu0 0.0
        %3403 = vmatmul.mubr.f32.gmra.mrb[0].mxu0 %v3336
        %v3404 = vpop.f32.mrb[0].mxu0
        %v3405 = vadd.f32 0.0, %v3404
        %v3406 = vpop.f32.mrb[0].mxu0
        %3407 = vdwg.mxu0
        %3409 = vrot.lane.b32.xlu0 %v3405, 40
        %v3410 = vpop.permute.xlu0 %3409
        %vm3412 = vcmask 439616
        %3413 = vst.msk [vmem:[#allocation4 + $0x8] sm:$0x3f] %vm3412, %v3410
        %v3414 = vld [vmem:[#allocation3 + $0x30] sm:$0x3f]
        %3416 = vrot.lane.b32.xlu0 %v3414, 127
        %v3417 = vpop.permute.xlu0 %3416
        %v3419 = vmax.f32 %v3414, %v3417
        %3420 = vrot.lane.b32.xlu0 %v3414, 96
        %v3421 = vpop.permute.xlu0 %3420
        %v3423 = vmax.f32 %v3419, %v3421
        %3424 = vrot.lane.b32.xlu0 %v3414, 95
        %v3425 = vpop.permute.xlu0 %3424
        %v3427 = vmax.f32 %v3423, %v3425
        %3429 = vrot.lane.b32.xlu0 %v3427, 64
        %v3430 = vpop.permute.xlu0 %3429
        %v3431 = vsel %vm2205, %v3430, 0
        %3433 = vmatprep.subr.mxu0 0.0
        %3434 = vmatpush1.msra.mxu0 %v2187
        %3435 = vmatprep.subr.mxu0 0.0
        %3436 = vmatpush1.msra.mxu0 %v2188
        %3437 = vmatprep.subr.mxu0 0.0
        %3438 = vmatpush1.msra.mxu0 %v2189
        %3439 = vmatprep.subr.mxu0 0.0
        %3440 = vmatpush1.msra.mxu0 %v2210
        %3441 = vmatprep.subr.mxu0 0.0
        %3442 = vmatpush1.msra.mxu0 0.0
        %3443 = vmatprep.subr.mxu0 0.0
        %3444 = vmatpush1.msra.mxu0 0.0
        %3445 = vmatprep.subr.mxu0 0.0
        %3446 = vmatpush1.msra.mxu0 0.0
        %3447 = vmatprep.subr.mxu0 0.0
        %3448 = vmatpush1.msra.mxu0 0.0
        %3449 = vmatprep.subr.mxu0 0.0
        %3450 = vmatpush1.msra.mxu0 0.0
        %3451 = vmatprep.subr.mxu0 0.0
        %3452 = vmatpush1.msra.mxu0 0.0
        %3453 = vmatprep.subr.mxu0 0.0
        %3454 = vmatpush1.msra.mxu0 0.0
        %3455 = vmatprep.subr.mxu0 0.0
        %3456 = vmatpush1.msra.mxu0 0.0
        %3457 = vmatprep.subr.mxu0 0.0
        %3458 = vmatpush1.msra.mxu0 0.0
        %3459 = vmatprep.subr.mxu0 0.0
        %3460 = vmatpush1.msra.mxu0 0.0
        %3461 = vmatprep.subr.mxu0 0.0
        %3462 = vmatpush1.msra.mxu0 0.0
        %3463 = vmatprep.subr.mxu0 0.0
        %3464 = vmatpush1.msra.mxu0 0.0
        %3465 = vmatprep.subr.mxu0 0.0
        %3466 = vmatpush1.msra.mxu0 0.0
        %3467 = vmatprep.subr.mxu0 0.0
        %3468 = vmatpush1.msra.mxu0 0.0
        %3469 = vmatprep.subr.mxu0 0.0
        %3470 = vmatpush1.msra.mxu0 0.0
        %3471 = vmatprep.subr.mxu0 0.0
        %3472 = vmatpush1.msra.mxu0 0.0
        %3473 = vmatprep.subr.mxu0 0.0
        %3474 = vmatpush1.msra.mxu0 0.0
        %3475 = vmatprep.subr.mxu0 0.0
        %3476 = vmatpush1.msra.mxu0 0.0
        %3477 = vmatprep.subr.mxu0 0.0
        %3478 = vmatpush1.msra.mxu0 0.0
        %3479 = vmatprep.subr.mxu0 0.0
        %3480 = vmatpush1.msra.mxu0 0.0
        %3481 = vmatprep.subr.mxu0 0.0
        %3482 = vmatpush1.msra.mxu0 0.0
        %3483 = vmatprep.subr.mxu0 0.0
        %3484 = vmatpush1.msra.mxu0 0.0
        %3485 = vmatprep.subr.mxu0 0.0
        %3486 = vmatpush1.msra.mxu0 0.0
        %3487 = vmatprep.subr.mxu0 0.0
        %3488 = vmatpush1.msra.mxu0 0.0
        %3489 = vmatprep.subr.mxu0 0.0
        %3490 = vmatpush1.msra.mxu0 0.0
        %3491 = vmatprep.subr.mxu0 0.0
        %3492 = vmatpush1.msra.mxu0 0.0
        %3493 = vmatprep.subr.mxu0 0.0
        %3494 = vmatpush1.msra.mxu0 0.0
        %3495 = vmatprep.subr.mxu0 0.0
        %3496 = vmatpush1.msra.mxu0 0.0
        %3497 = vmatprep.mubr.f32.mxu0 0.0
        %3498 = vmatmul.mubr.f32.gmra.mrb[0].mxu0 %v3431
        %v3499 = vpop.f32.mrb[0].mxu0
        %v3500 = vadd.f32 0.0, %v3499
        %v3501 = vpop.f32.mrb[0].mxu0
        %3502 = vdwg.mxu0
        %3504 = vrot.lane.b32.xlu0 %v3500, 54
        %v3505 = vpop.permute.xlu0 %3504
        %vm3507 = vcmask 554416
        %3508 = vst.msk [vmem:[#allocation4 + $0x8] sm:$0x3f] %vm3507, %v3505
        %v3509 = vld [vmem:[#allocation4] sm:$0x3f]
        %v3510 = vld [vmem:[#allocation4 + $0x8] sm:$0x3f]
        %3511 = vst [vmem:[#allocation5] sm:$0x3f] %v3509
        %vm3512 = vcmask 62464
        %3513 = vst.msk [vmem:[#allocation5 + $0x8] sm:$0x3f] %vm3512, %v3510
        %v3514 = vld [vmem:[#allocation4] sm:$0x3f]
        %v3515 = vld [vmem:[#allocation4 + $0x8] sm:$0x3f]
        %v3518 = vrot.slane %v3514, 2
        %v3519 = vrot.slane %v3515, 2
        %3520 = vrot.lane.b32.xlu0 %v3518, 127
        %v3521 = vpop.permute.xlu0 %3520
        %3522 = vrot.lane.b32.xlu0 %v3519, 127
        %v3523 = vpop.permute.xlu0 %3522
        %v3524 = vsel %vm491, %v3521, %v3523
        %3527 = vst [vmem:[#allocation5] sm:$0xc0] %v3524
        %vm3528 = vcmask 64518
        %3529 = vst.msk [vmem:[#allocation5 + $0x8] sm:$0xc0] %vm3528, %v3523
        %3530 = vst [vmem:[#allocation5 + $0x10] sm:$0xf] %v3524
        %vm3531 = vcmask 60416
        %3532 = vst.msk [vmem:[#allocation5 + $0x18] sm:$0xf] %vm3531, %v3523
        %v3533 = vld [vmem:[#allocation4] sm:$0x3f]
        %v3534 = vld [vmem:[#allocation4 + $0x8] sm:$0x3f]
        %v3537 = vrot.slane %v3533, 4
        %v3538 = vrot.slane %v3534, 4
        %3539 = vrot.lane.b32.xlu0 %v3537, 126
        %v3540 = vpop.permute.xlu0 %3539
        %3541 = vrot.lane.b32.xlu0 %v3538, 126
        %v3542 = vpop.permute.xlu0 %3541
        %v3543 = vsel %vm545, %v3540, %v3542
        %3546 = vst [vmem:[#allocation5 + $0x10] sm:$0xf0] %v3543
        %vm3547 = vcmask 64516
        %3548 = vst.msk [vmem:[#allocation5 + $0x18] sm:$0xf0] %vm3547, %v3542
        %3549 = vst [vmem:[#allocation5 + $0x20] sm:$0x3] %v3543
        %vm3550 = vcmask 58368
        %3551 = vst.msk [vmem:[#allocation5 + $0x28] sm:$0x3] %vm3550, %v3542
        %v3552 = vld [vmem:[#allocation4] sm:$0x3f]
        %v3553 = vld [vmem:[#allocation4 + $0x8] sm:$0x3f]
        %v3556 = vrot.slane %v3552, 6
        %v3557 = vrot.slane %v3553, 6
        %3558 = vrot.lane.b32.xlu0 %v3556, 125
        %v3559 = vpop.permute.xlu0 %3558
        %3560 = vrot.lane.b32.xlu0 %v3557, 125
        %v3561 = vpop.permute.xlu0 %3560
        %v3562 = vsel %vm607, %v3559, %v3561
        %3565 = vst [vmem:[#allocation5 + $0x20] sm:$0xfc] %v3562
        %vm3566 = vcmask 64514
        %3567 = vst.msk [vmem:[#allocation5 + $0x28] sm:$0xfc] %vm3566, %v3561
        %v3568 = vld [vmem:[#allocation4] sm:$0x3f]
        %v3569 = vld [vmem:[#allocation4 + $0x8] sm:$0x3f]
        %3572 = vrot.lane.b32.xlu0 %v3568, 124
        %v3573 = vpop.permute.xlu0 %3572
        %3574 = vrot.lane.b32.xlu0 %v3569, 124
        %v3575 = vpop.permute.xlu0 %3574
        %v3576 = vsel %vm655, %v3573, %v3575
        %3579 = vst [vmem:[#allocation5 + $0x30] sm:$0x3f] %v3576
        %3580 = vst.msk [vmem:[#allocation5 + $0x38] sm:$0x3f] %vm3512, %v3575
        %v3581 = vld [vmem:[#allocation4] sm:$0x3f]
        %v3582 = vld [vmem:[#allocation4 + $0x8] sm:$0x3f]
        %v3585 = vrot.slane %v3581, 2
        %v3586 = vrot.slane %v3582, 2
        %3587 = vrot.lane.b32.xlu0 %v3585, 114
        %v3588 = vpop.permute.xlu0 %3587
        %3589 = vrot.lane.b32.xlu0 %v3586, 114
        %v3590 = vpop.permute.xlu0 %3589
        %vm3591 = vcmask 932864
        %v3592 = vsel %vm3591, %v3588, %v3590
        %3595 = vst [vmem:[#allocation5 + $0x30] sm:$0xc0] %v3592
        %3596 = vst.msk [vmem:[#allocation5 + $0x38] sm:$0xc0] %vm3528, %v3590
        %3597 = vst [vmem:[#allocation5 + $0x40] sm:$0xf] %v3592
        %3598 = vst.msk [vmem:[#allocation5 + $0x48] sm:$0xf] %vm3531, %v3590
        %v3599 = vld [vmem:[#allocation4] sm:$0x3f]
        %v3600 = vld [vmem:[#allocation4 + $0x8] sm:$0x3f]
        %v3603 = vrot.slane %v3599, 4
        %v3604 = vrot.slane %v3600, 4
        %3605 = vrot.lane.b32.xlu0 %v3603, 113
        %v3606 = vpop.permute.xlu0 %3605
        %3607 = vrot.lane.b32.xlu0 %v3604, 113
        %v3608 = vpop.permute.xlu0 %3607
        %vm3609 = vcmask 924672
        %v3610 = vsel %vm3609, %v3606, %v3608
        %3613 = vst [vmem:[#allocation5 + $0x40] sm:$0xf0] %v3610
        %3614 = vst.msk [vmem:[#allocation5 + $0x48] sm:$0xf0] %vm3547, %v3608
        %3615 = vst [vmem:[#allocation5 + $0x50] sm:$0x3] %v3610
        %3616 = vst.msk [vmem:[#allocation5 + $0x58] sm:$0x3] %vm3550, %v3608
        %v3617 = vld [vmem:[#allocation4] sm:$0x3f]
        %v3618 = vld [vmem:[#allocation4 + $0x8] sm:$0x3f]
        %v3621 = vrot.slane %v3617, 6
        %v3622 = vrot.slane %v3618, 6
        %3623 = vrot.lane.b32.xlu0 %v3621, 112
        %v3624 = vpop.permute.xlu0 %3623
        %3625 = vrot.lane.b32.xlu0 %v3622, 112
        %v3626 = vpop.permute.xlu0 %3625
        %vm3627 = vcmask 916480
        %v3628 = vsel %vm3627, %v3624, %v3626
        %3631 = vst [vmem:[#allocation5 + $0x50] sm:$0xfc] %v3628
        %3632 = vst.msk [vmem:[#allocation5 + $0x58] sm:$0xfc] %vm3566, %v3626
        %v3633 = vld [vmem:[#allocation4] sm:$0x3f]
        %v3634 = vld [vmem:[#allocation4 + $0x8] sm:$0x3f]
        %3637 = vrot.lane.b32.xlu0 %v3633, 111
        %v3638 = vpop.permute.xlu0 %3637
        %3639 = vrot.lane.b32.xlu0 %v3634, 111
        %v3640 = vpop.permute.xlu0 %3639
        %vm3641 = vcmask 908288
        %v3642 = vsel %vm3641, %v3638, %v3640
        %3645 = vst [vmem:[#allocation5 + $0x60] sm:$0x3f] %v3642
        %3646 = vst.msk [vmem:[#allocation5 + $0x68] sm:$0x3f] %vm3512, %v3640
        %v3647 = vld [vmem:[#allocation4] sm:$0x3f]
        %v3648 = vld [vmem:[#allocation4 + $0x8] sm:$0x3f]
        %v3651 = vrot.slane %v3647, 2
        %v3652 = vrot.slane %v3648, 2
        %3653 = vrot.lane.b32.xlu0 %v3651, 110
        %v3654 = vpop.permute.xlu0 %3653
        %3655 = vrot.lane.b32.xlu0 %v3652, 110
        %v3656 = vpop.permute.xlu0 %3655
        %vm3657 = vcmask 900096
        %v3658 = vsel %vm3657, %v3654, %v3656
        %3661 = vst [vmem:[#allocation5 + $0x60] sm:$0xc0] %v3658
        %3662 = vst.msk [vmem:[#allocation5 + $0x68] sm:$0xc0] %vm3528, %v3656
        %3663 = vst [vmem:[#allocation5 + $0x70] sm:$0xf] %v3658
        %3664 = vst.msk [vmem:[#allocation5 + $0x78] sm:$0xf] %vm3531, %v3656
        %v3665 = vld [vmem:[#allocation4] sm:$0x3f]
        %v3666 = vld [vmem:[#allocation4 + $0x8] sm:$0x3f]
        %v3669 = vrot.slane %v3665, 4
        %v3670 = vrot.slane %v3666, 4
        %3671 = vrot.lane.b32.xlu0 %v3669, 100
        %v3672 = vpop.permute.xlu0 %3671
        %3673 = vrot.lane.b32.xlu0 %v3670, 100
        %v3674 = vpop.permute.xlu0 %3673
        %vm3675 = vcmask 818176
        %v3676 = vsel %vm3675, %v3672, %v3674
        %3679 = vst [vmem:[#allocation5 + $0x70] sm:$0xf0] %v3676
        %3680 = vst.msk [vmem:[#allocation5 + $0x78] sm:$0xf0] %vm3547, %v3674
        %3681 = vst [vmem:[#allocation5 + $0x80] sm:$0x3] %v3676
        %3682 = vst.msk [vmem:[#allocation5 + $0x88] sm:$0x3] %vm3550, %v3674
        %v3683 = vld [vmem:[#allocation4] sm:$0x3f]
        %v3684 = vld [vmem:[#allocation4 + $0x8] sm:$0x3f]
        %v3687 = vrot.slane %v3683, 6
        %v3688 = vrot.slane %v3684, 6
        %3689 = vrot.lane.b32.xlu0 %v3687, 99
        %v3690 = vpop.permute.xlu0 %3689
        %3691 = vrot.lane.b32.xlu0 %v3688, 99
        %v3692 = vpop.permute.xlu0 %3691
        %vm3693 = vcmask 809984
        %v3694 = vsel %vm3693, %v3690, %v3692
        %3697 = vst [vmem:[#allocation5 + $0x80] sm:$0xfc] %v3694
        %3698 = vst.msk [vmem:[#allocation5 + $0x88] sm:$0xfc] %vm3566, %v3692
        %v3699 = vld [vmem:[#allocation4] sm:$0x3f]
        %v3700 = vld [vmem:[#allocation4 + $0x8] sm:$0x3f]
        %3703 = vrot.lane.b32.xlu0 %v3699, 98
        %v3704 = vpop.permute.xlu0 %3703
        %3705 = vrot.lane.b32.xlu0 %v3700, 98
        %v3706 = vpop.permute.xlu0 %3705
        %vm3707 = vcmask 801792
        %v3708 = vsel %vm3707, %v3704, %v3706
        %3711 = vst [vmem:[#allocation5 + $0x90] sm:$0x3f] %v3708
        %3712 = vst.msk [vmem:[#allocation5 + $0x98] sm:$0x3f] %vm3512, %v3706
        %v3713 = vld [vmem:[#allocation4] sm:$0x3f]
        %v3714 = vld [vmem:[#allocation4 + $0x8] sm:$0x3f]
        %v3717 = vrot.slane %v3713, 2
        %v3718 = vrot.slane %v3714, 2
        %3719 = vrot.lane.b32.xlu0 %v3717, 97
        %v3720 = vpop.permute.xlu0 %3719
        %3721 = vrot.lane.b32.xlu0 %v3718, 97
        %v3722 = vpop.permute.xlu0 %3721
        %vm3723 = vcmask 793600
        %v3724 = vsel %vm3723, %v3720, %v3722
        %3727 = vst [vmem:[#allocation5 + $0x90] sm:$0xc0] %v3724
        %3728 = vst.msk [vmem:[#allocation5 + $0x98] sm:$0xc0] %vm3528, %v3722
        %3729 = vst [vmem:[#allocation5 + $0xa0] sm:$0xf] %v3724
        %3730 = vst.msk [vmem:[#allocation5 + $0xa8] sm:$0xf] %vm3531, %v3722
        %v3731 = vld [vmem:[#allocation4] sm:$0x3f]
        %v3732 = vld [vmem:[#allocation4 + $0x8] sm:$0x3f]
        %v3735 = vrot.slane %v3731, 4
        %v3736 = vrot.slane %v3732, 4
        %3737 = vrot.lane.b32.xlu0 %v3735, 96
        %v3738 = vpop.permute.xlu0 %3737
        %3739 = vrot.lane.b32.xlu0 %v3736, 96
        %v3740 = vpop.permute.xlu0 %3739
        %v3741 = vsel %vm713, %v3738, %v3740
        %3744 = vst [vmem:[#allocation5 + $0xa0] sm:$0xf0] %v3741
        %3745 = vst.msk [vmem:[#allocation5 + $0xa8] sm:$0xf0] %vm3547, %v3740
        %3746 = vst [vmem:[#allocation5 + $0xb0] sm:$0x3] %v3741
        %3747 = vst.msk [vmem:[#allocation5 + $0xb8] sm:$0x3] %vm3550, %v3740
        %v3748 = vld [vmem:[#allocation4] sm:$0x3f]
        %v3749 = vld [vmem:[#allocation4 + $0x8] sm:$0x3f]
        %v3752 = vrot.slane %v3748, 6
        %v3753 = vrot.slane %v3749, 6
        %3754 = vrot.lane.b32.xlu0 %v3752, 86
        %v3755 = vpop.permute.xlu0 %3754
        %3756 = vrot.lane.b32.xlu0 %v3753, 86
        %v3757 = vpop.permute.xlu0 %3756
        %vm3758 = vcmask 703488
        %v3759 = vsel %vm3758, %v3755, %v3757
        %3762 = vst [vmem:[#allocation5 + $0xb0] sm:$0xfc] %v3759
        %3763 = vst.msk [vmem:[#allocation5 + $0xb8] sm:$0xfc] %vm3566, %v3757
        %v3764 = vld [vmem:[#allocation4] sm:$0x3f]
        %v3765 = vld [vmem:[#allocation4 + $0x8] sm:$0x3f]
        %3768 = vrot.lane.b32.xlu0 %v3764, 85
        %v3769 = vpop.permute.xlu0 %3768
        %3770 = vrot.lane.b32.xlu0 %v3765, 85
        %v3771 = vpop.permute.xlu0 %3770
        %vm3772 = vcmask 695296
        %v3773 = vsel %vm3772, %v3769, %v3771
        %3776 = vst [vmem:[#allocation5 + $0xc0] sm:$0x3f] %v3773
        %3777 = vst.msk [vmem:[#allocation5 + $0xc8] sm:$0x3f] %vm3512, %v3771
        %v3778 = vld [vmem:[#allocation4] sm:$0x3f]
        %v3779 = vld [vmem:[#allocation4 + $0x8] sm:$0x3f]
        %v3782 = vrot.slane %v3778, 2
        %v3783 = vrot.slane %v3779, 2
        %3784 = vrot.lane.b32.xlu0 %v3782, 84
        %v3785 = vpop.permute.xlu0 %3784
        %3786 = vrot.lane.b32.xlu0 %v3783, 84
        %v3787 = vpop.permute.xlu0 %3786
        %vm3788 = vcmask 687104
        %v3789 = vsel %vm3788, %v3785, %v3787
        %3792 = vst [vmem:[#allocation5 + $0xc0] sm:$0xc0] %v3789
        %3793 = vst.msk [vmem:[#allocation5 + $0xc8] sm:$0xc0] %vm3528, %v3787
        %3794 = vst [vmem:[#allocation5 + $0xd0] sm:$0xf] %v3789
        %3795 = vst.msk [vmem:[#allocation5 + $0xd8] sm:$0xf] %vm3531, %v3787
        %v3796 = vld [vmem:[#allocation4] sm:$0x3f]
        %v3797 = vld [vmem:[#allocation4 + $0x8] sm:$0x3f]
        %v3800 = vrot.slane %v3796, 4
        %v3801 = vrot.slane %v3797, 4
        %3802 = vrot.lane.b32.xlu0 %v3800, 83
        %v3803 = vpop.permute.xlu0 %3802
        %3804 = vrot.lane.b32.xlu0 %v3801, 83
        %v3805 = vpop.permute.xlu0 %3804
        %vm3806 = vcmask 678912
        %v3807 = vsel %vm3806, %v3803, %v3805
        %3810 = vst [vmem:[#allocation5 + $0xd0] sm:$0xf0] %v3807
        %3811 = vst.msk [vmem:[#allocation5 + $0xd8] sm:$0xf0] %vm3547, %v3805
        %3812 = vst [vmem:[#allocation5 + $0xe0] sm:$0x3] %v3807
        %3813 = vst.msk [vmem:[#allocation5 + $0xe8] sm:$0x3] %vm3550, %v3805
        %v3814 = vld [vmem:[#allocation4] sm:$0x3f]
        %v3815 = vld [vmem:[#allocation4 + $0x8] sm:$0x3f]
        %v3818 = vrot.slane %v3814, 6
        %v3819 = vrot.slane %v3815, 6
        %3820 = vrot.lane.b32.xlu0 %v3818, 82
        %v3821 = vpop.permute.xlu0 %3820
        %3822 = vrot.lane.b32.xlu0 %v3819, 82
        %v3823 = vpop.permute.xlu0 %3822
        %vm3824 = vcmask 670720
        %v3825 = vsel %vm3824, %v3821, %v3823
        %3828 = vst [vmem:[#allocation5 + $0xe0] sm:$0xfc] %v3825
        %3829 = vst.msk [vmem:[#allocation5 + $0xe8] sm:$0xfc] %vm3566, %v3823
        %v3830 = vld [vmem:[#allocation4] sm:$0x3f]
        %v3831 = vld [vmem:[#allocation4 + $0x8] sm:$0x3f]
        %3834 = vrot.lane.b32.xlu0 %v3830, 72
        %v3835 = vpop.permute.xlu0 %3834
        %3836 = vrot.lane.b32.xlu0 %v3831, 72
        %v3837 = vpop.permute.xlu0 %3836
        %vm3838 = vcmask 588800
        %v3839 = vsel %vm3838, %v3835, %v3837
        %3842 = vst [vmem:[#allocation5 + $0xf0] sm:$0x3f] %v3839
        %3843 = vst.msk [vmem:[#allocation5 + $0xf8] sm:$0x3f] %vm3512, %v3837
        %v3844 = vld [vmem:[#allocation4] sm:$0x3f]
        %v3845 = vld [vmem:[#allocation4 + $0x8] sm:$0x3f]
        %v3848 = vrot.slane %v3844, 2
        %v3849 = vrot.slane %v3845, 2
        %3850 = vrot.lane.b32.xlu0 %v3848, 71
        %v3851 = vpop.permute.xlu0 %3850
        %3852 = vrot.lane.b32.xlu0 %v3849, 71
        %v3853 = vpop.permute.xlu0 %3852
        %vm3854 = vcmask 580608
        %v3855 = vsel %vm3854, %v3851, %v3853
        %3858 = vst [vmem:[#allocation5 + $0xf0] sm:$0xc0] %v3855
        %3859 = vst.msk [vmem:[#allocation5 + $0xf8] sm:$0xc0] %vm3528, %v3853
        %3860 = vst [vmem:[#allocation5 + $0x100] sm:$0xf] %v3855
        %3861 = vst.msk [vmem:[#allocation5 + $0x108] sm:$0xf] %vm3531, %v3853
        %v3862 = vld [vmem:[#allocation4] sm:$0x3f]
        %v3863 = vld [vmem:[#allocation4 + $0x8] sm:$0x3f]
        %v3866 = vrot.slane %v3862, 4
        %v3867 = vrot.slane %v3863, 4
        %3868 = vrot.lane.b32.xlu0 %v3866, 70
        %v3869 = vpop.permute.xlu0 %3868
        %3870 = vrot.lane.b32.xlu0 %v3867, 70
        %v3871 = vpop.permute.xlu0 %3870
        %vm3872 = vcmask 572416
        %v3873 = vsel %vm3872, %v3869, %v3871
        %3876 = vst [vmem:[#allocation5 + $0x100] sm:$0xf0] %v3873
        %3877 = vst.msk [vmem:[#allocation5 + $0x108] sm:$0xf0] %vm3547, %v3871
        %3878 = vst [vmem:[#allocation5 + $0x110] sm:$0x3] %v3873
        %3879 = vst.msk [vmem:[#allocation5 + $0x118] sm:$0x3] %vm3550, %v3871
        %v3880 = vld [vmem:[#allocation4] sm:$0x3f]
        %v3881 = vld [vmem:[#allocation4 + $0x8] sm:$0x3f]
        %v3884 = vrot.slane %v3880, 6
        %v3885 = vrot.slane %v3881, 6
        %3886 = vrot.lane.b32.xlu0 %v3884, 69
        %v3887 = vpop.permute.xlu0 %3886
        %3888 = vrot.lane.b32.xlu0 %v3885, 69
        %v3889 = vpop.permute.xlu0 %3888
        %vm3890 = vcmask 564224
        %v3891 = vsel %vm3890, %v3887, %v3889
        %3894 = vst [vmem:[#allocation5 + $0x110] sm:$0xfc] %v3891
        %3895 = vst.msk [vmem:[#allocation5 + $0x118] sm:$0xfc] %vm3566, %v3889
        %v3896 = vld [vmem:[#allocation4] sm:$0x3f]
        %v3897 = vld [vmem:[#allocation4 + $0x8] sm:$0x3f]
        %3900 = vrot.lane.b32.xlu0 %v3896, 68
        %v3901 = vpop.permute.xlu0 %3900
        %3902 = vrot.lane.b32.xlu0 %v3897, 68
        %v3903 = vpop.permute.xlu0 %3902
        %vm3904 = vcmask 556032
        %v3905 = vsel %vm3904, %v3901, %v3903
        %3908 = vst [vmem:[#allocation5 + $0x120] sm:$0x3f] %v3905
        %3909 = vst.msk [vmem:[#allocation5 + $0x128] sm:$0x3f] %vm3512, %v3903
        %v3910 = vld [vmem:[%s4] sm:$0xff]
        %v3911 = vld [vmem:[%s4 + $0x8] sm:$0xff]
        %v3912 = vld [vmem:[%s4 + $0x10] sm:$0xff]
        %v3913 = vld [vmem:[%s4 + $0x18] sm:$0xff]
        %v3914 = vld [vmem:[#allocation5] sm:$0xff]
        %v3915 = vld [vmem:[#allocation5 + $0x8] sm:$0xff]
        %v3916 = vld [vmem:[#allocation5 + $0x10] sm:$0xff]
        %v3917 = vld [vmem:[#allocation5 + $0x18] sm:$0xff]
        %v3918 = vld [vmem:[#allocation5 + $0x20] sm:$0xff]
        %v3919 = vld [vmem:[#allocation5 + $0x28] sm:$0xff]
        %v3920 = vld [vmem:[#allocation5 + $0x30] sm:$0xff]
        %v3921 = vld [vmem:[#allocation5 + $0x38] sm:$0xff]
        %v3922 = vld [vmem:[#allocation5 + $0x40] sm:$0xff]
        %v3923 = vld [vmem:[#allocation5 + $0x48] sm:$0xff]
        %v3924 = vld [vmem:[#allocation5 + $0x50] sm:$0xff]
        %v3925 = vld [vmem:[#allocation5 + $0x58] sm:$0xff]
        %v3926 = vld [vmem:[#allocation5 + $0x60] sm:$0xff]
        %v3927 = vld [vmem:[#allocation5 + $0x68] sm:$0xff]
        %v3928 = vld [vmem:[#allocation5 + $0x70] sm:$0xff]
        %v3929 = vld [vmem:[#allocation5 + $0x78] sm:$0xff]
        %v3930 = vld [vmem:[#allocation5 + $0x80] sm:$0xff]
        %v3931 = vld [vmem:[#allocation5 + $0x88] sm:$0xff]
        %v3932 = vld [vmem:[#allocation5 + $0x90] sm:$0xff]
        %v3933 = vld [vmem:[#allocation5 + $0x98] sm:$0xff]
        %v3934 = vld [vmem:[#allocation5 + $0xa0] sm:$0xff]
        %v3935 = vld [vmem:[#allocation5 + $0xa8] sm:$0xff]
        %v3936 = vld [vmem:[#allocation5 + $0xb0] sm:$0xff]
        %v3937 = vld [vmem:[#allocation5 + $0xb8] sm:$0xff]
        %v3938 = vld [vmem:[#allocation5 + $0xc0] sm:$0xff]
        %v3939 = vld [vmem:[#allocation5 + $0xc8] sm:$0xff]
        %v3940 = vld [vmem:[#allocation5 + $0xd0] sm:$0xff]
        %v3941 = vld [vmem:[#allocation5 + $0xd8] sm:$0xff]
        %v3942 = vld [vmem:[#allocation5 + $0xe0] sm:$0xff]
        %v3943 = vld [vmem:[#allocation5 + $0xe8] sm:$0xff]
        %v3944 = vld [vmem:[#allocation5 + $0xf0] sm:$0xff]
        %v3945 = vld [vmem:[#allocation5 + $0xf8] sm:$0xff]
        %v3946 = vld [vmem:[#allocation5 + $0x100] sm:$0xff]
        %v3947 = vld [vmem:[#allocation5 + $0x108] sm:$0xff]
        %v3948 = vld [vmem:[#allocation5 + $0x110] sm:$0xff]
        %v3949 = vld [vmem:[#allocation5 + $0x118] sm:$0xff]
        %v3950 = vld [vmem:[#allocation5 + $0x120] sm:$0x3f]
        %v3951 = vld [vmem:[#allocation5 + $0x128] sm:$0x3f]
        %v3952 = vld [vmem:[%s5] sm:$0xff]
        %v3953 = vld [vmem:[%s5 + $0x8] sm:$0xff]
        %3955 = vset.pattern.permute.xlu0 0
        %3956 = vperm.xlu0 %3955, %v3952
        %v3957 = vpop.permute.xlu0 %3956
        %3960 = vset.pattern.permute.xlu0 0
        %3961 = vperm.xlu0 %3960, %v3953
        %v3962 = vpop.permute.xlu0 %3961
        %vm3964 = vcmask 179200
        %v3966 = vsel %vm3964, %v3911, 0
        %v3969 = vsel %vm3964, %v3913, 0
        %vm3971 = vcmask 1045504
        %v3973 = vsel %vm3971, %v3950, 0
        %v3976 = vsel %vm3971, %v3951, 0
        %3978 = vmatprep.subr.mxu0 %v3915
        %3979 = vmatpush1.msra.mxu0 %v3914
        %3980 = vmatprep.subr.mxu0 %v3917
        %3981 = vmatpush1.msra.mxu0 %v3916
        %3982 = vmatprep.subr.mxu0 %v3919
        %3983 = vmatpush1.msra.mxu0 %v3918
        %3984 = vmatprep.subr.mxu0 %v3921
        %3985 = vmatpush1.msra.mxu0 %v3920
        %3986 = vmatprep.subr.mxu0 %v3923
        %3987 = vmatpush1.msra.mxu0 %v3922
        %3988 = vmatprep.subr.mxu0 %v3925
        %3989 = vmatpush1.msra.mxu0 %v3924
        %3990 = vmatprep.subr.mxu0 %v3927
        %3991 = vmatpush1.msra.mxu0 %v3926
        %3992 = vmatprep.subr.mxu0 %v3929
        %3993 = vmatpush1.msra.mxu0 %v3928
        %3994 = vmatprep.subr.mxu0 %v3931
        %3995 = vmatpush1.msra.mxu0 %v3930
        %3996 = vmatprep.subr.mxu0 %v3933
        %3997 = vmatpush1.msra.mxu0 %v3932
        %3998 = vmatprep.subr.mxu0 %v3935
        %3999 = vmatpush1.msra.mxu0 %v3934
        %4000 = vmatprep.subr.mxu0 %v3937
        %4001 = vmatpush1.msra.mxu0 %v3936
        %4002 = vmatprep.subr.mxu0 %v3939
        %4003 = vmatpush1.msra.mxu0 %v3938
        %4004 = vmatprep.subr.mxu0 %v3941
        %4005 = vmatpush1.msra.mxu0 %v3940
        %4006 = vmatprep.subr.mxu0 %v3943
        %4007 = vmatpush1.msra.mxu0 %v3942
        %4008 = vmatprep.subr.mxu0 %v3945
        %4009 = vmatpush1.msra.mxu0 %v3944
        %4010 = vmatprep.subr.mxu0 %v3947
        %4011 = vmatpush1.msra.mxu0 %v3946
        %4012 = vmatprep.subr.mxu0 %v3949
        %4013 = vmatpush1.msra.mxu0 %v3948
        %4014 = vmatprep.subr.mxu0 %v3976
        %4015 = vmatpush1.msra.mxu0 %v3973
        %4016 = vmatprep.subr.mxu0 0.0
        %4017 = vmatpush1.msra.mxu0 0.0
        %4018 = vmatprep.subr.mxu0 0.0
        %4019 = vmatpush1.msra.mxu0 0.0
        %4020 = vmatprep.subr.mxu0 0.0
        %4021 = vmatpush1.msra.mxu0 0.0
        %4022 = vmatprep.subr.mxu0 0.0
        %4023 = vmatpush1.msra.mxu0 0.0
        %4024 = vmatprep.subr.mxu0 0.0
        %4025 = vmatpush1.msra.mxu0 0.0
        %4026 = vmatprep.subr.mxu0 0.0
        %4027 = vmatpush1.msra.mxu0 0.0
        %4028 = vmatprep.subr.mxu0 0.0
        %4029 = vmatpush1.msra.mxu0 0.0
        %4030 = vmatprep.subr.mxu0 0.0
        %4031 = vmatpush1.msra.mxu0 0.0
        %4032 = vmatprep.subr.mxu0 0.0
        %4033 = vmatpush1.msra.mxu0 0.0
        %4034 = vmatprep.subr.mxu0 0.0
        %4035 = vmatpush1.msra.mxu0 0.0
        %4036 = vmatprep.subr.mxu0 0.0
        %4037 = vmatpush1.msra.mxu0 0.0
        %4038 = vmatprep.subr.mxu0 0.0
        %4039 = vmatpush1.msra.mxu0 0.0
        %4040 = vmatprep.subr.mxu0 0.0
        %4041 = vmatpush1.msra.mxu0 0.0
        %4042 = vmatprep.mubr.f32.mxu0 %v3966
        %4043 = vmatmul.mubr.f32.gmra.mrb[0].mxu0 %v3910
        %v4044 = vpop.f32.mrb[0].mxu0
        %v4045 = vadd.f32 %v3957, %v4044
        %v4046 = vpop.f32.mrb[0].mxu0
        %v4047 = vadd.f32 %v3957, %v4046
        %4048 = vmatprep.mubr.f32.mxu0 %v3969
        %4049 = vmatmul.mubr.f32.gmra.mrb[0].mxu0 %v3912
        %v4050 = vpop.f32.mrb[0].mxu0
        %v4051 = vadd.f32 %v3962, %v4050
        %v4052 = vpop.f32.mrb[0].mxu0
        %v4053 = vadd.f32 %v3962, %v4052
        %4054 = vdwg.mxu0
        %v4055 = vmax.f32 %v4045, 0.0
        %v4056 = vmax.f32 %v4047, 0.0
        %v4057 = vmax.f32 %v4051, 0.0
        %v4058 = vmax.f32 %v4053, 0.0
        %4059 = vst [vmem:[#allocation6] sm:$0xff] %v4055
        %vm4060 = vcmask 64512
        %4061 = vst.msk [vmem:[#allocation6 + $0x8] sm:$0xff] %vm4060, %v4056
        %4062 = vst [vmem:[#allocation6 + $0x10] sm:$0xff] %v4057
        %4063 = vst.msk [vmem:[#allocation6 + $0x18] sm:$0xff] %vm4060, %v4058
        %v4064 = vld [vmem:[%s6] sm:$0xff]
        %v4065 = vld [vmem:[%s6 + $0x8] sm:$0x1]
        %v4066 = vld [vmem:[#allocation6] sm:$0xff]
        %v4067 = vld [vmem:[#allocation6 + $0x10] sm:$0xff]
        %4070 = vrot.lane.b32.xlu0 %v4066, 127
        %v4071 = vpop.permute.xlu0 %4070
        %4072 = vrot.lane.b32.xlu0 %v4067, 127
        %v4073 = vpop.permute.xlu0 %4072
        %v4076 = vmax.f32 %v4066, %v4071
        %v4077 = vmax.f32 %v4067, %v4073
        %4078 = vrot.lane.b32.xlu0 %v4066, 114
        %v4079 = vpop.permute.xlu0 %4078
        %4080 = vrot.lane.b32.xlu0 %v4067, 114
        %v4081 = vpop.permute.xlu0 %4080
        %v4084 = vmax.f32 %v4076, %v4079
        %v4085 = vmax.f32 %v4077, %v4081
        %4086 = vrot.lane.b32.xlu0 %v4066, 113
        %v4087 = vpop.permute.xlu0 %4086
        %4088 = vrot.lane.b32.xlu0 %v4067, 113
        %v4089 = vpop.permute.xlu0 %4088
        %v4092 = vmax.f32 %v4084, %v4087
        %v4093 = vmax.f32 %v4085, %v4089
        %vm4094 = vcmask 72704
        %v4096 = vsel %vm4094, %v4092, 0
        %v4099 = vsel %vm4094, %v4093, 0
        %vm4101 = vcmask 1040384
        %v4103 = vsel %vm4101, %v4065, 0
        %4105 = vmatprep.subr.mxu0 0.0
        %4106 = vmatpush1.msra.mxu0 %v4064
        %4107 = vmatprep.subr.mxu0 0.0
        %4108 = vmatpush1.msra.mxu0 %v4103
        %4109 = vmatprep.subr.mxu0 0.0
        %4110 = vmatpush1.msra.mxu0 0.0
        %4111 = vmatprep.subr.mxu0 0.0
        %4112 = vmatpush1.msra.mxu0 0.0
        %4113 = vmatprep.subr.mxu0 0.0
        %4114 = vmatpush1.msra.mxu0 0.0
        %4115 = vmatprep.subr.mxu0 0.0
        %4116 = vmatpush1.msra.mxu0 0.0
        %4117 = vmatprep.subr.mxu0 0.0
        %4118 = vmatpush1.msra.mxu0 0.0
        %4119 = vmatprep.subr.mxu0 0.0
        %4120 = vmatpush1.msra.mxu0 0.0
        %4121 = vmatprep.subr.mxu0 0.0
        %4122 = vmatpush1.msra.mxu0 0.0
        %4123 = vmatprep.subr.mxu0 0.0
        %4124 = vmatpush1.msra.mxu0 0.0
        %4125 = vmatprep.subr.mxu0 0.0
        %4126 = vmatpush1.msra.mxu0 0.0
        %4127 = vmatprep.subr.mxu0 0.0
        %4128 = vmatpush1.msra.mxu0 0.0
        %4129 = vmatprep.subr.mxu0 0.0
        %4130 = vmatpush1.msra.mxu0 0.0
        %4131 = vmatprep.subr.mxu0 0.0
        %4132 = vmatpush1.msra.mxu0 0.0
        %4133 = vmatprep.subr.mxu0 0.0
        %4134 = vmatpush1.msra.mxu0 0.0
        %4135 = vmatprep.subr.mxu0 0.0
        %4136 = vmatpush1.msra.mxu0 0.0
        %4137 = vmatprep.subr.mxu0 0.0
        %4138 = vmatpush1.msra.mxu0 0.0
        %4139 = vmatprep.subr.mxu0 0.0
        %4140 = vmatpush1.msra.mxu0 0.0
        %4141 = vmatprep.subr.mxu0 0.0
        %4142 = vmatpush1.msra.mxu0 0.0
        %4143 = vmatprep.subr.mxu0 0.0
        %4144 = vmatpush1.msra.mxu0 0.0
        %4145 = vmatprep.subr.mxu0 0.0
        %4146 = vmatpush1.msra.mxu0 0.0
        %4147 = vmatprep.subr.mxu0 0.0
        %4148 = vmatpush1.msra.mxu0 0.0
        %4149 = vmatprep.subr.mxu0 0.0
        %4150 = vmatpush1.msra.mxu0 0.0
        %4151 = vmatprep.subr.mxu0 0.0
        %4152 = vmatpush1.msra.mxu0 0.0
        %4153 = vmatprep.subr.mxu0 0.0
        %4154 = vmatpush1.msra.mxu0 0.0
        %4155 = vmatprep.subr.mxu0 0.0
        %4156 = vmatpush1.msra.mxu0 0.0
        %4157 = vmatprep.subr.mxu0 0.0
        %4158 = vmatpush1.msra.mxu0 0.0
        %4159 = vmatprep.subr.mxu0 0.0
        %4160 = vmatpush1.msra.mxu0 0.0
        %4161 = vmatprep.subr.mxu0 0.0
        %4162 = vmatpush1.msra.mxu0 0.0
        %4163 = vmatprep.subr.mxu0 0.0
        %4164 = vmatpush1.msra.mxu0 0.0
        %4165 = vmatprep.subr.mxu0 0.0
        %4166 = vmatpush1.msra.mxu0 0.0
        %4167 = vmatprep.subr.mxu0 0.0
        %4168 = vmatpush1.msra.mxu0 0.0
        %4169 = vmatprep.mubr.f32.mxu0 0.0
        %4170 = vmatmul.mubr.f32.gmra.mrb[0].mxu0 %v4096
        %v4171 = vpop.f32.mrb[0].mxu0
        %v4172 = vadd.f32 0.0, %v4171
        %v4173 = vpop.f32.mrb[0].mxu0
        %4174 = vmatprep.mubr.f32.mxu0 0.0
        %4175 = vmatmul.mubr.f32.gmra.mrb[0].mxu0 %v4099
        %v4176 = vpop.f32.mrb[0].mxu0
        %v4177 = vadd.f32 0.0, %v4176
        %v4178 = vpop.f32.mrb[0].mxu0
        %4179 = vdwg.mxu0
        %vm4180 = vcmask 39936
        %4181 = vst.msk [vmem:[#allocation7] sm:$0xff] %vm4180, %v4172
        %4182 = vst.msk [vmem:[#allocation7 + $0x8] sm:$0xff] %vm4180, %v4177
        %v4183 = vld [vmem:[#allocation6] sm:$0xff]
        %v4184 = vld [vmem:[#allocation6 + $0x10] sm:$0xff]
        %4187 = vrot.lane.b32.xlu0 %v4183, 127
        %v4188 = vpop.permute.xlu0 %4187
        %4189 = vrot.lane.b32.xlu0 %v4184, 127
        %v4190 = vpop.permute.xlu0 %4189
        %v4193 = vmax.f32 %v4183, %v4188
        %v4194 = vmax.f32 %v4184, %v4190
        %4195 = vrot.lane.b32.xlu0 %v4183, 114
        %v4196 = vpop.permute.xlu0 %4195
        %4197 = vrot.lane.b32.xlu0 %v4184, 114
        %v4198 = vpop.permute.xlu0 %4197
        %v4201 = vmax.f32 %v4193, %v4196
        %v4202 = vmax.f32 %v4194, %v4198
        %4203 = vrot.lane.b32.xlu0 %v4183, 113
        %v4204 = vpop.permute.xlu0 %4203
        %4205 = vrot.lane.b32.xlu0 %v4184, 113
        %v4206 = vpop.permute.xlu0 %4205
        %v4209 = vmax.f32 %v4201, %v4204
        %v4210 = vmax.f32 %v4202, %v4206
        %4213 = vrot.lane.b32.xlu0 %v4209, 100
        %v4214 = vpop.permute.xlu0 %4213
        %4215 = vrot.lane.b32.xlu0 %v4210, 100
        %v4216 = vpop.permute.xlu0 %4215
        %v4217 = vsel %vm4094, %v4214, 0
        %v4219 = vsel %vm4094, %v4216, 0
        %4221 = vmatprep.subr.mxu0 0.0
        %4222 = vmatpush1.msra.mxu0 %v4064
        %4223 = vmatprep.subr.mxu0 0.0
        %4224 = vmatpush1.msra.mxu0 %v4103
        %4225 = vmatprep.subr.mxu0 0.0
        %4226 = vmatpush1.msra.mxu0 0.0
        %4227 = vmatprep.subr.mxu0 0.0
        %4228 = vmatpush1.msra.mxu0 0.0
        %4229 = vmatprep.subr.mxu0 0.0
        %4230 = vmatpush1.msra.mxu0 0.0
        %4231 = vmatprep.subr.mxu0 0.0
        %4232 = vmatpush1.msra.mxu0 0.0
        %4233 = vmatprep.subr.mxu0 0.0
        %4234 = vmatpush1.msra.mxu0 0.0
        %4235 = vmatprep.subr.mxu0 0.0
        %4236 = vmatpush1.msra.mxu0 0.0
        %4237 = vmatprep.subr.mxu0 0.0
        %4238 = vmatpush1.msra.mxu0 0.0
        %4239 = vmatprep.subr.mxu0 0.0
        %4240 = vmatpush1.msra.mxu0 0.0
        %4241 = vmatprep.subr.mxu0 0.0
        %4242 = vmatpush1.msra.mxu0 0.0
        %4243 = vmatprep.subr.mxu0 0.0
        %4244 = vmatpush1.msra.mxu0 0.0
        %4245 = vmatprep.subr.mxu0 0.0
        %4246 = vmatpush1.msra.mxu0 0.0
        %4247 = vmatprep.subr.mxu0 0.0
        %4248 = vmatpush1.msra.mxu0 0.0
        %4249 = vmatprep.subr.mxu0 0.0
        %4250 = vmatpush1.msra.mxu0 0.0
        %4251 = vmatprep.subr.mxu0 0.0
        %4252 = vmatpush1.msra.mxu0 0.0
        %4253 = vmatprep.subr.mxu0 0.0
        %4254 = vmatpush1.msra.mxu0 0.0
        %4255 = vmatprep.subr.mxu0 0.0
        %4256 = vmatpush1.msra.mxu0 0.0
        %4257 = vmatprep.subr.mxu0 0.0
        %4258 = vmatpush1.msra.mxu0 0.0
        %4259 = vmatprep.subr.mxu0 0.0
        %4260 = vmatpush1.msra.mxu0 0.0
        %4261 = vmatprep.subr.mxu0 0.0
        %4262 = vmatpush1.msra.mxu0 0.0
        %4263 = vmatprep.subr.mxu0 0.0
        %4264 = vmatpush1.msra.mxu0 0.0
        %4265 = vmatprep.subr.mxu0 0.0
        %4266 = vmatpush1.msra.mxu0 0.0
        %4267 = vmatprep.subr.mxu0 0.0
        %4268 = vmatpush1.msra.mxu0 0.0
        %4269 = vmatprep.subr.mxu0 0.0
        %4270 = vmatpush1.msra.mxu0 0.0
        %4271 = vmatprep.subr.mxu0 0.0
        %4272 = vmatpush1.msra.mxu0 0.0
        %4273 = vmatprep.subr.mxu0 0.0
        %4274 = vmatpush1.msra.mxu0 0.0
        %4275 = vmatprep.subr.mxu0 0.0
        %4276 = vmatpush1.msra.mxu0 0.0
        %4277 = vmatprep.subr.mxu0 0.0
        %4278 = vmatpush1.msra.mxu0 0.0
        %4279 = vmatprep.subr.mxu0 0.0
        %4280 = vmatpush1.msra.mxu0 0.0
        %4281 = vmatprep.subr.mxu0 0.0
        %4282 = vmatpush1.msra.mxu0 0.0
        %4283 = vmatprep.subr.mxu0 0.0
        %4284 = vmatpush1.msra.mxu0 0.0
        %4285 = vmatprep.mubr.f32.mxu0 0.0
        %4286 = vmatmul.mubr.f32.gmra.mrb[0].mxu0 %v4217
        %v4287 = vpop.f32.mrb[0].mxu0
        %v4288 = vadd.f32 0.0, %v4287
        %v4289 = vpop.f32.mrb[0].mxu0
        %4290 = vmatprep.mubr.f32.mxu0 0.0
        %4291 = vmatmul.mubr.f32.gmra.mrb[0].mxu0 %v4219
        %v4292 = vpop.f32.mrb[0].mxu0
        %v4293 = vadd.f32 0.0, %v4292
        %v4294 = vpop.f32.mrb[0].mxu0
        %4295 = vdwg.mxu0
        %4298 = vrot.lane.b32.xlu0 %v4288, 5
        %v4299 = vpop.permute.xlu0 %4298
        %4300 = vrot.lane.b32.xlu0 %v4293, 5
        %v4301 = vpop.permute.xlu0 %4300
        %vm4304 = vcmask 80936
        %4305 = vst.msk [vmem:[#allocation7] sm:$0xff] %vm4304, %v4299
        %4306 = vst.msk [vmem:[#allocation7 + $0x8] sm:$0xff] %vm4304, %v4301
        %v4307 = vld [vmem:[#allocation6] sm:$0xff]
        %v4308 = vld [vmem:[#allocation6 + $0x10] sm:$0xff]
        %4311 = vrot.lane.b32.xlu0 %v4307, 127
        %v4312 = vpop.permute.xlu0 %4311
        %4313 = vrot.lane.b32.xlu0 %v4308, 127
        %v4314 = vpop.permute.xlu0 %4313
        %v4317 = vmax.f32 %v4307, %v4312
        %v4318 = vmax.f32 %v4308, %v4314
        %4319 = vrot.lane.b32.xlu0 %v4307, 114
        %v4320 = vpop.permute.xlu0 %4319
        %4321 = vrot.lane.b32.xlu0 %v4308, 114
        %v4322 = vpop.permute.xlu0 %4321
        %v4325 = vmax.f32 %v4317, %v4320
        %v4326 = vmax.f32 %v4318, %v4322
        %4327 = vrot.lane.b32.xlu0 %v4307, 113
        %v4328 = vpop.permute.xlu0 %4327
        %4329 = vrot.lane.b32.xlu0 %v4308, 113
        %v4330 = vpop.permute.xlu0 %4329
        %v4333 = vmax.f32 %v4325, %v4328
        %v4334 = vmax.f32 %v4326, %v4330
        %4337 = vrot.lane.b32.xlu0 %v4333, 72
        %v4338 = vpop.permute.xlu0 %4337
        %4339 = vrot.lane.b32.xlu0 %v4334, 72
        %v4340 = vpop.permute.xlu0 %4339
        %v4341 = vsel %vm4094, %v4338, 0
        %v4343 = vsel %vm4094, %v4340, 0
        %4345 = vmatprep.subr.mxu0 0.0
        %4346 = vmatpush1.msra.mxu0 %v4064
        %4347 = vmatprep.subr.mxu0 0.0
        %4348 = vmatpush1.msra.mxu0 %v4103
        %4349 = vmatprep.subr.mxu0 0.0
        %4350 = vmatpush1.msra.mxu0 0.0
        %4351 = vmatprep.subr.mxu0 0.0
        %4352 = vmatpush1.msra.mxu0 0.0
        %4353 = vmatprep.subr.mxu0 0.0
        %4354 = vmatpush1.msra.mxu0 0.0
        %4355 = vmatprep.subr.mxu0 0.0
        %4356 = vmatpush1.msra.mxu0 0.0
        %4357 = vmatprep.subr.mxu0 0.0
        %4358 = vmatpush1.msra.mxu0 0.0
        %4359 = vmatprep.subr.mxu0 0.0
        %4360 = vmatpush1.msra.mxu0 0.0
        %4361 = vmatprep.subr.mxu0 0.0
        %4362 = vmatpush1.msra.mxu0 0.0
        %4363 = vmatprep.subr.mxu0 0.0
        %4364 = vmatpush1.msra.mxu0 0.0
        %4365 = vmatprep.subr.mxu0 0.0
        %4366 = vmatpush1.msra.mxu0 0.0
        %4367 = vmatprep.subr.mxu0 0.0
        %4368 = vmatpush1.msra.mxu0 0.0
        %4369 = vmatprep.subr.mxu0 0.0
        %4370 = vmatpush1.msra.mxu0 0.0
        %4371 = vmatprep.subr.mxu0 0.0
        %4372 = vmatpush1.msra.mxu0 0.0
        %4373 = vmatprep.subr.mxu0 0.0
        %4374 = vmatpush1.msra.mxu0 0.0
        %4375 = vmatprep.subr.mxu0 0.0
        %4376 = vmatpush1.msra.mxu0 0.0
        %4377 = vmatprep.subr.mxu0 0.0
        %4378 = vmatpush1.msra.mxu0 0.0
        %4379 = vmatprep.subr.mxu0 0.0
        %4380 = vmatpush1.msra.mxu0 0.0
        %4381 = vmatprep.subr.mxu0 0.0
        %4382 = vmatpush1.msra.mxu0 0.0
        %4383 = vmatprep.subr.mxu0 0.0
        %4384 = vmatpush1.msra.mxu0 0.0
        %4385 = vmatprep.subr.mxu0 0.0
        %4386 = vmatpush1.msra.mxu0 0.0
        %4387 = vmatprep.subr.mxu0 0.0
        %4388 = vmatpush1.msra.mxu0 0.0
        %4389 = vmatprep.subr.mxu0 0.0
        %4390 = vmatpush1.msra.mxu0 0.0
        %4391 = vmatprep.subr.mxu0 0.0
        %4392 = vmatpush1.msra.mxu0 0.0
        %4393 = vmatprep.subr.mxu0 0.0
        %4394 = vmatpush1.msra.mxu0 0.0
        %4395 = vmatprep.subr.mxu0 0.0
        %4396 = vmatpush1.msra.mxu0 0.0
        %4397 = vmatprep.subr.mxu0 0.0
        %4398 = vmatpush1.msra.mxu0 0.0
        %4399 = vmatprep.subr.mxu0 0.0
        %4400 = vmatpush1.msra.mxu0 0.0
        %4401 = vmatprep.subr.mxu0 0.0
        %4402 = vmatpush1.msra.mxu0 0.0
        %4403 = vmatprep.subr.mxu0 0.0
        %4404 = vmatpush1.msra.mxu0 0.0
        %4405 = vmatprep.subr.mxu0 0.0
        %4406 = vmatpush1.msra.mxu0 0.0
        %4407 = vmatprep.subr.mxu0 0.0
        %4408 = vmatpush1.msra.mxu0 0.0
        %4409 = vmatprep.mubr.f32.mxu0 0.0
        %4410 = vmatmul.mubr.f32.gmra.mrb[0].mxu0 %v4341
        %v4411 = vpop.f32.mrb[0].mxu0
        %v4412 = vadd.f32 0.0, %v4411
        %v4413 = vpop.f32.mrb[0].mxu0
        %4414 = vmatprep.mubr.f32.mxu0 0.0
        %4415 = vmatmul.mubr.f32.gmra.mrb[0].mxu0 %v4343
        %v4416 = vpop.f32.mrb[0].mxu0
        %v4417 = vadd.f32 0.0, %v4416
        %v4418 = vpop.f32.mrb[0].mxu0
        %4419 = vdwg.mxu0
        %4422 = vrot.lane.b32.xlu0 %v4412, 10
        %v4423 = vpop.permute.xlu0 %4422
        %4424 = vrot.lane.b32.xlu0 %v4417, 10
        %v4425 = vpop.permute.xlu0 %4424
        %vm4428 = vcmask 121936
        %4429 = vst.msk [vmem:[#allocation7] sm:$0xff] %vm4428, %v4423
        %4430 = vst.msk [vmem:[#allocation7 + $0x8] sm:$0xff] %vm4428, %v4425
        %v4431 = vld [vmem:[#allocation6] sm:$0xff]
        %v4432 = vld [vmem:[#allocation6 + $0x10] sm:$0xff]
        %4435 = vrot.lane.b32.xlu0 %v4431, 127
        %v4436 = vpop.permute.xlu0 %4435
        %4437 = vrot.lane.b32.xlu0 %v4432, 127
        %v4438 = vpop.permute.xlu0 %4437
        %v4441 = vmax.f32 %v4431, %v4436
        %v4442 = vmax.f32 %v4432, %v4438
        %4443 = vrot.lane.b32.xlu0 %v4431, 114
        %v4444 = vpop.permute.xlu0 %4443
        %4445 = vrot.lane.b32.xlu0 %v4432, 114
        %v4446 = vpop.permute.xlu0 %4445
        %v4449 = vmax.f32 %v4441, %v4444
        %v4450 = vmax.f32 %v4442, %v4446
        %4451 = vrot.lane.b32.xlu0 %v4431, 113
        %v4452 = vpop.permute.xlu0 %4451
        %4453 = vrot.lane.b32.xlu0 %v4432, 113
        %v4454 = vpop.permute.xlu0 %4453
        %v4457 = vmax.f32 %v4449, %v4452
        %v4458 = vmax.f32 %v4450, %v4454
        %4461 = vrot.lane.b32.xlu0 %v4457, 44
        %v4462 = vpop.permute.xlu0 %4461
        %4463 = vrot.lane.b32.xlu0 %v4458, 44
        %v4464 = vpop.permute.xlu0 %4463
        %v4465 = vsel %vm4094, %v4462, 0
        %v4467 = vsel %vm4094, %v4464, 0
        %4469 = vmatprep.subr.mxu0 0.0
        %4470 = vmatpush1.msra.mxu0 %v4064
        %4471 = vmatprep.subr.mxu0 0.0
        %4472 = vmatpush1.msra.mxu0 %v4103
        %4473 = vmatprep.subr.mxu0 0.0
        %4474 = vmatpush1.msra.mxu0 0.0
        %4475 = vmatprep.subr.mxu0 0.0
        %4476 = vmatpush1.msra.mxu0 0.0
        %4477 = vmatprep.subr.mxu0 0.0
        %4478 = vmatpush1.msra.mxu0 0.0
        %4479 = vmatprep.subr.mxu0 0.0
        %4480 = vmatpush1.msra.mxu0 0.0
        %4481 = vmatprep.subr.mxu0 0.0
        %4482 = vmatpush1.msra.mxu0 0.0
        %4483 = vmatprep.subr.mxu0 0.0
        %4484 = vmatpush1.msra.mxu0 0.0
        %4485 = vmatprep.subr.mxu0 0.0
        %4486 = vmatpush1.msra.mxu0 0.0
        %4487 = vmatprep.subr.mxu0 0.0
        %4488 = vmatpush1.msra.mxu0 0.0
        %4489 = vmatprep.subr.mxu0 0.0
        %4490 = vmatpush1.msra.mxu0 0.0
        %4491 = vmatprep.subr.mxu0 0.0
        %4492 = vmatpush1.msra.mxu0 0.0
        %4493 = vmatprep.subr.mxu0 0.0
        %4494 = vmatpush1.msra.mxu0 0.0
        %4495 = vmatprep.subr.mxu0 0.0
        %4496 = vmatpush1.msra.mxu0 0.0
        %4497 = vmatprep.subr.mxu0 0.0
        %4498 = vmatpush1.msra.mxu0 0.0
        %4499 = vmatprep.subr.mxu0 0.0
        %4500 = vmatpush1.msra.mxu0 0.0
        %4501 = vmatprep.subr.mxu0 0.0
        %4502 = vmatpush1.msra.mxu0 0.0
        %4503 = vmatprep.subr.mxu0 0.0
        %4504 = vmatpush1.msra.mxu0 0.0
        %4505 = vmatprep.subr.mxu0 0.0
        %4506 = vmatpush1.msra.mxu0 0.0
        %4507 = vmatprep.subr.mxu0 0.0
        %4508 = vmatpush1.msra.mxu0 0.0
        %4509 = vmatprep.subr.mxu0 0.0
        %4510 = vmatpush1.msra.mxu0 0.0
        %4511 = vmatprep.subr.mxu0 0.0
        %4512 = vmatpush1.msra.mxu0 0.0
        %4513 = vmatprep.subr.mxu0 0.0
        %4514 = vmatpush1.msra.mxu0 0.0
        %4515 = vmatprep.subr.mxu0 0.0
        %4516 = vmatpush1.msra.mxu0 0.0
        %4517 = vmatprep.subr.mxu0 0.0
        %4518 = vmatpush1.msra.mxu0 0.0
        %4519 = vmatprep.subr.mxu0 0.0
        %4520 = vmatpush1.msra.mxu0 0.0
        %4521 = vmatprep.subr.mxu0 0.0
        %4522 = vmatpush1.msra.mxu0 0.0
        %4523 = vmatprep.subr.mxu0 0.0
        %4524 = vmatpush1.msra.mxu0 0.0
        %4525 = vmatprep.subr.mxu0 0.0
        %4526 = vmatpush1.msra.mxu0 0.0
        %4527 = vmatprep.subr.mxu0 0.0
        %4528 = vmatpush1.msra.mxu0 0.0
        %4529 = vmatprep.subr.mxu0 0.0
        %4530 = vmatpush1.msra.mxu0 0.0
        %4531 = vmatprep.subr.mxu0 0.0
        %4532 = vmatpush1.msra.mxu0 0.0
        %4533 = vmatprep.mubr.f32.mxu0 0.0
        %4534 = vmatmul.mubr.f32.gmra.mrb[0].mxu0 %v4465
        %v4535 = vpop.f32.mrb[0].mxu0
        %v4536 = vadd.f32 0.0, %v4535
        %v4537 = vpop.f32.mrb[0].mxu0
        %4538 = vmatprep.mubr.f32.mxu0 0.0
        %4539 = vmatmul.mubr.f32.gmra.mrb[0].mxu0 %v4467
        %v4540 = vpop.f32.mrb[0].mxu0
        %v4541 = vadd.f32 0.0, %v4540
        %v4542 = vpop.f32.mrb[0].mxu0
        %4543 = vdwg.mxu0
        %4546 = vrot.lane.b32.xlu0 %v4536, 15
        %v4547 = vpop.permute.xlu0 %4546
        %4548 = vrot.lane.b32.xlu0 %v4541, 15
        %v4549 = vpop.permute.xlu0 %4548
        %vm4552 = vcmask 162936
        %4553 = vst.msk [vmem:[#allocation7] sm:$0xff] %vm4552, %v4547
        %4554 = vst.msk [vmem:[#allocation7 + $0x8] sm:$0xff] %vm4552, %v4549
        %v4555 = vld [vmem:[#allocation6] sm:$0xff]
        %v4556 = vld [vmem:[#allocation6 + $0x10] sm:$0xff]
        %4559 = vrot.lane.b32.xlu0 %v4555, 127
        %v4560 = vpop.permute.xlu0 %4559
        %4561 = vrot.lane.b32.xlu0 %v4556, 127
        %v4562 = vpop.permute.xlu0 %4561
        %v4565 = vmax.f32 %v4555, %v4560
        %v4566 = vmax.f32 %v4556, %v4562
        %v4567 = vld [vmem:[#allocation6 + $0x8] sm:$0xff]
        %v4568 = vld [vmem:[#allocation6 + $0x18] sm:$0xff]
        %4571 = vrot.lane.b32.xlu0 %v4555, 114
        %v4572 = vpop.permute.xlu0 %4571
        %4573 = vrot.lane.b32.xlu0 %v4567, 114
        %v4574 = vpop.permute.xlu0 %4573
        %4575 = vrot.lane.b32.xlu0 %v4556, 114
        %v4576 = vpop.permute.xlu0 %4575
        %4577 = vrot.lane.b32.xlu0 %v4568, 114
        %v4578 = vpop.permute.xlu0 %4577
        %v4579 = vsel %vm3591, %v4572, %v4574
        %v4580 = vsel %vm3591, %v4576, %v4578
        %v4583 = vmax.f32 %v4565, %v4579
        %v4584 = vmax.f32 %v4566, %v4580
        %4585 = vrot.lane.b32.xlu0 %v4555, 113
        %v4586 = vpop.permute.xlu0 %4585
        %4587 = vrot.lane.b32.xlu0 %v4567, 113
        %v4588 = vpop.permute.xlu0 %4587
        %4589 = vrot.lane.b32.xlu0 %v4556, 113
        %v4590 = vpop.permute.xlu0 %4589
        %4591 = vrot.lane.b32.xlu0 %v4568, 113
        %v4592 = vpop.permute.xlu0 %4591
        %v4593 = vsel %vm3609, %v4586, %v4588
        %v4594 = vsel %vm3609, %v4590, %v4592
        %v4597 = vmax.f32 %v4583, %v4593
        %v4598 = vmax.f32 %v4584, %v4594
        %4601 = vrot.lane.b32.xlu0 %v4597, 16
        %v4602 = vpop.permute.xlu0 %4601
        %4603 = vrot.lane.b32.xlu0 %v4598, 16
        %v4604 = vpop.permute.xlu0 %4603
        %v4605 = vsel %vm4094, %v4602, 0
        %v4607 = vsel %vm4094, %v4604, 0
        %4609 = vmatprep.subr.mxu0 0.0
        %4610 = vmatpush1.msra.mxu0 %v4064
        %4611 = vmatprep.subr.mxu0 0.0
        %4612 = vmatpush1.msra.mxu0 %v4103
        %4613 = vmatprep.subr.mxu0 0.0
        %4614 = vmatpush1.msra.mxu0 0.0
        %4615 = vmatprep.subr.mxu0 0.0
        %4616 = vmatpush1.msra.mxu0 0.0
        %4617 = vmatprep.subr.mxu0 0.0
        %4618 = vmatpush1.msra.mxu0 0.0
        %4619 = vmatprep.subr.mxu0 0.0
        %4620 = vmatpush1.msra.mxu0 0.0
        %4621 = vmatprep.subr.mxu0 0.0
        %4622 = vmatpush1.msra.mxu0 0.0
        %4623 = vmatprep.subr.mxu0 0.0
        %4624 = vmatpush1.msra.mxu0 0.0
        %4625 = vmatprep.subr.mxu0 0.0
        %4626 = vmatpush1.msra.mxu0 0.0
        %4627 = vmatprep.subr.mxu0 0.0
        %4628 = vmatpush1.msra.mxu0 0.0
        %4629 = vmatprep.subr.mxu0 0.0
        %4630 = vmatpush1.msra.mxu0 0.0
        %4631 = vmatprep.subr.mxu0 0.0
        %4632 = vmatpush1.msra.mxu0 0.0
        %4633 = vmatprep.subr.mxu0 0.0
        %4634 = vmatpush1.msra.mxu0 0.0
        %4635 = vmatprep.subr.mxu0 0.0
        %4636 = vmatpush1.msra.mxu0 0.0
        %4637 = vmatprep.subr.mxu0 0.0
        %4638 = vmatpush1.msra.mxu0 0.0
        %4639 = vmatprep.subr.mxu0 0.0
        %4640 = vmatpush1.msra.mxu0 0.0
        %4641 = vmatprep.subr.mxu0 0.0
        %4642 = vmatpush1.msra.mxu0 0.0
        %4643 = vmatprep.subr.mxu0 0.0
        %4644 = vmatpush1.msra.mxu0 0.0
        %4645 = vmatprep.subr.mxu0 0.0
        %4646 = vmatpush1.msra.mxu0 0.0
        %4647 = vmatprep.subr.mxu0 0.0
        %4648 = vmatpush1.msra.mxu0 0.0
        %4649 = vmatprep.subr.mxu0 0.0
        %4650 = vmatpush1.msra.mxu0 0.0
        %4651 = vmatprep.subr.mxu0 0.0
        %4652 = vmatpush1.msra.mxu0 0.0
        %4653 = vmatprep.subr.mxu0 0.0
        %4654 = vmatpush1.msra.mxu0 0.0
        %4655 = vmatprep.subr.mxu0 0.0
        %4656 = vmatpush1.msra.mxu0 0.0
        %4657 = vmatprep.subr.mxu0 0.0
        %4658 = vmatpush1.msra.mxu0 0.0
        %4659 = vmatprep.subr.mxu0 0.0
        %4660 = vmatpush1.msra.mxu0 0.0
        %4661 = vmatprep.subr.mxu0 0.0
        %4662 = vmatpush1.msra.mxu0 0.0
        %4663 = vmatprep.subr.mxu0 0.0
        %4664 = vmatpush1.msra.mxu0 0.0
        %4665 = vmatprep.subr.mxu0 0.0
        %4666 = vmatpush1.msra.mxu0 0.0
        %4667 = vmatprep.subr.mxu0 0.0
        %4668 = vmatpush1.msra.mxu0 0.0
        %4669 = vmatprep.subr.mxu0 0.0
        %4670 = vmatpush1.msra.mxu0 0.0
        %4671 = vmatprep.subr.mxu0 0.0
        %4672 = vmatpush1.msra.mxu0 0.0
        %4673 = vmatprep.mubr.f32.mxu0 0.0
        %4674 = vmatmul.mubr.f32.gmra.mrb[0].mxu0 %v4605
        %v4675 = vpop.f32.mrb[0].mxu0
        %v4676 = vadd.f32 0.0, %v4675
        %v4677 = vpop.f32.mrb[0].mxu0
        %4678 = vmatprep.mubr.f32.mxu0 0.0
        %4679 = vmatmul.mubr.f32.gmra.mrb[0].mxu0 %v4607
        %v4680 = vpop.f32.mrb[0].mxu0
        %v4681 = vadd.f32 0.0, %v4680
        %v4682 = vpop.f32.mrb[0].mxu0
        %4683 = vdwg.mxu0
        %4686 = vrot.lane.b32.xlu0 %v4676, 20
        %v4687 = vpop.permute.xlu0 %4686
        %4688 = vrot.lane.b32.xlu0 %v4681, 20
        %v4689 = vpop.permute.xlu0 %4688
        %vm4692 = vcmask 203936
        %4693 = vst.msk [vmem:[#allocation7] sm:$0xff] %vm4692, %v4687
        %4694 = vst.msk [vmem:[#allocation7 + $0x8] sm:$0xff] %vm4692, %v4689
        %v4695 = vld [vmem:[#allocation7] sm:$0x1]
        %v4696 = vlaneseq
        %vm4697 = vcmp.ge.s32.totalorder %v4696, 0
        %vm4698 = vcmp.lt.s32.totalorder %v4696, 25
        %vm4699 = vmand %vm4697, %vm4698
        %4700 = vst.msk [vmem:[#allocation8] sm:$0x1] %vm4699, %v4695
        %v4701 = vld [vmem:[#allocation7 + $0x1] sm:$0x1]
        %v4704 = vunpack.c.l.s4 1966171168
        %v4705 = vunpack.c.0.s8 %v4704
        %v4706 = vlaneseq
        %v4707 = vshrl.u32 %v4706, 7
        %v4708 = vsub.s32 %v4705, %v4707
        %v4709 = vrot.slane %v4701, %v4708
        %v4711 = vunpack.c.l.s4 1966171168
        %v4712 = vunpack.c.0.s8 %v4711
        %v4713 = vlaneseq
        %v4714 = vshrl.u32 %v4713, 7
        %v4715 = vsub.s32 %v4712, %v4714
        %v4716 = vrot.slane %v4709, %v4715
        %4717 = vrot.lane.b32.xlu0 %v4716, 25
        %v4718 = vpop.permute.xlu0 %4717
        %vm4720 = vcmp.ge.s32.totalorder %v4696, 25
        %vm4721 = vcmp.lt.s32.totalorder %v4696, 50
        %vm4722 = vmand %vm4720, %vm4721
        %4723 = vst.msk [vmem:[#allocation8] sm:$0x1] %vm4722, %v4718
        %v4724 = vld [vmem:[#allocation7 + $0x2] sm:$0x1]
        %v4727 = vunpack.c.l.s4 1966171168
        %v4728 = vunpack.c.0.s8 %v4727
        %v4729 = vlaneseq
        %v4730 = vshrl.u32 %v4729, 7
        %v4731 = vsub.s32 %v4728, %v4730
        %v4732 = vrot.slane %v4724, %v4731
        %v4734 = vunpack.c.l.s4 1966171168
        %v4735 = vunpack.c.0.s8 %v4734
        %v4736 = vlaneseq
        %v4737 = vshrl.u32 %v4736, 7
        %v4738 = vsub.s32 %v4735, %v4737
        %v4739 = vrot.slane %v4732, %v4738
        %4740 = vrot.lane.b32.xlu0 %v4739, 50
        %v4741 = vpop.permute.xlu0 %4740
        %vm4743 = vcmp.ge.s32.totalorder %v4696, 50
        %vm4744 = vcmp.lt.s32.totalorder %v4696, 75
        %vm4745 = vmand %vm4743, %vm4744
        %4746 = vst.msk [vmem:[#allocation8] sm:$0x1] %vm4745, %v4741
        %v4747 = vld [vmem:[#allocation7 + $0x3] sm:$0x1]
        %v4750 = vunpack.c.l.s4 1966171168
        %v4751 = vunpack.c.0.s8 %v4750
        %v4752 = vlaneseq
        %v4753 = vshrl.u32 %v4752, 7
        %v4754 = vsub.s32 %v4751, %v4753
        %v4755 = vrot.slane %v4747, %v4754
        %v4757 = vunpack.c.l.s4 1966171168
        %v4758 = vunpack.c.0.s8 %v4757
        %v4759 = vlaneseq
        %v4760 = vshrl.u32 %v4759, 7
        %v4761 = vsub.s32 %v4758, %v4760
        %v4762 = vrot.slane %v4755, %v4761
        %4763 = vrot.lane.b32.xlu0 %v4762, 75
        %v4764 = vpop.permute.xlu0 %4763
        %vm4766 = vcmp.ge.s32.totalorder %v4696, 75
        %vm4767 = vcmp.lt.s32.totalorder %v4696, 100
        %vm4768 = vmand %vm4766, %vm4767
        %4769 = vst.msk [vmem:[#allocation8] sm:$0x1] %vm4768, %v4764
        %v4770 = vld [vmem:[#allocation7 + $0x4] sm:$0x1]
        %v4773 = vunpack.c.l.s4 1966171168
        %v4774 = vunpack.c.0.s8 %v4773
        %v4775 = vlaneseq
        %v4776 = vshrl.u32 %v4775, 7
        %v4777 = vsub.s32 %v4774, %v4776
        %v4778 = vrot.slane %v4770, %v4777
        %v4780 = vunpack.c.l.s4 1966171168
        %v4781 = vunpack.c.0.s8 %v4780
        %v4782 = vlaneseq
        %v4783 = vshrl.u32 %v4782, 7
        %v4784 = vsub.s32 %v4781, %v4783
        %v4785 = vrot.slane %v4778, %v4784
        %4786 = vrot.lane.b32.xlu0 %v4785, 100
        %v4787 = vpop.permute.xlu0 %4786
        %vm4789 = vcmp.ge.s32.totalorder %v4696, 100
        %vm4790 = vcmp.lt.s32.totalorder %v4696, 125
        %vm4791 = vmand %vm4789, %vm4790
        %4792 = vst.msk [vmem:[#allocation8] sm:$0x1] %vm4791, %v4787
        %v4793 = vld [vmem:[#allocation7 + $0x5] sm:$0x1]
        %v4796 = vunpack.c.l.s4 1966171168
        %v4797 = vunpack.c.0.s8 %v4796
        %v4798 = vlaneseq
        %v4799 = vshrl.u32 %v4798, 7
        %v4800 = vsub.s32 %v4797, %v4799
        %v4801 = vrot.slane %v4793, %v4800
        %v4803 = vunpack.c.l.s4 1966171168
        %v4804 = vunpack.c.0.s8 %v4803
        %v4805 = vlaneseq
        %v4806 = vshrl.u32 %v4805, 7
        %v4807 = vsub.s32 %v4804, %v4806
        %v4808 = vrot.slane %v4801, %v4807
        %4809 = vrot.lane.b32.xlu0 %v4808, 125
        %v4810 = vpop.permute.xlu0 %4809
        %v4811 = vrot.slane %v4810, 7
        %v4812 = vsel %vm607, %v4811, %v4810
        %vm4814 = vcmp.ge.s32.totalorder %v4696, 125
        %vm4815 = vcmp.lt.s32.totalorder %v4696, 150
        %vm4816 = vmand %vm4814, %vm4815
        %4817 = vst.msk [vmem:[#allocation8] sm:$0x3] %vm4816, %v4812
        %v4818 = vld [vmem:[#allocation7 + $0x6] sm:$0x1]
        %v4821 = vunpack.c.l.s4 1966171168
        %v4822 = vunpack.c.0.s8 %v4821
        %v4823 = vlaneseq
        %v4824 = vshrl.u32 %v4823, 7
        %v4825 = vsub.s32 %v4822, %v4824
        %v4826 = vrot.slane %v4818, %v4825
        %v4828 = vunpack.c.l.s4 1966171168
        %v4829 = vunpack.c.0.s8 %v4828
        %v4830 = vlaneseq
        %v4831 = vshrl.u32 %v4830, 7
        %v4832 = vsub.s32 %v4829, %v4831
        %v4833 = vrot.slane %v4826, %v4832
        %4834 = vrot.lane.b32.xlu0 %v4833, 22
        %v4835 = vpop.permute.xlu0 %4834
        %vm4837 = vcmp.ge.s32.totalorder %v4696, 22
        %vm4838 = vcmp.lt.s32.totalorder %v4696, 47
        %vm4839 = vmand %vm4837, %vm4838
        %4840 = vst.msk [vmem:[#allocation8 + $0x1] sm:$0x1] %vm4839, %v4835
        %v4841 = vld [vmem:[#allocation7 + $0x7] sm:$0x1]
        %v4844 = vunpack.c.l.s4 1966171168
        %v4845 = vunpack.c.0.s8 %v4844
        %v4846 = vlaneseq
        %v4847 = vshrl.u32 %v4846, 7
        %v4848 = vsub.s32 %v4845, %v4847
        %v4849 = vrot.slane %v4841, %v4848
        %v4851 = vunpack.c.l.s4 1966171168
        %v4852 = vunpack.c.0.s8 %v4851
        %v4853 = vlaneseq
        %v4854 = vshrl.u32 %v4853, 7
        %v4855 = vsub.s32 %v4852, %v4854
        %v4856 = vrot.slane %v4849, %v4855
        %4857 = vrot.lane.b32.xlu0 %v4856, 47
        %v4858 = vpop.permute.xlu0 %4857
        %vm4860 = vcmp.ge.s32.totalorder %v4696, 47
        %vm4861 = vcmp.lt.s32.totalorder %v4696, 72
        %vm4862 = vmand %vm4860, %vm4861
        %4863 = vst.msk [vmem:[#allocation8 + $0x1] sm:$0x1] %vm4862, %v4858
        %v4864 = vld [vmem:[#allocation7 + $0x8] sm:$0x1]
        %v4867 = vunpack.c.l.s4 1966171168
        %v4868 = vunpack.c.0.s8 %v4867
        %v4869 = vlaneseq
        %v4870 = vshrl.u32 %v4869, 7
        %v4871 = vsub.s32 %v4868, %v4870
        %v4872 = vrot.slane %v4864, %v4871
        %v4874 = vunpack.c.l.s4 1966171168
        %v4875 = vunpack.c.0.s8 %v4874
        %v4876 = vlaneseq
        %v4877 = vshrl.u32 %v4876, 7
        %v4878 = vsub.s32 %v4875, %v4877
        %v4879 = vrot.slane %v4872, %v4878
        %4880 = vrot.lane.b32.xlu0 %v4879, 72
        %v4881 = vpop.permute.xlu0 %4880
        %vm4883 = vcmp.ge.s32.totalorder %v4696, 72
        %vm4884 = vcmp.lt.s32.totalorder %v4696, 97
        %vm4885 = vmand %vm4883, %vm4884
        %4886 = vst.msk [vmem:[#allocation8 + $0x1] sm:$0x1] %vm4885, %v4881
        %v4887 = vld [vmem:[#allocation7 + $0x9] sm:$0x1]
        %v4890 = vunpack.c.l.s4 1966171168
        %v4891 = vunpack.c.0.s8 %v4890
        %v4892 = vlaneseq
        %v4893 = vshrl.u32 %v4892, 7
        %v4894 = vsub.s32 %v4891, %v4893
        %v4895 = vrot.slane %v4887, %v4894
        %v4897 = vunpack.c.l.s4 1966171168
        %v4898 = vunpack.c.0.s8 %v4897
        %v4899 = vlaneseq
        %v4900 = vshrl.u32 %v4899, 7
        %v4901 = vsub.s32 %v4898, %v4900
        %v4902 = vrot.slane %v4895, %v4901
        %4903 = vrot.lane.b32.xlu0 %v4902, 97
        %v4904 = vpop.permute.xlu0 %4903
        %vm4906 = vcmp.ge.s32.totalorder %v4696, 97
        %vm4907 = vcmp.lt.s32.totalorder %v4696, 122
        %vm4908 = vmand %vm4906, %vm4907
        %4909 = vst.msk [vmem:[#allocation8 + $0x1] sm:$0x1] %vm4908, %v4904
        %v4910 = vld [vmem:[#allocation7 + $0xa] sm:$0x1]
        %v4913 = vunpack.c.l.s4 1966171168
        %v4914 = vunpack.c.0.s8 %v4913
        %v4915 = vlaneseq
        %v4916 = vshrl.u32 %v4915, 7
        %v4917 = vsub.s32 %v4914, %v4916
        %v4918 = vrot.slane %v4910, %v4917
        %v4920 = vunpack.c.l.s4 1966171168
        %v4921 = vunpack.c.0.s8 %v4920
        %v4922 = vlaneseq
        %v4923 = vshrl.u32 %v4922, 7
        %v4924 = vsub.s32 %v4921, %v4923
        %v4925 = vrot.slane %v4918, %v4924
        %4926 = vrot.lane.b32.xlu0 %v4925, 122
        %v4927 = vpop.permute.xlu0 %4926
        %v4928 = vrot.slane %v4927, 7
        %vm4929 = vcmask 998400
        %v4930 = vsel %vm4929, %v4928, %v4927
        %vm4932 = vcmp.ge.s32.totalorder %v4696, 122
        %vm4933 = vcmp.lt.s32.totalorder %v4696, 147
        %vm4934 = vmand %vm4932, %vm4933
        %4935 = vst.msk [vmem:[#allocation8 + $0x1] sm:$0x3] %vm4934, %v4930
        %v4936 = vld [vmem:[#allocation7 + $0xb] sm:$0x1]
        %v4939 = vunpack.c.l.s4 1966171168
        %v4940 = vunpack.c.0.s8 %v4939
        %v4941 = vlaneseq
        %v4942 = vshrl.u32 %v4941, 7
        %v4943 = vsub.s32 %v4940, %v4942
        %v4944 = vrot.slane %v4936, %v4943
        %v4946 = vunpack.c.l.s4 1966171168
        %v4947 = vunpack.c.0.s8 %v4946
        %v4948 = vlaneseq
        %v4949 = vshrl.u32 %v4948, 7
        %v4950 = vsub.s32 %v4947, %v4949
        %v4951 = vrot.slane %v4944, %v4950
        %4952 = vrot.lane.b32.xlu0 %v4951, 19
        %v4953 = vpop.permute.xlu0 %4952
        %vm4955 = vcmp.ge.s32.totalorder %v4696, 19
        %vm4956 = vcmp.lt.s32.totalorder %v4696, 44
        %vm4957 = vmand %vm4955, %vm4956
        %4958 = vst.msk [vmem:[#allocation8 + $0x2] sm:$0x1] %vm4957, %v4953
        %v4959 = vld [vmem:[#allocation7 + $0xc] sm:$0x1]
        %v4962 = vunpack.c.l.s4 1966171168
        %v4963 = vunpack.c.0.s8 %v4962
        %v4964 = vlaneseq
        %v4965 = vshrl.u32 %v4964, 7
        %v4966 = vsub.s32 %v4963, %v4965
        %v4967 = vrot.slane %v4959, %v4966
        %v4969 = vunpack.c.l.s4 1966171168
        %v4970 = vunpack.c.0.s8 %v4969
        %v4971 = vlaneseq
        %v4972 = vshrl.u32 %v4971, 7
        %v4973 = vsub.s32 %v4970, %v4972
        %v4974 = vrot.slane %v4967, %v4973
        %4975 = vrot.lane.b32.xlu0 %v4974, 44
        %v4976 = vpop.permute.xlu0 %4975
        %vm4978 = vcmp.ge.s32.totalorder %v4696, 44
        %vm4979 = vcmp.lt.s32.totalorder %v4696, 69
        %vm4980 = vmand %vm4978, %vm4979
        %4981 = vst.msk [vmem:[#allocation8 + $0x2] sm:$0x1] %vm4980, %v4976
        %v4982 = vld [vmem:[#allocation7 + $0xd] sm:$0x1]
        %v4985 = vunpack.c.l.s4 1966171168
        %v4986 = vunpack.c.0.s8 %v4985
        %v4987 = vlaneseq
        %v4988 = vshrl.u32 %v4987, 7
        %v4989 = vsub.s32 %v4986, %v4988
        %v4990 = vrot.slane %v4982, %v4989
        %v4992 = vunpack.c.l.s4 1966171168
        %v4993 = vunpack.c.0.s8 %v4992
        %v4994 = vlaneseq
        %v4995 = vshrl.u32 %v4994, 7
        %v4996 = vsub.s32 %v4993, %v4995
        %v4997 = vrot.slane %v4990, %v4996
        %4998 = vrot.lane.b32.xlu0 %v4997, 69
        %v4999 = vpop.permute.xlu0 %4998
        %vm5001 = vcmp.ge.s32.totalorder %v4696, 69
        %vm5002 = vcmp.lt.s32.totalorder %v4696, 94
        %vm5003 = vmand %vm5001, %vm5002
        %5004 = vst.msk [vmem:[#allocation8 + $0x2] sm:$0x1] %vm5003, %v4999
        %v5005 = vld [vmem:[#allocation7 + $0xe] sm:$0x1]
        %v5008 = vunpack.c.l.s4 1966171168
        %v5009 = vunpack.c.0.s8 %v5008
        %v5010 = vlaneseq
        %v5011 = vshrl.u32 %v5010, 7
        %v5012 = vsub.s32 %v5009, %v5011
        %v5013 = vrot.slane %v5005, %v5012
        %v5015 = vunpack.c.l.s4 1966171168
        %v5016 = vunpack.c.0.s8 %v5015
        %v5017 = vlaneseq
        %v5018 = vshrl.u32 %v5017, 7
        %v5019 = vsub.s32 %v5016, %v5018
        %v5020 = vrot.slane %v5013, %v5019
        %5021 = vrot.lane.b32.xlu0 %v5020, 94
        %v5022 = vpop.permute.xlu0 %5021
        %vm5024 = vcmp.ge.s32.totalorder %v4696, 94
        %vm5025 = vcmp.lt.s32.totalorder %v4696, 119
        %vm5026 = vmand %vm5024, %vm5025
        %5027 = vst.msk [vmem:[#allocation8 + $0x2] sm:$0x1] %vm5026, %v5022
        %v5028 = vld [vmem:[#allocation7 + $0xf] sm:$0x1]
        %v5031 = vunpack.c.l.s4 1966171168
        %v5032 = vunpack.c.0.s8 %v5031
        %v5033 = vlaneseq
        %v5034 = vshrl.u32 %v5033, 7
        %v5035 = vsub.s32 %v5032, %v5034
        %v5036 = vrot.slane %v5028, %v5035
        %v5038 = vunpack.c.l.s4 1966171168
        %v5039 = vunpack.c.0.s8 %v5038
        %v5040 = vlaneseq
        %v5041 = vshrl.u32 %v5040, 7
        %v5042 = vsub.s32 %v5039, %v5041
        %v5043 = vrot.slane %v5036, %v5042
        %5044 = vrot.lane.b32.xlu0 %v5043, 119
        %v5045 = vpop.permute.xlu0 %5044
        %v5046 = vrot.slane %v5045, 7
        %vm5047 = vcmask 973824
        %v5048 = vsel %vm5047, %v5046, %v5045
        %vm5050 = vcmp.ge.s32.totalorder %v4696, 119
        %vm5051 = vcmp.lt.s32.totalorder %v4696, 144
        %vm5052 = vmand %vm5050, %vm5051
        %5053 = vst.msk [vmem:[#allocation8 + $0x2] sm:$0x3] %vm5052, %v5048
        %v5054 = vld [vmem:[#allocation8] sm:$0xf]
        %v5055 = vld [vmem:[%s7] sm:$0xff]
        %v5056 = vld [vmem:[%s7 + $0x8] sm:$0xff]
        %v5057 = vld [vmem:[%s7 + $0x10] sm:$0xff]
        %v5058 = vld [vmem:[%s7 + $0x18] sm:$0xff]
        %v5059 = vld [vmem:[%s7 + $0x20] sm:$0xff]
        %v5060 = vld [vmem:[%s7 + $0x28] sm:$0xff]
        %v5061 = vld [vmem:[%s7 + $0x30] sm:$0xff]
        %v5062 = vld [vmem:[%s7 + $0x38] sm:$0xff]
        %v5063 = vld [vmem:[%s7 + $0x40] sm:$0xff]
        %v5064 = vld [vmem:[%s7 + $0x48] sm:$0xff]
        %v5065 = vld [vmem:[%s7 + $0x50] sm:$0xff]
        %v5066 = vld [vmem:[%s7 + $0x58] sm:$0xff]
        %v5067 = vld [vmem:[%s7 + $0x60] sm:$0xff]
        %v5068 = vld [vmem:[%s7 + $0x68] sm:$0xff]
        %v5069 = vld [vmem:[%s7 + $0x70] sm:$0xff]
        %v5070 = vld [vmem:[%s7 + $0x78] sm:$0xff]
        %v5071 = vld [vmem:[%s7 + $0x80] sm:$0xff]
        %v5072 = vld [vmem:[%s7 + $0x88] sm:$0xff]
        %v5073 = vld [vmem:[%s7 + $0x90] sm:$0xff]
        %v5074 = vld [vmem:[%s7 + $0x98] sm:$0xff]
        %v5075 = vld [vmem:[%s7 + $0xa0] sm:$0xff]
        %v5076 = vld [vmem:[%s7 + $0xa8] sm:$0xff]
        %v5077 = vld [vmem:[%s7 + $0xb0] sm:$0xff]
        %v5078 = vld [vmem:[%s7 + $0xb8] sm:$0xff]
        %v5079 = vld [vmem:[%s7 + $0xc0] sm:$0xff]
        %v5080 = vld [vmem:[%s7 + $0xc8] sm:$0xff]
        %v5081 = vld [vmem:[%s7 + $0xd0] sm:$0xff]
        %v5082 = vld [vmem:[%s7 + $0xd8] sm:$0xff]
        %v5083 = vld [vmem:[%s7 + $0xe0] sm:$0xff]
        %v5084 = vld [vmem:[%s7 + $0xe8] sm:$0xff]
        %v5085 = vld [vmem:[%s7 + $0xf0] sm:$0xff]
        %v5086 = vld [vmem:[%s7 + $0xf8] sm:$0xff]
        %v5087 = vld [vmem:[%s7 + $0x100] sm:$0xff]
        %v5088 = vld [vmem:[%s7 + $0x108] sm:$0xff]
        %v5089 = vld [vmem:[%s7 + $0x110] sm:$0xff]
        %v5090 = vld [vmem:[%s7 + $0x118] sm:$0xff]
        %v5091 = vld [vmem:[%s7 + $0x120] sm:$0xff]
        %v5092 = vld [vmem:[%s7 + $0x128] sm:$0xff]
        %v5093 = vld [vmem:[%s7 + $0x130] sm:$0xff]
        %v5094 = vld [vmem:[%s7 + $0x138] sm:$0xff]
        %v5095 = vld [vmem:[%s7 + $0x140] sm:$0xff]
        %v5096 = vld [vmem:[%s7 + $0x148] sm:$0xff]
        %v5097 = vld [vmem:[%s7 + $0x150] sm:$0xff]
        %v5098 = vld [vmem:[%s7 + $0x158] sm:$0xff]
        %v5099 = vld [vmem:[%s7 + $0x160] sm:$0xff]
        %v5100 = vld [vmem:[%s7 + $0x168] sm:$0xff]
        %v5101 = vld [vmem:[%s7 + $0x170] sm:$0xff]
        %v5102 = vld [vmem:[%s7 + $0x178] sm:$0xff]
        %v5103 = vld [vmem:[%s7 + $0x180] sm:$0xff]
        %v5104 = vld [vmem:[%s7 + $0x188] sm:$0xff]
        %v5105 = vld [vmem:[%s8] sm:$0x1]
        %v5107 = vlaneseq
        %v5108 = vshrl.u32 %v5107, 7
        %v5109 = vsub.s32 0, %v5108
        %v5110 = vrot.slane %v5054, %v5109
        %v5111 = vlaneseq
        %v5112 = vshrl.u32 %v5111, 7
        %v5113 = vsub.s32 1, %v5112
        %v5114 = vrot.slane %v5054, %v5113
        %v5115 = vlaneseq
        %v5116 = vshrl.u32 %v5115, 7
        %v5117 = vsub.s32 2, %v5116
        %v5118 = vrot.slane %v5054, %v5117
        %v5119 = vlaneseq
        %v5120 = vshrl.u32 %v5119, 7
        %v5121 = vsub.s32 3, %v5120
        %v5122 = vrot.slane %v5054, %v5121
        %vm5126 = vcmask 130048
        %v5127 = vsel %vm5126, %v5122, 0
        %5129 = vmatprep.subr.mxu0 0.0
        %5130 = vmatpush1.msra.mxu0 %v5055
        %5131 = vmatprep.subr.mxu0 0.0
        %5132 = vmatpush1.msra.mxu0 %v5056
        %5133 = vmatprep.subr.mxu0 0.0
        %5134 = vmatpush1.msra.mxu0 %v5057
        %5135 = vmatprep.subr.mxu0 0.0
        %5136 = vmatpush1.msra.mxu0 %v5058
        %5137 = vmatprep.subr.mxu0 0.0
        %5138 = vmatpush1.msra.mxu0 %v5059
        %5139 = vmatprep.subr.mxu0 0.0
        %5140 = vmatpush1.msra.mxu0 %v5060
        %5141 = vmatprep.subr.mxu0 0.0
        %5142 = vmatpush1.msra.mxu0 %v5061
        %5143 = vmatprep.subr.mxu0 0.0
        %5144 = vmatpush1.msra.mxu0 %v5062
        %5145 = vmatprep.subr.mxu0 0.0
        %5146 = vmatpush1.msra.mxu0 %v5063
        %5147 = vmatprep.subr.mxu0 0.0
        %5148 = vmatpush1.msra.mxu0 %v5064
        %5149 = vmatprep.subr.mxu0 0.0
        %5150 = vmatpush1.msra.mxu0 %v5065
        %5151 = vmatprep.subr.mxu0 0.0
        %5152 = vmatpush1.msra.mxu0 %v5066
        %5153 = vmatprep.subr.mxu0 0.0
        %5154 = vmatpush1.msra.mxu0 %v5067
        %5155 = vmatprep.subr.mxu0 0.0
        %5156 = vmatpush1.msra.mxu0 %v5068
        %5157 = vmatprep.subr.mxu0 0.0
        %5158 = vmatpush1.msra.mxu0 %v5069
        %5159 = vmatprep.subr.mxu0 0.0
        %5160 = vmatpush1.msra.mxu0 %v5070
        %5161 = vmatprep.subr.mxu0 0.0
        %5162 = vmatpush1.msra.mxu0 %v5071
        %5163 = vmatprep.subr.mxu0 0.0
        %5164 = vmatpush1.msra.mxu0 %v5072
        %5165 = vmatprep.subr.mxu0 0.0
        %5166 = vmatpush1.msra.mxu0 %v5073
        %5167 = vmatprep.subr.mxu0 0.0
        %5168 = vmatpush1.msra.mxu0 %v5074
        %5169 = vmatprep.subr.mxu0 0.0
        %5170 = vmatpush1.msra.mxu0 %v5075
        %5171 = vmatprep.subr.mxu0 0.0
        %5172 = vmatpush1.msra.mxu0 %v5076
        %5173 = vmatprep.subr.mxu0 0.0
        %5174 = vmatpush1.msra.mxu0 %v5077
        %5175 = vmatprep.subr.mxu0 0.0
        %5176 = vmatpush1.msra.mxu0 %v5078
        %5177 = vmatprep.subr.mxu0 0.0
        %5178 = vmatpush1.msra.mxu0 %v5079
        %5179 = vmatprep.subr.mxu0 0.0
        %5180 = vmatpush1.msra.mxu0 %v5080
        %5181 = vmatprep.subr.mxu0 0.0
        %5182 = vmatpush1.msra.mxu0 %v5081
        %5183 = vmatprep.subr.mxu0 0.0
        %5184 = vmatpush1.msra.mxu0 %v5082
        %5185 = vmatprep.subr.mxu0 0.0
        %5186 = vmatpush1.msra.mxu0 %v5083
        %5187 = vmatprep.subr.mxu0 0.0
        %5188 = vmatpush1.msra.mxu0 %v5084
        %5189 = vmatprep.subr.mxu0 0.0
        %5190 = vmatpush1.msra.mxu0 %v5085
        %5191 = vmatprep.subr.mxu0 0.0
        %5192 = vmatpush1.msra.mxu0 %v5086
        %5193 = vmatprep.mubr.f32.mxu0 %v5114
        %5194 = vmatmul.mubr.f32.gmra.mrb[0].mxu0 %v5110
        %v5195 = vpop.f32.mrb[0].mxu0
        %v5196 = vadd.f32 %v5105, %v5195
        %v5197 = vpop.f32.mrb[0].mxu0
        %5198 = vdwg.mxu0
        %5199 = vmatprep.subr.mxu0 0.0
        %5200 = vmatpush1.msra.mxu0 %v5087
        %5201 = vmatprep.subr.mxu0 0.0
        %5202 = vmatpush1.msra.mxu0 %v5088
        %5203 = vmatprep.subr.mxu0 0.0
        %5204 = vmatpush1.msra.mxu0 %v5089
        %5205 = vmatprep.subr.mxu0 0.0
        %5206 = vmatpush1.msra.mxu0 %v5090
        %5207 = vmatprep.subr.mxu0 0.0
        %5208 = vmatpush1.msra.mxu0 %v5091
        %5209 = vmatprep.subr.mxu0 0.0
        %5210 = vmatpush1.msra.mxu0 %v5092
        %5211 = vmatprep.subr.mxu0 0.0
        %5212 = vmatpush1.msra.mxu0 %v5093
        %5213 = vmatprep.subr.mxu0 0.0
        %5214 = vmatpush1.msra.mxu0 %v5094
        %5215 = vmatprep.subr.mxu0 0.0
        %5216 = vmatpush1.msra.mxu0 %v5095
        %5217 = vmatprep.subr.mxu0 0.0
        %5218 = vmatpush1.msra.mxu0 %v5096
        %5219 = vmatprep.subr.mxu0 0.0
        %5220 = vmatpush1.msra.mxu0 %v5097
        %5221 = vmatprep.subr.mxu0 0.0
        %5222 = vmatpush1.msra.mxu0 %v5098
        %5223 = vmatprep.subr.mxu0 0.0
        %5224 = vmatpush1.msra.mxu0 %v5099
        %5225 = vmatprep.subr.mxu0 0.0
        %5226 = vmatpush1.msra.mxu0 %v5100
        %5227 = vmatprep.subr.mxu0 0.0
        %5228 = vmatpush1.msra.mxu0 %v5101
        %5229 = vmatprep.subr.mxu0 0.0
        %5230 = vmatpush1.msra.mxu0 %v5102
        %5231 = vmatprep.subr.mxu0 0.0
        %5232 = vmatpush1.msra.mxu0 %v5103
        %5233 = vmatprep.subr.mxu0 0.0
        %5234 = vmatpush1.msra.mxu0 %v5104
        %5235 = vmatprep.subr.mxu0 0.0
        %5236 = vmatpush1.msra.mxu0 0.0
        %5237 = vmatprep.subr.mxu0 0.0
        %5238 = vmatpush1.msra.mxu0 0.0
        %5239 = vmatprep.subr.mxu0 0.0
        %5240 = vmatpush1.msra.mxu0 0.0
        %5241 = vmatprep.subr.mxu0 0.0
        %5242 = vmatpush1.msra.mxu0 0.0
        %5243 = vmatprep.subr.mxu0 0.0
        %5244 = vmatpush1.msra.mxu0 0.0
        %5245 = vmatprep.subr.mxu0 0.0
        %5246 = vmatpush1.msra.mxu0 0.0
        %5247 = vmatprep.subr.mxu0 0.0
        %5248 = vmatpush1.msra.mxu0 0.0
        %5249 = vmatprep.subr.mxu0 0.0
        %5250 = vmatpush1.msra.mxu0 0.0
        %5251 = vmatprep.subr.mxu0 0.0
        %5252 = vmatpush1.msra.mxu0 0.0
        %5253 = vmatprep.subr.mxu0 0.0
        %5254 = vmatpush1.msra.mxu0 0.0
        %5255 = vmatprep.subr.mxu0 0.0
        %5256 = vmatpush1.msra.mxu0 0.0
        %5257 = vmatprep.subr.mxu0 0.0
        %5258 = vmatpush1.msra.mxu0 0.0
        %5259 = vmatprep.subr.mxu0 0.0
        %5260 = vmatpush1.msra.mxu0 0.0
        %5261 = vmatprep.subr.mxu0 0.0
        %5262 = vmatpush1.msra.mxu0 0.0
        %5263 = vmatprep.mubr.f32.mxu0 %v5127
        %5264 = vmatmul.mubr.f32.gmra.mrb[0].mxu0 %v5118
        %v5265 = vpop.f32.mrb[0].mxu0
        %v5266 = vadd.f32 %v5196, %v5265
        %v5267 = vpop.f32.mrb[0].mxu0
        %5268 = vdwg.mxu0
        %v5269 = vmax.f32 %v5266, 0.0
        %v5270 = vld [vmem:[%s9] sm:$0xff]
        %v5271 = vld [vmem:[%s9 + $0x8] sm:$0xff]
        %v5272 = vld [vmem:[%s9 + $0x10] sm:$0xff]
        %v5273 = vld [vmem:[%s9 + $0x18] sm:$0xff]
        %v5274 = vld [vmem:[%s9 + $0x20] sm:$0xff]
        %v5275 = vld [vmem:[%s9 + $0x28] sm:$0xff]
        %v5276 = vld [vmem:[%s9 + $0x30] sm:$0xff]
        %v5277 = vld [vmem:[%s9 + $0x38] sm:$0xff]
        %v5278 = vld [vmem:[%s9 + $0x40] sm:$0xff]
        %v5279 = vld [vmem:[%s9 + $0x48] sm:$0xff]
        %v5280 = vld [vmem:[%s9 + $0x50] sm:$0xff]
        %v5281 = vld [vmem:[%s9 + $0x58] sm:$0xff]
        %v5282 = vld [vmem:[%s9 + $0x60] sm:$0xff]
        %v5283 = vld [vmem:[%s9 + $0x68] sm:$0xff]
        %v5284 = vld [vmem:[%s9 + $0x70] sm:$0xff]
        %v5285 = vld [vmem:[%s10] sm:$0x1]
        %vm5286 = vcmask 982016
        %v5288 = vsel %vm5286, %v5269, 0
        %5290 = vmatprep.subr.mxu0 0.0
        %5291 = vmatpush1.msra.mxu0 %v5270
        %5292 = vmatprep.subr.mxu0 0.0
        %5293 = vmatpush1.msra.mxu0 %v5271
        %5294 = vmatprep.subr.mxu0 0.0
        %5295 = vmatpush1.msra.mxu0 %v5272
        %5296 = vmatprep.subr.mxu0 0.0
        %5297 = vmatpush1.msra.mxu0 %v5273
        %5298 = vmatprep.subr.mxu0 0.0
        %5299 = vmatpush1.msra.mxu0 %v5274
        %5300 = vmatprep.subr.mxu0 0.0
        %5301 = vmatpush1.msra.mxu0 %v5275
        %5302 = vmatprep.subr.mxu0 0.0
        %5303 = vmatpush1.msra.mxu0 %v5276
        %5304 = vmatprep.subr.mxu0 0.0
        %5305 = vmatpush1.msra.mxu0 %v5277
        %5306 = vmatprep.subr.mxu0 0.0
        %5307 = vmatpush1.msra.mxu0 %v5278
        %5308 = vmatprep.subr.mxu0 0.0
        %5309 = vmatpush1.msra.mxu0 %v5279
        %5310 = vmatprep.subr.mxu0 0.0
        %5311 = vmatpush1.msra.mxu0 %v5280
        %5312 = vmatprep.subr.mxu0 0.0
        %5313 = vmatpush1.msra.mxu0 %v5281
        %5314 = vmatprep.subr.mxu0 0.0
        %5315 = vmatpush1.msra.mxu0 %v5282
        %5316 = vmatprep.subr.mxu0 0.0
        %5317 = vmatpush1.msra.mxu0 %v5283
        %5318 = vmatprep.subr.mxu0 0.0
        %5319 = vmatpush1.msra.mxu0 %v5284
        %5320 = vmatprep.subr.mxu0 0.0
        %5321 = vmatpush1.msra.mxu0 0.0
        %5322 = vmatprep.subr.mxu0 0.0
        %5323 = vmatpush1.msra.mxu0 0.0
        %5324 = vmatprep.subr.mxu0 0.0
        %5325 = vmatpush1.msra.mxu0 0.0
        %5326 = vmatprep.subr.mxu0 0.0
        %5327 = vmatpush1.msra.mxu0 0.0
        %5328 = vmatprep.subr.mxu0 0.0
        %5329 = vmatpush1.msra.mxu0 0.0
        %5330 = vmatprep.subr.mxu0 0.0
        %5331 = vmatpush1.msra.mxu0 0.0
        %5332 = vmatprep.subr.mxu0 0.0
        %5333 = vmatpush1.msra.mxu0 0.0
        %5334 = vmatprep.subr.mxu0 0.0
        %5335 = vmatpush1.msra.mxu0 0.0
        %5336 = vmatprep.subr.mxu0 0.0
        %5337 = vmatpush1.msra.mxu0 0.0
        %5338 = vmatprep.subr.mxu0 0.0
        %5339 = vmatpush1.msra.mxu0 0.0
        %5340 = vmatprep.subr.mxu0 0.0
        %5341 = vmatpush1.msra.mxu0 0.0
        %5342 = vmatprep.subr.mxu0 0.0
        %5343 = vmatpush1.msra.mxu0 0.0
        %5344 = vmatprep.subr.mxu0 0.0
        %5345 = vmatpush1.msra.mxu0 0.0
        %5346 = vmatprep.subr.mxu0 0.0
        %5347 = vmatpush1.msra.mxu0 0.0
        %5348 = vmatprep.subr.mxu0 0.0
        %5349 = vmatpush1.msra.mxu0 0.0
        %5350 = vmatprep.subr.mxu0 0.0
        %5351 = vmatpush1.msra.mxu0 0.0
        %5352 = vmatprep.subr.mxu0 0.0
        %5353 = vmatpush1.msra.mxu0 0.0
        %5354 = vmatprep.mubr.f32.mxu0 0.0
        %5355 = vmatmul.mubr.f32.gmra.mrb[0].mxu0 %v5288
        %v5356 = vpop.f32.mrb[0].mxu0
        %v5357 = vadd.f32 %v5285, %v5356
        %v5358 = vpop.f32.mrb[0].mxu0
        %5359 = vdwg.mxu0
        %v5360 = vmax.f32 %v5357, 0.0
        %v5361 = vld [vmem:[%s11] sm:$0xff]
        %v5362 = vld [vmem:[%s11 + $0x8] sm:$0xff]
        %v5363 = vld [vmem:[%s11 + $0x10] sm:$0xff]
        %v5364 = vld [vmem:[%s11 + $0x18] sm:$0xff]
        %v5365 = vld [vmem:[%s11 + $0x20] sm:$0xff]
        %v5366 = vld [vmem:[%s11 + $0x28] sm:$0xff]
        %v5367 = vld [vmem:[%s11 + $0x30] sm:$0xff]
        %v5368 = vld [vmem:[%s11 + $0x38] sm:$0xff]
        %v5369 = vld [vmem:[%s11 + $0x40] sm:$0xff]
        %v5370 = vld [vmem:[%s11 + $0x48] sm:$0xff]
        %v5371 = vld [vmem:[%s11 + $0x50] sm:$0xf]
        %v5372 = vld [vmem:[%s12] sm:$0x1]
        %v5374 = vsel %vm3788, %v5360, 0
        %vm5376 = vcmask 1043456
        %v5378 = vsel %vm5376, %v5371, 0
        %5380 = vmatprep.subr.mxu0 0.0
        %5381 = vmatpush1.msra.mxu0 %v5361
        %5382 = vmatprep.subr.mxu0 0.0
        %5383 = vmatpush1.msra.mxu0 %v5362
        %5384 = vmatprep.subr.mxu0 0.0
        %5385 = vmatpush1.msra.mxu0 %v5363
        %5386 = vmatprep.subr.mxu0 0.0
        %5387 = vmatpush1.msra.mxu0 %v5364
        %5388 = vmatprep.subr.mxu0 0.0
        %5389 = vmatpush1.msra.mxu0 %v5365
        %5390 = vmatprep.subr.mxu0 0.0
        %5391 = vmatpush1.msra.mxu0 %v5366
        %5392 = vmatprep.subr.mxu0 0.0
        %5393 = vmatpush1.msra.mxu0 %v5367
        %5394 = vmatprep.subr.mxu0 0.0
        %5395 = vmatpush1.msra.mxu0 %v5368
        %5396 = vmatprep.subr.mxu0 0.0
        %5397 = vmatpush1.msra.mxu0 %v5369
        %5398 = vmatprep.subr.mxu0 0.0
        %5399 = vmatpush1.msra.mxu0 %v5370
        %5400 = vmatprep.subr.mxu0 0.0
        %5401 = vmatpush1.msra.mxu0 %v5378
        %5402 = vmatprep.subr.mxu0 0.0
        %5403 = vmatpush1.msra.mxu0 0.0
        %5404 = vmatprep.subr.mxu0 0.0
        %5405 = vmatpush1.msra.mxu0 0.0
        %5406 = vmatprep.subr.mxu0 0.0
        %5407 = vmatpush1.msra.mxu0 0.0
        %5408 = vmatprep.subr.mxu0 0.0
        %5409 = vmatpush1.msra.mxu0 0.0
        %5410 = vmatprep.subr.mxu0 0.0
        %5411 = vmatpush1.msra.mxu0 0.0
        %5412 = vmatprep.subr.mxu0 0.0
        %5413 = vmatpush1.msra.mxu0 0.0
        %5414 = vmatprep.subr.mxu0 0.0
        %5415 = vmatpush1.msra.mxu0 0.0
        %5416 = vmatprep.subr.mxu0 0.0
        %5417 = vmatpush1.msra.mxu0 0.0
        %5418 = vmatprep.subr.mxu0 0.0
        %5419 = vmatpush1.msra.mxu0 0.0
        %5420 = vmatprep.subr.mxu0 0.0
        %5421 = vmatpush1.msra.mxu0 0.0
        %5422 = vmatprep.subr.mxu0 0.0
        %5423 = vmatpush1.msra.mxu0 0.0
        %5424 = vmatprep.subr.mxu0 0.0
        %5425 = vmatpush1.msra.mxu0 0.0
        %5426 = vmatprep.subr.mxu0 0.0
        %5427 = vmatpush1.msra.mxu0 0.0
        %5428 = vmatprep.subr.mxu0 0.0
        %5429 = vmatpush1.msra.mxu0 0.0
        %5430 = vmatprep.subr.mxu0 0.0
        %5431 = vmatpush1.msra.mxu0 0.0
        %5432 = vmatprep.subr.mxu0 0.0
        %5433 = vmatpush1.msra.mxu0 0.0
        %5434 = vmatprep.subr.mxu0 0.0
        %5435 = vmatpush1.msra.mxu0 0.0
        %5436 = vmatprep.subr.mxu0 0.0
        %5437 = vmatpush1.msra.mxu0 0.0
        %5438 = vmatprep.subr.mxu0 0.0
        %5439 = vmatpush1.msra.mxu0 0.0
        %5440 = vmatprep.subr.mxu0 0.0
        %5441 = vmatpush1.msra.mxu0 0.0
        %5442 = vmatprep.subr.mxu0 0.0
        %5443 = vmatpush1.msra.mxu0 0.0
        %5444 = vmatprep.mubr.f32.mxu0 0.0
        %5445 = vmatmul.mubr.f32.gmra.mrb[0].mxu0 %v5374
        %v5446 = vpop.f32.mrb[0].mxu0
        %v5447 = vadd.f32 %v5372, %v5446
        %v5448 = vpop.f32.mrb[0].mxu0
        %5449 = vdwg.mxu0
        %vm5450 = vcmask 73728
        %5451 = vst.msk [vmem:[%s432] sm:$0x1] %vm5450, %v5447
        %s5452 = sand.u32 %s313, 1
        %s5453 = scalar_lea.sflag [#allocation10], %s5452
        %s5454 = sand.u32 %s313, 1
        %s5455 = scalar_lea.vmem [#allocation9], %s5454
        // Predicated region
        $region73: #{lenet_forward.1} parent=71 // pred_check
          %p5456 = pneg %p323
        $region74: #{lenet_forward.1} parent=71 // pred_check_branch
          %5458 = sbr.rel (%p5456) target = $region76
        $region75: #{lenet_forward.1} parent=71 // pred_region
          %s5460 = ssub.s32 16, 16
          %5461 = vsyncadd %s5453, %s5460
          %s5462 = smul.addr %s27, 16
          %s5463 = scalar_lea.hbm %s13, %s5462
          %s5465 = sshll.u32 %s5455, 4
          %s5466 = int_to_ptr.vmem [resolvable:$true] %s5465
          %5468 = dma.vmem_to_hbm [thread:$0]  %s5466, 16, %s5463, %s5453
        $region76: #{lenet_forward.1} parent=71 // pred_fallthru
          _
      $region72: #{lenet_forward.1} parent=5 // pred_fallthru
        _
      %p5469 = scmp.le.s32.totalorder 2, %s22
      // Predicated region
      $region77: #{lenet_forward.1} parent=5 // pred_check
        %p5470 = pneg %p5469
      $region78: #{lenet_forward.1} parent=5 // pred_check_branch
        %5472 = sbr.rel (%p5470) target = $region80
      $region79: #{lenet_forward.1} parent=5 // pred_region
        %s5473 = ssub.s32 %s22, 2
        // Predicated region
        $region81: #{lenet_forward.1} parent=79 // pred_check
          %p5474 = pneg %p329
        $region82: #{lenet_forward.1} parent=79 // pred_check_branch
          %5476 = sbr.rel (%p5474) target = $region84
        $region83: #{lenet_forward.1} parent=79 // pred_region
          %s5477 = sand.u32 %s314, 1
          %s5478 = scalar_lea.sflag [#allocation10], %s5477
          %s5479 = sand.u32 %s314, 1
          %s5480 = scalar_lea.vmem [#allocation9], %s5479
          %5481 = dma.done %s5478, 16
        $region84: #{lenet_forward.1} parent=79 // pred_fallthru
          _
      $region80: #{lenet_forward.1} parent=5 // pred_fallthru
        _
    $region6: #{lenet_forward.1} parent=1 // loop_footer
      %s26 = sadd.s32 1, %s22
    $region7: #{lenet_forward.1} parent=1 // loop_footer_branch
      %21 = sbr.rel target = $region3
    $region8: #{lenet_forward.1} parent=1 // loop_exit
      _
    %5482 = vsyncpa [#allocation10], 1
    %s5483 = scalar_lea.sflag [#allocation10], 1
    %5484 = vsyncpa %s5483, 1

</llo_original>
